<compile_context>
chip_gen: v6e
topology: v6e:2x2x1
jax: 0.10.0
libtpu: 0.0.40
codegen_flags: <defaults>
</compile_context>

<pallas_src>
import functools

import jax
import jax.numpy as jnp
import numpy as np
from jax.experimental import pallas as pl
from jax.experimental.pallas import tpu as pltpu

# ---- synthetic Config (the torch module's Config fields) -------------------
C = 4            # config.numChannels
KZ = 3           # config.kernelSize
PAD = KZ // 2
L = 3            # config.numLayers
OUT_CHANNEL = 3
BN_EPS = 1e-5

# f32 keeps the tight check against the f32 reference; flip to jnp.bfloat16 on
# v6e/v7x to halve VMEM / DMA bytes (then loosen the tolerance to ~1e-2).
COMPUTE_DTYPE = jnp.float32

# The row-pair scratch layout used for the fused pixel-shuffle assumes pad == 1.
assert KZ == 3 and PAD == 1  # TODO(synk): generalize the shuffle scratch for kz != 3


# ---------------------------- Pallas kernel ---------------------------------
def _decoder_kernel(*refs, num_layers):
    """Fused decoder forward for ONE batch element (one grid step)."""
    x_ref = refs[0]
    t_refs = refs[1:1 + num_layers]
    s_refs = refs[1 + num_layers:1 + 2 * num_layers]
    out_ref = refs[1 + 2 * num_layers]
    act_refs = refs[2 + 2 * num_layers:]

    h = x_ref.shape[1] - 2 * PAD          # spatial height of this layer's output
    x2d = x_ref[0]                        # (h + 2, (w + 2) * C) padded, row-packed

    for l in range(num_layers):
        t_ref = t_refs[l]
        # conv = sum over kernel rows of lane-dense GEMMs on the MXU
        acc = jnp.dot(x2d[0:h, :], t_ref[0], preferred_element_type=jnp.float32)
        for dh in range(1, KZ):
            acc = acc + jnp.dot(x2d[dh:dh + h, :], t_ref[dh],
                                preferred_element_type=jnp.float32)
        y = acc + s_refs[l][...]          # conv bias + BN shift (BN scale folded into T)
        half = y.shape[1] // 2            # multiple of 128 -> aligned lane slices

        if l < num_layers - 1:
            y = jnp.maximum(y, 0.0)       # ReLU (BN already applied via fold)
            a_ref = act_refs[l]
            # zero once: provides the 1-pixel spatial zero-padding border
            a_ref[...] = jnp.zeros(a_ref.shape, a_ref.dtype)
            # fused PixelShuffle: column half i of y = rows 2h'+i of the upscaled image
            a_ref[0:h, 1, C:C + half] = y[:, :half].astype(a_ref.dtype)
            a_ref[1:h + 1, 0, C:C + half] = y[:, half:].astype(a_ref.dtype)
            h = 2 * h
            # row-major flatten of (h/2+1, 2, L) == padded (h+2, L) next-layer image
            x2d = a_ref[...].reshape(h + 2 * PAD, a_ref.shape[2])
        else:
            # last layer: no BN / ReLU; emit the pixel-shuffled image directly
            out_ref[0, :, 0, :] = y[:, :half].astype(out_ref.dtype)
            out_ref[0, :, 1, :] = y[:, half:].astype(out_ref.dtype)


# ----------------------- host-side weight preprocessing ----------------------
def _build_layer_matrices(w_oihw, scale, shift, W):
    """Build the block-Toeplitz GEMM weights for one layer.

    Returns
      T         : (kz, (W+2)*cin, W*cout)  -- BN scale folded in, output columns
                  permuted to (i, w, j, c) (pixel-shuffle-ready ordering).
      shift_row : (1, W*cout)              -- per-column additive term.
    """
    w = np.asarray(w_oihw, np.float32) * np.asarray(scale, np.float32)[:, None, None, None]
    shift = np.asarray(shift, np.float32)
    cout, cin, kz, _ = w.shape
    c = cout // 4
    # conv output channel o = cc*4 + i*2 + j  ->  p = i*2c + j*c + cc
    perm = np.array([cc * 4 + i * 2 + j
                     for i in range(2) for j in range(2) for cc in range(c)])
    w_p = w[perm]                                  # (cout, cin, kz, kz), p-ordered
    shift_p = shift[perm]
    Kmat = np.transpose(w_p, (1, 0, 2, 3))         # (cin, cout_p, kz, kz)
    Wp = W + 2 * PAD
    T = np.zeros((kz, Wp * cin, W * cout), np.float32)
    halfc = W * 2 * c                              # columns per i-half
    for dh in range(kz):
        for dw in range(kz):
            blk = Kmat[:, :, dh, dw]               # (cin, cout_p)
            b0, b1 = blk[:, :2 * c], blk[:, 2 * c:]
            for wo in range(W):
                u = wo + dw                        # padded input column
                T[dh, u * cin:(u + 1) * cin, wo * 2 * c:(wo + 1) * 2 * c] = b0
                T[dh, u * cin:(u + 1) * cin,
                  halfc + wo * 2 * c:halfc + (wo + 1) * 2 * c] = b1
    shift_row = np.concatenate([np.tile(shift_p[:2 * c], W),
                                np.tile(shift_p[2 * c:], W)])
    return (jnp.asarray(T, COMPUTE_DTYPE),
            jnp.asarray(shift_row, jnp.float32).reshape(1, W * cout))


def init_params(key):
    """Deterministic synthetic parameters for L DecodeBlocks (PyTorch layout)."""
    params = []
    cin = C
    for layer in range(L):
        last = layer == L - 1
        co = OUT_CHANNEL if last else C            # channels after pixel shuffle
        cout = 4 * co                              # conv output channels
        key, kw, kb, kg, kbt, km, kv = jax.random.split(key, 7)
        w_oihw = jax.random.normal(kw, (cout, cin, KZ, KZ), jnp.float32) * 0.1
        b = jax.random.normal(kb, (cout,), jnp.float32) * 0.1
        if not last:
            gamma = 1.0 + 0.1 * jax.random.normal(kg, (co,), jnp.float32)
            beta = 0.1 * jax.random.normal(kbt, (co,), jnp.float32)
            rmean = 0.1 * jax.random.normal(km, (co,), jnp.float32)
            rvar = 1.0 + 0.1 * jax.random.uniform(kv, (co,), jnp.float32)
            bn = (gamma, beta, rmean, rvar)
        else:
            bn = None
        params.append(dict(w_oihw=w_oihw, b=b, bn=bn, last=last))
        cin = co
    return params


def prepare_kernel_params(params, W0):
    """Fold eval-mode BN + conv bias and build per-layer GEMM matrices."""
    kparams = []
    W = W0
    for p in params:
        cout = p["w_oihw"].shape[0]
        if p["bn"] is not None:
            gamma, beta, rmean, rvar = (np.asarray(a, np.float32) for a in p["bn"])
            s_c = gamma / np.sqrt(rvar + BN_EPS)   # eval-mode BN scale (post-shuffle ch)
            sh_c = beta - rmean * s_c
            scale = np.repeat(s_c, 4)              # post-shuffle ch c -> conv chs 4c..4c+3
            shift = np.repeat(sh_c, 4) + scale * np.asarray(p["b"], np.float32)
        else:
            scale = np.ones((cout,), np.float32)
            shift = np.asarray(p["b"], np.float32)
        T, shift_row = _build_layer_matrices(p["w_oihw"], scale, shift, W)
        kparams.append(dict(T=T, shift_row=shift_row))
        W *= 2
    return kparams


# ------------------------------ forward wrapper ------------------------------
def decoder_forward(x_nchw, kparams):
    N, cin, H0, W0 = x_nchw.shape
    nl = len(kparams)

    # NCHW -> row-packed (N, H, W*C); zero-pad one pixel (PAD rows / PAD*C lanes).
    x = jnp.transpose(x_nchw, (0, 2, 3, 1)).reshape(N, H0, W0 * cin)
    x = jnp.pad(x, ((0, 0), (PAD, PAD), (PAD * cin, PAD * cin))).astype(COMPUTE_DTYPE)

    t_list = [kp["T"] for kp in kparams]
    s_list = [kp["shift_row"] for kp in kparams]

    Hf = H0 * 2 ** nl
    Wf = W0 * 2 ** nl
    n_last = t_list[-1].shape[-1]                  # W_L * 4 * out_channel
    out_block = (1, Hf // 2, 2, n_last // 2)       # lane dim = Wf*out_channel (mult of 128)

    in_specs = [pl.BlockSpec((1,) + x.shape[1:], lambda n: (n, 0, 0))]
    in_specs += [pl.BlockSpec(t.shape, lambda n: (0, 0, 0)) for t in t_list]
    in_specs += [pl.BlockSpec(s.shape, lambda n: (0, 0)) for s in s_list]

    scratch = []
    h, w = H0, W0
    for _ in range(nl - 1):
        scratch.append(
            pltpu.VMEM((h + PAD, 2, (2 * w + 2 * PAD) * cin), COMPUTE_DTYPE))
        h, w = 2 * h, 2 * w

    out = pl.pallas_call(
        functools.partial(_decoder_kernel, num_layers=nl),
        out_shape=jax.ShapeDtypeStruct((N,) + out_block[1:], jnp.float32),
        grid=(N,),                                 # batch axis -> both TCs on v7x
        in_specs=in_specs,
        out_specs=pl.BlockSpec(out_block, lambda n: (n, 0, 0, 0)),
        scratch_shapes=scratch,
        compiler_params=pltpu.CompilerParams(
            dimension_semantics=("parallel",)),
    )(x, *t_list, *s_list)

    cf = n_last // 2 // Wf                         # = out_channel
    out = out.reshape(N, Hf, Wf, cf)
    return jnp.transpose(out, (0, 3, 1, 2))        # NHWC -> NCHW


# --------------------- pure-JAX reference (for checking) ---------------------
def decoder_reference(x_nchw, params):
    x = x_nchw
    for p in params:
        w, b = p["w_oihw"], p["b"]
        y = jax.lax.conv_general_dilated(
            x, w, (1, 1), [(PAD, PAD), (PAD, PAD)],
            dimension_numbers=("NCHW", "OIHW", "NCHW")) + b[None, :, None, None]
        N, O, H, W = y.shape
        c = O // 4
        y = y.reshape(N, c, 2, 2, H, W).transpose(0, 1, 4, 2, 5, 3)
        y = y.reshape(N, c, 2 * H, 2 * W)          # PixelShuffle(2), NCHW
        if p["bn"] is not None:
            gamma, beta, rmean, rvar = p["bn"]
            y = (gamma[None, :, None, None] * (y - rmean[None, :, None, None])
                 / jnp.sqrt(rvar + BN_EPS)[None, :, None, None]
                 + beta[None, :, None, None])
            y = jnp.maximum(y, 0.0)
        x = y
    return x


# ---------------------------------- main -------------------------------------
if __name__ == "__main__":
    key = jax.random.PRNGKey(0)
    key, kx, kp = jax.random.split(key, 3)
    x = jax.random.normal(kx, (2, C, 16, 16), jnp.float32)   # NCHW, like PyTorch

    params = init_params(kp)
    kparams = prepare_kernel_params(params, x.shape[3])

    fwd = jax.jit(decoder_forward)
    out = jax.block_until_ready(fwd(x, kparams))

    expected_shape = (2, OUT_CHANNEL, 16 * 2 ** L, 16 * 2 ** L)
    assert out.shape == expected_shape, (out.shape, expected_shape)

    ref = jax.block_until_ready(decoder_reference(x, params))
    max_err = float(jnp.max(jnp.abs(out - ref)))
    assert jnp.allclose(out, ref, atol=2e-3, rtol=2e-3), max_err

    print("KERNEL_OK")
</pallas_src>

<mosaic_0001>
module attributes {stable_mosaic.version = 11 : i64} {
  func.func @_decoder_kernel(%arg0: i32, %arg1: memref<1x18x72xf32, #tpu.memory_space<vmem>>, %arg2: memref<3x72x256xf32, #tpu.memory_space<vmem>>, %arg3: memref<3x136x512xf32, #tpu.memory_space<vmem>>, %arg4: memref<3x264x768xf32, #tpu.memory_space<vmem>>, %arg5: memref<1x256xf32, #tpu.memory_space<vmem>>, %arg6: memref<1x512xf32, #tpu.memory_space<vmem>>, %arg7: memref<1x768xf32, #tpu.memory_space<vmem>>, %arg8: memref<1x64x2x384xf32, #tpu.memory_space<vmem>>, %arg9: memref<17x2x136xf32, #tpu.memory_space<vmem>>, %arg10: memref<33x2x264xf32, #tpu.memory_space<vmem>>) attributes {dimension_semantics = [#tpu.dimension_semantics<parallel>], iteration_bounds = array<i64: 2>, scalar_prefetch = 0 : i64, scratch_operands = 2 : i64, tpu.core_type = #tpu.core_type<tc>, window_params = [{transform_indices = @transform_0, window_bounds = array<i64: 1, 18, 72>}, {pipeline_mode = #tpu.pipeline_mode<synchronous>, transform_indices = @transform_1, window_bounds = array<i64: 3, 72, 256>}, {pipeline_mode = #tpu.pipeline_mode<synchronous>, transform_indices = @transform_2, window_bounds = array<i64: 3, 136, 512>}, {pipeline_mode = #tpu.pipeline_mode<synchronous>, transform_indices = @transform_3, window_bounds = array<i64: 3, 264, 768>}, {pipeline_mode = #tpu.pipeline_mode<synchronous>, transform_indices = @transform_4, window_bounds = array<i64: 1, 256>}, {pipeline_mode = #tpu.pipeline_mode<synchronous>, transform_indices = @transform_5, window_bounds = array<i64: 1, 512>}, {pipeline_mode = #tpu.pipeline_mode<synchronous>, transform_indices = @transform_6, window_bounds = array<i64: 1, 768>}, {transform_indices = @transform_7, window_bounds = array<i64: 1, 64, 2, 384>}]} {
    %c0 = arith.constant 0 : index
    %c0_0 = arith.constant 0 : index
    %c0_1 = arith.constant 0 : index
    %0 = vector.load %arg1[%c0, %c0_0, %c0_1] : memref<1x18x72xf32, #tpu.memory_space<vmem>>, vector<1x18x72xf32>
    %1 = vector.shape_cast %0 : vector<1x18x72xf32> to vector<18x72xf32>
    %2 = vector.extract_strided_slice %1 {offsets = [0, 0], sizes = [16, 72], strides = [1, 1]} : vector<18x72xf32> to vector<16x72xf32>
    %c0_2 = arith.constant 0 : index
    %c0_3 = arith.constant 0 : index
    %c0_4 = arith.constant 0 : index
    %3 = vector.load %arg2[%c0_2, %c0_3, %c0_4] : memref<3x72x256xf32, #tpu.memory_space<vmem>>, vector<1x72x256xf32>
    %4 = vector.shape_cast %3 : vector<1x72x256xf32> to vector<72x256xf32>
    %cst = arith.constant dense<0.000000e+00> : vector<16x256xf32>
    %5 = tpu.matmul %2, %4, %cst {dimension_numbers = #tpu.dot_dimension_numbers<[1], [0], [0], [1], [0, 0, 1, 1], [], []>} : vector<16x72xf32>, vector<72x256xf32>, vector<16x256xf32> -> vector<16x256xf32>
    %6 = vector.extract_strided_slice %1 {offsets = [1, 0], sizes = [16, 72], strides = [1, 1]} : vector<18x72xf32> to vector<16x72xf32>
    %c1 = arith.constant 1 : index
    %c0_5 = arith.constant 0 : index
    %c0_6 = arith.constant 0 : index
    %7 = vector.load %arg2[%c1, %c0_5, %c0_6] : memref<3x72x256xf32, #tpu.memory_space<vmem>>, vector<1x72x256xf32>
    %8 = vector.shape_cast %7 : vector<1x72x256xf32> to vector<72x256xf32>
    %cst_7 = arith.constant dense<0.000000e+00> : vector<16x256xf32>
    %9 = tpu.matmul %6, %8, %cst_7 {dimension_numbers = #tpu.dot_dimension_numbers<[1], [0], [0], [1], [0, 0, 1, 1], [], []>} : vector<16x72xf32>, vector<72x256xf32>, vector<16x256xf32> -> vector<16x256xf32>
    %10 = arith.addf %5, %9 : vector<16x256xf32>
    %11 = vector.extract_strided_slice %1 {offsets = [2, 0], sizes = [16, 72], strides = [1, 1]} : vector<18x72xf32> to vector<16x72xf32>
    %c2 = arith.constant 2 : index
    %c0_8 = arith.constant 0 : index
    %c0_9 = arith.constant 0 : index
    %12 = vector.load %arg2[%c2, %c0_8, %c0_9] : memref<3x72x256xf32, #tpu.memory_space<vmem>>, vector<1x72x256xf32>
    %13 = vector.shape_cast %12 : vector<1x72x256xf32> to vector<72x256xf32>
    %cst_10 = arith.constant dense<0.000000e+00> : vector<16x256xf32>
    %14 = tpu.matmul %11, %13, %cst_10 {dimension_numbers = #tpu.dot_dimension_numbers<[1], [0], [0], [1], [0, 0, 1, 1], [], []>} : vector<16x72xf32>, vector<72x256xf32>, vector<16x256xf32> -> vector<16x256xf32>
    %15 = arith.addf %10, %14 : vector<16x256xf32>
    %c0_11 = arith.constant 0 : index
    %c0_12 = arith.constant 0 : index
    %16 = vector.load %arg5[%c0_11, %c0_12] : memref<1x256xf32, #tpu.memory_space<vmem>>, vector<1x256xf32>
    %17 = vector.broadcast %16 : vector<1x256xf32> to vector<16x256xf32>
    %18 = arith.addf %15, %17 : vector<16x256xf32>
    %cst_13 = arith.constant 0.000000e+00 : f32
    %19 = vector.broadcast %cst_13 : f32 to vector<16x256xf32>
    %20 = arith.maximumf %18, %19 : vector<16x256xf32>
    %cst_14 = arith.constant 0.000000e+00 : f32
    %21 = vector.broadcast %cst_14 : f32 to vector<17x2x136xf32>
    %c0_15 = arith.constant 0 : index
    %c0_16 = arith.constant 0 : index
    %c0_17 = arith.constant 0 : index
    %22 = vector.load %arg9[%c0_15, %c0_16, %c0_17] : memref<17x2x136xf32, #tpu.memory_space<vmem>>, vector<17x2x136xf32>
    tpu.vector_store %arg9[%c0_15, %c0_16, %c0_17], %21 {strides = array<i32>} : memref<17x2x136xf32, #tpu.memory_space<vmem>>, vector<17x2x136xf32>,
    %23 = vector.extract_strided_slice %20 {offsets = [0, 0], sizes = [16, 128], strides = [1, 1]} : vector<16x256xf32> to vector<16x128xf32>
    %c0_18 = arith.constant 0 : index
    %c1_19 = arith.constant 1 : index
    %c4 = arith.constant 4 : index
    %24 = vector.load %arg9[%c0_18, %c1_19, %c4] : memref<17x2x136xf32, #tpu.memory_space<vmem>>, vector<16x1x128xf32>
    %25 = vector.shape_cast %24 : vector<16x1x128xf32> to vector<16x128xf32>
    %26 = vector.shape_cast %23 : vector<16x128xf32> to vector<16x1x128xf32>
    tpu.vector_store %arg9[%c0_18, %c1_19, %c4], %26 {strides = array<i32>} : memref<17x2x136xf32, #tpu.memory_space<vmem>>, vector<16x1x128xf32>,
    %27 = vector.extract_strided_slice %20 {offsets = [0, 128], sizes = [16, 128], strides = [1, 1]} : vector<16x256xf32> to vector<16x128xf32>
    %c1_20 = arith.constant 1 : index
    %c0_21 = arith.constant 0 : index
    %c4_22 = arith.constant 4 : index
    %28 = vector.load %arg9[%c1_20, %c0_21, %c4_22] : memref<17x2x136xf32, #tpu.memory_space<vmem>>, vector<16x1x128xf32>
    %29 = vector.shape_cast %28 : vector<16x1x128xf32> to vector<16x128xf32>
    %30 = vector.shape_cast %27 : vector<16x128xf32> to vector<16x1x128xf32>
    tpu.vector_store %arg9[%c1_20, %c0_21, %c4_22], %30 {strides = array<i32>} : memref<17x2x136xf32, #tpu.memory_space<vmem>>, vector<16x1x128xf32>,
    %c0_23 = arith.constant 0 : index
    %c0_24 = arith.constant 0 : index
    %c0_25 = arith.constant 0 : index
    %31 = vector.load %arg9[%c0_23, %c0_24, %c0_25] : memref<17x2x136xf32, #tpu.memory_space<vmem>>, vector<17x2x136xf32>
    %32 = vector.shape_cast %31 : vector<17x2x136xf32> to vector<34x136xf32>
    %33 = vector.extract_strided_slice %32 {offsets = [0, 0], sizes = [32, 136], strides = [1, 1]} : vector<34x136xf32> to vector<32x136xf32>
    %c0_26 = arith.constant 0 : index
    %c0_27 = arith.constant 0 : index
    %c0_28 = arith.constant 0 : index
    %34 = vector.load %arg3[%c0_26, %c0_27, %c0_28] : memref<3x136x512xf32, #tpu.memory_space<vmem>>, vector<1x136x512xf32>
    %35 = vector.shape_cast %34 : vector<1x136x512xf32> to vector<136x512xf32>
    %cst_29 = arith.constant dense<0.000000e+00> : vector<32x512xf32>
    %36 = tpu.matmul %33, %35, %cst_29 {dimension_numbers = #tpu.dot_dimension_numbers<[1], [0], [0], [1], [0, 0, 1, 1], [], []>} : vector<32x136xf32>, vector<136x512xf32>, vector<32x512xf32> -> vector<32x512xf32>
    %37 = vector.extract_strided_slice %32 {offsets = [1, 0], sizes = [32, 136], strides = [1, 1]} : vector<34x136xf32> to vector<32x136xf32>
    %c1_30 = arith.constant 1 : index
    %c0_31 = arith.constant 0 : index
    %c0_32 = arith.constant 0 : index
    %38 = vector.load %arg3[%c1_30, %c0_31, %c0_32] : memref<3x136x512xf32, #tpu.memory_space<vmem>>, vector<1x136x512xf32>
    %39 = vector.shape_cast %38 : vector<1x136x512xf32> to vector<136x512xf32>
    %cst_33 = arith.constant dense<0.000000e+00> : vector<32x512xf32>
    %40 = tpu.matmul %37, %39, %cst_33 {dimension_numbers = #tpu.dot_dimension_numbers<[1], [0], [0], [1], [0, 0, 1, 1], [], []>} : vector<32x136xf32>, vector<136x512xf32>, vector<32x512xf32> -> vector<32x512xf32>
    %41 = arith.addf %36, %40 : vector<32x512xf32>
    %42 = vector.extract_strided_slice %32 {offsets = [2, 0], sizes = [32, 136], strides = [1, 1]} : vector<34x136xf32> to vector<32x136xf32>
    %c2_34 = arith.constant 2 : index
    %c0_35 = arith.constant 0 : index
    %c0_36 = arith.constant 0 : index
    %43 = vector.load %arg3[%c2_34, %c0_35, %c0_36] : memref<3x136x512xf32, #tpu.memory_space<vmem>>, vector<1x136x512xf32>
    %44 = vector.shape_cast %43 : vector<1x136x512xf32> to vector<136x512xf32>
    %cst_37 = arith.constant dense<0.000000e+00> : vector<32x512xf32>
    %45 = tpu.matmul %42, %44, %cst_37 {dimension_numbers = #tpu.dot_dimension_numbers<[1], [0], [0], [1], [0, 0, 1, 1], [], []>} : vector<32x136xf32>, vector<136x512xf32>, vector<32x512xf32> -> vector<32x512xf32>
    %46 = arith.addf %41, %45 : vector<32x512xf32>
    %c0_38 = arith.constant 0 : index
    %c0_39 = arith.constant 0 : index
    %47 = vector.load %arg6[%c0_38, %c0_39] : memref<1x512xf32, #tpu.memory_space<vmem>>, vector<1x512xf32>
    %48 = vector.broadcast %47 : vector<1x512xf32> to vector<32x512xf32>
    %49 = arith.addf %46, %48 : vector<32x512xf32>
    %cst_40 = arith.constant 0.000000e+00 : f32
    %50 = vector.broadcast %cst_40 : f32 to vector<32x512xf32>
    %51 = arith.maximumf %49, %50 : vector<32x512xf32>
    %cst_41 = arith.constant 0.000000e+00 : f32
    %52 = vector.broadcast %cst_41 : f32 to vector<33x2x264xf32>
    %c0_42 = arith.constant 0 : index
    %c0_43 = arith.constant 0 : index
    %c0_44 = arith.constant 0 : index
    %53 = vector.load %arg10[%c0_42, %c0_43, %c0_44] : memref<33x2x264xf32, #tpu.memory_space<vmem>>, vector<33x2x264xf32>
    tpu.vector_store %arg10[%c0_42, %c0_43, %c0_44], %52 {strides = array<i32>} : memref<33x2x264xf32, #tpu.memory_space<vmem>>, vector<33x2x264xf32>,
    %54 = vector.extract_strided_slice %51 {offsets = [0, 0], sizes = [32, 256], strides = [1, 1]} : vector<32x512xf32> to vector<32x256xf32>
    %c0_45 = arith.constant 0 : index
    %c1_46 = arith.constant 1 : index
    %c4_47 = arith.constant 4 : index
    %55 = vector.load %arg10[%c0_45, %c1_46, %c4_47] : memref<33x2x264xf32, #tpu.memory_space<vmem>>, vector<32x1x256xf32>
    %56 = vector.shape_cast %55 : vector<32x1x256xf32> to vector<32x256xf32>
    %57 = vector.shape_cast %54 : vector<32x256xf32> to vector<32x1x256xf32>
    tpu.vector_store %arg10[%c0_45, %c1_46, %c4_47], %57 {strides = array<i32>} : memref<33x2x264xf32, #tpu.memory_space<vmem>>, vector<32x1x256xf32>,
    %58 = vector.extract_strided_slice %51 {offsets = [0, 256], sizes = [32, 256], strides = [1, 1]} : vector<32x512xf32> to vector<32x256xf32>
    %c1_48 = arith.constant 1 : index
    %c0_49 = arith.constant 0 : index
    %c4_50 = arith.constant 4 : index
    %59 = vector.load %arg10[%c1_48, %c0_49, %c4_50] : memref<33x2x264xf32, #tpu.memory_space<vmem>>, vector<32x1x256xf32>
    %60 = vector.shape_cast %59 : vector<32x1x256xf32> to vector<32x256xf32>
    %61 = vector.shape_cast %58 : vector<32x256xf32> to vector<32x1x256xf32>
    tpu.vector_store %arg10[%c1_48, %c0_49, %c4_50], %61 {strides = array<i32>} : memref<33x2x264xf32, #tpu.memory_space<vmem>>, vector<32x1x256xf32>,
    %c0_51 = arith.constant 0 : index
    %c0_52 = arith.constant 0 : index
    %c0_53 = arith.constant 0 : index
    %62 = vector.load %arg10[%c0_51, %c0_52, %c0_53] : memref<33x2x264xf32, #tpu.memory_space<vmem>>, vector<33x2x264xf32>
    %63 = vector.shape_cast %62 : vector<33x2x264xf32> to vector<66x264xf32>
    %64 = vector.extract_strided_slice %63 {offsets = [0, 0], sizes = [64, 264], strides = [1, 1]} : vector<66x264xf32> to vector<64x264xf32>
    %c0_54 = arith.constant 0 : index
    %c0_55 = arith.constant 0 : index
    %c0_56 = arith.constant 0 : index
    %65 = vector.load %arg4[%c0_54, %c0_55, %c0_56] : memref<3x264x768xf32, #tpu.memory_space<vmem>>, vector<1x264x768xf32>
    %66 = vector.shape_cast %65 : vector<1x264x768xf32> to vector<264x768xf32>
    %cst_57 = arith.constant dense<0.000000e+00> : vector<64x768xf32>
    %67 = tpu.matmul %64, %66, %cst_57 {dimension_numbers = #tpu.dot_dimension_numbers<[1], [0], [0], [1], [0, 0, 1, 1], [], []>} : vector<64x264xf32>, vector<264x768xf32>, vector<64x768xf32> -> vector<64x768xf32>
    %68 = vector.extract_strided_slice %63 {offsets = [1, 0], sizes = [64, 264], strides = [1, 1]} : vector<66x264xf32> to vector<64x264xf32>
    %c1_58 = arith.constant 1 : index
    %c0_59 = arith.constant 0 : index
    %c0_60 = arith.constant 0 : index
    %69 = vector.load %arg4[%c1_58, %c0_59, %c0_60] : memref<3x264x768xf32, #tpu.memory_space<vmem>>, vector<1x264x768xf32>
    %70 = vector.shape_cast %69 : vector<1x264x768xf32> to vector<264x768xf32>
    %cst_61 = arith.constant dense<0.000000e+00> : vector<64x768xf32>
    %71 = tpu.matmul %68, %70, %cst_61 {dimension_numbers = #tpu.dot_dimension_numbers<[1], [0], [0], [1], [0, 0, 1, 1], [], []>} : vector<64x264xf32>, vector<264x768xf32>, vector<64x768xf32> -> vector<64x768xf32>
    %72 = arith.addf %67, %71 : vector<64x768xf32>
    %73 = vector.extract_strided_slice %63 {offsets = [2, 0], sizes = [64, 264], strides = [1, 1]} : vector<66x264xf32> to vector<64x264xf32>
    %c2_62 = arith.constant 2 : index
    %c0_63 = arith.constant 0 : index
    %c0_64 = arith.constant 0 : index
    %74 = vector.load %arg4[%c2_62, %c0_63, %c0_64] : memref<3x264x768xf32, #tpu.memory_space<vmem>>, vector<1x264x768xf32>
    %75 = vector.shape_cast %74 : vector<1x264x768xf32> to vector<264x768xf32>
    %cst_65 = arith.constant dense<0.000000e+00> : vector<64x768xf32>
    %76 = tpu.matmul %73, %75, %cst_65 {dimension_numbers = #tpu.dot_dimension_numbers<[1], [0], [0], [1], [0, 0, 1, 1], [], []>} : vector<64x264xf32>, vector<264x768xf32>, vector<64x768xf32> -> vector<64x768xf32>
    %77 = arith.addf %72, %76 : vector<64x768xf32>
    %c0_66 = arith.constant 0 : index
    %c0_67 = arith.constant 0 : index
    %78 = vector.load %arg7[%c0_66, %c0_67] : memref<1x768xf32, #tpu.memory_space<vmem>>, vector<1x768xf32>
    %79 = vector.broadcast %78 : vector<1x768xf32> to vector<64x768xf32>
    %80 = arith.addf %77, %79 : vector<64x768xf32>
    %81 = vector.extract_strided_slice %80 {offsets = [0, 0], sizes = [64, 384], strides = [1, 1]} : vector<64x768xf32> to vector<64x384xf32>
    %c0_68 = arith.constant 0 : index
    %c0_69 = arith.constant 0 : index
    %c0_70 = arith.constant 0 : index
    %c0_71 = arith.constant 0 : index
    %82 = vector.load %arg8[%c0_68, %c0_69, %c0_70, %c0_71] : memref<1x64x2x384xf32, #tpu.memory_space<vmem>>, vector<1x64x1x384xf32>
    %83 = vector.shape_cast %82 : vector<1x64x1x384xf32> to vector<64x384xf32>
    %84 = vector.shape_cast %81 : vector<64x384xf32> to vector<1x64x1x384xf32>
    tpu.vector_store %arg8[%c0_68, %c0_69, %c0_70, %c0_71], %84 {strides = array<i32>} : memref<1x64x2x384xf32, #tpu.memory_space<vmem>>, vector<1x64x1x384xf32>,
    %85 = vector.extract_strided_slice %80 {offsets = [0, 384], sizes = [64, 384], strides = [1, 1]} : vector<64x768xf32> to vector<64x384xf32>
    %c0_72 = arith.constant 0 : index
    %c0_73 = arith.constant 0 : index
    %c1_74 = arith.constant 1 : index
    %c0_75 = arith.constant 0 : index
    %86 = vector.load %arg8[%c0_72, %c0_73, %c1_74, %c0_75] : memref<1x64x2x384xf32, #tpu.memory_space<vmem>>, vector<1x64x1x384xf32>
    %87 = vector.shape_cast %86 : vector<1x64x1x384xf32> to vector<64x384xf32>
    %88 = vector.shape_cast %85 : vector<64x384xf32> to vector<1x64x1x384xf32>
    tpu.vector_store %arg8[%c0_72, %c0_73, %c1_74, %c0_75], %88 {strides = array<i32>} : memref<1x64x2x384xf32, #tpu.memory_space<vmem>>, vector<1x64x1x384xf32>,
    return
  }
  func.func @transform_0(%arg0: i32) -> (i32, i32, i32) {
    %c0_i32 = arith.constant 0 : i32
    %c0_i32_0 = arith.constant 0 : i32
    %c0_i32_1 = arith.constant 0 : i32
    return %arg0, %c0_i32, %c0_i32_0 : i32, i32, i32
  }
  func.func @transform_1(%arg0: i32) -> (i32, i32, i32) {
    %c0_i32 = arith.constant 0 : i32
    %c0_i32_0 = arith.constant 0 : i32
    %c0_i32_1 = arith.constant 0 : i32
    %c0_i32_2 = arith.constant 0 : i32
    return %c0_i32, %c0_i32_0, %c0_i32_1 : i32, i32, i32
  }
  func.func @transform_2(%arg0: i32) -> (i32, i32, i32) {
    %c0_i32 = arith.constant 0 : i32
    %c0_i32_0 = arith.constant 0 : i32
    %c0_i32_1 = arith.constant 0 : i32
    %c0_i32_2 = arith.constant 0 : i32
    return %c0_i32, %c0_i32_0, %c0_i32_1 : i32, i32, i32
  }
  func.func @transform_3(%arg0: i32) -> (i32, i32, i32) {
    %c0_i32 = arith.constant 0 : i32
    %c0_i32_0 = arith.constant 0 : i32
    %c0_i32_1 = arith.constant 0 : i32
    %c0_i32_2 = arith.constant 0 : i32
    return %c0_i32, %c0_i32_0, %c0_i32_1 : i32, i32, i32
  }
  func.func @transform_4(%arg0: i32) -> (i32, i32) {
    %c0_i32 = arith.constant 0 : i32
    %c0_i32_0 = arith.constant 0 : i32
    %c0_i32_1 = arith.constant 0 : i32
    return %c0_i32, %c0_i32_0 : i32, i32
  }
  func.func @transform_5(%arg0: i32) -> (i32, i32) {
    %c0_i32 = arith.constant 0 : i32
    %c0_i32_0 = arith.constant 0 : i32
    %c0_i32_1 = arith.constant 0 : i32
    return %c0_i32, %c0_i32_0 : i32, i32
  }
  func.func @transform_6(%arg0: i32) -> (i32, i32) {
    %c0_i32 = arith.constant 0 : i32
    %c0_i32_0 = arith.constant 0 : i32
    %c0_i32_1 = arith.constant 0 : i32
    return %c0_i32, %c0_i32_0 : i32, i32
  }
  func.func @transform_7(%arg0: i32) -> (i32, i32, i32, i32) {
    %c0_i32 = arith.constant 0 : i32
    %c0_i32_0 = arith.constant 0 : i32
    %c0_i32_1 = arith.constant 0 : i32
    %c0_i32_2 = arith.constant 0 : i32
    return %arg0, %c0_i32, %c0_i32_0, %c0_i32_1 : i32, i32, i32, i32
  }
}

</mosaic_0001>

<llo_original>
// kernel: decoder_forward.1
$region0: #{decoder_forward.1}
  #allocation0 [shape = 'u32[]', space=smem, size = 0x4, offset = 0x4, fixed_abs, tag = 'smem constant byte address 0x4 - core index']
  #allocation1 [shape = 'u32[144,128]{1,0:T(1,128)}', space=vmem, size = 0x12000, scoped, tag = 'internal scratch']
  #allocation2 [shape = 'f32[17,2,136]{2,1,0:T(2,128)}', space=vmem, size = 0x8800, scoped, tag = 'scratch operand']
  #allocation3 [shape = 'f32[33,2,264]{2,1,0:T(2,128)}', space=vmem, size = 0x18c00, scoped, tag = 'scratch operand']
  %s0 = inlined_call_operand.vmem [shape: f32[2,18,72], index: 0, kind: input, shape index: {}]
  %s1 = inlined_call_operand.hbm [shape: f32[3,72,256], index: 1, kind: input, shape index: {}]
  %s2 = inlined_call_operand.hbm [shape: f32[3,136,512], index: 2, kind: input, shape index: {}]
  %s3 = inlined_call_operand.hbm [shape: f32[3,264,768], index: 3, kind: input, shape index: {}]
  %s4 = inlined_call_operand.hbm [shape: f32[1,256], index: 4, kind: input, shape index: {}]
  %s5 = inlined_call_operand.hbm [shape: f32[1,512], index: 5, kind: input, shape index: {}]
  %s6 = inlined_call_operand.hbm [shape: f32[1,768], index: 6, kind: input, shape index: {}]
  %s7 = inlined_call_operand.vmem [shape: f32[2,64,2,384], index: 7, kind: output, shape index: {}]
  %s8 = sld [smem:[#allocation0]]
  $region85: #{decoder_forward.1} parent=0
    _
  %s10 = ssub.s32 1, %s8
  %s11 = scalar_select 0, %s10, %s8
  $region1: #{decoder_forward.1} parent=0
    #allocation4 [shape = 'u8[221184]{0}', space=vmem, size = 0x36000, scoped, tag = 'input window, operand 1, single buffered']
    #allocation5 [shape = 's32[2]{0}', space=sflag, size = 0x8, scoped, tag = 'scoped memory for decoder_forward.1']
    #allocation6 [shape = 'u8[835584]{0}', space=vmem, size = 0xcc000, scoped, tag = 'input window, operand 2, single buffered']
    #allocation7 [shape = 's32[1]{0}', space=sflag, size = 0x4, scoped, tag = 'scoped memory for decoder_forward.1']
    #allocation8 [shape = 'u8[2433024]{0}', space=vmem, size = 0x252000, scoped, tag = 'input window, operand 3, single buffered']
    #allocation9 [shape = 'u8[1024]{0}', space=vmem, size = 0x400, scoped, tag = 'input window, operand 4, single buffered']
    #allocation10 [shape = 's32[1]{0}', space=sflag, size = 0x4, scoped, tag = 'scoped memory for decoder_forward.1']
    #allocation11 [shape = 'u8[2048]{0}', space=vmem, size = 0x800, scoped, tag = 'input window, operand 5, single buffered']
    #allocation12 [shape = 'u8[3072]{0}', space=vmem, size = 0xc00, scoped, tag = 'input window, operand 6, single buffered']
    #allocation13 [shape = 's32[1]{0}', space=sflag, size = 0x4, scoped, tag = 'scoped memory for decoder_forward.1']
    %12 = vsyncpa [#allocation5], 0
    %13 = vsyncpa [#allocation7], 0
    %14 = vsyncpa [#allocation10], 0
    %15 = vsyncpa [#allocation13], 0
    loop: start=0, step=1, limit=4
    $region2: #{decoder_forward.1} parent=1 // loop_pre_header
      _
    $region3: #{decoder_forward.1} parent=1 // loop_header
      %s17 = sphi 0, %s21
      %p18 = scmp.ge.s32.totalorder %s17, 4
      %s27 = sphi 0, %s29
      %s30 = sphi 0, %s27
      %s31 = sphi 0, %s30
      %s47 = sphi 0, %s31
      %s51 = sphi 0, %s51
      %s53 = sphi 0, %s51
      %s54 = sphi 0, %s53
      %s68 = sphi 0, %s54
      %s72 = sphi 0, %s72
      %s74 = sphi 0, %s72
      %s75 = sphi 0, %s74
      %s89 = sphi 0, %s75
      %s93 = sphi 0, %s93
      %s95 = sphi 0, %s93
      %s96 = sphi 0, %s95
      %s110 = sphi 0, %s96
      %s114 = sphi 0, %s114
      %s116 = sphi 0, %s114
      %s117 = sphi 0, %s116
      %s131 = sphi 0, %s117
      %s135 = sphi 0, %s135
      %s137 = sphi 0, %s135
      %s138 = sphi 0, %s137
      %s152 = sphi 0, %s138
      %s156 = sphi 0, %s156
      %s158 = sphi 0, %s156
      %s159 = sphi 0, %s158
      %s173 = sphi 0, %s159
      %s179 = sphi 0, %s181
      %s182 = sphi 0, %s179
      %s183 = sphi 0, %s182
      %s199 = sphi 0, %s183
    $region4: #{decoder_forward.1} parent=1 // loop_header_branch
      %20 = sbr.rel (%p18) target = $region8
    $region5: #{decoder_forward.1} parent=1 // loop_body
      %s22 = ssub.s32 %s17, 1
      %s23 = ssub.s32 %s17, 2
      %s24 = sadd.s32 %s17, 1
      %s25 = ssub.s32 %s17, %s24
      %p26 = scmp.eq.s32.totalorder %s25, 0
      %s28 = sadd.s32 %s27, 1
      %s29 = scalar_select %p26, %s27, %s28
      %p32 = pneg %p26
      %p33 = scmp.eq.s32.totalorder %s17, 1
      %p34 = por %p32, %p33
      %p35 = scmp.ne.s32.totalorder %s27, %s30
      %p36 = scmp.eq.s32.totalorder %s17, 0
      %p37 = por %p35, %p36
      %p38 = scmp.ne.s32.totalorder %s27, %s30
      %p39 = scmp.eq.s32.totalorder %s22, 1
      %p40 = por %p38, %p39
      %p41 = scmp.ne.s32.totalorder %s30, %s31
      %p42 = scmp.eq.s32.totalorder %s22, 0
      %p43 = por %p41, %p42
      %p44 = scmp.ne.s32.totalorder %s30, %s31
      %p45 = scmp.eq.s32.totalorder %s23, 1
      %p46 = por %p44, %p45
      %p48 = scmp.ne.s32.totalorder %s31, %s47
      %p49 = scmp.eq.s32.totalorder %s23, 0
      %p50 = por %p48, %p49
      %s52 = sadd.s32 %s51, 1
      %p55 = scmp.eq.s32.totalorder %s17, 1
      %p56 = scmp.ne.s32.totalorder %s51, %s53
      %p57 = scmp.eq.s32.totalorder %s17, 0
      %p58 = por %p56, %p57
      %p59 = scmp.ne.s32.totalorder %s51, %s53
      %p60 = scmp.eq.s32.totalorder %s22, 1
      %p61 = por %p59, %p60
      %p62 = scmp.ne.s32.totalorder %s53, %s54
      %p63 = scmp.eq.s32.totalorder %s22, 0
      %p64 = por %p62, %p63
      %p65 = scmp.ne.s32.totalorder %s53, %s54
      %p66 = scmp.eq.s32.totalorder %s23, 1
      %p67 = por %p65, %p66
      %p69 = scmp.ne.s32.totalorder %s54, %s68
      %p70 = scmp.eq.s32.totalorder %s23, 0
      %p71 = por %p69, %p70
      %s73 = sadd.s32 %s72, 1
      %p76 = scmp.eq.s32.totalorder %s17, 1
      %p77 = scmp.ne.s32.totalorder %s72, %s74
      %p78 = scmp.eq.s32.totalorder %s17, 0
      %p79 = por %p77, %p78
      %p80 = scmp.ne.s32.totalorder %s72, %s74
      %p81 = scmp.eq.s32.totalorder %s22, 1
      %p82 = por %p80, %p81
      %p83 = scmp.ne.s32.totalorder %s74, %s75
      %p84 = scmp.eq.s32.totalorder %s22, 0
      %p85 = por %p83, %p84
      %p86 = scmp.ne.s32.totalorder %s74, %s75
      %p87 = scmp.eq.s32.totalorder %s23, 1
      %p88 = por %p86, %p87
      %p90 = scmp.ne.s32.totalorder %s75, %s89
      %p91 = scmp.eq.s32.totalorder %s23, 0
      %p92 = por %p90, %p91
      %s94 = sadd.s32 %s93, 1
      %p97 = scmp.eq.s32.totalorder %s17, 1
      %p98 = scmp.ne.s32.totalorder %s93, %s95
      %p99 = scmp.eq.s32.totalorder %s17, 0
      %p100 = por %p98, %p99
      %p101 = scmp.ne.s32.totalorder %s93, %s95
      %p102 = scmp.eq.s32.totalorder %s22, 1
      %p103 = por %p101, %p102
      %p104 = scmp.ne.s32.totalorder %s95, %s96
      %p105 = scmp.eq.s32.totalorder %s22, 0
      %p106 = por %p104, %p105
      %p107 = scmp.ne.s32.totalorder %s95, %s96
      %p108 = scmp.eq.s32.totalorder %s23, 1
      %p109 = por %p107, %p108
      %p111 = scmp.ne.s32.totalorder %s96, %s110
      %p112 = scmp.eq.s32.totalorder %s23, 0
      %p113 = por %p111, %p112
      %s115 = sadd.s32 %s114, 1
      %p118 = scmp.eq.s32.totalorder %s17, 1
      %p119 = scmp.ne.s32.totalorder %s114, %s116
      %p120 = scmp.eq.s32.totalorder %s17, 0
      %p121 = por %p119, %p120
      %p122 = scmp.ne.s32.totalorder %s114, %s116
      %p123 = scmp.eq.s32.totalorder %s22, 1
      %p124 = por %p122, %p123
      %p125 = scmp.ne.s32.totalorder %s116, %s117
      %p126 = scmp.eq.s32.totalorder %s22, 0
      %p127 = por %p125, %p126
      %p128 = scmp.ne.s32.totalorder %s116, %s117
      %p129 = scmp.eq.s32.totalorder %s23, 1
      %p130 = por %p128, %p129
      %p132 = scmp.ne.s32.totalorder %s117, %s131
      %p133 = scmp.eq.s32.totalorder %s23, 0
      %p134 = por %p132, %p133
      %s136 = sadd.s32 %s135, 1
      %p139 = scmp.eq.s32.totalorder %s17, 1
      %p140 = scmp.ne.s32.totalorder %s135, %s137
      %p141 = scmp.eq.s32.totalorder %s17, 0
      %p142 = por %p140, %p141
      %p143 = scmp.ne.s32.totalorder %s135, %s137
      %p144 = scmp.eq.s32.totalorder %s22, 1
      %p145 = por %p143, %p144
      %p146 = scmp.ne.s32.totalorder %s137, %s138
      %p147 = scmp.eq.s32.totalorder %s22, 0
      %p148 = por %p146, %p147
      %p149 = scmp.ne.s32.totalorder %s137, %s138
      %p150 = scmp.eq.s32.totalorder %s23, 1
      %p151 = por %p149, %p150
      %p153 = scmp.ne.s32.totalorder %s138, %s152
      %p154 = scmp.eq.s32.totalorder %s23, 0
      %p155 = por %p153, %p154
      %s157 = sadd.s32 %s156, 1
      %p160 = scmp.eq.s32.totalorder %s17, 1
      %p161 = scmp.ne.s32.totalorder %s156, %s158
      %p162 = scmp.eq.s32.totalorder %s17, 0
      %p163 = por %p161, %p162
      %p164 = scmp.ne.s32.totalorder %s156, %s158
      %p165 = scmp.eq.s32.totalorder %s22, 1
      %p166 = por %p164, %p165
      %p167 = scmp.ne.s32.totalorder %s158, %s159
      %p168 = scmp.eq.s32.totalorder %s22, 0
      %p169 = por %p167, %p168
      %p170 = scmp.ne.s32.totalorder %s158, %s159
      %p171 = scmp.eq.s32.totalorder %s23, 1
      %p172 = por %p170, %p171
      %p174 = scmp.ne.s32.totalorder %s159, %s173
      %p175 = scmp.eq.s32.totalorder %s23, 0
      %p176 = por %p174, %p175
      %s177 = ssub.s32 %s17, %s24
      %p178 = scmp.eq.s32.totalorder %s177, 0
      %s180 = sadd.s32 %s179, 1
      %s181 = scalar_select %p178, %s179, %s180
      %p184 = pneg %p178
      %p185 = scmp.eq.s32.totalorder %s17, 1
      %p186 = por %p184, %p185
      %p187 = scmp.ne.s32.totalorder %s179, %s182
      %p188 = scmp.eq.s32.totalorder %s17, 0
      %p189 = por %p187, %p188
      %p190 = scmp.ne.s32.totalorder %s179, %s182
      %p191 = scmp.eq.s32.totalorder %s22, 1
      %p192 = por %p190, %p191
      %p193 = scmp.ne.s32.totalorder %s182, %s183
      %p194 = scmp.eq.s32.totalorder %s22, 0
      %p195 = por %p193, %p194
      %p196 = scmp.ne.s32.totalorder %s182, %s183
      %p197 = scmp.eq.s32.totalorder %s23, 1
      %p198 = por %p196, %p197
      %p200 = scmp.ne.s32.totalorder %s183, %s199
      %p201 = scmp.eq.s32.totalorder %s23, 0
      %p202 = por %p200, %p201
      %p203 = scmp.le.s32.totalorder 1, %s17
      %p204 = scmp.lt.s32.totalorder %s17, 3
      %p205 = pnand %p203, %p204
      %p206 = pneg %p205
      // Predicated region
      $region9: #{decoder_forward.1} parent=5 // pred_check
        _
      $region10: #{decoder_forward.1} parent=5 // pred_check_branch
        %208 = sbr.rel (%p205) target = $region12
      $region11: #{decoder_forward.1} parent=5 // pred_region
        %s209 = ssub.s32 %s17, 1
        // Predicated region
        $region13: #{decoder_forward.1} parent=11 // pred_check
          %p210 = pneg %p64
        $region14: #{decoder_forward.1} parent=11 // pred_check_branch
          %212 = sbr.rel (%p210) target = $region16
        $region15: #{decoder_forward.1} parent=11 // pred_region
          %s214 = ssub.s32 6912, 6912
          %215 = vsyncadd [#allocation5], %s214
          %s216 = sshll.u32 [#allocation4], 4
          %s217 = int_to_ptr.vmem [resolvable:$true] %s216
          %222 = dma.hbm_to_vmem [thread:$0]  %s1, 6912, %s217, [#allocation5], 256, 256, 16
        $region16: #{decoder_forward.1} parent=11 // pred_fallthru
          _
        // Predicated region
        $region17: #{decoder_forward.1} parent=11 // pred_check
          %p223 = pneg %p85
        $region18: #{decoder_forward.1} parent=11 // pred_check_branch
          %225 = sbr.rel (%p223) target = $region20
        $region19: #{decoder_forward.1} parent=11 // pred_region
          %s227 = ssub.s32 26112, 26112
          %228 = vsyncadd [#allocation7], %s227
          %s229 = sshll.u32 [#allocation6], 4
          %s230 = int_to_ptr.vmem [resolvable:$true] %s229
          %235 = dma.hbm_to_vmem [thread:$0]  %s2, 26112, %s230, [#allocation7], 512, 512, 32
        $region20: #{decoder_forward.1} parent=11 // pred_fallthru
          _
        // Predicated region
        $region21: #{decoder_forward.1} parent=11 // pred_check
          %p236 = pneg %p106
        $region22: #{decoder_forward.1} parent=11 // pred_check_branch
          %238 = sbr.rel (%p236) target = $region24
        $region23: #{decoder_forward.1} parent=11 // pred_region
          %s240 = ssub.s32 76032, 76032
          %241 = vsyncadd [#allocation7], %s240
          %s242 = sshll.u32 [#allocation8], 4
          %s243 = int_to_ptr.vmem [resolvable:$true] %s242
          %248 = dma.hbm_to_vmem [thread:$0]  %s3, 76032, %s243, [#allocation7], 768, 768, 48
        $region24: #{decoder_forward.1} parent=11 // pred_fallthru
          _
        // Predicated region
        $region25: #{decoder_forward.1} parent=11 // pred_check
          %p249 = pneg %p127
        $region26: #{decoder_forward.1} parent=11 // pred_check_branch
          %251 = sbr.rel (%p249) target = $region28
        $region27: #{decoder_forward.1} parent=11 // pred_region
          %s253 = ssub.s32 32, 32
          %254 = vsyncadd [#allocation10], %s253
          %s256 = sshll.u32 [#allocation9], 4
          %s257 = int_to_ptr.vmem [resolvable:$true] %s256
          %259 = dma.hbm_to_vmem [thread:$0]  %s4, 32, %s257, [#allocation10]
        $region28: #{decoder_forward.1} parent=11 // pred_fallthru
          _
        // Predicated region
        $region29: #{decoder_forward.1} parent=11 // pred_check
          %p260 = pneg %p148
        $region30: #{decoder_forward.1} parent=11 // pred_check_branch
          %262 = sbr.rel (%p260) target = $region32
        $region31: #{decoder_forward.1} parent=11 // pred_region
          %s264 = ssub.s32 64, 64
          %265 = vsyncadd [#allocation10], %s264
          %s267 = sshll.u32 [#allocation11], 4
          %s268 = int_to_ptr.vmem [resolvable:$true] %s267
          %270 = dma.hbm_to_vmem [thread:$0]  %s5, 64, %s268, [#allocation10]
        $region32: #{decoder_forward.1} parent=11 // pred_fallthru
          _
        // Predicated region
        $region33: #{decoder_forward.1} parent=11 // pred_check
          %p271 = pneg %p169
        $region34: #{decoder_forward.1} parent=11 // pred_check_branch
          %273 = sbr.rel (%p271) target = $region36
        $region35: #{decoder_forward.1} parent=11 // pred_region
          %s275 = ssub.s32 96, 96
          %276 = vsyncadd [#allocation13], %s275
          %s278 = sshll.u32 [#allocation12], 4
          %s279 = int_to_ptr.vmem [resolvable:$true] %s278
          %281 = dma.hbm_to_vmem [thread:$0]  %s6, 96, %s279, [#allocation13]
        $region36: #{decoder_forward.1} parent=11 // pred_fallthru
          _
      $region12: #{decoder_forward.1} parent=5 // pred_fallthru
        _
      %p282 = scmp.lt.s32.totalorder %s17, 2
      // Predicated region
      $region37: #{decoder_forward.1} parent=5 // pred_check
        %p283 = pneg %p282
      $region38: #{decoder_forward.1} parent=5 // pred_check_branch
        %285 = sbr.rel (%p283) target = $region40
      $region39: #{decoder_forward.1} parent=5 // pred_region
        // Predicated region
        $region41: #{decoder_forward.1} parent=39 // pred_check
          %p286 = pneg %p37
        $region42: #{decoder_forward.1} parent=39 // pred_check_branch
          %288 = sbr.rel (%p286) target = $region44
        $region43: #{decoder_forward.1} parent=39 // pred_region
          %p289 = scmp.lt.s32.totalorder %s17, 1
          %s290 = scalar_select %p289, %s17, 1
          %s291 = smul.addr %s290, 3
          %s292 = smul.addr %s291, 8
          %s293 = scalar_lea.vmem %s0, %s292
        $region44: #{decoder_forward.1} parent=39 // pred_fallthru
          _
      $region40: #{decoder_forward.1} parent=5 // pred_fallthru
        _
      %p294 = scmp.le.s32.totalorder 1, %s17
      %p295 = scmp.lt.s32.totalorder %s17, 3
      %p296 = pnand %p294, %p295
      %p297 = pneg %p296
      // Predicated region
      $region45: #{decoder_forward.1} parent=5 // pred_check
        _
      $region46: #{decoder_forward.1} parent=5 // pred_check_branch
        %299 = sbr.rel (%p296) target = $region48
      $region47: #{decoder_forward.1} parent=5 // pred_region
        %s300 = ssub.s32 %s17, 1
        // Predicated region
        $region49: #{decoder_forward.1} parent=47 // pred_check
          %p301 = pneg %p64
        $region50: #{decoder_forward.1} parent=47 // pred_check_branch
          %303 = sbr.rel (%p301) target = $region52
        $region51: #{decoder_forward.1} parent=47 // pred_region
          %304 = dma.done [#allocation5], 6912
        $region52: #{decoder_forward.1} parent=47 // pred_fallthru
          _
        // Predicated region
        $region53: #{decoder_forward.1} parent=47 // pred_check
          %p305 = pneg %p85
        $region54: #{decoder_forward.1} parent=47 // pred_check_branch
          %307 = sbr.rel (%p305) target = $region56
        $region55: #{decoder_forward.1} parent=47 // pred_region
          %308 = dma.done [#allocation7], 26112
        $region56: #{decoder_forward.1} parent=47 // pred_fallthru
          _
        // Predicated region
        $region57: #{decoder_forward.1} parent=47 // pred_check
          %p309 = pneg %p106
        $region58: #{decoder_forward.1} parent=47 // pred_check_branch
          %311 = sbr.rel (%p309) target = $region60
        $region59: #{decoder_forward.1} parent=47 // pred_region
          %312 = dma.done [#allocation7], 76032
        $region60: #{decoder_forward.1} parent=47 // pred_fallthru
          _
        // Predicated region
        $region61: #{decoder_forward.1} parent=47 // pred_check
          %p313 = pneg %p127
        $region62: #{decoder_forward.1} parent=47 // pred_check_branch
          %315 = sbr.rel (%p313) target = $region64
        $region63: #{decoder_forward.1} parent=47 // pred_region
          %316 = dma.done [#allocation10], 32
        $region64: #{decoder_forward.1} parent=47 // pred_fallthru
          _
        // Predicated region
        $region65: #{decoder_forward.1} parent=47 // pred_check
          %p317 = pneg %p148
        $region66: #{decoder_forward.1} parent=47 // pred_check_branch
          %319 = sbr.rel (%p317) target = $region68
        $region67: #{decoder_forward.1} parent=47 // pred_region
          %320 = dma.done [#allocation10], 64
        $region68: #{decoder_forward.1} parent=47 // pred_fallthru
          _
        // Predicated region
        $region69: #{decoder_forward.1} parent=47 // pred_check
          %p321 = pneg %p169
        $region70: #{decoder_forward.1} parent=47 // pred_check_branch
          %323 = sbr.rel (%p321) target = $region72
        $region71: #{decoder_forward.1} parent=47 // pred_region
          %324 = dma.done [#allocation13], 96
        $region72: #{decoder_forward.1} parent=47 // pred_fallthru
          _
        %p325 = scmp.lt.s32.totalorder %s22, 1
        %s326 = scalar_select %p325, %s22, 1
        %s327 = smul.addr %s326, 3
        %s328 = smul.addr %s327, 8
        %s329 = scalar_lea.vmem %s0, %s328
        %p330 = pneg %p43
        %p331 = pneg %p40
        %p332 = pneg %p64
        %p333 = pneg %p61
        %p334 = pneg %p85
        %p335 = pneg %p82
        %p336 = pneg %p106
        %p337 = pneg %p103
        %p338 = pneg %p127
        %p339 = pneg %p124
        %p340 = pneg %p148
        %p341 = pneg %p145
        %p342 = pneg %p169
        %p343 = pneg %p166
        %p344 = pneg %p195
        %p345 = pneg %p192
        %p346 = scmp.lt.s32.totalorder %s22, 1
        %s347 = scalar_select %p346, %s22, 1
        %s348 = smul.addr %s347, 192
        %s349 = smul.addr %s348, 2
        %s350 = scalar_lea.vmem %s7, %s349
        %p351 = scmp.lt.s32.totalorder %s22, 1
        %s352 = scalar_select %p351, %s22, 1
        %s353 = smul.addr %s352, 3
        %s354 = smul.addr %s353, 8
        %s355 = scalar_lea.vmem %s0, %s354
        %p356 = scmp.lt.s32.totalorder %s22, 1
        %s357 = scalar_select %p356, %s22, 1
        %s358 = smul.addr %s357, 192
        %s359 = smul.addr %s358, 2
        %s360 = scalar_lea.vmem %s7, %s359
        %v361 = vld [vmem:[%s355] sm:$0xff]
        %v362 = vld [vmem:[%s355 + $0x8] sm:$0xff]
        %v363 = vld [vmem:[%s355 + $0x10] sm:$0x3]
        %v364 = vld [vmem:[#allocation4] sm:$0xff]
        %v365 = vld [vmem:[#allocation4 + $0x8] sm:$0xff]
        %v366 = vld [vmem:[#allocation4 + $0x10] sm:$0xff]
        %v367 = vld [vmem:[#allocation4 + $0x18] sm:$0xff]
        %v368 = vld [vmem:[#allocation4 + $0x20] sm:$0xff]
        %v369 = vld [vmem:[#allocation4 + $0x28] sm:$0xff]
        %v370 = vld [vmem:[#allocation4 + $0x30] sm:$0xff]
        %v371 = vld [vmem:[#allocation4 + $0x38] sm:$0xff]
        %v372 = vld [vmem:[#allocation4 + $0x40] sm:$0xff]
        %v373 = vld [vmem:[#allocation4 + $0x48] sm:$0xff]
        %v374 = vld [vmem:[#allocation4 + $0x50] sm:$0xff]
        %v375 = vld [vmem:[#allocation4 + $0x58] sm:$0xff]
        %v376 = vld [vmem:[#allocation4 + $0x60] sm:$0xff]
        %v377 = vld [vmem:[#allocation4 + $0x68] sm:$0xff]
        %v378 = vld [vmem:[#allocation4 + $0x70] sm:$0xff]
        %v379 = vld [vmem:[#allocation4 + $0x78] sm:$0xff]
        %v380 = vld [vmem:[#allocation4 + $0x80] sm:$0xff]
        %v381 = vld [vmem:[#allocation4 + $0x88] sm:$0xff]
        %s382 = scalar_lea.vmem [#allocation4], 144
        %v383 = vld [vmem:[%s382] sm:$0xff]
        %v384 = vld [vmem:[%s382 + $0x8] sm:$0xff]
        %v385 = vld [vmem:[%s382 + $0x10] sm:$0xff]
        %v386 = vld [vmem:[%s382 + $0x18] sm:$0xff]
        %v387 = vld [vmem:[%s382 + $0x20] sm:$0xff]
        %v388 = vld [vmem:[%s382 + $0x28] sm:$0xff]
        %v389 = vld [vmem:[%s382 + $0x30] sm:$0xff]
        %v390 = vld [vmem:[%s382 + $0x38] sm:$0xff]
        %v391 = vld [vmem:[%s382 + $0x40] sm:$0xff]
        %v392 = vld [vmem:[%s382 + $0x48] sm:$0xff]
        %v393 = vld [vmem:[%s382 + $0x50] sm:$0xff]
        %v394 = vld [vmem:[%s382 + $0x58] sm:$0xff]
        %v395 = vld [vmem:[%s382 + $0x60] sm:$0xff]
        %v396 = vld [vmem:[%s382 + $0x68] sm:$0xff]
        %v397 = vld [vmem:[%s382 + $0x70] sm:$0xff]
        %v398 = vld [vmem:[%s382 + $0x78] sm:$0xff]
        %v399 = vld [vmem:[%s382 + $0x80] sm:$0xff]
        %v400 = vld [vmem:[%s382 + $0x88] sm:$0xff]
        %vm404 = vcmask 1046528
        %v405 = vrot.slane %v361, 1
        %v406 = vrot.slane %v362, 1
        %v407 = vsel %vm404, %v405, %v406
        %v408 = vrot.slane %v363, 1
        %v409 = vsel %vm404, %v406, %v408
        %vm410 = vcmask 588800
        %v411 = vsel %vm410, %v407, 0
        %v413 = vsel %vm410, %v409, 0
        %415 = vmatprep.subr.mxu0 0.0
        %416 = vmatpush1.msra.mxu0 0.0
        %417 = vmatprep.subr.mxu0 0.0
        %418 = vmatpush1.msra.mxu0 0.0
        %419 = vmatprep.subr.mxu0 0.0
        %420 = vmatpush1.msra.mxu0 0.0
        %421 = vmatprep.subr.mxu0 0.0
        %422 = vmatpush1.msra.mxu0 0.0
        %423 = vmatprep.subr.mxu0 0.0
        %424 = vmatpush1.msra.mxu0 0.0
        %425 = vmatprep.subr.mxu0 0.0
        %426 = vmatpush1.msra.mxu0 0.0
        %427 = vmatprep.subr.mxu0 0.0
        %428 = vmatpush1.msra.mxu0 0.0
        %429 = vmatprep.subr.mxu0 %v400
        %430 = vmatpush1.msra.mxu0 %v399
        %431 = vmatprep.subr.mxu0 %v398
        %432 = vmatpush1.msra.mxu0 %v397
        %433 = vmatprep.subr.mxu0 %v396
        %434 = vmatpush1.msra.mxu0 %v395
        %435 = vmatprep.subr.mxu0 %v394
        %436 = vmatpush1.msra.mxu0 %v393
        %437 = vmatprep.subr.mxu0 %v392
        %438 = vmatpush1.msra.mxu0 %v391
        %439 = vmatprep.subr.mxu0 %v390
        %440 = vmatpush1.msra.mxu0 %v389
        %441 = vmatprep.subr.mxu0 %v388
        %442 = vmatpush1.msra.mxu0 %v387
        %443 = vmatprep.subr.mxu0 %v386
        %444 = vmatpush1.msra.mxu0 %v385
        %445 = vmatprep.subr.mxu0 %v384
        %446 = vmatpush1.msra.mxu0 %v383
        %447 = vmatprep.subr.mxu0 0.0
        %448 = vmatpush2.msra.mxu0 0.0
        %449 = vmatprep.subr.mxu0 0.0
        %450 = vmatpush2.msra.mxu0 0.0
        %451 = vmatprep.subr.mxu0 0.0
        %452 = vmatpush2.msra.mxu0 0.0
        %453 = vmatprep.subr.mxu0 0.0
        %454 = vmatpush2.msra.mxu0 0.0
        %455 = vmatprep.subr.mxu0 0.0
        %456 = vmatpush2.msra.mxu0 0.0
        %457 = vmatprep.subr.mxu0 0.0
        %458 = vmatpush2.msra.mxu0 0.0
        %459 = vmatprep.subr.mxu0 0.0
        %460 = vmatpush2.msra.mxu0 0.0
        %461 = vmatprep.subr.mxu0 0.0
        %462 = vmatpush2.msra.mxu0 0.0
        %463 = vmatprep.subr.mxu0 0.0
        %464 = vmatpush2.msra.mxu0 0.0
        %465 = vmatprep.subr.mxu0 0.0
        %466 = vmatpush2.msra.mxu0 0.0
        %467 = vmatprep.subr.mxu0 0.0
        %468 = vmatpush2.msra.mxu0 0.0
        %469 = vmatprep.subr.mxu0 0.0
        %470 = vmatpush2.msra.mxu0 0.0
        %471 = vmatprep.subr.mxu0 0.0
        %472 = vmatpush2.msra.mxu0 0.0
        %473 = vmatprep.subr.mxu0 0.0
        %474 = vmatpush2.msra.mxu0 0.0
        %475 = vmatprep.subr.mxu0 0.0
        %476 = vmatpush2.msra.mxu0 0.0
        %477 = vmatprep.subr.mxu0 0.0
        %478 = vmatpush2.msra.mxu0 0.0
        %479 = vmatprep.mubr.f32.mxu0 0.0
        %480 = vmatmul.mubr.f32.gmra.mxu0 %v411
        %v481 = vpop.f32.mrf.mxu0
        %v482 = vadd.f32 0.0, %v481
        %v483 = vpop.f32.mrf.mxu0
        %v484 = vadd.f32 0.0, %v483
        %485 = vmatprep.mubr.f32.mxu0 0.0
        %486 = vmatmul.mubr.f32.gmra.mxu0 %v413
        %v487 = vpop.f32.mrf.mxu0
        %v488 = vadd.f32 0.0, %v487
        %v489 = vpop.f32.mrf.mxu0
        %v490 = vadd.f32 0.0, %v489
        %491 = vdwg.mxu0
        %v492 = vsel %vm410, %v361, 0
        %v494 = vsel %vm410, %v362, 0
        %496 = vmatprep.subr.mxu0 0.0
        %497 = vmatpush1.msra.mxu0 0.0
        %498 = vmatprep.subr.mxu0 0.0
        %499 = vmatpush1.msra.mxu0 0.0
        %500 = vmatprep.subr.mxu0 0.0
        %501 = vmatpush1.msra.mxu0 0.0
        %502 = vmatprep.subr.mxu0 0.0
        %503 = vmatpush1.msra.mxu0 0.0
        %504 = vmatprep.subr.mxu0 0.0
        %505 = vmatpush1.msra.mxu0 0.0
        %506 = vmatprep.subr.mxu0 0.0
        %507 = vmatpush1.msra.mxu0 0.0
        %508 = vmatprep.subr.mxu0 0.0
        %509 = vmatpush1.msra.mxu0 0.0
        %510 = vmatprep.subr.mxu0 %v381
        %511 = vmatpush1.msra.mxu0 %v380
        %512 = vmatprep.subr.mxu0 %v379
        %513 = vmatpush1.msra.mxu0 %v378
        %514 = vmatprep.subr.mxu0 %v377
        %515 = vmatpush1.msra.mxu0 %v376
        %516 = vmatprep.subr.mxu0 %v375
        %517 = vmatpush1.msra.mxu0 %v374
        %518 = vmatprep.subr.mxu0 %v373
        %519 = vmatpush1.msra.mxu0 %v372
        %520 = vmatprep.subr.mxu0 %v371
        %521 = vmatpush1.msra.mxu0 %v370
        %522 = vmatprep.subr.mxu0 %v369
        %523 = vmatpush1.msra.mxu0 %v368
        %524 = vmatprep.subr.mxu0 %v367
        %525 = vmatpush1.msra.mxu0 %v366
        %526 = vmatprep.subr.mxu0 %v365
        %527 = vmatpush1.msra.mxu0 %v364
        %528 = vmatprep.subr.mxu0 0.0
        %529 = vmatpush2.msra.mxu0 0.0
        %530 = vmatprep.subr.mxu0 0.0
        %531 = vmatpush2.msra.mxu0 0.0
        %532 = vmatprep.subr.mxu0 0.0
        %533 = vmatpush2.msra.mxu0 0.0
        %534 = vmatprep.subr.mxu0 0.0
        %535 = vmatpush2.msra.mxu0 0.0
        %536 = vmatprep.subr.mxu0 0.0
        %537 = vmatpush2.msra.mxu0 0.0
        %538 = vmatprep.subr.mxu0 0.0
        %539 = vmatpush2.msra.mxu0 0.0
        %540 = vmatprep.subr.mxu0 0.0
        %541 = vmatpush2.msra.mxu0 0.0
        %542 = vmatprep.subr.mxu0 0.0
        %543 = vmatpush2.msra.mxu0 0.0
        %544 = vmatprep.subr.mxu0 0.0
        %545 = vmatpush2.msra.mxu0 0.0
        %546 = vmatprep.subr.mxu0 0.0
        %547 = vmatpush2.msra.mxu0 0.0
        %548 = vmatprep.subr.mxu0 0.0
        %549 = vmatpush2.msra.mxu0 0.0
        %550 = vmatprep.subr.mxu0 0.0
        %551 = vmatpush2.msra.mxu0 0.0
        %552 = vmatprep.subr.mxu0 0.0
        %553 = vmatpush2.msra.mxu0 0.0
        %554 = vmatprep.subr.mxu0 0.0
        %555 = vmatpush2.msra.mxu0 0.0
        %556 = vmatprep.subr.mxu0 0.0
        %557 = vmatpush2.msra.mxu0 0.0
        %558 = vmatprep.subr.mxu0 0.0
        %559 = vmatpush2.msra.mxu0 0.0
        %560 = vmatprep.mubr.f32.mxu0 0.0
        %561 = vmatmul.mubr.f32.gmra.mxu0 %v492
        %v562 = vpop.f32.mrf.mxu0
        %v563 = vadd.f32 %v482, %v562
        %v564 = vpop.f32.mrf.mxu0
        %v565 = vadd.f32 %v484, %v564
        %566 = vmatprep.mubr.f32.mxu0 0.0
        %567 = vmatmul.mubr.f32.gmra.mxu0 %v494
        %v568 = vpop.f32.mrf.mxu0
        %v569 = vadd.f32 %v488, %v568
        %v570 = vpop.f32.mrf.mxu0
        %v571 = vadd.f32 %v490, %v570
        %572 = vdwg.mxu0
        %s573 = scalar_lea.vmem [#allocation4], 288
        %v574 = vld [vmem:[%s573] sm:$0xff]
        %v575 = vld [vmem:[%s573 + $0x8] sm:$0xff]
        %v576 = vld [vmem:[%s573 + $0x10] sm:$0xff]
        %v577 = vld [vmem:[%s573 + $0x18] sm:$0xff]
        %v578 = vld [vmem:[%s573 + $0x20] sm:$0xff]
        %v579 = vld [vmem:[%s573 + $0x28] sm:$0xff]
        %v580 = vld [vmem:[%s573 + $0x30] sm:$0xff]
        %v581 = vld [vmem:[%s573 + $0x38] sm:$0xff]
        %v582 = vld [vmem:[%s573 + $0x40] sm:$0xff]
        %v583 = vld [vmem:[%s573 + $0x48] sm:$0xff]
        %v584 = vld [vmem:[%s573 + $0x50] sm:$0xff]
        %v585 = vld [vmem:[%s573 + $0x58] sm:$0xff]
        %v586 = vld [vmem:[%s573 + $0x60] sm:$0xff]
        %v587 = vld [vmem:[%s573 + $0x68] sm:$0xff]
        %v588 = vld [vmem:[%s573 + $0x70] sm:$0xff]
        %v589 = vld [vmem:[%s573 + $0x78] sm:$0xff]
        %v590 = vld [vmem:[%s573 + $0x80] sm:$0xff]
        %v591 = vld [vmem:[%s573 + $0x88] sm:$0xff]
        %vm592 = vcmask 1045504
        %v593 = vrot.slane %v361, 2
        %v594 = vrot.slane %v362, 2
        %v595 = vsel %vm592, %v593, %v594
        %v596 = vrot.slane %v363, 2
        %v597 = vsel %vm592, %v594, %v596
        %v598 = vsel %vm410, %v595, 0
        %v600 = vsel %vm410, %v597, 0
        %602 = vmatprep.subr.mxu0 0.0
        %603 = vmatpush1.msra.mxu0 0.0
        %604 = vmatprep.subr.mxu0 0.0
        %605 = vmatpush1.msra.mxu0 0.0
        %606 = vmatprep.subr.mxu0 0.0
        %607 = vmatpush1.msra.mxu0 0.0
        %608 = vmatprep.subr.mxu0 0.0
        %609 = vmatpush1.msra.mxu0 0.0
        %610 = vmatprep.subr.mxu0 0.0
        %611 = vmatpush1.msra.mxu0 0.0
        %612 = vmatprep.subr.mxu0 0.0
        %613 = vmatpush1.msra.mxu0 0.0
        %614 = vmatprep.subr.mxu0 0.0
        %615 = vmatpush1.msra.mxu0 0.0
        %616 = vmatprep.subr.mxu0 %v591
        %617 = vmatpush1.msra.mxu0 %v590
        %618 = vmatprep.subr.mxu0 %v589
        %619 = vmatpush1.msra.mxu0 %v588
        %620 = vmatprep.subr.mxu0 %v587
        %621 = vmatpush1.msra.mxu0 %v586
        %622 = vmatprep.subr.mxu0 %v585
        %623 = vmatpush1.msra.mxu0 %v584
        %624 = vmatprep.subr.mxu0 %v583
        %625 = vmatpush1.msra.mxu0 %v582
        %626 = vmatprep.subr.mxu0 %v581
        %627 = vmatpush1.msra.mxu0 %v580
        %628 = vmatprep.subr.mxu0 %v579
        %629 = vmatpush1.msra.mxu0 %v578
        %630 = vmatprep.subr.mxu0 %v577
        %631 = vmatpush1.msra.mxu0 %v576
        %632 = vmatprep.subr.mxu0 %v575
        %633 = vmatpush1.msra.mxu0 %v574
        %634 = vmatprep.subr.mxu0 0.0
        %635 = vmatpush2.msra.mxu0 0.0
        %636 = vmatprep.subr.mxu0 0.0
        %637 = vmatpush2.msra.mxu0 0.0
        %638 = vmatprep.subr.mxu0 0.0
        %639 = vmatpush2.msra.mxu0 0.0
        %640 = vmatprep.subr.mxu0 0.0
        %641 = vmatpush2.msra.mxu0 0.0
        %642 = vmatprep.subr.mxu0 0.0
        %643 = vmatpush2.msra.mxu0 0.0
        %644 = vmatprep.subr.mxu0 0.0
        %645 = vmatpush2.msra.mxu0 0.0
        %646 = vmatprep.subr.mxu0 0.0
        %647 = vmatpush2.msra.mxu0 0.0
        %648 = vmatprep.subr.mxu0 0.0
        %649 = vmatpush2.msra.mxu0 0.0
        %650 = vmatprep.subr.mxu0 0.0
        %651 = vmatpush2.msra.mxu0 0.0
        %652 = vmatprep.subr.mxu0 0.0
        %653 = vmatpush2.msra.mxu0 0.0
        %654 = vmatprep.subr.mxu0 0.0
        %655 = vmatpush2.msra.mxu0 0.0
        %656 = vmatprep.subr.mxu0 0.0
        %657 = vmatpush2.msra.mxu0 0.0
        %658 = vmatprep.subr.mxu0 0.0
        %659 = vmatpush2.msra.mxu0 0.0
        %660 = vmatprep.subr.mxu0 0.0
        %661 = vmatpush2.msra.mxu0 0.0
        %662 = vmatprep.subr.mxu0 0.0
        %663 = vmatpush2.msra.mxu0 0.0
        %664 = vmatprep.subr.mxu0 0.0
        %665 = vmatpush2.msra.mxu0 0.0
        %666 = vmatprep.mubr.f32.mxu0 0.0
        %667 = vmatmul.mubr.f32.gmra.mxu0 %v598
        %v668 = vpop.f32.mrf.mxu0
        %v669 = vadd.f32 0.0, %v668
        %v670 = vpop.f32.mrf.mxu0
        %v671 = vadd.f32 0.0, %v670
        %672 = vmatprep.mubr.f32.mxu0 0.0
        %673 = vmatmul.mubr.f32.gmra.mxu0 %v600
        %v674 = vpop.f32.mrf.mxu0
        %v675 = vadd.f32 0.0, %v674
        %v676 = vpop.f32.mrf.mxu0
        %v677 = vadd.f32 0.0, %v676
        %678 = vdwg.mxu0
        %v679 = vadd.f32 %v563, %v669
        %v680 = vadd.f32 %v565, %v671
        %v681 = vadd.f32 %v569, %v675
        %v682 = vadd.f32 %v571, %v677
        %v683 = vld [vmem:[#allocation9] sm:$0x3]
        %v685 = vlaneseq
        %v686 = vshrl.u32 %v685, 7
        %v687 = vsub.s32 0, %v686
        %v688 = vrot.slane %v683, %v687
        %v689 = vlaneseq
        %v690 = vshrl.u32 %v689, 7
        %v691 = vsub.s32 1, %v690
        %v692 = vrot.slane %v683, %v691
        %v695 = vadd.f32 %v679, %v688
        %v696 = vadd.f32 %v680, %v692
        %v697 = vadd.f32 %v681, %v688
        %v698 = vadd.f32 %v682, %v692
        %v699 = vmax.f32 %v695, 0.0
        %v700 = vmax.f32 %v696, 0.0
        %v701 = vmax.f32 %v697, 0.0
        %v702 = vmax.f32 %v698, 0.0
        %vm703 = vcmask 1041408
        %vm704 = vcmask 60418
        %vm705 = vmor %vm704, %vm703
        %706 = vst.msk [vmem:[#allocation2] sm:$0xf] %vm705, 0.0
        %707 = vst.msk [vmem:[#allocation2 + $0x4] sm:$0xf] %vm705, 0.0
        %708 = vst.msk [vmem:[#allocation2 + $0x8] sm:$0xf] %vm705, 0.0
        %709 = vst.msk [vmem:[#allocation2 + $0xc] sm:$0xf] %vm705, 0.0
        %710 = vst.msk [vmem:[#allocation2 + $0x10] sm:$0xf] %vm705, 0.0
        %711 = vst.msk [vmem:[#allocation2 + $0x14] sm:$0xf] %vm705, 0.0
        %712 = vst.msk [vmem:[#allocation2 + $0x18] sm:$0xf] %vm705, 0.0
        %713 = vst.msk [vmem:[#allocation2 + $0x1c] sm:$0xf] %vm705, 0.0
        %714 = vst.msk [vmem:[#allocation2 + $0x20] sm:$0xf] %vm705, 0.0
        %715 = vst.msk [vmem:[#allocation2 + $0x24] sm:$0xf] %vm705, 0.0
        %716 = vst.msk [vmem:[#allocation2 + $0x28] sm:$0xf] %vm705, 0.0
        %717 = vst.msk [vmem:[#allocation2 + $0x2c] sm:$0xf] %vm705, 0.0
        %718 = vst.msk [vmem:[#allocation2 + $0x30] sm:$0xf] %vm705, 0.0
        %719 = vst.msk [vmem:[#allocation2 + $0x34] sm:$0xf] %vm705, 0.0
        %720 = vst.msk [vmem:[#allocation2 + $0x38] sm:$0xf] %vm705, 0.0
        %721 = vst.msk [vmem:[#allocation2 + $0x3c] sm:$0xf] %vm705, 0.0
        %722 = vst.msk [vmem:[#allocation2 + $0x40] sm:$0xf] %vm705, 0.0
        %v725 = vcombine.high %v699, %v699
        %v727 = vunpack.c.l.s4 1966171168
        %v728 = vunpack.c.0.s8 %v727
        %v729 = vlaneseq
        %v730 = vshrl.u32 %v729, 7
        %v731 = vsub.s32 %v728, %v730
        %v732 = vrot.slane %v699, %v731
        %v734 = vunpack.c.l.s4 1966171168
        %v735 = vunpack.c.0.s8 %v734
        %v736 = vlaneseq
        %v737 = vshrl.u32 %v736, 7
        %v738 = vsub.s32 %v735, %v737
        %v739 = vrot.slane %v725, %v738
        %v740 = vcombine.high %v732, %v732
        %v741 = vcombine.high %v739, %v739
        %v743 = vunpack.c.l.s4 1966171168
        %v744 = vunpack.c.0.s8 %v743
        %v745 = vlaneseq
        %v746 = vshrl.u32 %v745, 7
        %v747 = vsub.s32 %v744, %v746
        %v748 = vrot.slane %v732, %v747
        %v750 = vunpack.c.l.s4 1966171168
        %v751 = vunpack.c.0.s8 %v750
        %v752 = vlaneseq
        %v753 = vshrl.u32 %v752, 7
        %v754 = vsub.s32 %v751, %v753
        %v755 = vrot.slane %v739, %v754
        %v757 = vunpack.c.l.s4 1966171168
        %v758 = vunpack.c.0.s8 %v757
        %v759 = vlaneseq
        %v760 = vshrl.u32 %v759, 7
        %v761 = vsub.s32 %v758, %v760
        %v762 = vrot.slane %v740, %v761
        %v764 = vunpack.c.l.s4 1966171168
        %v765 = vunpack.c.0.s8 %v764
        %v766 = vlaneseq
        %v767 = vshrl.u32 %v766, 7
        %v768 = vsub.s32 %v765, %v767
        %v769 = vrot.slane %v741, %v768
        %v770 = vcombine.high %v748, %v748
        %v771 = vcombine.high %v755, %v755
        %v772 = vcombine.high %v762, %v762
        %v773 = vcombine.high %v769, %v769
        %v774 = vcombine.high %v701, %v701
        %v776 = vunpack.c.l.s4 1966171168
        %v777 = vunpack.c.0.s8 %v776
        %v778 = vlaneseq
        %v779 = vshrl.u32 %v778, 7
        %v780 = vsub.s32 %v777, %v779
        %v781 = vrot.slane %v701, %v780
        %v783 = vunpack.c.l.s4 1966171168
        %v784 = vunpack.c.0.s8 %v783
        %v785 = vlaneseq
        %v786 = vshrl.u32 %v785, 7
        %v787 = vsub.s32 %v784, %v786
        %v788 = vrot.slane %v774, %v787
        %v789 = vcombine.high %v781, %v781
        %v790 = vcombine.high %v788, %v788
        %v792 = vunpack.c.l.s4 1966171168
        %v793 = vunpack.c.0.s8 %v792
        %v794 = vlaneseq
        %v795 = vshrl.u32 %v794, 7
        %v796 = vsub.s32 %v793, %v795
        %v797 = vrot.slane %v781, %v796
        %v799 = vunpack.c.l.s4 1966171168
        %v800 = vunpack.c.0.s8 %v799
        %v801 = vlaneseq
        %v802 = vshrl.u32 %v801, 7
        %v803 = vsub.s32 %v800, %v802
        %v804 = vrot.slane %v788, %v803
        %v806 = vunpack.c.l.s4 1966171168
        %v807 = vunpack.c.0.s8 %v806
        %v808 = vlaneseq
        %v809 = vshrl.u32 %v808, 7
        %v810 = vsub.s32 %v807, %v809
        %v811 = vrot.slane %v789, %v810
        %v813 = vunpack.c.l.s4 1966171168
        %v814 = vunpack.c.0.s8 %v813
        %v815 = vlaneseq
        %v816 = vshrl.u32 %v815, 7
        %v817 = vsub.s32 %v814, %v816
        %v818 = vrot.slane %v790, %v817
        %v819 = vcombine.high %v797, %v797
        %v820 = vcombine.high %v804, %v804
        %v821 = vcombine.high %v811, %v811
        %v822 = vcombine.high %v818, %v818
        %v824 = vunpack.c.l.s4 857870592
        %v825 = vunpack.c.0.s8 %v824
        %v826 = vlaneseq
        %v827 = vshrl.u32 %v826, 7
        %v828 = vsub.s32 %v825, %v827
        %v829 = vrot.slane %v748, %v828
        %v831 = vunpack.c.l.s4 857870592
        %v832 = vunpack.c.0.s8 %v831
        %v833 = vlaneseq
        %v834 = vshrl.u32 %v833, 7
        %v835 = vsub.s32 %v832, %v834
        %v836 = vrot.slane %v762, %v835
        %v838 = vunpack.c.l.s4 857870592
        %v839 = vunpack.c.0.s8 %v838
        %v840 = vlaneseq
        %v841 = vshrl.u32 %v840, 7
        %v842 = vsub.s32 %v839, %v841
        %v843 = vrot.slane %v770, %v842
        %v845 = vunpack.c.l.s4 857870592
        %v846 = vunpack.c.0.s8 %v845
        %v847 = vlaneseq
        %v848 = vshrl.u32 %v847, 7
        %v849 = vsub.s32 %v846, %v848
        %v850 = vrot.slane %v772, %v849
        %v852 = vunpack.c.l.s4 857870592
        %v853 = vunpack.c.0.s8 %v852
        %v854 = vlaneseq
        %v855 = vshrl.u32 %v854, 7
        %v856 = vsub.s32 %v853, %v855
        %v857 = vrot.slane %v755, %v856
        %v859 = vunpack.c.l.s4 857870592
        %v860 = vunpack.c.0.s8 %v859
        %v861 = vlaneseq
        %v862 = vshrl.u32 %v861, 7
        %v863 = vsub.s32 %v860, %v862
        %v864 = vrot.slane %v769, %v863
        %v866 = vunpack.c.l.s4 857870592
        %v867 = vunpack.c.0.s8 %v866
        %v868 = vlaneseq
        %v869 = vshrl.u32 %v868, 7
        %v870 = vsub.s32 %v867, %v869
        %v871 = vrot.slane %v771, %v870
        %v873 = vunpack.c.l.s4 857870592
        %v874 = vunpack.c.0.s8 %v873
        %v875 = vlaneseq
        %v876 = vshrl.u32 %v875, 7
        %v877 = vsub.s32 %v874, %v876
        %v878 = vrot.slane %v773, %v877
        %v880 = vunpack.c.l.s4 857870592
        %v881 = vunpack.c.0.s8 %v880
        %v882 = vlaneseq
        %v883 = vshrl.u32 %v882, 7
        %v884 = vsub.s32 %v881, %v883
        %v885 = vrot.slane %v797, %v884
        %v887 = vunpack.c.l.s4 857870592
        %v888 = vunpack.c.0.s8 %v887
        %v889 = vlaneseq
        %v890 = vshrl.u32 %v889, 7
        %v891 = vsub.s32 %v888, %v890
        %v892 = vrot.slane %v811, %v891
        %v894 = vunpack.c.l.s4 857870592
        %v895 = vunpack.c.0.s8 %v894
        %v896 = vlaneseq
        %v897 = vshrl.u32 %v896, 7
        %v898 = vsub.s32 %v895, %v897
        %v899 = vrot.slane %v819, %v898
        %v901 = vunpack.c.l.s4 857870592
        %v902 = vunpack.c.0.s8 %v901
        %v903 = vlaneseq
        %v904 = vshrl.u32 %v903, 7
        %v905 = vsub.s32 %v902, %v904
        %v906 = vrot.slane %v821, %v905
        %v908 = vunpack.c.l.s4 857870592
        %v909 = vunpack.c.0.s8 %v908
        %v910 = vlaneseq
        %v911 = vshrl.u32 %v910, 7
        %v912 = vsub.s32 %v909, %v911
        %v913 = vrot.slane %v804, %v912
        %v915 = vunpack.c.l.s4 857870592
        %v916 = vunpack.c.0.s8 %v915
        %v917 = vlaneseq
        %v918 = vshrl.u32 %v917, 7
        %v919 = vsub.s32 %v916, %v918
        %v920 = vrot.slane %v818, %v919
        %v922 = vunpack.c.l.s4 857870592
        %v923 = vunpack.c.0.s8 %v922
        %v924 = vlaneseq
        %v925 = vshrl.u32 %v924, 7
        %v926 = vsub.s32 %v923, %v925
        %v927 = vrot.slane %v820, %v926
        %v929 = vunpack.c.l.s4 857870592
        %v930 = vunpack.c.0.s8 %v929
        %v931 = vlaneseq
        %v932 = vshrl.u32 %v931, 7
        %v933 = vsub.s32 %v930, %v932
        %v934 = vrot.slane %v822, %v933
        %935 = vrot.lane.b32.xlu0 %v829, 4
        %v936 = vpop.permute.xlu0 %935
        %937 = vrot.lane.b32.xlu0 %v836, 4
        %v938 = vpop.permute.xlu0 %937
        %939 = vrot.lane.b32.xlu0 %v843, 4
        %v940 = vpop.permute.xlu0 %939
        %941 = vrot.lane.b32.xlu0 %v850, 4
        %v942 = vpop.permute.xlu0 %941
        %943 = vrot.lane.b32.xlu0 %v857, 4
        %v944 = vpop.permute.xlu0 %943
        %945 = vrot.lane.b32.xlu0 %v864, 4
        %v946 = vpop.permute.xlu0 %945
        %947 = vrot.lane.b32.xlu0 %v871, 4
        %v948 = vpop.permute.xlu0 %947
        %949 = vrot.lane.b32.xlu0 %v878, 4
        %v950 = vpop.permute.xlu0 %949
        %951 = vrot.lane.b32.xlu0 %v885, 4
        %v952 = vpop.permute.xlu0 %951
        %953 = vrot.lane.b32.xlu0 %v892, 4
        %v954 = vpop.permute.xlu0 %953
        %955 = vrot.lane.b32.xlu0 %v899, 4
        %v956 = vpop.permute.xlu0 %955
        %957 = vrot.lane.b32.xlu0 %v906, 4
        %v958 = vpop.permute.xlu0 %957
        %959 = vrot.lane.b32.xlu0 %v913, 4
        %v960 = vpop.permute.xlu0 %959
        %961 = vrot.lane.b32.xlu0 %v920, 4
        %v962 = vpop.permute.xlu0 %961
        %963 = vrot.lane.b32.xlu0 %v927, 4
        %v964 = vpop.permute.xlu0 %963
        %965 = vrot.lane.b32.xlu0 %v934, 4
        %v966 = vpop.permute.xlu0 %965
        %v967 = vrot.slane %v936, 6
        %v968 = vrot.slane %v938, 6
        %v969 = vrot.slane %v940, 6
        %v970 = vrot.slane %v942, 6
        %v971 = vrot.slane %v944, 6
        %v972 = vrot.slane %v946, 6
        %v973 = vrot.slane %v948, 6
        %v974 = vrot.slane %v950, 6
        %v975 = vrot.slane %v952, 6
        %v976 = vrot.slane %v954, 6
        %v977 = vrot.slane %v956, 6
        %v978 = vrot.slane %v958, 6
        %v979 = vrot.slane %v960, 6
        %v980 = vrot.slane %v962, 6
        %v981 = vrot.slane %v964, 6
        %v982 = vrot.slane %v966, 6
        %vm983 = vcmask 31744
        %v984 = vsel %vm983, %v967, %v936
        %v985 = vsel %vm983, %v968, %v938
        %v986 = vsel %vm983, %v969, %v940
        %v987 = vsel %vm983, %v970, %v942
        %v988 = vsel %vm983, %v971, %v944
        %v989 = vsel %vm983, %v972, %v946
        %v990 = vsel %vm983, %v973, %v948
        %v991 = vsel %vm983, %v974, %v950
        %v992 = vsel %vm983, %v975, %v952
        %v993 = vsel %vm983, %v976, %v954
        %v994 = vsel %vm983, %v977, %v956
        %v995 = vsel %vm983, %v978, %v958
        %v996 = vsel %vm983, %v979, %v960
        %v997 = vsel %vm983, %v980, %v962
        %v998 = vsel %vm983, %v981, %v964
        %v999 = vsel %vm983, %v982, %v966
        %vm1016 = vcmask 1040416
        %vm1017 = vcmask 26626
        %vm1018 = vmor %vm1017, %vm1016
        %1019 = vst.msk [vmem:[#allocation2 + $0x1] sm:$0x5] %vm1018, %v984
        %1020 = vst.msk [vmem:[#allocation2 + $0x5] sm:$0x5] %vm1018, %v985
        %1021 = vst.msk [vmem:[#allocation2 + $0x9] sm:$0x5] %vm1018, %v986
        %1022 = vst.msk [vmem:[#allocation2 + $0xd] sm:$0x5] %vm1018, %v987
        %1023 = vst.msk [vmem:[#allocation2 + $0x11] sm:$0x5] %vm1018, %v988
        %1024 = vst.msk [vmem:[#allocation2 + $0x15] sm:$0x5] %vm1018, %v989
        %1025 = vst.msk [vmem:[#allocation2 + $0x19] sm:$0x5] %vm1018, %v990
        %1026 = vst.msk [vmem:[#allocation2 + $0x1d] sm:$0x5] %vm1018, %v991
        %1027 = vst.msk [vmem:[#allocation2 + $0x21] sm:$0x5] %vm1018, %v992
        %1028 = vst.msk [vmem:[#allocation2 + $0x25] sm:$0x5] %vm1018, %v993
        %1029 = vst.msk [vmem:[#allocation2 + $0x29] sm:$0x5] %vm1018, %v994
        %1030 = vst.msk [vmem:[#allocation2 + $0x2d] sm:$0x5] %vm1018, %v995
        %1031 = vst.msk [vmem:[#allocation2 + $0x31] sm:$0x5] %vm1018, %v996
        %1032 = vst.msk [vmem:[#allocation2 + $0x35] sm:$0x5] %vm1018, %v997
        %1033 = vst.msk [vmem:[#allocation2 + $0x39] sm:$0x5] %vm1018, %v998
        %1034 = vst.msk [vmem:[#allocation2 + $0x3d] sm:$0x5] %vm1018, %v999
        %v1037 = vcombine.high %v700, %v700
        %v1039 = vunpack.c.l.s4 1966171168
        %v1040 = vunpack.c.0.s8 %v1039
        %v1041 = vlaneseq
        %v1042 = vshrl.u32 %v1041, 7
        %v1043 = vsub.s32 %v1040, %v1042
        %v1044 = vrot.slane %v700, %v1043
        %v1046 = vunpack.c.l.s4 1966171168
        %v1047 = vunpack.c.0.s8 %v1046
        %v1048 = vlaneseq
        %v1049 = vshrl.u32 %v1048, 7
        %v1050 = vsub.s32 %v1047, %v1049
        %v1051 = vrot.slane %v1037, %v1050
        %v1052 = vcombine.high %v1044, %v1044
        %v1053 = vcombine.high %v1051, %v1051
        %v1055 = vunpack.c.l.s4 1966171168
        %v1056 = vunpack.c.0.s8 %v1055
        %v1057 = vlaneseq
        %v1058 = vshrl.u32 %v1057, 7
        %v1059 = vsub.s32 %v1056, %v1058
        %v1060 = vrot.slane %v1044, %v1059
        %v1062 = vunpack.c.l.s4 1966171168
        %v1063 = vunpack.c.0.s8 %v1062
        %v1064 = vlaneseq
        %v1065 = vshrl.u32 %v1064, 7
        %v1066 = vsub.s32 %v1063, %v1065
        %v1067 = vrot.slane %v1051, %v1066
        %v1069 = vunpack.c.l.s4 1966171168
        %v1070 = vunpack.c.0.s8 %v1069
        %v1071 = vlaneseq
        %v1072 = vshrl.u32 %v1071, 7
        %v1073 = vsub.s32 %v1070, %v1072
        %v1074 = vrot.slane %v1052, %v1073
        %v1076 = vunpack.c.l.s4 1966171168
        %v1077 = vunpack.c.0.s8 %v1076
        %v1078 = vlaneseq
        %v1079 = vshrl.u32 %v1078, 7
        %v1080 = vsub.s32 %v1077, %v1079
        %v1081 = vrot.slane %v1053, %v1080
        %v1082 = vcombine.high %v1060, %v1060
        %v1083 = vcombine.high %v1067, %v1067
        %v1084 = vcombine.high %v1074, %v1074
        %v1085 = vcombine.high %v1081, %v1081
        %v1086 = vcombine.high %v702, %v702
        %v1088 = vunpack.c.l.s4 1966171168
        %v1089 = vunpack.c.0.s8 %v1088
        %v1090 = vlaneseq
        %v1091 = vshrl.u32 %v1090, 7
        %v1092 = vsub.s32 %v1089, %v1091
        %v1093 = vrot.slane %v702, %v1092
        %v1095 = vunpack.c.l.s4 1966171168
        %v1096 = vunpack.c.0.s8 %v1095
        %v1097 = vlaneseq
        %v1098 = vshrl.u32 %v1097, 7
        %v1099 = vsub.s32 %v1096, %v1098
        %v1100 = vrot.slane %v1086, %v1099
        %v1101 = vcombine.high %v1093, %v1093
        %v1102 = vcombine.high %v1100, %v1100
        %v1104 = vunpack.c.l.s4 1966171168
        %v1105 = vunpack.c.0.s8 %v1104
        %v1106 = vlaneseq
        %v1107 = vshrl.u32 %v1106, 7
        %v1108 = vsub.s32 %v1105, %v1107
        %v1109 = vrot.slane %v1093, %v1108
        %v1111 = vunpack.c.l.s4 1966171168
        %v1112 = vunpack.c.0.s8 %v1111
        %v1113 = vlaneseq
        %v1114 = vshrl.u32 %v1113, 7
        %v1115 = vsub.s32 %v1112, %v1114
        %v1116 = vrot.slane %v1100, %v1115
        %v1118 = vunpack.c.l.s4 1966171168
        %v1119 = vunpack.c.0.s8 %v1118
        %v1120 = vlaneseq
        %v1121 = vshrl.u32 %v1120, 7
        %v1122 = vsub.s32 %v1119, %v1121
        %v1123 = vrot.slane %v1101, %v1122
        %v1125 = vunpack.c.l.s4 1966171168
        %v1126 = vunpack.c.0.s8 %v1125
        %v1127 = vlaneseq
        %v1128 = vshrl.u32 %v1127, 7
        %v1129 = vsub.s32 %v1126, %v1128
        %v1130 = vrot.slane %v1102, %v1129
        %v1131 = vcombine.high %v1109, %v1109
        %v1132 = vcombine.high %v1116, %v1116
        %v1133 = vcombine.high %v1123, %v1123
        %v1134 = vcombine.high %v1130, %v1130
        %v1136 = vunpack.c.l.s4 857870592
        %v1137 = vunpack.c.0.s8 %v1136
        %v1138 = vlaneseq
        %v1139 = vshrl.u32 %v1138, 7
        %v1140 = vsub.s32 %v1137, %v1139
        %v1141 = vrot.slane %v1060, %v1140
        %v1143 = vunpack.c.l.s4 857870592
        %v1144 = vunpack.c.0.s8 %v1143
        %v1145 = vlaneseq
        %v1146 = vshrl.u32 %v1145, 7
        %v1147 = vsub.s32 %v1144, %v1146
        %v1148 = vrot.slane %v1074, %v1147
        %v1150 = vunpack.c.l.s4 857870592
        %v1151 = vunpack.c.0.s8 %v1150
        %v1152 = vlaneseq
        %v1153 = vshrl.u32 %v1152, 7
        %v1154 = vsub.s32 %v1151, %v1153
        %v1155 = vrot.slane %v1082, %v1154
        %v1157 = vunpack.c.l.s4 857870592
        %v1158 = vunpack.c.0.s8 %v1157
        %v1159 = vlaneseq
        %v1160 = vshrl.u32 %v1159, 7
        %v1161 = vsub.s32 %v1158, %v1160
        %v1162 = vrot.slane %v1084, %v1161
        %v1164 = vunpack.c.l.s4 857870592
        %v1165 = vunpack.c.0.s8 %v1164
        %v1166 = vlaneseq
        %v1167 = vshrl.u32 %v1166, 7
        %v1168 = vsub.s32 %v1165, %v1167
        %v1169 = vrot.slane %v1067, %v1168
        %v1171 = vunpack.c.l.s4 857870592
        %v1172 = vunpack.c.0.s8 %v1171
        %v1173 = vlaneseq
        %v1174 = vshrl.u32 %v1173, 7
        %v1175 = vsub.s32 %v1172, %v1174
        %v1176 = vrot.slane %v1081, %v1175
        %v1178 = vunpack.c.l.s4 857870592
        %v1179 = vunpack.c.0.s8 %v1178
        %v1180 = vlaneseq
        %v1181 = vshrl.u32 %v1180, 7
        %v1182 = vsub.s32 %v1179, %v1181
        %v1183 = vrot.slane %v1083, %v1182
        %v1185 = vunpack.c.l.s4 857870592
        %v1186 = vunpack.c.0.s8 %v1185
        %v1187 = vlaneseq
        %v1188 = vshrl.u32 %v1187, 7
        %v1189 = vsub.s32 %v1186, %v1188
        %v1190 = vrot.slane %v1085, %v1189
        %v1192 = vunpack.c.l.s4 857870592
        %v1193 = vunpack.c.0.s8 %v1192
        %v1194 = vlaneseq
        %v1195 = vshrl.u32 %v1194, 7
        %v1196 = vsub.s32 %v1193, %v1195
        %v1197 = vrot.slane %v1109, %v1196
        %v1199 = vunpack.c.l.s4 857870592
        %v1200 = vunpack.c.0.s8 %v1199
        %v1201 = vlaneseq
        %v1202 = vshrl.u32 %v1201, 7
        %v1203 = vsub.s32 %v1200, %v1202
        %v1204 = vrot.slane %v1123, %v1203
        %v1206 = vunpack.c.l.s4 857870592
        %v1207 = vunpack.c.0.s8 %v1206
        %v1208 = vlaneseq
        %v1209 = vshrl.u32 %v1208, 7
        %v1210 = vsub.s32 %v1207, %v1209
        %v1211 = vrot.slane %v1131, %v1210
        %v1213 = vunpack.c.l.s4 857870592
        %v1214 = vunpack.c.0.s8 %v1213
        %v1215 = vlaneseq
        %v1216 = vshrl.u32 %v1215, 7
        %v1217 = vsub.s32 %v1214, %v1216
        %v1218 = vrot.slane %v1133, %v1217
        %v1220 = vunpack.c.l.s4 857870592
        %v1221 = vunpack.c.0.s8 %v1220
        %v1222 = vlaneseq
        %v1223 = vshrl.u32 %v1222, 7
        %v1224 = vsub.s32 %v1221, %v1223
        %v1225 = vrot.slane %v1116, %v1224
        %v1227 = vunpack.c.l.s4 857870592
        %v1228 = vunpack.c.0.s8 %v1227
        %v1229 = vlaneseq
        %v1230 = vshrl.u32 %v1229, 7
        %v1231 = vsub.s32 %v1228, %v1230
        %v1232 = vrot.slane %v1130, %v1231
        %v1234 = vunpack.c.l.s4 857870592
        %v1235 = vunpack.c.0.s8 %v1234
        %v1236 = vlaneseq
        %v1237 = vshrl.u32 %v1236, 7
        %v1238 = vsub.s32 %v1235, %v1237
        %v1239 = vrot.slane %v1132, %v1238
        %v1241 = vunpack.c.l.s4 857870592
        %v1242 = vunpack.c.0.s8 %v1241
        %v1243 = vlaneseq
        %v1244 = vshrl.u32 %v1243, 7
        %v1245 = vsub.s32 %v1242, %v1244
        %v1246 = vrot.slane %v1134, %v1245
        %1247 = vrot.lane.b32.xlu0 %v1141, 4
        %v1248 = vpop.permute.xlu0 %1247
        %1249 = vrot.lane.b32.xlu0 %v1148, 4
        %v1250 = vpop.permute.xlu0 %1249
        %1251 = vrot.lane.b32.xlu0 %v1155, 4
        %v1252 = vpop.permute.xlu0 %1251
        %1253 = vrot.lane.b32.xlu0 %v1162, 4
        %v1254 = vpop.permute.xlu0 %1253
        %1255 = vrot.lane.b32.xlu0 %v1169, 4
        %v1256 = vpop.permute.xlu0 %1255
        %1257 = vrot.lane.b32.xlu0 %v1176, 4
        %v1258 = vpop.permute.xlu0 %1257
        %1259 = vrot.lane.b32.xlu0 %v1183, 4
        %v1260 = vpop.permute.xlu0 %1259
        %1261 = vrot.lane.b32.xlu0 %v1190, 4
        %v1262 = vpop.permute.xlu0 %1261
        %1263 = vrot.lane.b32.xlu0 %v1197, 4
        %v1264 = vpop.permute.xlu0 %1263
        %1265 = vrot.lane.b32.xlu0 %v1204, 4
        %v1266 = vpop.permute.xlu0 %1265
        %1267 = vrot.lane.b32.xlu0 %v1211, 4
        %v1268 = vpop.permute.xlu0 %1267
        %1269 = vrot.lane.b32.xlu0 %v1218, 4
        %v1270 = vpop.permute.xlu0 %1269
        %1271 = vrot.lane.b32.xlu0 %v1225, 4
        %v1272 = vpop.permute.xlu0 %1271
        %1273 = vrot.lane.b32.xlu0 %v1232, 4
        %v1274 = vpop.permute.xlu0 %1273
        %1275 = vrot.lane.b32.xlu0 %v1239, 4
        %v1276 = vpop.permute.xlu0 %1275
        %1277 = vrot.lane.b32.xlu0 %v1246, 4
        %v1278 = vpop.permute.xlu0 %1277
        %v1279 = vrot.slane %v1248, 6
        %v1280 = vrot.slane %v1250, 6
        %v1281 = vrot.slane %v1252, 6
        %v1282 = vrot.slane %v1254, 6
        %v1283 = vrot.slane %v1256, 6
        %v1284 = vrot.slane %v1258, 6
        %v1285 = vrot.slane %v1260, 6
        %v1286 = vrot.slane %v1262, 6
        %v1287 = vrot.slane %v1264, 6
        %v1288 = vrot.slane %v1266, 6
        %v1289 = vrot.slane %v1268, 6
        %v1290 = vrot.slane %v1270, 6
        %v1291 = vrot.slane %v1272, 6
        %v1292 = vrot.slane %v1274, 6
        %v1293 = vrot.slane %v1276, 6
        %v1294 = vrot.slane %v1278, 6
        %v1295 = vsel %vm983, %v1279, %v1248
        %v1296 = vsel %vm983, %v1280, %v1250
        %v1297 = vsel %vm983, %v1281, %v1252
        %v1298 = vsel %vm983, %v1282, %v1254
        %v1299 = vsel %vm983, %v1283, %v1256
        %v1300 = vsel %vm983, %v1284, %v1258
        %v1301 = vsel %vm983, %v1285, %v1260
        %v1302 = vsel %vm983, %v1286, %v1262
        %v1303 = vsel %vm983, %v1287, %v1264
        %v1304 = vsel %vm983, %v1288, %v1266
        %v1305 = vsel %vm983, %v1289, %v1268
        %v1306 = vsel %vm983, %v1290, %v1270
        %v1307 = vsel %vm983, %v1291, %v1272
        %v1308 = vsel %vm983, %v1292, %v1274
        %v1309 = vsel %vm983, %v1293, %v1276
        %v1310 = vsel %vm983, %v1294, %v1278
        %s1327 = scalar_lea.vmem [#allocation2], 4
        %1328 = vst.msk [vmem:[%s1327] sm:$0x5] %vm1018, %v1295
        %1329 = vst.msk [vmem:[%s1327 + $0x4] sm:$0x5] %vm1018, %v1296
        %1330 = vst.msk [vmem:[%s1327 + $0x8] sm:$0x5] %vm1018, %v1297
        %1331 = vst.msk [vmem:[%s1327 + $0xc] sm:$0x5] %vm1018, %v1298
        %1332 = vst.msk [vmem:[%s1327 + $0x10] sm:$0x5] %vm1018, %v1299
        %1333 = vst.msk [vmem:[%s1327 + $0x14] sm:$0x5] %vm1018, %v1300
        %1334 = vst.msk [vmem:[%s1327 + $0x18] sm:$0x5] %vm1018, %v1301
        %1335 = vst.msk [vmem:[%s1327 + $0x1c] sm:$0x5] %vm1018, %v1302
        %1336 = vst.msk [vmem:[%s1327 + $0x20] sm:$0x5] %vm1018, %v1303
        %1337 = vst.msk [vmem:[%s1327 + $0x24] sm:$0x5] %vm1018, %v1304
        %1338 = vst.msk [vmem:[%s1327 + $0x28] sm:$0x5] %vm1018, %v1305
        %1339 = vst.msk [vmem:[%s1327 + $0x2c] sm:$0x5] %vm1018, %v1306
        %1340 = vst.msk [vmem:[%s1327 + $0x30] sm:$0x5] %vm1018, %v1307
        %1341 = vst.msk [vmem:[%s1327 + $0x34] sm:$0x5] %vm1018, %v1308
        %1342 = vst.msk [vmem:[%s1327 + $0x38] sm:$0x5] %vm1018, %v1309
        %1343 = vst.msk [vmem:[%s1327 + $0x3c] sm:$0x5] %vm1018, %v1310
        %v1344 = vld [vmem:[#allocation2] sm:$0xf]
        %v1345 = vld [vmem:[#allocation2 + $0x4] sm:$0xf]
        %v1346 = vld [vmem:[#allocation2 + $0x8] sm:$0xf]
        %v1347 = vld [vmem:[#allocation2 + $0xc] sm:$0xf]
        %v1348 = vld [vmem:[#allocation2 + $0x10] sm:$0xf]
        %v1349 = vld [vmem:[#allocation2 + $0x14] sm:$0xf]
        %v1350 = vld [vmem:[#allocation2 + $0x18] sm:$0xf]
        %v1351 = vld [vmem:[#allocation2 + $0x1c] sm:$0xf]
        %v1352 = vld [vmem:[#allocation2 + $0x20] sm:$0xf]
        %v1353 = vld [vmem:[#allocation2 + $0x24] sm:$0xf]
        %v1354 = vld [vmem:[#allocation2 + $0x28] sm:$0xf]
        %v1355 = vld [vmem:[#allocation2 + $0x2c] sm:$0xf]
        %v1356 = vld [vmem:[#allocation2 + $0x30] sm:$0xf]
        %v1357 = vld [vmem:[#allocation2 + $0x34] sm:$0xf]
        %v1358 = vld [vmem:[#allocation2 + $0x38] sm:$0xf]
        %v1359 = vld [vmem:[#allocation2 + $0x3c] sm:$0xf]
        %v1360 = vld [vmem:[#allocation2 + $0x40] sm:$0xf]
        %v1361 = vld [vmem:[#allocation6] sm:$0xff]
        %v1362 = vld [vmem:[#allocation6 + $0x8] sm:$0xff]
        %v1363 = vld [vmem:[#allocation6 + $0x10] sm:$0xff]
        %v1364 = vld [vmem:[#allocation6 + $0x18] sm:$0xff]
        %v1365 = vld [vmem:[#allocation6 + $0x20] sm:$0xff]
        %v1366 = vld [vmem:[#allocation6 + $0x28] sm:$0xff]
        %v1367 = vld [vmem:[#allocation6 + $0x30] sm:$0xff]
        %v1368 = vld [vmem:[#allocation6 + $0x38] sm:$0xff]
        %v1369 = vld [vmem:[#allocation6 + $0x40] sm:$0xff]
        %v1370 = vld [vmem:[#allocation6 + $0x48] sm:$0xff]
        %v1371 = vld [vmem:[#allocation6 + $0x50] sm:$0xff]
        %v1372 = vld [vmem:[#allocation6 + $0x58] sm:$0xff]
        %v1373 = vld [vmem:[#allocation6 + $0x60] sm:$0xff]
        %v1374 = vld [vmem:[#allocation6 + $0x68] sm:$0xff]
        %v1375 = vld [vmem:[#allocation6 + $0x70] sm:$0xff]
        %v1376 = vld [vmem:[#allocation6 + $0x78] sm:$0xff]
        %v1377 = vld [vmem:[#allocation6 + $0x80] sm:$0xff]
        %v1378 = vld [vmem:[#allocation6 + $0x88] sm:$0xff]
        %v1379 = vld [vmem:[#allocation6 + $0x90] sm:$0xff]
        %v1380 = vld [vmem:[#allocation6 + $0x98] sm:$0xff]
        %v1381 = vld [vmem:[#allocation6 + $0xa0] sm:$0xff]
        %v1382 = vld [vmem:[#allocation6 + $0xa8] sm:$0xff]
        %v1383 = vld [vmem:[#allocation6 + $0xb0] sm:$0xff]
        %v1384 = vld [vmem:[#allocation6 + $0xb8] sm:$0xff]
        %v1385 = vld [vmem:[#allocation6 + $0xc0] sm:$0xff]
        %v1386 = vld [vmem:[#allocation6 + $0xc8] sm:$0xff]
        %v1387 = vld [vmem:[#allocation6 + $0xd0] sm:$0xff]
        %v1388 = vld [vmem:[#allocation6 + $0xd8] sm:$0xff]
        %v1389 = vld [vmem:[#allocation6 + $0xe0] sm:$0xff]
        %v1390 = vld [vmem:[#allocation6 + $0xe8] sm:$0xff]
        %v1391 = vld [vmem:[#allocation6 + $0xf0] sm:$0xff]
        %v1392 = vld [vmem:[#allocation6 + $0xf8] sm:$0xff]
        %v1393 = vld [vmem:[#allocation6 + $0x100] sm:$0xff]
        %v1394 = vld [vmem:[#allocation6 + $0x108] sm:$0xff]
        %v1395 = vld [vmem:[#allocation6 + $0x110] sm:$0xff]
        %v1396 = vld [vmem:[#allocation6 + $0x118] sm:$0xff]
        %v1397 = vld [vmem:[#allocation6 + $0x120] sm:$0xff]
        %v1398 = vld [vmem:[#allocation6 + $0x128] sm:$0xff]
        %v1399 = vld [vmem:[#allocation6 + $0x130] sm:$0xff]
        %v1400 = vld [vmem:[#allocation6 + $0x138] sm:$0xff]
        %v1401 = vld [vmem:[#allocation6 + $0x140] sm:$0xff]
        %v1402 = vld [vmem:[#allocation6 + $0x148] sm:$0xff]
        %v1403 = vld [vmem:[#allocation6 + $0x150] sm:$0xff]
        %v1404 = vld [vmem:[#allocation6 + $0x158] sm:$0xff]
        %v1405 = vld [vmem:[#allocation6 + $0x160] sm:$0xff]
        %v1406 = vld [vmem:[#allocation6 + $0x168] sm:$0xff]
        %v1407 = vld [vmem:[#allocation6 + $0x170] sm:$0xff]
        %v1408 = vld [vmem:[#allocation6 + $0x178] sm:$0xff]
        %v1409 = vld [vmem:[#allocation6 + $0x180] sm:$0xff]
        %v1410 = vld [vmem:[#allocation6 + $0x188] sm:$0xff]
        %v1411 = vld [vmem:[#allocation6 + $0x190] sm:$0xff]
        %v1412 = vld [vmem:[#allocation6 + $0x198] sm:$0xff]
        %v1413 = vld [vmem:[#allocation6 + $0x1a0] sm:$0xff]
        %v1414 = vld [vmem:[#allocation6 + $0x1a8] sm:$0xff]
        %v1415 = vld [vmem:[#allocation6 + $0x1b0] sm:$0xff]
        %v1416 = vld [vmem:[#allocation6 + $0x1b8] sm:$0xff]
        %v1417 = vld [vmem:[#allocation6 + $0x1c0] sm:$0xff]
        %v1418 = vld [vmem:[#allocation6 + $0x1c8] sm:$0xff]
        %v1419 = vld [vmem:[#allocation6 + $0x1d0] sm:$0xff]
        %v1420 = vld [vmem:[#allocation6 + $0x1d8] sm:$0xff]
        %v1421 = vld [vmem:[#allocation6 + $0x1e0] sm:$0xff]
        %v1422 = vld [vmem:[#allocation6 + $0x1e8] sm:$0xff]
        %v1423 = vld [vmem:[#allocation6 + $0x1f0] sm:$0xff]
        %v1424 = vld [vmem:[#allocation6 + $0x1f8] sm:$0xff]
        %v1425 = vld [vmem:[#allocation6 + $0x200] sm:$0xff]
        %v1426 = vld [vmem:[#allocation6 + $0x208] sm:$0xff]
        %v1427 = vld [vmem:[#allocation6 + $0x210] sm:$0xff]
        %v1428 = vld [vmem:[#allocation6 + $0x218] sm:$0xff]
        %s1429 = scalar_lea.vmem [#allocation6], 544
        %v1430 = vld [vmem:[%s1429] sm:$0xff]
        %v1431 = vld [vmem:[%s1429 + $0x8] sm:$0xff]
        %v1432 = vld [vmem:[%s1429 + $0x10] sm:$0xff]
        %v1433 = vld [vmem:[%s1429 + $0x18] sm:$0xff]
        %v1434 = vld [vmem:[%s1429 + $0x20] sm:$0xff]
        %v1435 = vld [vmem:[%s1429 + $0x28] sm:$0xff]
        %v1436 = vld [vmem:[%s1429 + $0x30] sm:$0xff]
        %v1437 = vld [vmem:[%s1429 + $0x38] sm:$0xff]
        %v1438 = vld [vmem:[%s1429 + $0x40] sm:$0xff]
        %v1439 = vld [vmem:[%s1429 + $0x48] sm:$0xff]
        %v1440 = vld [vmem:[%s1429 + $0x50] sm:$0xff]
        %v1441 = vld [vmem:[%s1429 + $0x58] sm:$0xff]
        %v1442 = vld [vmem:[%s1429 + $0x60] sm:$0xff]
        %v1443 = vld [vmem:[%s1429 + $0x68] sm:$0xff]
        %v1444 = vld [vmem:[%s1429 + $0x70] sm:$0xff]
        %v1445 = vld [vmem:[%s1429 + $0x78] sm:$0xff]
        %v1446 = vld [vmem:[%s1429 + $0x80] sm:$0xff]
        %v1447 = vld [vmem:[%s1429 + $0x88] sm:$0xff]
        %v1448 = vld [vmem:[%s1429 + $0x90] sm:$0xff]
        %v1449 = vld [vmem:[%s1429 + $0x98] sm:$0xff]
        %v1450 = vld [vmem:[%s1429 + $0xa0] sm:$0xff]
        %v1451 = vld [vmem:[%s1429 + $0xa8] sm:$0xff]
        %v1452 = vld [vmem:[%s1429 + $0xb0] sm:$0xff]
        %v1453 = vld [vmem:[%s1429 + $0xb8] sm:$0xff]
        %v1454 = vld [vmem:[%s1429 + $0xc0] sm:$0xff]
        %v1455 = vld [vmem:[%s1429 + $0xc8] sm:$0xff]
        %v1456 = vld [vmem:[%s1429 + $0xd0] sm:$0xff]
        %v1457 = vld [vmem:[%s1429 + $0xd8] sm:$0xff]
        %v1458 = vld [vmem:[%s1429 + $0xe0] sm:$0xff]
        %v1459 = vld [vmem:[%s1429 + $0xe8] sm:$0xff]
        %v1460 = vld [vmem:[%s1429 + $0xf0] sm:$0xff]
        %v1461 = vld [vmem:[%s1429 + $0xf8] sm:$0xff]
        %v1462 = vld [vmem:[%s1429 + $0x100] sm:$0xff]
        %v1463 = vld [vmem:[%s1429 + $0x108] sm:$0xff]
        %v1464 = vld [vmem:[%s1429 + $0x110] sm:$0xff]
        %v1465 = vld [vmem:[%s1429 + $0x118] sm:$0xff]
        %v1466 = vld [vmem:[%s1429 + $0x120] sm:$0xff]
        %v1467 = vld [vmem:[%s1429 + $0x128] sm:$0xff]
        %v1468 = vld [vmem:[%s1429 + $0x130] sm:$0xff]
        %v1469 = vld [vmem:[%s1429 + $0x138] sm:$0xff]
        %v1470 = vld [vmem:[%s1429 + $0x140] sm:$0xff]
        %v1471 = vld [vmem:[%s1429 + $0x148] sm:$0xff]
        %v1472 = vld [vmem:[%s1429 + $0x150] sm:$0xff]
        %v1473 = vld [vmem:[%s1429 + $0x158] sm:$0xff]
        %v1474 = vld [vmem:[%s1429 + $0x160] sm:$0xff]
        %v1475 = vld [vmem:[%s1429 + $0x168] sm:$0xff]
        %v1476 = vld [vmem:[%s1429 + $0x170] sm:$0xff]
        %v1477 = vld [vmem:[%s1429 + $0x178] sm:$0xff]
        %v1478 = vld [vmem:[%s1429 + $0x180] sm:$0xff]
        %v1479 = vld [vmem:[%s1429 + $0x188] sm:$0xff]
        %v1480 = vld [vmem:[%s1429 + $0x190] sm:$0xff]
        %v1481 = vld [vmem:[%s1429 + $0x198] sm:$0xff]
        %v1482 = vld [vmem:[%s1429 + $0x1a0] sm:$0xff]
        %v1483 = vld [vmem:[%s1429 + $0x1a8] sm:$0xff]
        %v1484 = vld [vmem:[%s1429 + $0x1b0] sm:$0xff]
        %v1485 = vld [vmem:[%s1429 + $0x1b8] sm:$0xff]
        %v1486 = vld [vmem:[%s1429 + $0x1c0] sm:$0xff]
        %v1487 = vld [vmem:[%s1429 + $0x1c8] sm:$0xff]
        %v1488 = vld [vmem:[%s1429 + $0x1d0] sm:$0xff]
        %v1489 = vld [vmem:[%s1429 + $0x1d8] sm:$0xff]
        %v1490 = vld [vmem:[%s1429 + $0x1e0] sm:$0xff]
        %v1491 = vld [vmem:[%s1429 + $0x1e8] sm:$0xff]
        %v1492 = vld [vmem:[%s1429 + $0x1f0] sm:$0xff]
        %v1493 = vld [vmem:[%s1429 + $0x1f8] sm:$0xff]
        %v1494 = vld [vmem:[%s1429 + $0x200] sm:$0xff]
        %v1495 = vld [vmem:[%s1429 + $0x208] sm:$0xff]
        %v1496 = vld [vmem:[%s1429 + $0x210] sm:$0xff]
        %v1497 = vld [vmem:[%s1429 + $0x218] sm:$0xff]
        %v1515 = vcombine.low %v1344, %v1345
        %v1516 = vcombine.low %v1346, %v1347
        %v1518 = vunpack.c.l.s4 1983009808
        %v1519 = vunpack.c.0.s8 %v1518
        %v1520 = vlaneseq
        %v1521 = vshrl.u32 %v1520, 7
        %v1522 = vsub.s32 %v1519, %v1521
        %v1523 = vrot.slane %v1515, %v1522
        %v1525 = vunpack.c.l.s4 1983009808
        %v1526 = vunpack.c.0.s8 %v1525
        %v1527 = vlaneseq
        %v1528 = vshrl.u32 %v1527, 7
        %v1529 = vsub.s32 %v1526, %v1528
        %v1530 = vrot.slane %v1516, %v1529
        %v1531 = vcombine.low %v1523, %v1530
        %v1532 = vcombine.high %v1523, %v1530
        %v1533 = vcombine.low %v1348, %v1349
        %v1534 = vcombine.low %v1350, %v1351
        %v1536 = vunpack.c.l.s4 1983009808
        %v1537 = vunpack.c.0.s8 %v1536
        %v1538 = vlaneseq
        %v1539 = vshrl.u32 %v1538, 7
        %v1540 = vsub.s32 %v1537, %v1539
        %v1541 = vrot.slane %v1533, %v1540
        %v1543 = vunpack.c.l.s4 1983009808
        %v1544 = vunpack.c.0.s8 %v1543
        %v1545 = vlaneseq
        %v1546 = vshrl.u32 %v1545, 7
        %v1547 = vsub.s32 %v1544, %v1546
        %v1548 = vrot.slane %v1534, %v1547
        %v1549 = vcombine.low %v1541, %v1548
        %v1550 = vcombine.high %v1541, %v1548
        %v1551 = vcombine.low %v1352, %v1353
        %v1552 = vcombine.low %v1354, %v1355
        %v1554 = vunpack.c.l.s4 1983009808
        %v1555 = vunpack.c.0.s8 %v1554
        %v1556 = vlaneseq
        %v1557 = vshrl.u32 %v1556, 7
        %v1558 = vsub.s32 %v1555, %v1557
        %v1559 = vrot.slane %v1551, %v1558
        %v1561 = vunpack.c.l.s4 1983009808
        %v1562 = vunpack.c.0.s8 %v1561
        %v1563 = vlaneseq
        %v1564 = vshrl.u32 %v1563, 7
        %v1565 = vsub.s32 %v1562, %v1564
        %v1566 = vrot.slane %v1552, %v1565
        %v1567 = vcombine.low %v1559, %v1566
        %v1568 = vcombine.high %v1559, %v1566
        %v1569 = vcombine.low %v1356, %v1357
        %v1570 = vcombine.low %v1358, %v1359
        %v1572 = vunpack.c.l.s4 1983009808
        %v1573 = vunpack.c.0.s8 %v1572
        %v1574 = vlaneseq
        %v1575 = vshrl.u32 %v1574, 7
        %v1576 = vsub.s32 %v1573, %v1575
        %v1577 = vrot.slane %v1569, %v1576
        %v1579 = vunpack.c.l.s4 1983009808
        %v1580 = vunpack.c.0.s8 %v1579
        %v1581 = vlaneseq
        %v1582 = vshrl.u32 %v1581, 7
        %v1583 = vsub.s32 %v1580, %v1582
        %v1584 = vrot.slane %v1570, %v1583
        %v1585 = vcombine.low %v1577, %v1584
        %v1586 = vcombine.high %v1577, %v1584
        %v1588 = vunpack.c.l.s4 1983009808
        %v1589 = vunpack.c.0.s8 %v1588
        %v1590 = vlaneseq
        %v1591 = vshrl.u32 %v1590, 7
        %v1592 = vsub.s32 %v1589, %v1591
        %v1593 = vrot.slane %v1360, %v1592
        %v1594 = vcombine.high %v1593, %v1593
        %v1595 = vrot.slane %v1531, 1
        %v1596 = vrot.slane %v1549, 1
        %v1597 = vsel %vm404, %v1595, %v1596
        %v1598 = vrot.slane %v1532, 1
        %v1599 = vrot.slane %v1550, 1
        %v1600 = vsel %vm404, %v1598, %v1599
        %v1601 = vrot.slane %v1567, 1
        %v1602 = vsel %vm404, %v1596, %v1601
        %v1603 = vrot.slane %v1568, 1
        %v1604 = vsel %vm404, %v1599, %v1603
        %v1605 = vrot.slane %v1585, 1
        %v1606 = vsel %vm404, %v1601, %v1605
        %v1607 = vrot.slane %v1586, 1
        %v1608 = vsel %vm404, %v1603, %v1607
        %v1609 = vrot.slane %v1593, 1
        %v1610 = vsel %vm404, %v1605, %v1609
        %v1611 = vrot.slane %v1594, 1
        %v1612 = vsel %vm404, %v1607, %v1611
        %vm1617 = vcmask 64512
        %v1618 = vsel %vm1617, %v1600, 0
        %v1620 = vsel %vm1617, %v1604, 0
        %v1622 = vsel %vm1617, %v1608, 0
        %v1624 = vsel %vm1617, %v1612, 0
        %1626 = vmatprep.subr.mxu0 %v1491
        %1627 = vmatpush1.msra.mxu0 %v1490
        %1628 = vmatprep.subr.mxu0 %v1487
        %1629 = vmatpush1.msra.mxu0 %v1486
        %1630 = vmatprep.subr.mxu0 %v1483
        %1631 = vmatpush1.msra.mxu0 %v1482
        %1632 = vmatprep.subr.mxu0 %v1479
        %1633 = vmatpush1.msra.mxu0 %v1478
        %1634 = vmatprep.subr.mxu0 %v1475
        %1635 = vmatpush1.msra.mxu0 %v1474
        %1636 = vmatprep.subr.mxu0 %v1471
        %1637 = vmatpush1.msra.mxu0 %v1470
        %1638 = vmatprep.subr.mxu0 %v1467
        %1639 = vmatpush1.msra.mxu0 %v1466
        %1640 = vmatprep.subr.mxu0 %v1463
        %1641 = vmatpush1.msra.mxu0 %v1462
        %1642 = vmatprep.subr.mxu0 %v1459
        %1643 = vmatpush1.msra.mxu0 %v1458
        %1644 = vmatprep.subr.mxu0 %v1455
        %1645 = vmatpush1.msra.mxu0 %v1454
        %1646 = vmatprep.subr.mxu0 %v1451
        %1647 = vmatpush1.msra.mxu0 %v1450
        %1648 = vmatprep.subr.mxu0 %v1447
        %1649 = vmatpush1.msra.mxu0 %v1446
        %1650 = vmatprep.subr.mxu0 %v1443
        %1651 = vmatpush1.msra.mxu0 %v1442
        %1652 = vmatprep.subr.mxu0 %v1439
        %1653 = vmatpush1.msra.mxu0 %v1438
        %1654 = vmatprep.subr.mxu0 %v1435
        %1655 = vmatpush1.msra.mxu0 %v1434
        %1656 = vmatprep.subr.mxu0 %v1431
        %1657 = vmatpush1.msra.mxu0 %v1430
        %1658 = vmatprep.subr.mxu0 0.0
        %1659 = vmatpush2.msra.mxu0 0.0
        %1660 = vmatprep.subr.mxu0 0.0
        %1661 = vmatpush2.msra.mxu0 0.0
        %1662 = vmatprep.subr.mxu0 0.0
        %1663 = vmatpush2.msra.mxu0 0.0
        %1664 = vmatprep.subr.mxu0 0.0
        %1665 = vmatpush2.msra.mxu0 0.0
        %1666 = vmatprep.subr.mxu0 0.0
        %1667 = vmatpush2.msra.mxu0 0.0
        %1668 = vmatprep.subr.mxu0 0.0
        %1669 = vmatpush2.msra.mxu0 0.0
        %1670 = vmatprep.subr.mxu0 0.0
        %1671 = vmatpush2.msra.mxu0 0.0
        %1672 = vmatprep.subr.mxu0 0.0
        %1673 = vmatpush2.msra.mxu0 0.0
        %1674 = vmatprep.subr.mxu0 0.0
        %1675 = vmatpush2.msra.mxu0 0.0
        %1676 = vmatprep.subr.mxu0 0.0
        %1677 = vmatpush2.msra.mxu0 0.0
        %1678 = vmatprep.subr.mxu0 0.0
        %1679 = vmatpush2.msra.mxu0 0.0
        %1680 = vmatprep.subr.mxu0 0.0
        %1681 = vmatpush2.msra.mxu0 0.0
        %1682 = vmatprep.subr.mxu0 0.0
        %1683 = vmatpush2.msra.mxu0 0.0
        %1684 = vmatprep.subr.mxu0 0.0
        %1685 = vmatpush2.msra.mxu0 0.0
        %1686 = vmatprep.subr.mxu0 0.0
        %1687 = vmatpush2.msra.mxu0 0.0
        %1688 = vmatprep.subr.mxu0 %v1495
        %1689 = vmatpush2.msra.mxu0 %v1494
        %1690 = vmatprep.mubr.f32.mxu0 %v1618
        %1691 = vmatmul.mubr.f32.gmra.mxu0 %v1597
        %v1692 = vpop.f32.mrf.mxu0
        %v1693 = vadd.f32 0.0, %v1692
        %v1694 = vpop.f32.mrf.mxu0
        %v1695 = vadd.f32 0.0, %v1694
        %1696 = vmatprep.mubr.f32.mxu0 %v1620
        %1697 = vmatmul.mubr.f32.gmra.mxu0 %v1602
        %v1698 = vpop.f32.mrf.mxu0
        %v1699 = vadd.f32 0.0, %v1698
        %v1700 = vpop.f32.mrf.mxu0
        %v1701 = vadd.f32 0.0, %v1700
        %1702 = vmatprep.mubr.f32.mxu0 %v1622
        %1703 = vmatmul.mubr.f32.gmra.mxu0 %v1606
        %v1704 = vpop.f32.mrf.mxu0
        %v1705 = vadd.f32 0.0, %v1704
        %v1706 = vpop.f32.mrf.mxu0
        %v1707 = vadd.f32 0.0, %v1706
        %1708 = vmatprep.mubr.f32.mxu0 %v1624
        %1709 = vmatmul.mubr.f32.gmra.mxu0 %v1610
        %v1710 = vpop.f32.mrf.mxu0
        %v1711 = vadd.f32 0.0, %v1710
        %v1712 = vpop.f32.mrf.mxu0
        %v1713 = vadd.f32 0.0, %v1712
        %1714 = vdwg.mxu0
        %1715 = vmatprep.subr.mxu0 %v1493
        %1716 = vmatpush1.msra.mxu0 %v1492
        %1717 = vmatprep.subr.mxu0 %v1489
        %1718 = vmatpush1.msra.mxu0 %v1488
        %1719 = vmatprep.subr.mxu0 %v1485
        %1720 = vmatpush1.msra.mxu0 %v1484
        %1721 = vmatprep.subr.mxu0 %v1481
        %1722 = vmatpush1.msra.mxu0 %v1480
        %1723 = vmatprep.subr.mxu0 %v1477
        %1724 = vmatpush1.msra.mxu0 %v1476
        %1725 = vmatprep.subr.mxu0 %v1473
        %1726 = vmatpush1.msra.mxu0 %v1472
        %1727 = vmatprep.subr.mxu0 %v1469
        %1728 = vmatpush1.msra.mxu0 %v1468
        %1729 = vmatprep.subr.mxu0 %v1465
        %1730 = vmatpush1.msra.mxu0 %v1464
        %1731 = vmatprep.subr.mxu0 %v1461
        %1732 = vmatpush1.msra.mxu0 %v1460
        %1733 = vmatprep.subr.mxu0 %v1457
        %1734 = vmatpush1.msra.mxu0 %v1456
        %1735 = vmatprep.subr.mxu0 %v1453
        %1736 = vmatpush1.msra.mxu0 %v1452
        %1737 = vmatprep.subr.mxu0 %v1449
        %1738 = vmatpush1.msra.mxu0 %v1448
        %1739 = vmatprep.subr.mxu0 %v1445
        %1740 = vmatpush1.msra.mxu0 %v1444
        %1741 = vmatprep.subr.mxu0 %v1441
        %1742 = vmatpush1.msra.mxu0 %v1440
        %1743 = vmatprep.subr.mxu0 %v1437
        %1744 = vmatpush1.msra.mxu0 %v1436
        %1745 = vmatprep.subr.mxu0 %v1433
        %1746 = vmatpush1.msra.mxu0 %v1432
        %1747 = vmatprep.subr.mxu0 0.0
        %1748 = vmatpush2.msra.mxu0 0.0
        %1749 = vmatprep.subr.mxu0 0.0
        %1750 = vmatpush2.msra.mxu0 0.0
        %1751 = vmatprep.subr.mxu0 0.0
        %1752 = vmatpush2.msra.mxu0 0.0
        %1753 = vmatprep.subr.mxu0 0.0
        %1754 = vmatpush2.msra.mxu0 0.0
        %1755 = vmatprep.subr.mxu0 0.0
        %1756 = vmatpush2.msra.mxu0 0.0
        %1757 = vmatprep.subr.mxu0 0.0
        %1758 = vmatpush2.msra.mxu0 0.0
        %1759 = vmatprep.subr.mxu0 0.0
        %1760 = vmatpush2.msra.mxu0 0.0
        %1761 = vmatprep.subr.mxu0 0.0
        %1762 = vmatpush2.msra.mxu0 0.0
        %1763 = vmatprep.subr.mxu0 0.0
        %1764 = vmatpush2.msra.mxu0 0.0
        %1765 = vmatprep.subr.mxu0 0.0
        %1766 = vmatpush2.msra.mxu0 0.0
        %1767 = vmatprep.subr.mxu0 0.0
        %1768 = vmatpush2.msra.mxu0 0.0
        %1769 = vmatprep.subr.mxu0 0.0
        %1770 = vmatpush2.msra.mxu0 0.0
        %1771 = vmatprep.subr.mxu0 0.0
        %1772 = vmatpush2.msra.mxu0 0.0
        %1773 = vmatprep.subr.mxu0 0.0
        %1774 = vmatpush2.msra.mxu0 0.0
        %1775 = vmatprep.subr.mxu0 0.0
        %1776 = vmatpush2.msra.mxu0 0.0
        %1777 = vmatprep.subr.mxu0 %v1497
        %1778 = vmatpush2.msra.mxu0 %v1496
        %1779 = vmatprep.mubr.f32.mxu0 %v1618
        %1780 = vmatmul.mubr.f32.gmra.mxu0 %v1597
        %v1781 = vpop.f32.mrf.mxu0
        %v1782 = vadd.f32 0.0, %v1781
        %v1783 = vpop.f32.mrf.mxu0
        %v1784 = vadd.f32 0.0, %v1783
        %1785 = vmatprep.mubr.f32.mxu0 %v1620
        %1786 = vmatmul.mubr.f32.gmra.mxu0 %v1602
        %v1787 = vpop.f32.mrf.mxu0
        %v1788 = vadd.f32 0.0, %v1787
        %v1789 = vpop.f32.mrf.mxu0
        %v1790 = vadd.f32 0.0, %v1789
        %1791 = vmatprep.mubr.f32.mxu0 %v1622
        %1792 = vmatmul.mubr.f32.gmra.mxu0 %v1606
        %v1793 = vpop.f32.mrf.mxu0
        %v1794 = vadd.f32 0.0, %v1793
        %v1795 = vpop.f32.mrf.mxu0
        %v1796 = vadd.f32 0.0, %v1795
        %1797 = vmatprep.mubr.f32.mxu0 %v1624
        %1798 = vmatmul.mubr.f32.gmra.mxu0 %v1610
        %v1799 = vpop.f32.mrf.mxu0
        %v1800 = vadd.f32 0.0, %v1799
        %v1801 = vpop.f32.mrf.mxu0
        %v1802 = vadd.f32 0.0, %v1801
        %1803 = vdwg.mxu0
        %v1808 = vsel %vm1617, %v1532, 0
        %v1810 = vsel %vm1617, %v1550, 0
        %v1812 = vsel %vm1617, %v1568, 0
        %v1814 = vsel %vm1617, %v1586, 0
        %1816 = vmatprep.subr.mxu0 %v1422
        %1817 = vmatpush1.msra.mxu0 %v1421
        %1818 = vmatprep.subr.mxu0 %v1418
        %1819 = vmatpush1.msra.mxu0 %v1417
        %1820 = vmatprep.subr.mxu0 %v1414
        %1821 = vmatpush1.msra.mxu0 %v1413
        %1822 = vmatprep.subr.mxu0 %v1410
        %1823 = vmatpush1.msra.mxu0 %v1409
        %1824 = vmatprep.subr.mxu0 %v1406
        %1825 = vmatpush1.msra.mxu0 %v1405
        %1826 = vmatprep.subr.mxu0 %v1402
        %1827 = vmatpush1.msra.mxu0 %v1401
        %1828 = vmatprep.subr.mxu0 %v1398
        %1829 = vmatpush1.msra.mxu0 %v1397
        %1830 = vmatprep.subr.mxu0 %v1394
        %1831 = vmatpush1.msra.mxu0 %v1393
        %1832 = vmatprep.subr.mxu0 %v1390
        %1833 = vmatpush1.msra.mxu0 %v1389
        %1834 = vmatprep.subr.mxu0 %v1386
        %1835 = vmatpush1.msra.mxu0 %v1385
        %1836 = vmatprep.subr.mxu0 %v1382
        %1837 = vmatpush1.msra.mxu0 %v1381
        %1838 = vmatprep.subr.mxu0 %v1378
        %1839 = vmatpush1.msra.mxu0 %v1377
        %1840 = vmatprep.subr.mxu0 %v1374
        %1841 = vmatpush1.msra.mxu0 %v1373
        %1842 = vmatprep.subr.mxu0 %v1370
        %1843 = vmatpush1.msra.mxu0 %v1369
        %1844 = vmatprep.subr.mxu0 %v1366
        %1845 = vmatpush1.msra.mxu0 %v1365
        %1846 = vmatprep.subr.mxu0 %v1362
        %1847 = vmatpush1.msra.mxu0 %v1361
        %1848 = vmatprep.subr.mxu0 0.0
        %1849 = vmatpush2.msra.mxu0 0.0
        %1850 = vmatprep.subr.mxu0 0.0
        %1851 = vmatpush2.msra.mxu0 0.0
        %1852 = vmatprep.subr.mxu0 0.0
        %1853 = vmatpush2.msra.mxu0 0.0
        %1854 = vmatprep.subr.mxu0 0.0
        %1855 = vmatpush2.msra.mxu0 0.0
        %1856 = vmatprep.subr.mxu0 0.0
        %1857 = vmatpush2.msra.mxu0 0.0
        %1858 = vmatprep.subr.mxu0 0.0
        %1859 = vmatpush2.msra.mxu0 0.0
        %1860 = vmatprep.subr.mxu0 0.0
        %1861 = vmatpush2.msra.mxu0 0.0
        %1862 = vmatprep.subr.mxu0 0.0
        %1863 = vmatpush2.msra.mxu0 0.0
        %1864 = vmatprep.subr.mxu0 0.0
        %1865 = vmatpush2.msra.mxu0 0.0
        %1866 = vmatprep.subr.mxu0 0.0
        %1867 = vmatpush2.msra.mxu0 0.0
        %1868 = vmatprep.subr.mxu0 0.0
        %1869 = vmatpush2.msra.mxu0 0.0
        %1870 = vmatprep.subr.mxu0 0.0
        %1871 = vmatpush2.msra.mxu0 0.0
        %1872 = vmatprep.subr.mxu0 0.0
        %1873 = vmatpush2.msra.mxu0 0.0
        %1874 = vmatprep.subr.mxu0 0.0
        %1875 = vmatpush2.msra.mxu0 0.0
        %1876 = vmatprep.subr.mxu0 0.0
        %1877 = vmatpush2.msra.mxu0 0.0
        %1878 = vmatprep.subr.mxu0 %v1426
        %1879 = vmatpush2.msra.mxu0 %v1425
        %1880 = vmatprep.mubr.f32.mxu0 %v1808
        %1881 = vmatmul.mubr.f32.gmra.mxu0 %v1531
        %v1882 = vpop.f32.mrf.mxu0
        %v1883 = vadd.f32 %v1693, %v1882
        %v1884 = vpop.f32.mrf.mxu0
        %v1885 = vadd.f32 %v1695, %v1884
        %1886 = vmatprep.mubr.f32.mxu0 %v1810
        %1887 = vmatmul.mubr.f32.gmra.mxu0 %v1549
        %v1888 = vpop.f32.mrf.mxu0
        %v1889 = vadd.f32 %v1699, %v1888
        %v1890 = vpop.f32.mrf.mxu0
        %v1891 = vadd.f32 %v1701, %v1890
        %1892 = vmatprep.mubr.f32.mxu0 %v1812
        %1893 = vmatmul.mubr.f32.gmra.mxu0 %v1567
        %v1894 = vpop.f32.mrf.mxu0
        %v1895 = vadd.f32 %v1705, %v1894
        %v1896 = vpop.f32.mrf.mxu0
        %v1897 = vadd.f32 %v1707, %v1896
        %1898 = vmatprep.mubr.f32.mxu0 %v1814
        %1899 = vmatmul.mubr.f32.gmra.mxu0 %v1585
        %v1900 = vpop.f32.mrf.mxu0
        %v1901 = vadd.f32 %v1711, %v1900
        %v1902 = vpop.f32.mrf.mxu0
        %v1903 = vadd.f32 %v1713, %v1902
        %1904 = vdwg.mxu0
        %1905 = vmatprep.subr.mxu0 %v1424
        %1906 = vmatpush1.msra.mxu0 %v1423
        %1907 = vmatprep.subr.mxu0 %v1420
        %1908 = vmatpush1.msra.mxu0 %v1419
        %1909 = vmatprep.subr.mxu0 %v1416
        %1910 = vmatpush1.msra.mxu0 %v1415
        %1911 = vmatprep.subr.mxu0 %v1412
        %1912 = vmatpush1.msra.mxu0 %v1411
        %1913 = vmatprep.subr.mxu0 %v1408
        %1914 = vmatpush1.msra.mxu0 %v1407
        %1915 = vmatprep.subr.mxu0 %v1404
        %1916 = vmatpush1.msra.mxu0 %v1403
        %1917 = vmatprep.subr.mxu0 %v1400
        %1918 = vmatpush1.msra.mxu0 %v1399
        %1919 = vmatprep.subr.mxu0 %v1396
        %1920 = vmatpush1.msra.mxu0 %v1395
        %1921 = vmatprep.subr.mxu0 %v1392
        %1922 = vmatpush1.msra.mxu0 %v1391
        %1923 = vmatprep.subr.mxu0 %v1388
        %1924 = vmatpush1.msra.mxu0 %v1387
        %1925 = vmatprep.subr.mxu0 %v1384
        %1926 = vmatpush1.msra.mxu0 %v1383
        %1927 = vmatprep.subr.mxu0 %v1380
        %1928 = vmatpush1.msra.mxu0 %v1379
        %1929 = vmatprep.subr.mxu0 %v1376
        %1930 = vmatpush1.msra.mxu0 %v1375
        %1931 = vmatprep.subr.mxu0 %v1372
        %1932 = vmatpush1.msra.mxu0 %v1371
        %1933 = vmatprep.subr.mxu0 %v1368
        %1934 = vmatpush1.msra.mxu0 %v1367
        %1935 = vmatprep.subr.mxu0 %v1364
        %1936 = vmatpush1.msra.mxu0 %v1363
        %1937 = vmatprep.subr.mxu0 0.0
        %1938 = vmatpush2.msra.mxu0 0.0
        %1939 = vmatprep.subr.mxu0 0.0
        %1940 = vmatpush2.msra.mxu0 0.0
        %1941 = vmatprep.subr.mxu0 0.0
        %1942 = vmatpush2.msra.mxu0 0.0
        %1943 = vmatprep.subr.mxu0 0.0
        %1944 = vmatpush2.msra.mxu0 0.0
        %1945 = vmatprep.subr.mxu0 0.0
        %1946 = vmatpush2.msra.mxu0 0.0
        %1947 = vmatprep.subr.mxu0 0.0
        %1948 = vmatpush2.msra.mxu0 0.0
        %1949 = vmatprep.subr.mxu0 0.0
        %1950 = vmatpush2.msra.mxu0 0.0
        %1951 = vmatprep.subr.mxu0 0.0
        %1952 = vmatpush2.msra.mxu0 0.0
        %1953 = vmatprep.subr.mxu0 0.0
        %1954 = vmatpush2.msra.mxu0 0.0
        %1955 = vmatprep.subr.mxu0 0.0
        %1956 = vmatpush2.msra.mxu0 0.0
        %1957 = vmatprep.subr.mxu0 0.0
        %1958 = vmatpush2.msra.mxu0 0.0
        %1959 = vmatprep.subr.mxu0 0.0
        %1960 = vmatpush2.msra.mxu0 0.0
        %1961 = vmatprep.subr.mxu0 0.0
        %1962 = vmatpush2.msra.mxu0 0.0
        %1963 = vmatprep.subr.mxu0 0.0
        %1964 = vmatpush2.msra.mxu0 0.0
        %1965 = vmatprep.subr.mxu0 0.0
        %1966 = vmatpush2.msra.mxu0 0.0
        %1967 = vmatprep.subr.mxu0 %v1428
        %1968 = vmatpush2.msra.mxu0 %v1427
        %1969 = vmatprep.mubr.f32.mxu0 %v1808
        %1970 = vmatmul.mubr.f32.gmra.mxu0 %v1531
        %v1971 = vpop.f32.mrf.mxu0
        %v1972 = vadd.f32 %v1782, %v1971
        %v1973 = vpop.f32.mrf.mxu0
        %v1974 = vadd.f32 %v1784, %v1973
        %1975 = vmatprep.mubr.f32.mxu0 %v1810
        %1976 = vmatmul.mubr.f32.gmra.mxu0 %v1549
        %v1977 = vpop.f32.mrf.mxu0
        %v1978 = vadd.f32 %v1788, %v1977
        %v1979 = vpop.f32.mrf.mxu0
        %v1980 = vadd.f32 %v1790, %v1979
        %1981 = vmatprep.mubr.f32.mxu0 %v1812
        %1982 = vmatmul.mubr.f32.gmra.mxu0 %v1567
        %v1983 = vpop.f32.mrf.mxu0
        %v1984 = vadd.f32 %v1794, %v1983
        %v1985 = vpop.f32.mrf.mxu0
        %v1986 = vadd.f32 %v1796, %v1985
        %1987 = vmatprep.mubr.f32.mxu0 %v1814
        %1988 = vmatmul.mubr.f32.gmra.mxu0 %v1585
        %v1989 = vpop.f32.mrf.mxu0
        %v1990 = vadd.f32 %v1800, %v1989
        %v1991 = vpop.f32.mrf.mxu0
        %v1992 = vadd.f32 %v1802, %v1991
        %1993 = vdwg.mxu0
        %s1994 = scalar_lea.vmem [#allocation6], 1088
        %v1995 = vld [vmem:[%s1994] sm:$0xff]
        %v1996 = vld [vmem:[%s1994 + $0x8] sm:$0xff]
        %v1997 = vld [vmem:[%s1994 + $0x10] sm:$0xff]
        %v1998 = vld [vmem:[%s1994 + $0x18] sm:$0xff]
        %v1999 = vld [vmem:[%s1994 + $0x20] sm:$0xff]
        %v2000 = vld [vmem:[%s1994 + $0x28] sm:$0xff]
        %v2001 = vld [vmem:[%s1994 + $0x30] sm:$0xff]
        %v2002 = vld [vmem:[%s1994 + $0x38] sm:$0xff]
        %v2003 = vld [vmem:[%s1994 + $0x40] sm:$0xff]
        %v2004 = vld [vmem:[%s1994 + $0x48] sm:$0xff]
        %v2005 = vld [vmem:[%s1994 + $0x50] sm:$0xff]
        %v2006 = vld [vmem:[%s1994 + $0x58] sm:$0xff]
        %v2007 = vld [vmem:[%s1994 + $0x60] sm:$0xff]
        %v2008 = vld [vmem:[%s1994 + $0x68] sm:$0xff]
        %v2009 = vld [vmem:[%s1994 + $0x70] sm:$0xff]
        %v2010 = vld [vmem:[%s1994 + $0x78] sm:$0xff]
        %v2011 = vld [vmem:[%s1994 + $0x80] sm:$0xff]
        %v2012 = vld [vmem:[%s1994 + $0x88] sm:$0xff]
        %v2013 = vld [vmem:[%s1994 + $0x90] sm:$0xff]
        %v2014 = vld [vmem:[%s1994 + $0x98] sm:$0xff]
        %v2015 = vld [vmem:[%s1994 + $0xa0] sm:$0xff]
        %v2016 = vld [vmem:[%s1994 + $0xa8] sm:$0xff]
        %v2017 = vld [vmem:[%s1994 + $0xb0] sm:$0xff]
        %v2018 = vld [vmem:[%s1994 + $0xb8] sm:$0xff]
        %v2019 = vld [vmem:[%s1994 + $0xc0] sm:$0xff]
        %v2020 = vld [vmem:[%s1994 + $0xc8] sm:$0xff]
        %v2021 = vld [vmem:[%s1994 + $0xd0] sm:$0xff]
        %v2022 = vld [vmem:[%s1994 + $0xd8] sm:$0xff]
        %v2023 = vld [vmem:[%s1994 + $0xe0] sm:$0xff]
        %v2024 = vld [vmem:[%s1994 + $0xe8] sm:$0xff]
        %v2025 = vld [vmem:[%s1994 + $0xf0] sm:$0xff]
        %v2026 = vld [vmem:[%s1994 + $0xf8] sm:$0xff]
        %v2027 = vld [vmem:[%s1994 + $0x100] sm:$0xff]
        %v2028 = vld [vmem:[%s1994 + $0x108] sm:$0xff]
        %v2029 = vld [vmem:[%s1994 + $0x110] sm:$0xff]
        %v2030 = vld [vmem:[%s1994 + $0x118] sm:$0xff]
        %v2031 = vld [vmem:[%s1994 + $0x120] sm:$0xff]
        %v2032 = vld [vmem:[%s1994 + $0x128] sm:$0xff]
        %v2033 = vld [vmem:[%s1994 + $0x130] sm:$0xff]
        %v2034 = vld [vmem:[%s1994 + $0x138] sm:$0xff]
        %v2035 = vld [vmem:[%s1994 + $0x140] sm:$0xff]
        %v2036 = vld [vmem:[%s1994 + $0x148] sm:$0xff]
        %v2037 = vld [vmem:[%s1994 + $0x150] sm:$0xff]
        %v2038 = vld [vmem:[%s1994 + $0x158] sm:$0xff]
        %v2039 = vld [vmem:[%s1994 + $0x160] sm:$0xff]
        %v2040 = vld [vmem:[%s1994 + $0x168] sm:$0xff]
        %v2041 = vld [vmem:[%s1994 + $0x170] sm:$0xff]
        %v2042 = vld [vmem:[%s1994 + $0x178] sm:$0xff]
        %v2043 = vld [vmem:[%s1994 + $0x180] sm:$0xff]
        %v2044 = vld [vmem:[%s1994 + $0x188] sm:$0xff]
        %v2045 = vld [vmem:[%s1994 + $0x190] sm:$0xff]
        %v2046 = vld [vmem:[%s1994 + $0x198] sm:$0xff]
        %v2047 = vld [vmem:[%s1994 + $0x1a0] sm:$0xff]
        %v2048 = vld [vmem:[%s1994 + $0x1a8] sm:$0xff]
        %v2049 = vld [vmem:[%s1994 + $0x1b0] sm:$0xff]
        %v2050 = vld [vmem:[%s1994 + $0x1b8] sm:$0xff]
        %v2051 = vld [vmem:[%s1994 + $0x1c0] sm:$0xff]
        %v2052 = vld [vmem:[%s1994 + $0x1c8] sm:$0xff]
        %v2053 = vld [vmem:[%s1994 + $0x1d0] sm:$0xff]
        %v2054 = vld [vmem:[%s1994 + $0x1d8] sm:$0xff]
        %v2055 = vld [vmem:[%s1994 + $0x1e0] sm:$0xff]
        %v2056 = vld [vmem:[%s1994 + $0x1e8] sm:$0xff]
        %v2057 = vld [vmem:[%s1994 + $0x1f0] sm:$0xff]
        %v2058 = vld [vmem:[%s1994 + $0x1f8] sm:$0xff]
        %v2059 = vld [vmem:[%s1994 + $0x200] sm:$0xff]
        %v2060 = vld [vmem:[%s1994 + $0x208] sm:$0xff]
        %v2061 = vld [vmem:[%s1994 + $0x210] sm:$0xff]
        %v2062 = vld [vmem:[%s1994 + $0x218] sm:$0xff]
        %v2063 = vcombine.low %v1345, %v1346
        %v2064 = vcombine.low %v1347, %v1348
        %v2066 = vunpack.c.l.s4 1983009808
        %v2067 = vunpack.c.0.s8 %v2066
        %v2068 = vlaneseq
        %v2069 = vshrl.u32 %v2068, 7
        %v2070 = vsub.s32 %v2067, %v2069
        %v2071 = vrot.slane %v2063, %v2070
        %v2073 = vunpack.c.l.s4 1983009808
        %v2074 = vunpack.c.0.s8 %v2073
        %v2075 = vlaneseq
        %v2076 = vshrl.u32 %v2075, 7
        %v2077 = vsub.s32 %v2074, %v2076
        %v2078 = vrot.slane %v2064, %v2077
        %v2079 = vcombine.low %v2071, %v2078
        %v2080 = vcombine.high %v2071, %v2078
        %v2081 = vcombine.low %v1349, %v1350
        %v2082 = vcombine.low %v1351, %v1352
        %v2084 = vunpack.c.l.s4 1983009808
        %v2085 = vunpack.c.0.s8 %v2084
        %v2086 = vlaneseq
        %v2087 = vshrl.u32 %v2086, 7
        %v2088 = vsub.s32 %v2085, %v2087
        %v2089 = vrot.slane %v2081, %v2088
        %v2091 = vunpack.c.l.s4 1983009808
        %v2092 = vunpack.c.0.s8 %v2091
        %v2093 = vlaneseq
        %v2094 = vshrl.u32 %v2093, 7
        %v2095 = vsub.s32 %v2092, %v2094
        %v2096 = vrot.slane %v2082, %v2095
        %v2097 = vcombine.low %v2089, %v2096
        %v2098 = vcombine.high %v2089, %v2096
        %v2099 = vcombine.low %v1353, %v1354
        %v2100 = vcombine.low %v1355, %v1356
        %v2102 = vunpack.c.l.s4 1983009808
        %v2103 = vunpack.c.0.s8 %v2102
        %v2104 = vlaneseq
        %v2105 = vshrl.u32 %v2104, 7
        %v2106 = vsub.s32 %v2103, %v2105
        %v2107 = vrot.slane %v2099, %v2106
        %v2109 = vunpack.c.l.s4 1983009808
        %v2110 = vunpack.c.0.s8 %v2109
        %v2111 = vlaneseq
        %v2112 = vshrl.u32 %v2111, 7
        %v2113 = vsub.s32 %v2110, %v2112
        %v2114 = vrot.slane %v2100, %v2113
        %v2115 = vcombine.low %v2107, %v2114
        %v2116 = vcombine.high %v2107, %v2114
        %v2117 = vcombine.low %v1357, %v1358
        %v2118 = vcombine.low %v1359, %v1360
        %v2120 = vunpack.c.l.s4 1983009808
        %v2121 = vunpack.c.0.s8 %v2120
        %v2122 = vlaneseq
        %v2123 = vshrl.u32 %v2122, 7
        %v2124 = vsub.s32 %v2121, %v2123
        %v2125 = vrot.slane %v2117, %v2124
        %v2127 = vunpack.c.l.s4 1983009808
        %v2128 = vunpack.c.0.s8 %v2127
        %v2129 = vlaneseq
        %v2130 = vshrl.u32 %v2129, 7
        %v2131 = vsub.s32 %v2128, %v2130
        %v2132 = vrot.slane %v2118, %v2131
        %v2133 = vcombine.low %v2125, %v2132
        %v2134 = vcombine.high %v2125, %v2132
        %v2139 = vsel %vm1617, %v2080, 0
        %v2141 = vsel %vm1617, %v2098, 0
        %v2143 = vsel %vm1617, %v2116, 0
        %v2145 = vsel %vm1617, %v2134, 0
        %2147 = vmatprep.subr.mxu0 %v2056
        %2148 = vmatpush1.msra.mxu0 %v2055
        %2149 = vmatprep.subr.mxu0 %v2052
        %2150 = vmatpush1.msra.mxu0 %v2051
        %2151 = vmatprep.subr.mxu0 %v2048
        %2152 = vmatpush1.msra.mxu0 %v2047
        %2153 = vmatprep.subr.mxu0 %v2044
        %2154 = vmatpush1.msra.mxu0 %v2043
        %2155 = vmatprep.subr.mxu0 %v2040
        %2156 = vmatpush1.msra.mxu0 %v2039
        %2157 = vmatprep.subr.mxu0 %v2036
        %2158 = vmatpush1.msra.mxu0 %v2035
        %2159 = vmatprep.subr.mxu0 %v2032
        %2160 = vmatpush1.msra.mxu0 %v2031
        %2161 = vmatprep.subr.mxu0 %v2028
        %2162 = vmatpush1.msra.mxu0 %v2027
        %2163 = vmatprep.subr.mxu0 %v2024
        %2164 = vmatpush1.msra.mxu0 %v2023
        %2165 = vmatprep.subr.mxu0 %v2020
        %2166 = vmatpush1.msra.mxu0 %v2019
        %2167 = vmatprep.subr.mxu0 %v2016
        %2168 = vmatpush1.msra.mxu0 %v2015
        %2169 = vmatprep.subr.mxu0 %v2012
        %2170 = vmatpush1.msra.mxu0 %v2011
        %2171 = vmatprep.subr.mxu0 %v2008
        %2172 = vmatpush1.msra.mxu0 %v2007
        %2173 = vmatprep.subr.mxu0 %v2004
        %2174 = vmatpush1.msra.mxu0 %v2003
        %2175 = vmatprep.subr.mxu0 %v2000
        %2176 = vmatpush1.msra.mxu0 %v1999
        %2177 = vmatprep.subr.mxu0 %v1996
        %2178 = vmatpush1.msra.mxu0 %v1995
        %2179 = vmatprep.subr.mxu0 0.0
        %2180 = vmatpush2.msra.mxu0 0.0
        %2181 = vmatprep.subr.mxu0 0.0
        %2182 = vmatpush2.msra.mxu0 0.0
        %2183 = vmatprep.subr.mxu0 0.0
        %2184 = vmatpush2.msra.mxu0 0.0
        %2185 = vmatprep.subr.mxu0 0.0
        %2186 = vmatpush2.msra.mxu0 0.0
        %2187 = vmatprep.subr.mxu0 0.0
        %2188 = vmatpush2.msra.mxu0 0.0
        %2189 = vmatprep.subr.mxu0 0.0
        %2190 = vmatpush2.msra.mxu0 0.0
        %2191 = vmatprep.subr.mxu0 0.0
        %2192 = vmatpush2.msra.mxu0 0.0
        %2193 = vmatprep.subr.mxu0 0.0
        %2194 = vmatpush2.msra.mxu0 0.0
        %2195 = vmatprep.subr.mxu0 0.0
        %2196 = vmatpush2.msra.mxu0 0.0
        %2197 = vmatprep.subr.mxu0 0.0
        %2198 = vmatpush2.msra.mxu0 0.0
        %2199 = vmatprep.subr.mxu0 0.0
        %2200 = vmatpush2.msra.mxu0 0.0
        %2201 = vmatprep.subr.mxu0 0.0
        %2202 = vmatpush2.msra.mxu0 0.0
        %2203 = vmatprep.subr.mxu0 0.0
        %2204 = vmatpush2.msra.mxu0 0.0
        %2205 = vmatprep.subr.mxu0 0.0
        %2206 = vmatpush2.msra.mxu0 0.0
        %2207 = vmatprep.subr.mxu0 0.0
        %2208 = vmatpush2.msra.mxu0 0.0
        %2209 = vmatprep.subr.mxu0 %v2060
        %2210 = vmatpush2.msra.mxu0 %v2059
        %2211 = vmatprep.mubr.f32.mxu0 %v2139
        %2212 = vmatmul.mubr.f32.gmra.mxu0 %v2079
        %v2213 = vpop.f32.mrf.mxu0
        %v2214 = vadd.f32 0.0, %v2213
        %v2215 = vpop.f32.mrf.mxu0
        %v2216 = vadd.f32 0.0, %v2215
        %2217 = vmatprep.mubr.f32.mxu0 %v2141
        %2218 = vmatmul.mubr.f32.gmra.mxu0 %v2097
        %v2219 = vpop.f32.mrf.mxu0
        %v2220 = vadd.f32 0.0, %v2219
        %v2221 = vpop.f32.mrf.mxu0
        %v2222 = vadd.f32 0.0, %v2221
        %2223 = vmatprep.mubr.f32.mxu0 %v2143
        %2224 = vmatmul.mubr.f32.gmra.mxu0 %v2115
        %v2225 = vpop.f32.mrf.mxu0
        %v2226 = vadd.f32 0.0, %v2225
        %v2227 = vpop.f32.mrf.mxu0
        %v2228 = vadd.f32 0.0, %v2227
        %2229 = vmatprep.mubr.f32.mxu0 %v2145
        %2230 = vmatmul.mubr.f32.gmra.mxu0 %v2133
        %v2231 = vpop.f32.mrf.mxu0
        %v2232 = vadd.f32 0.0, %v2231
        %v2233 = vpop.f32.mrf.mxu0
        %v2234 = vadd.f32 0.0, %v2233
        %2235 = vdwg.mxu0
        %2236 = vmatprep.subr.mxu0 %v2058
        %2237 = vmatpush1.msra.mxu0 %v2057
        %2238 = vmatprep.subr.mxu0 %v2054
        %2239 = vmatpush1.msra.mxu0 %v2053
        %2240 = vmatprep.subr.mxu0 %v2050
        %2241 = vmatpush1.msra.mxu0 %v2049
        %2242 = vmatprep.subr.mxu0 %v2046
        %2243 = vmatpush1.msra.mxu0 %v2045
        %2244 = vmatprep.subr.mxu0 %v2042
        %2245 = vmatpush1.msra.mxu0 %v2041
        %2246 = vmatprep.subr.mxu0 %v2038
        %2247 = vmatpush1.msra.mxu0 %v2037
        %2248 = vmatprep.subr.mxu0 %v2034
        %2249 = vmatpush1.msra.mxu0 %v2033
        %2250 = vmatprep.subr.mxu0 %v2030
        %2251 = vmatpush1.msra.mxu0 %v2029
        %2252 = vmatprep.subr.mxu0 %v2026
        %2253 = vmatpush1.msra.mxu0 %v2025
        %2254 = vmatprep.subr.mxu0 %v2022
        %2255 = vmatpush1.msra.mxu0 %v2021
        %2256 = vmatprep.subr.mxu0 %v2018
        %2257 = vmatpush1.msra.mxu0 %v2017
        %2258 = vmatprep.subr.mxu0 %v2014
        %2259 = vmatpush1.msra.mxu0 %v2013
        %2260 = vmatprep.subr.mxu0 %v2010
        %2261 = vmatpush1.msra.mxu0 %v2009
        %2262 = vmatprep.subr.mxu0 %v2006
        %2263 = vmatpush1.msra.mxu0 %v2005
        %2264 = vmatprep.subr.mxu0 %v2002
        %2265 = vmatpush1.msra.mxu0 %v2001
        %2266 = vmatprep.subr.mxu0 %v1998
        %2267 = vmatpush1.msra.mxu0 %v1997
        %2268 = vmatprep.subr.mxu0 0.0
        %2269 = vmatpush2.msra.mxu0 0.0
        %2270 = vmatprep.subr.mxu0 0.0
        %2271 = vmatpush2.msra.mxu0 0.0
        %2272 = vmatprep.subr.mxu0 0.0
        %2273 = vmatpush2.msra.mxu0 0.0
        %2274 = vmatprep.subr.mxu0 0.0
        %2275 = vmatpush2.msra.mxu0 0.0
        %2276 = vmatprep.subr.mxu0 0.0
        %2277 = vmatpush2.msra.mxu0 0.0
        %2278 = vmatprep.subr.mxu0 0.0
        %2279 = vmatpush2.msra.mxu0 0.0
        %2280 = vmatprep.subr.mxu0 0.0
        %2281 = vmatpush2.msra.mxu0 0.0
        %2282 = vmatprep.subr.mxu0 0.0
        %2283 = vmatpush2.msra.mxu0 0.0
        %2284 = vmatprep.subr.mxu0 0.0
        %2285 = vmatpush2.msra.mxu0 0.0
        %2286 = vmatprep.subr.mxu0 0.0
        %2287 = vmatpush2.msra.mxu0 0.0
        %2288 = vmatprep.subr.mxu0 0.0
        %2289 = vmatpush2.msra.mxu0 0.0
        %2290 = vmatprep.subr.mxu0 0.0
        %2291 = vmatpush2.msra.mxu0 0.0
        %2292 = vmatprep.subr.mxu0 0.0
        %2293 = vmatpush2.msra.mxu0 0.0
        %2294 = vmatprep.subr.mxu0 0.0
        %2295 = vmatpush2.msra.mxu0 0.0
        %2296 = vmatprep.subr.mxu0 0.0
        %2297 = vmatpush2.msra.mxu0 0.0
        %2298 = vmatprep.subr.mxu0 %v2062
        %2299 = vmatpush2.msra.mxu0 %v2061
        %2300 = vmatprep.mubr.f32.mxu0 %v2139
        %2301 = vmatmul.mubr.f32.gmra.mxu0 %v2079
        %v2302 = vpop.f32.mrf.mxu0
        %v2303 = vadd.f32 0.0, %v2302
        %v2304 = vpop.f32.mrf.mxu0
        %v2305 = vadd.f32 0.0, %v2304
        %2306 = vmatprep.mubr.f32.mxu0 %v2141
        %2307 = vmatmul.mubr.f32.gmra.mxu0 %v2097
        %v2308 = vpop.f32.mrf.mxu0
        %v2309 = vadd.f32 0.0, %v2308
        %v2310 = vpop.f32.mrf.mxu0
        %v2311 = vadd.f32 0.0, %v2310
        %2312 = vmatprep.mubr.f32.mxu0 %v2143
        %2313 = vmatmul.mubr.f32.gmra.mxu0 %v2115
        %v2314 = vpop.f32.mrf.mxu0
        %v2315 = vadd.f32 0.0, %v2314
        %v2316 = vpop.f32.mrf.mxu0
        %v2317 = vadd.f32 0.0, %v2316
        %2318 = vmatprep.mubr.f32.mxu0 %v2145
        %2319 = vmatmul.mubr.f32.gmra.mxu0 %v2133
        %v2320 = vpop.f32.mrf.mxu0
        %v2321 = vadd.f32 0.0, %v2320
        %v2322 = vpop.f32.mrf.mxu0
        %v2323 = vadd.f32 0.0, %v2322
        %2324 = vdwg.mxu0
        %v2325 = vadd.f32 %v1883, %v2214
        %v2326 = vadd.f32 %v1885, %v2216
        %v2327 = vadd.f32 %v1972, %v2303
        %v2328 = vadd.f32 %v1974, %v2305
        %v2329 = vadd.f32 %v1889, %v2220
        %v2330 = vadd.f32 %v1891, %v2222
        %v2331 = vadd.f32 %v1978, %v2309
        %v2332 = vadd.f32 %v1980, %v2311
        %v2333 = vadd.f32 %v1895, %v2226
        %v2334 = vadd.f32 %v1897, %v2228
        %v2335 = vadd.f32 %v1984, %v2315
        %v2336 = vadd.f32 %v1986, %v2317
        %v2337 = vadd.f32 %v1901, %v2232
        %v2338 = vadd.f32 %v1903, %v2234
        %v2339 = vadd.f32 %v1990, %v2321
        %v2340 = vadd.f32 %v1992, %v2323
        %v2341 = vld [vmem:[#allocation11] sm:$0xf]
        %v2343 = vlaneseq
        %v2344 = vshrl.u32 %v2343, 7
        %v2345 = vsub.s32 0, %v2344
        %v2346 = vrot.slane %v2341, %v2345
        %v2347 = vlaneseq
        %v2348 = vshrl.u32 %v2347, 7
        %v2349 = vsub.s32 1, %v2348
        %v2350 = vrot.slane %v2341, %v2349
        %v2351 = vlaneseq
        %v2352 = vshrl.u32 %v2351, 7
        %v2353 = vsub.s32 2, %v2352
        %v2354 = vrot.slane %v2341, %v2353
        %v2355 = vlaneseq
        %v2356 = vshrl.u32 %v2355, 7
        %v2357 = vsub.s32 3, %v2356
        %v2358 = vrot.slane %v2341, %v2357
        %v2363 = vadd.f32 %v2325, %v2346
        %v2364 = vadd.f32 %v2326, %v2350
        %v2365 = vadd.f32 %v2327, %v2354
        %v2366 = vadd.f32 %v2328, %v2358
        %v2367 = vadd.f32 %v2329, %v2346
        %v2368 = vadd.f32 %v2330, %v2350
        %v2369 = vadd.f32 %v2331, %v2354
        %v2370 = vadd.f32 %v2332, %v2358
        %v2371 = vadd.f32 %v2333, %v2346
        %v2372 = vadd.f32 %v2334, %v2350
        %v2373 = vadd.f32 %v2335, %v2354
        %v2374 = vadd.f32 %v2336, %v2358
        %v2375 = vadd.f32 %v2337, %v2346
        %v2376 = vadd.f32 %v2338, %v2350
        %v2377 = vadd.f32 %v2339, %v2354
        %v2378 = vadd.f32 %v2340, %v2358
        %v2379 = vmax.f32 %v2363, 0.0
        %v2380 = vmax.f32 %v2364, 0.0
        %v2381 = vmax.f32 %v2365, 0.0
        %v2382 = vmax.f32 %v2366, 0.0
        %v2383 = vmax.f32 %v2367, 0.0
        %v2384 = vmax.f32 %v2368, 0.0
        %v2385 = vmax.f32 %v2369, 0.0
        %v2386 = vmax.f32 %v2370, 0.0
        %v2387 = vmax.f32 %v2371, 0.0
        %v2388 = vmax.f32 %v2372, 0.0
        %v2389 = vmax.f32 %v2373, 0.0
        %v2390 = vmax.f32 %v2374, 0.0
        %v2391 = vmax.f32 %v2375, 0.0
        %v2392 = vmax.f32 %v2376, 0.0
        %v2393 = vmax.f32 %v2377, 0.0
        %v2394 = vmax.f32 %v2378, 0.0
        %vm2395 = vcmask 1043458
        %vm2396 = vmor %vm2395, %vm703
        %vm2397 = vcmask 62468
        %vm2398 = vmor %vm2397, %vm2396
        %2399 = vst.msk [vmem:[#allocation3] sm:$0x3f] %vm2398, 0.0
        %2400 = vst.msk [vmem:[#allocation3 + $0x6] sm:$0x3f] %vm2398, 0.0
        %2401 = vst.msk [vmem:[#allocation3 + $0xc] sm:$0x3f] %vm2398, 0.0
        %2402 = vst.msk [vmem:[#allocation3 + $0x12] sm:$0x3f] %vm2398, 0.0
        %2403 = vst.msk [vmem:[#allocation3 + $0x18] sm:$0x3f] %vm2398, 0.0
        %2404 = vst.msk [vmem:[#allocation3 + $0x1e] sm:$0x3f] %vm2398, 0.0
        %2405 = vst.msk [vmem:[#allocation3 + $0x24] sm:$0x3f] %vm2398, 0.0
        %2406 = vst.msk [vmem:[#allocation3 + $0x2a] sm:$0x3f] %vm2398, 0.0
        %2407 = vst.msk [vmem:[#allocation3 + $0x30] sm:$0x3f] %vm2398, 0.0
        %2408 = vst.msk [vmem:[#allocation3 + $0x36] sm:$0x3f] %vm2398, 0.0
        %2409 = vst.msk [vmem:[#allocation3 + $0x3c] sm:$0x3f] %vm2398, 0.0
        %2410 = vst.msk [vmem:[#allocation3 + $0x42] sm:$0x3f] %vm2398, 0.0
        %2411 = vst.msk [vmem:[#allocation3 + $0x48] sm:$0x3f] %vm2398, 0.0
        %2412 = vst.msk [vmem:[#allocation3 + $0x4e] sm:$0x3f] %vm2398, 0.0
        %2413 = vst.msk [vmem:[#allocation3 + $0x54] sm:$0x3f] %vm2398, 0.0
        %2414 = vst.msk [vmem:[#allocation3 + $0x5a] sm:$0x3f] %vm2398, 0.0
        %2415 = vst.msk [vmem:[#allocation3 + $0x60] sm:$0x3f] %vm2398, 0.0
        %2416 = vst.msk [vmem:[#allocation3 + $0x66] sm:$0x3f] %vm2398, 0.0
        %2417 = vst.msk [vmem:[#allocation3 + $0x6c] sm:$0x3f] %vm2398, 0.0
        %2418 = vst.msk [vmem:[#allocation3 + $0x72] sm:$0x3f] %vm2398, 0.0
        %2419 = vst.msk [vmem:[#allocation3 + $0x78] sm:$0x3f] %vm2398, 0.0
        %2420 = vst.msk [vmem:[#allocation3 + $0x7e] sm:$0x3f] %vm2398, 0.0
        %2421 = vst.msk [vmem:[#allocation3 + $0x84] sm:$0x3f] %vm2398, 0.0
        %2422 = vst.msk [vmem:[#allocation3 + $0x8a] sm:$0x3f] %vm2398, 0.0
        %2423 = vst.msk [vmem:[#allocation3 + $0x90] sm:$0x3f] %vm2398, 0.0
        %2424 = vst.msk [vmem:[#allocation3 + $0x96] sm:$0x3f] %vm2398, 0.0
        %2425 = vst.msk [vmem:[#allocation3 + $0x9c] sm:$0x3f] %vm2398, 0.0
        %2426 = vst.msk [vmem:[#allocation3 + $0xa2] sm:$0x3f] %vm2398, 0.0
        %2427 = vst.msk [vmem:[#allocation3 + $0xa8] sm:$0x3f] %vm2398, 0.0
        %2428 = vst.msk [vmem:[#allocation3 + $0xae] sm:$0x3f] %vm2398, 0.0
        %2429 = vst.msk [vmem:[#allocation3 + $0xb4] sm:$0x3f] %vm2398, 0.0
        %2430 = vst.msk [vmem:[#allocation3 + $0xba] sm:$0x3f] %vm2398, 0.0
        %2431 = vst.msk [vmem:[#allocation3 + $0xc0] sm:$0x3f] %vm2398, 0.0
        %v2440 = vcombine.low %v2379, %v2380
        %v2441 = vcombine.high %v2379, %v2380
        %v2443 = vunpack.c.l.s4 1966171168
        %v2444 = vunpack.c.0.s8 %v2443
        %v2445 = vlaneseq
        %v2446 = vshrl.u32 %v2445, 7
        %v2447 = vsub.s32 %v2444, %v2446
        %v2448 = vrot.slane %v2440, %v2447
        %v2450 = vunpack.c.l.s4 1966171168
        %v2451 = vunpack.c.0.s8 %v2450
        %v2452 = vlaneseq
        %v2453 = vshrl.u32 %v2452, 7
        %v2454 = vsub.s32 %v2451, %v2453
        %v2455 = vrot.slane %v2441, %v2454
        %v2456 = vcombine.high %v2448, %v2448
        %v2457 = vcombine.high %v2455, %v2455
        %v2459 = vunpack.c.l.s4 1966171168
        %v2460 = vunpack.c.0.s8 %v2459
        %v2461 = vlaneseq
        %v2462 = vshrl.u32 %v2461, 7
        %v2463 = vsub.s32 %v2460, %v2462
        %v2464 = vrot.slane %v2448, %v2463
        %v2466 = vunpack.c.l.s4 1966171168
        %v2467 = vunpack.c.0.s8 %v2466
        %v2468 = vlaneseq
        %v2469 = vshrl.u32 %v2468, 7
        %v2470 = vsub.s32 %v2467, %v2469
        %v2471 = vrot.slane %v2455, %v2470
        %v2473 = vunpack.c.l.s4 1966171168
        %v2474 = vunpack.c.0.s8 %v2473
        %v2475 = vlaneseq
        %v2476 = vshrl.u32 %v2475, 7
        %v2477 = vsub.s32 %v2474, %v2476
        %v2478 = vrot.slane %v2456, %v2477
        %v2480 = vunpack.c.l.s4 1966171168
        %v2481 = vunpack.c.0.s8 %v2480
        %v2482 = vlaneseq
        %v2483 = vshrl.u32 %v2482, 7
        %v2484 = vsub.s32 %v2481, %v2483
        %v2485 = vrot.slane %v2457, %v2484
        %v2486 = vcombine.high %v2464, %v2464
        %v2487 = vcombine.high %v2471, %v2471
        %v2488 = vcombine.high %v2478, %v2478
        %v2489 = vcombine.high %v2485, %v2485
        %v2490 = vcombine.low %v2383, %v2384
        %v2491 = vcombine.high %v2383, %v2384
        %v2493 = vunpack.c.l.s4 1966171168
        %v2494 = vunpack.c.0.s8 %v2493
        %v2495 = vlaneseq
        %v2496 = vshrl.u32 %v2495, 7
        %v2497 = vsub.s32 %v2494, %v2496
        %v2498 = vrot.slane %v2490, %v2497
        %v2500 = vunpack.c.l.s4 1966171168
        %v2501 = vunpack.c.0.s8 %v2500
        %v2502 = vlaneseq
        %v2503 = vshrl.u32 %v2502, 7
        %v2504 = vsub.s32 %v2501, %v2503
        %v2505 = vrot.slane %v2491, %v2504
        %v2506 = vcombine.high %v2498, %v2498
        %v2507 = vcombine.high %v2505, %v2505
        %v2509 = vunpack.c.l.s4 1966171168
        %v2510 = vunpack.c.0.s8 %v2509
        %v2511 = vlaneseq
        %v2512 = vshrl.u32 %v2511, 7
        %v2513 = vsub.s32 %v2510, %v2512
        %v2514 = vrot.slane %v2498, %v2513
        %v2516 = vunpack.c.l.s4 1966171168
        %v2517 = vunpack.c.0.s8 %v2516
        %v2518 = vlaneseq
        %v2519 = vshrl.u32 %v2518, 7
        %v2520 = vsub.s32 %v2517, %v2519
        %v2521 = vrot.slane %v2505, %v2520
        %v2523 = vunpack.c.l.s4 1966171168
        %v2524 = vunpack.c.0.s8 %v2523
        %v2525 = vlaneseq
        %v2526 = vshrl.u32 %v2525, 7
        %v2527 = vsub.s32 %v2524, %v2526
        %v2528 = vrot.slane %v2506, %v2527
        %v2530 = vunpack.c.l.s4 1966171168
        %v2531 = vunpack.c.0.s8 %v2530
        %v2532 = vlaneseq
        %v2533 = vshrl.u32 %v2532, 7
        %v2534 = vsub.s32 %v2531, %v2533
        %v2535 = vrot.slane %v2507, %v2534
        %v2536 = vcombine.high %v2514, %v2514
        %v2537 = vcombine.high %v2521, %v2521
        %v2538 = vcombine.high %v2528, %v2528
        %v2539 = vcombine.high %v2535, %v2535
        %v2540 = vcombine.low %v2387, %v2388
        %v2541 = vcombine.high %v2387, %v2388
        %v2543 = vunpack.c.l.s4 1966171168
        %v2544 = vunpack.c.0.s8 %v2543
        %v2545 = vlaneseq
        %v2546 = vshrl.u32 %v2545, 7
        %v2547 = vsub.s32 %v2544, %v2546
        %v2548 = vrot.slane %v2540, %v2547
        %v2550 = vunpack.c.l.s4 1966171168
        %v2551 = vunpack.c.0.s8 %v2550
        %v2552 = vlaneseq
        %v2553 = vshrl.u32 %v2552, 7
        %v2554 = vsub.s32 %v2551, %v2553
        %v2555 = vrot.slane %v2541, %v2554
        %v2556 = vcombine.high %v2548, %v2548
        %v2557 = vcombine.high %v2555, %v2555
        %v2559 = vunpack.c.l.s4 1966171168
        %v2560 = vunpack.c.0.s8 %v2559
        %v2561 = vlaneseq
        %v2562 = vshrl.u32 %v2561, 7
        %v2563 = vsub.s32 %v2560, %v2562
        %v2564 = vrot.slane %v2548, %v2563
        %v2566 = vunpack.c.l.s4 1966171168
        %v2567 = vunpack.c.0.s8 %v2566
        %v2568 = vlaneseq
        %v2569 = vshrl.u32 %v2568, 7
        %v2570 = vsub.s32 %v2567, %v2569
        %v2571 = vrot.slane %v2555, %v2570
        %v2573 = vunpack.c.l.s4 1966171168
        %v2574 = vunpack.c.0.s8 %v2573
        %v2575 = vlaneseq
        %v2576 = vshrl.u32 %v2575, 7
        %v2577 = vsub.s32 %v2574, %v2576
        %v2578 = vrot.slane %v2556, %v2577
        %v2580 = vunpack.c.l.s4 1966171168
        %v2581 = vunpack.c.0.s8 %v2580
        %v2582 = vlaneseq
        %v2583 = vshrl.u32 %v2582, 7
        %v2584 = vsub.s32 %v2581, %v2583
        %v2585 = vrot.slane %v2557, %v2584
        %v2586 = vcombine.high %v2564, %v2564
        %v2587 = vcombine.high %v2571, %v2571
        %v2588 = vcombine.high %v2578, %v2578
        %v2589 = vcombine.high %v2585, %v2585
        %v2590 = vcombine.low %v2391, %v2392
        %v2591 = vcombine.high %v2391, %v2392
        %v2593 = vunpack.c.l.s4 1966171168
        %v2594 = vunpack.c.0.s8 %v2593
        %v2595 = vlaneseq
        %v2596 = vshrl.u32 %v2595, 7
        %v2597 = vsub.s32 %v2594, %v2596
        %v2598 = vrot.slane %v2590, %v2597
        %v2600 = vunpack.c.l.s4 1966171168
        %v2601 = vunpack.c.0.s8 %v2600
        %v2602 = vlaneseq
        %v2603 = vshrl.u32 %v2602, 7
        %v2604 = vsub.s32 %v2601, %v2603
        %v2605 = vrot.slane %v2591, %v2604
        %v2606 = vcombine.high %v2598, %v2598
        %v2607 = vcombine.high %v2605, %v2605
        %v2609 = vunpack.c.l.s4 1966171168
        %v2610 = vunpack.c.0.s8 %v2609
        %v2611 = vlaneseq
        %v2612 = vshrl.u32 %v2611, 7
        %v2613 = vsub.s32 %v2610, %v2612
        %v2614 = vrot.slane %v2598, %v2613
        %v2616 = vunpack.c.l.s4 1966171168
        %v2617 = vunpack.c.0.s8 %v2616
        %v2618 = vlaneseq
        %v2619 = vshrl.u32 %v2618, 7
        %v2620 = vsub.s32 %v2617, %v2619
        %v2621 = vrot.slane %v2605, %v2620
        %v2623 = vunpack.c.l.s4 1966171168
        %v2624 = vunpack.c.0.s8 %v2623
        %v2625 = vlaneseq
        %v2626 = vshrl.u32 %v2625, 7
        %v2627 = vsub.s32 %v2624, %v2626
        %v2628 = vrot.slane %v2606, %v2627
        %v2630 = vunpack.c.l.s4 1966171168
        %v2631 = vunpack.c.0.s8 %v2630
        %v2632 = vlaneseq
        %v2633 = vshrl.u32 %v2632, 7
        %v2634 = vsub.s32 %v2631, %v2633
        %v2635 = vrot.slane %v2607, %v2634
        %v2636 = vcombine.high %v2614, %v2614
        %v2637 = vcombine.high %v2621, %v2621
        %v2638 = vcombine.high %v2628, %v2628
        %v2639 = vcombine.high %v2635, %v2635
        %2640 = vrot.lane.b32.xlu0 %v2464, 4
        %v2641 = vpop.permute.xlu0 %2640
        %2642 = vrot.lane.b32.xlu0 %v2478, 4
        %v2643 = vpop.permute.xlu0 %2642
        %2644 = vrot.lane.b32.xlu0 %v2486, 4
        %v2645 = vpop.permute.xlu0 %2644
        %2646 = vrot.lane.b32.xlu0 %v2488, 4
        %v2647 = vpop.permute.xlu0 %2646
        %2648 = vrot.lane.b32.xlu0 %v2471, 4
        %v2649 = vpop.permute.xlu0 %2648
        %2650 = vrot.lane.b32.xlu0 %v2485, 4
        %v2651 = vpop.permute.xlu0 %2650
        %2652 = vrot.lane.b32.xlu0 %v2487, 4
        %v2653 = vpop.permute.xlu0 %2652
        %2654 = vrot.lane.b32.xlu0 %v2489, 4
        %v2655 = vpop.permute.xlu0 %2654
        %2656 = vrot.lane.b32.xlu0 %v2514, 4
        %v2657 = vpop.permute.xlu0 %2656
        %2658 = vrot.lane.b32.xlu0 %v2528, 4
        %v2659 = vpop.permute.xlu0 %2658
        %2660 = vrot.lane.b32.xlu0 %v2536, 4
        %v2661 = vpop.permute.xlu0 %2660
        %2662 = vrot.lane.b32.xlu0 %v2538, 4
        %v2663 = vpop.permute.xlu0 %2662
        %2664 = vrot.lane.b32.xlu0 %v2521, 4
        %v2665 = vpop.permute.xlu0 %2664
        %2666 = vrot.lane.b32.xlu0 %v2535, 4
        %v2667 = vpop.permute.xlu0 %2666
        %2668 = vrot.lane.b32.xlu0 %v2537, 4
        %v2669 = vpop.permute.xlu0 %2668
        %2670 = vrot.lane.b32.xlu0 %v2539, 4
        %v2671 = vpop.permute.xlu0 %2670
        %2672 = vrot.lane.b32.xlu0 %v2564, 4
        %v2673 = vpop.permute.xlu0 %2672
        %2674 = vrot.lane.b32.xlu0 %v2578, 4
        %v2675 = vpop.permute.xlu0 %2674
        %2676 = vrot.lane.b32.xlu0 %v2586, 4
        %v2677 = vpop.permute.xlu0 %2676
        %2678 = vrot.lane.b32.xlu0 %v2588, 4
        %v2679 = vpop.permute.xlu0 %2678
        %2680 = vrot.lane.b32.xlu0 %v2571, 4
        %v2681 = vpop.permute.xlu0 %2680
        %2682 = vrot.lane.b32.xlu0 %v2585, 4
        %v2683 = vpop.permute.xlu0 %2682
        %2684 = vrot.lane.b32.xlu0 %v2587, 4
        %v2685 = vpop.permute.xlu0 %2684
        %2686 = vrot.lane.b32.xlu0 %v2589, 4
        %v2687 = vpop.permute.xlu0 %2686
        %2688 = vrot.lane.b32.xlu0 %v2614, 4
        %v2689 = vpop.permute.xlu0 %2688
        %2690 = vrot.lane.b32.xlu0 %v2628, 4
        %v2691 = vpop.permute.xlu0 %2690
        %2692 = vrot.lane.b32.xlu0 %v2636, 4
        %v2693 = vpop.permute.xlu0 %2692
        %2694 = vrot.lane.b32.xlu0 %v2638, 4
        %v2695 = vpop.permute.xlu0 %2694
        %2696 = vrot.lane.b32.xlu0 %v2621, 4
        %v2697 = vpop.permute.xlu0 %2696
        %2698 = vrot.lane.b32.xlu0 %v2635, 4
        %v2699 = vpop.permute.xlu0 %2698
        %2700 = vrot.lane.b32.xlu0 %v2637, 4
        %v2701 = vpop.permute.xlu0 %2700
        %2702 = vrot.lane.b32.xlu0 %v2639, 4
        %v2703 = vpop.permute.xlu0 %2702
        %v2704 = vrot.slane %v2641, 7
        %v2705 = vrot.slane %v2643, 7
        %v2706 = vrot.slane %v2645, 7
        %v2707 = vrot.slane %v2647, 7
        %v2708 = vrot.slane %v2649, 7
        %v2709 = vrot.slane %v2651, 7
        %v2710 = vrot.slane %v2653, 7
        %v2711 = vrot.slane %v2655, 7
        %v2712 = vrot.slane %v2657, 7
        %v2713 = vrot.slane %v2659, 7
        %v2714 = vrot.slane %v2661, 7
        %v2715 = vrot.slane %v2663, 7
        %v2716 = vrot.slane %v2665, 7
        %v2717 = vrot.slane %v2667, 7
        %v2718 = vrot.slane %v2669, 7
        %v2719 = vrot.slane %v2671, 7
        %v2720 = vrot.slane %v2673, 7
        %v2721 = vrot.slane %v2675, 7
        %v2722 = vrot.slane %v2677, 7
        %v2723 = vrot.slane %v2679, 7
        %v2724 = vrot.slane %v2681, 7
        %v2725 = vrot.slane %v2683, 7
        %v2726 = vrot.slane %v2685, 7
        %v2727 = vrot.slane %v2687, 7
        %v2728 = vrot.slane %v2689, 7
        %v2729 = vrot.slane %v2691, 7
        %v2730 = vrot.slane %v2693, 7
        %v2731 = vrot.slane %v2695, 7
        %v2732 = vrot.slane %v2697, 7
        %v2733 = vrot.slane %v2699, 7
        %v2734 = vrot.slane %v2701, 7
        %v2735 = vrot.slane %v2703, 7
        %v2736 = vsel %vm983, %v2704, %v2641
        %v2737 = vsel %vm983, %v2705, %v2643
        %v2738 = vsel %vm983, %v2706, %v2645
        %v2739 = vsel %vm983, %v2707, %v2647
        %v2740 = vsel %vm983, %v2708, %v2649
        %v2741 = vsel %vm983, %v2709, %v2651
        %v2742 = vsel %vm983, %v2710, %v2653
        %v2743 = vsel %vm983, %v2711, %v2655
        %v2744 = vsel %vm983, %v2712, %v2657
        %v2745 = vsel %vm983, %v2713, %v2659
        %v2746 = vsel %vm983, %v2714, %v2661
        %v2747 = vsel %vm983, %v2715, %v2663
        %v2748 = vsel %vm983, %v2716, %v2665
        %v2749 = vsel %vm983, %v2717, %v2667
        %v2750 = vsel %vm983, %v2718, %v2669
        %v2751 = vsel %vm983, %v2719, %v2671
        %v2752 = vsel %vm983, %v2720, %v2673
        %v2753 = vsel %vm983, %v2721, %v2675
        %v2754 = vsel %vm983, %v2722, %v2677
        %v2755 = vsel %vm983, %v2723, %v2679
        %v2756 = vsel %vm983, %v2724, %v2681
        %v2757 = vsel %vm983, %v2725, %v2683
        %v2758 = vsel %vm983, %v2726, %v2685
        %v2759 = vsel %vm983, %v2727, %v2687
        %v2760 = vsel %vm983, %v2728, %v2689
        %v2761 = vsel %vm983, %v2729, %v2691
        %v2762 = vsel %vm983, %v2730, %v2693
        %v2763 = vsel %vm983, %v2731, %v2695
        %v2764 = vsel %vm983, %v2732, %v2697
        %v2765 = vsel %vm983, %v2733, %v2699
        %v2766 = vsel %vm983, %v2734, %v2701
        %v2767 = vsel %vm983, %v2735, %v2703
        %v2800 = vlaneseq
        %vm2801 = vcmp.ge.s32.totalorder %v2800, 4
        %vm2802 = vcmp.lt.s32.totalorder %v2800, 260
        %vm2803 = vmand %vm2801, %vm2802
        %s2804 = scalar_lea.vmem [#allocation3], 1
        %2805 = vst.msk [vmem:[%s2804] ss:$2 sm:$0x7] %vm2803, %v2736
        %s2806 = scalar_lea.vmem [#allocation3], 7
        %2807 = vst.msk [vmem:[%s2806] ss:$2 sm:$0x7] %vm2803, %v2737
        %s2808 = scalar_lea.vmem [#allocation3], 13
        %2809 = vst.msk [vmem:[%s2808] ss:$2 sm:$0x7] %vm2803, %v2738
        %s2810 = scalar_lea.vmem [#allocation3], 19
        %2811 = vst.msk [vmem:[%s2810] ss:$2 sm:$0x7] %vm2803, %v2739
        %s2812 = scalar_lea.vmem [#allocation3], 25
        %2813 = vst.msk [vmem:[%s2812] ss:$2 sm:$0x7] %vm2803, %v2740
        %s2814 = scalar_lea.vmem [#allocation3], 31
        %2815 = vst.msk [vmem:[%s2814] ss:$2 sm:$0x7] %vm2803, %v2741
        %s2816 = scalar_lea.vmem [#allocation3], 37
        %2817 = vst.msk [vmem:[%s2816] ss:$2 sm:$0x7] %vm2803, %v2742
        %s2818 = scalar_lea.vmem [#allocation3], 43
        %2819 = vst.msk [vmem:[%s2818] ss:$2 sm:$0x7] %vm2803, %v2743
        %s2820 = scalar_lea.vmem [#allocation3], 49
        %2821 = vst.msk [vmem:[%s2820] ss:$2 sm:$0x7] %vm2803, %v2744
        %s2822 = scalar_lea.vmem [#allocation3], 55
        %2823 = vst.msk [vmem:[%s2822] ss:$2 sm:$0x7] %vm2803, %v2745
        %s2824 = scalar_lea.vmem [#allocation3], 61
        %2825 = vst.msk [vmem:[%s2824] ss:$2 sm:$0x7] %vm2803, %v2746
        %s2826 = scalar_lea.vmem [#allocation3], 67
        %2827 = vst.msk [vmem:[%s2826] ss:$2 sm:$0x7] %vm2803, %v2747
        %s2828 = scalar_lea.vmem [#allocation3], 73
        %2829 = vst.msk [vmem:[%s2828] ss:$2 sm:$0x7] %vm2803, %v2748
        %s2830 = scalar_lea.vmem [#allocation3], 79
        %2831 = vst.msk [vmem:[%s2830] ss:$2 sm:$0x7] %vm2803, %v2749
        %s2832 = scalar_lea.vmem [#allocation3], 85
        %2833 = vst.msk [vmem:[%s2832] ss:$2 sm:$0x7] %vm2803, %v2750
        %s2834 = scalar_lea.vmem [#allocation3], 91
        %2835 = vst.msk [vmem:[%s2834] ss:$2 sm:$0x7] %vm2803, %v2751
        %s2836 = scalar_lea.vmem [#allocation3], 97
        %2837 = vst.msk [vmem:[%s2836] ss:$2 sm:$0x7] %vm2803, %v2752
        %s2838 = scalar_lea.vmem [#allocation3], 103
        %2839 = vst.msk [vmem:[%s2838] ss:$2 sm:$0x7] %vm2803, %v2753
        %s2840 = scalar_lea.vmem [#allocation3], 109
        %2841 = vst.msk [vmem:[%s2840] ss:$2 sm:$0x7] %vm2803, %v2754
        %s2842 = scalar_lea.vmem [#allocation3], 115
        %2843 = vst.msk [vmem:[%s2842] ss:$2 sm:$0x7] %vm2803, %v2755
        %s2844 = scalar_lea.vmem [#allocation3], 121
        %2845 = vst.msk [vmem:[%s2844] ss:$2 sm:$0x7] %vm2803, %v2756
        %s2846 = scalar_lea.vmem [#allocation3], 127
        %2847 = vst.msk [vmem:[%s2846] ss:$2 sm:$0x7] %vm2803, %v2757
        %s2848 = scalar_lea.vmem [#allocation3], 133
        %2849 = vst.msk [vmem:[%s2848] ss:$2 sm:$0x7] %vm2803, %v2758
        %s2850 = scalar_lea.vmem [#allocation3], 139
        %2851 = vst.msk [vmem:[%s2850] ss:$2 sm:$0x7] %vm2803, %v2759
        %s2852 = scalar_lea.vmem [#allocation3], 145
        %2853 = vst.msk [vmem:[%s2852] ss:$2 sm:$0x7] %vm2803, %v2760
        %s2854 = scalar_lea.vmem [#allocation3], 151
        %2855 = vst.msk [vmem:[%s2854] ss:$2 sm:$0x7] %vm2803, %v2761
        %s2856 = scalar_lea.vmem [#allocation3], 157
        %2857 = vst.msk [vmem:[%s2856] ss:$2 sm:$0x7] %vm2803, %v2762
        %s2858 = scalar_lea.vmem [#allocation3], 163
        %2859 = vst.msk [vmem:[%s2858] ss:$2 sm:$0x7] %vm2803, %v2763
        %s2860 = scalar_lea.vmem [#allocation3], 169
        %2861 = vst.msk [vmem:[%s2860] ss:$2 sm:$0x7] %vm2803, %v2764
        %s2862 = scalar_lea.vmem [#allocation3], 175
        %2863 = vst.msk [vmem:[%s2862] ss:$2 sm:$0x7] %vm2803, %v2765
        %s2864 = scalar_lea.vmem [#allocation3], 181
        %2865 = vst.msk [vmem:[%s2864] ss:$2 sm:$0x7] %vm2803, %v2766
        %s2866 = scalar_lea.vmem [#allocation3], 187
        %2867 = vst.msk [vmem:[%s2866] ss:$2 sm:$0x7] %vm2803, %v2767
        %v2876 = vcombine.low %v2381, %v2382
        %v2877 = vcombine.high %v2381, %v2382
        %v2879 = vunpack.c.l.s4 1966171168
        %v2880 = vunpack.c.0.s8 %v2879
        %v2881 = vlaneseq
        %v2882 = vshrl.u32 %v2881, 7
        %v2883 = vsub.s32 %v2880, %v2882
        %v2884 = vrot.slane %v2876, %v2883
        %v2886 = vunpack.c.l.s4 1966171168
        %v2887 = vunpack.c.0.s8 %v2886
        %v2888 = vlaneseq
        %v2889 = vshrl.u32 %v2888, 7
        %v2890 = vsub.s32 %v2887, %v2889
        %v2891 = vrot.slane %v2877, %v2890
        %v2892 = vcombine.high %v2884, %v2884
        %v2893 = vcombine.high %v2891, %v2891
        %v2895 = vunpack.c.l.s4 1966171168
        %v2896 = vunpack.c.0.s8 %v2895
        %v2897 = vlaneseq
        %v2898 = vshrl.u32 %v2897, 7
        %v2899 = vsub.s32 %v2896, %v2898
        %v2900 = vrot.slane %v2884, %v2899
        %v2902 = vunpack.c.l.s4 1966171168
        %v2903 = vunpack.c.0.s8 %v2902
        %v2904 = vlaneseq
        %v2905 = vshrl.u32 %v2904, 7
        %v2906 = vsub.s32 %v2903, %v2905
        %v2907 = vrot.slane %v2891, %v2906
        %v2909 = vunpack.c.l.s4 1966171168
        %v2910 = vunpack.c.0.s8 %v2909
        %v2911 = vlaneseq
        %v2912 = vshrl.u32 %v2911, 7
        %v2913 = vsub.s32 %v2910, %v2912
        %v2914 = vrot.slane %v2892, %v2913
        %v2916 = vunpack.c.l.s4 1966171168
        %v2917 = vunpack.c.0.s8 %v2916
        %v2918 = vlaneseq
        %v2919 = vshrl.u32 %v2918, 7
        %v2920 = vsub.s32 %v2917, %v2919
        %v2921 = vrot.slane %v2893, %v2920
        %v2922 = vcombine.high %v2900, %v2900
        %v2923 = vcombine.high %v2907, %v2907
        %v2924 = vcombine.high %v2914, %v2914
        %v2925 = vcombine.high %v2921, %v2921
        %v2926 = vcombine.low %v2385, %v2386
        %v2927 = vcombine.high %v2385, %v2386
        %v2929 = vunpack.c.l.s4 1966171168
        %v2930 = vunpack.c.0.s8 %v2929
        %v2931 = vlaneseq
        %v2932 = vshrl.u32 %v2931, 7
        %v2933 = vsub.s32 %v2930, %v2932
        %v2934 = vrot.slane %v2926, %v2933
        %v2936 = vunpack.c.l.s4 1966171168
        %v2937 = vunpack.c.0.s8 %v2936
        %v2938 = vlaneseq
        %v2939 = vshrl.u32 %v2938, 7
        %v2940 = vsub.s32 %v2937, %v2939
        %v2941 = vrot.slane %v2927, %v2940
        %v2942 = vcombine.high %v2934, %v2934
        %v2943 = vcombine.high %v2941, %v2941
        %v2945 = vunpack.c.l.s4 1966171168
        %v2946 = vunpack.c.0.s8 %v2945
        %v2947 = vlaneseq
        %v2948 = vshrl.u32 %v2947, 7
        %v2949 = vsub.s32 %v2946, %v2948
        %v2950 = vrot.slane %v2934, %v2949
        %v2952 = vunpack.c.l.s4 1966171168
        %v2953 = vunpack.c.0.s8 %v2952
        %v2954 = vlaneseq
        %v2955 = vshrl.u32 %v2954, 7
        %v2956 = vsub.s32 %v2953, %v2955
        %v2957 = vrot.slane %v2941, %v2956
        %v2959 = vunpack.c.l.s4 1966171168
        %v2960 = vunpack.c.0.s8 %v2959
        %v2961 = vlaneseq
        %v2962 = vshrl.u32 %v2961, 7
        %v2963 = vsub.s32 %v2960, %v2962
        %v2964 = vrot.slane %v2942, %v2963
        %v2966 = vunpack.c.l.s4 1966171168
        %v2967 = vunpack.c.0.s8 %v2966
        %v2968 = vlaneseq
        %v2969 = vshrl.u32 %v2968, 7
        %v2970 = vsub.s32 %v2967, %v2969
        %v2971 = vrot.slane %v2943, %v2970
        %v2972 = vcombine.high %v2950, %v2950
        %v2973 = vcombine.high %v2957, %v2957
        %v2974 = vcombine.high %v2964, %v2964
        %v2975 = vcombine.high %v2971, %v2971
        %v2976 = vcombine.low %v2389, %v2390
        %v2977 = vcombine.high %v2389, %v2390
        %v2979 = vunpack.c.l.s4 1966171168
        %v2980 = vunpack.c.0.s8 %v2979
        %v2981 = vlaneseq
        %v2982 = vshrl.u32 %v2981, 7
        %v2983 = vsub.s32 %v2980, %v2982
        %v2984 = vrot.slane %v2976, %v2983
        %v2986 = vunpack.c.l.s4 1966171168
        %v2987 = vunpack.c.0.s8 %v2986
        %v2988 = vlaneseq
        %v2989 = vshrl.u32 %v2988, 7
        %v2990 = vsub.s32 %v2987, %v2989
        %v2991 = vrot.slane %v2977, %v2990
        %v2992 = vcombine.high %v2984, %v2984
        %v2993 = vcombine.high %v2991, %v2991
        %v2995 = vunpack.c.l.s4 1966171168
        %v2996 = vunpack.c.0.s8 %v2995
        %v2997 = vlaneseq
        %v2998 = vshrl.u32 %v2997, 7
        %v2999 = vsub.s32 %v2996, %v2998
        %v3000 = vrot.slane %v2984, %v2999
        %v3002 = vunpack.c.l.s4 1966171168
        %v3003 = vunpack.c.0.s8 %v3002
        %v3004 = vlaneseq
        %v3005 = vshrl.u32 %v3004, 7
        %v3006 = vsub.s32 %v3003, %v3005
        %v3007 = vrot.slane %v2991, %v3006
        %v3009 = vunpack.c.l.s4 1966171168
        %v3010 = vunpack.c.0.s8 %v3009
        %v3011 = vlaneseq
        %v3012 = vshrl.u32 %v3011, 7
        %v3013 = vsub.s32 %v3010, %v3012
        %v3014 = vrot.slane %v2992, %v3013
        %v3016 = vunpack.c.l.s4 1966171168
        %v3017 = vunpack.c.0.s8 %v3016
        %v3018 = vlaneseq
        %v3019 = vshrl.u32 %v3018, 7
        %v3020 = vsub.s32 %v3017, %v3019
        %v3021 = vrot.slane %v2993, %v3020
        %v3022 = vcombine.high %v3000, %v3000
        %v3023 = vcombine.high %v3007, %v3007
        %v3024 = vcombine.high %v3014, %v3014
        %v3025 = vcombine.high %v3021, %v3021
        %v3026 = vcombine.low %v2393, %v2394
        %v3027 = vcombine.high %v2393, %v2394
        %v3029 = vunpack.c.l.s4 1966171168
        %v3030 = vunpack.c.0.s8 %v3029
        %v3031 = vlaneseq
        %v3032 = vshrl.u32 %v3031, 7
        %v3033 = vsub.s32 %v3030, %v3032
        %v3034 = vrot.slane %v3026, %v3033
        %v3036 = vunpack.c.l.s4 1966171168
        %v3037 = vunpack.c.0.s8 %v3036
        %v3038 = vlaneseq
        %v3039 = vshrl.u32 %v3038, 7
        %v3040 = vsub.s32 %v3037, %v3039
        %v3041 = vrot.slane %v3027, %v3040
        %v3042 = vcombine.high %v3034, %v3034
        %v3043 = vcombine.high %v3041, %v3041
        %v3045 = vunpack.c.l.s4 1966171168
        %v3046 = vunpack.c.0.s8 %v3045
        %v3047 = vlaneseq
        %v3048 = vshrl.u32 %v3047, 7
        %v3049 = vsub.s32 %v3046, %v3048
        %v3050 = vrot.slane %v3034, %v3049
        %v3052 = vunpack.c.l.s4 1966171168
        %v3053 = vunpack.c.0.s8 %v3052
        %v3054 = vlaneseq
        %v3055 = vshrl.u32 %v3054, 7
        %v3056 = vsub.s32 %v3053, %v3055
        %v3057 = vrot.slane %v3041, %v3056
        %v3059 = vunpack.c.l.s4 1966171168
        %v3060 = vunpack.c.0.s8 %v3059
        %v3061 = vlaneseq
        %v3062 = vshrl.u32 %v3061, 7
        %v3063 = vsub.s32 %v3060, %v3062
        %v3064 = vrot.slane %v3042, %v3063
        %v3066 = vunpack.c.l.s4 1966171168
        %v3067 = vunpack.c.0.s8 %v3066
        %v3068 = vlaneseq
        %v3069 = vshrl.u32 %v3068, 7
        %v3070 = vsub.s32 %v3067, %v3069
        %v3071 = vrot.slane %v3043, %v3070
        %v3072 = vcombine.high %v3050, %v3050
        %v3073 = vcombine.high %v3057, %v3057
        %v3074 = vcombine.high %v3064, %v3064
        %v3075 = vcombine.high %v3071, %v3071
        %3076 = vrot.lane.b32.xlu0 %v2900, 4
        %v3077 = vpop.permute.xlu0 %3076
        %3078 = vrot.lane.b32.xlu0 %v2914, 4
        %v3079 = vpop.permute.xlu0 %3078
        %3080 = vrot.lane.b32.xlu0 %v2922, 4
        %v3081 = vpop.permute.xlu0 %3080
        %3082 = vrot.lane.b32.xlu0 %v2924, 4
        %v3083 = vpop.permute.xlu0 %3082
        %3084 = vrot.lane.b32.xlu0 %v2907, 4
        %v3085 = vpop.permute.xlu0 %3084
        %3086 = vrot.lane.b32.xlu0 %v2921, 4
        %v3087 = vpop.permute.xlu0 %3086
        %3088 = vrot.lane.b32.xlu0 %v2923, 4
        %v3089 = vpop.permute.xlu0 %3088
        %3090 = vrot.lane.b32.xlu0 %v2925, 4
        %v3091 = vpop.permute.xlu0 %3090
        %3092 = vrot.lane.b32.xlu0 %v2950, 4
        %v3093 = vpop.permute.xlu0 %3092
        %3094 = vrot.lane.b32.xlu0 %v2964, 4
        %v3095 = vpop.permute.xlu0 %3094
        %3096 = vrot.lane.b32.xlu0 %v2972, 4
        %v3097 = vpop.permute.xlu0 %3096
        %3098 = vrot.lane.b32.xlu0 %v2974, 4
        %v3099 = vpop.permute.xlu0 %3098
        %3100 = vrot.lane.b32.xlu0 %v2957, 4
        %v3101 = vpop.permute.xlu0 %3100
        %3102 = vrot.lane.b32.xlu0 %v2971, 4
        %v3103 = vpop.permute.xlu0 %3102
        %3104 = vrot.lane.b32.xlu0 %v2973, 4
        %v3105 = vpop.permute.xlu0 %3104
        %3106 = vrot.lane.b32.xlu0 %v2975, 4
        %v3107 = vpop.permute.xlu0 %3106
        %3108 = vrot.lane.b32.xlu0 %v3000, 4
        %v3109 = vpop.permute.xlu0 %3108
        %3110 = vrot.lane.b32.xlu0 %v3014, 4
        %v3111 = vpop.permute.xlu0 %3110
        %3112 = vrot.lane.b32.xlu0 %v3022, 4
        %v3113 = vpop.permute.xlu0 %3112
        %3114 = vrot.lane.b32.xlu0 %v3024, 4
        %v3115 = vpop.permute.xlu0 %3114
        %3116 = vrot.lane.b32.xlu0 %v3007, 4
        %v3117 = vpop.permute.xlu0 %3116
        %3118 = vrot.lane.b32.xlu0 %v3021, 4
        %v3119 = vpop.permute.xlu0 %3118
        %3120 = vrot.lane.b32.xlu0 %v3023, 4
        %v3121 = vpop.permute.xlu0 %3120
        %3122 = vrot.lane.b32.xlu0 %v3025, 4
        %v3123 = vpop.permute.xlu0 %3122
        %3124 = vrot.lane.b32.xlu0 %v3050, 4
        %v3125 = vpop.permute.xlu0 %3124
        %3126 = vrot.lane.b32.xlu0 %v3064, 4
        %v3127 = vpop.permute.xlu0 %3126
        %3128 = vrot.lane.b32.xlu0 %v3072, 4
        %v3129 = vpop.permute.xlu0 %3128
        %3130 = vrot.lane.b32.xlu0 %v3074, 4
        %v3131 = vpop.permute.xlu0 %3130
        %3132 = vrot.lane.b32.xlu0 %v3057, 4
        %v3133 = vpop.permute.xlu0 %3132
        %3134 = vrot.lane.b32.xlu0 %v3071, 4
        %v3135 = vpop.permute.xlu0 %3134
        %3136 = vrot.lane.b32.xlu0 %v3073, 4
        %v3137 = vpop.permute.xlu0 %3136
        %3138 = vrot.lane.b32.xlu0 %v3075, 4
        %v3139 = vpop.permute.xlu0 %3138
        %v3140 = vrot.slane %v3077, 7
        %v3141 = vrot.slane %v3079, 7
        %v3142 = vrot.slane %v3081, 7
        %v3143 = vrot.slane %v3083, 7
        %v3144 = vrot.slane %v3085, 7
        %v3145 = vrot.slane %v3087, 7
        %v3146 = vrot.slane %v3089, 7
        %v3147 = vrot.slane %v3091, 7
        %v3148 = vrot.slane %v3093, 7
        %v3149 = vrot.slane %v3095, 7
        %v3150 = vrot.slane %v3097, 7
        %v3151 = vrot.slane %v3099, 7
        %v3152 = vrot.slane %v3101, 7
        %v3153 = vrot.slane %v3103, 7
        %v3154 = vrot.slane %v3105, 7
        %v3155 = vrot.slane %v3107, 7
        %v3156 = vrot.slane %v3109, 7
        %v3157 = vrot.slane %v3111, 7
        %v3158 = vrot.slane %v3113, 7
        %v3159 = vrot.slane %v3115, 7
        %v3160 = vrot.slane %v3117, 7
        %v3161 = vrot.slane %v3119, 7
        %v3162 = vrot.slane %v3121, 7
        %v3163 = vrot.slane %v3123, 7
        %v3164 = vrot.slane %v3125, 7
        %v3165 = vrot.slane %v3127, 7
        %v3166 = vrot.slane %v3129, 7
        %v3167 = vrot.slane %v3131, 7
        %v3168 = vrot.slane %v3133, 7
        %v3169 = vrot.slane %v3135, 7
        %v3170 = vrot.slane %v3137, 7
        %v3171 = vrot.slane %v3139, 7
        %v3172 = vsel %vm983, %v3140, %v3077
        %v3173 = vsel %vm983, %v3141, %v3079
        %v3174 = vsel %vm983, %v3142, %v3081
        %v3175 = vsel %vm983, %v3143, %v3083
        %v3176 = vsel %vm983, %v3144, %v3085
        %v3177 = vsel %vm983, %v3145, %v3087
        %v3178 = vsel %vm983, %v3146, %v3089
        %v3179 = vsel %vm983, %v3147, %v3091
        %v3180 = vsel %vm983, %v3148, %v3093
        %v3181 = vsel %vm983, %v3149, %v3095
        %v3182 = vsel %vm983, %v3150, %v3097
        %v3183 = vsel %vm983, %v3151, %v3099
        %v3184 = vsel %vm983, %v3152, %v3101
        %v3185 = vsel %vm983, %v3153, %v3103
        %v3186 = vsel %vm983, %v3154, %v3105
        %v3187 = vsel %vm983, %v3155, %v3107
        %v3188 = vsel %vm983, %v3156, %v3109
        %v3189 = vsel %vm983, %v3157, %v3111
        %v3190 = vsel %vm983, %v3158, %v3113
        %v3191 = vsel %vm983, %v3159, %v3115
        %v3192 = vsel %vm983, %v3160, %v3117
        %v3193 = vsel %vm983, %v3161, %v3119
        %v3194 = vsel %vm983, %v3162, %v3121
        %v3195 = vsel %vm983, %v3163, %v3123
        %v3196 = vsel %vm983, %v3164, %v3125
        %v3197 = vsel %vm983, %v3165, %v3127
        %v3198 = vsel %vm983, %v3166, %v3129
        %v3199 = vsel %vm983, %v3167, %v3131
        %v3200 = vsel %vm983, %v3168, %v3133
        %v3201 = vsel %vm983, %v3169, %v3135
        %v3202 = vsel %vm983, %v3170, %v3137
        %v3203 = vsel %vm983, %v3171, %v3139
        %s3236 = scalar_lea.vmem [#allocation3], 6
        %3237 = vst.msk [vmem:[%s3236] ss:$2 sm:$0x7] %vm2803, %v3172
        %s3238 = scalar_lea.vmem %s3236, 6 [#allocation3]
        %3239 = vst.msk [vmem:[%s3238] ss:$2 sm:$0x7] %vm2803, %v3173
        %s3240 = scalar_lea.vmem %s3236, 12 [#allocation3]
        %3241 = vst.msk [vmem:[%s3240] ss:$2 sm:$0x7] %vm2803, %v3174
        %s3242 = scalar_lea.vmem %s3236, 18 [#allocation3]
        %3243 = vst.msk [vmem:[%s3242] ss:$2 sm:$0x7] %vm2803, %v3175
        %s3244 = scalar_lea.vmem %s3236, 24 [#allocation3]
        %3245 = vst.msk [vmem:[%s3244] ss:$2 sm:$0x7] %vm2803, %v3176
        %s3246 = scalar_lea.vmem %s3236, 30 [#allocation3]
        %3247 = vst.msk [vmem:[%s3246] ss:$2 sm:$0x7] %vm2803, %v3177
        %s3248 = scalar_lea.vmem %s3236, 36 [#allocation3]
        %3249 = vst.msk [vmem:[%s3248] ss:$2 sm:$0x7] %vm2803, %v3178
        %s3250 = scalar_lea.vmem %s3236, 42 [#allocation3]
        %3251 = vst.msk [vmem:[%s3250] ss:$2 sm:$0x7] %vm2803, %v3179
        %s3252 = scalar_lea.vmem %s3236, 48 [#allocation3]
        %3253 = vst.msk [vmem:[%s3252] ss:$2 sm:$0x7] %vm2803, %v3180
        %s3254 = scalar_lea.vmem %s3236, 54 [#allocation3]
        %3255 = vst.msk [vmem:[%s3254] ss:$2 sm:$0x7] %vm2803, %v3181
        %s3256 = scalar_lea.vmem %s3236, 60 [#allocation3]
        %3257 = vst.msk [vmem:[%s3256] ss:$2 sm:$0x7] %vm2803, %v3182
        %s3258 = scalar_lea.vmem %s3236, 66 [#allocation3]
        %3259 = vst.msk [vmem:[%s3258] ss:$2 sm:$0x7] %vm2803, %v3183
        %s3260 = scalar_lea.vmem %s3236, 72 [#allocation3]
        %3261 = vst.msk [vmem:[%s3260] ss:$2 sm:$0x7] %vm2803, %v3184
        %s3262 = scalar_lea.vmem %s3236, 78 [#allocation3]
        %3263 = vst.msk [vmem:[%s3262] ss:$2 sm:$0x7] %vm2803, %v3185
        %s3264 = scalar_lea.vmem %s3236, 84 [#allocation3]
        %3265 = vst.msk [vmem:[%s3264] ss:$2 sm:$0x7] %vm2803, %v3186
        %s3266 = scalar_lea.vmem %s3236, 90 [#allocation3]
        %3267 = vst.msk [vmem:[%s3266] ss:$2 sm:$0x7] %vm2803, %v3187
        %s3268 = scalar_lea.vmem %s3236, 96 [#allocation3]
        %3269 = vst.msk [vmem:[%s3268] ss:$2 sm:$0x7] %vm2803, %v3188
        %s3270 = scalar_lea.vmem %s3236, 102 [#allocation3]
        %3271 = vst.msk [vmem:[%s3270] ss:$2 sm:$0x7] %vm2803, %v3189
        %s3272 = scalar_lea.vmem %s3236, 108 [#allocation3]
        %3273 = vst.msk [vmem:[%s3272] ss:$2 sm:$0x7] %vm2803, %v3190
        %s3274 = scalar_lea.vmem %s3236, 114 [#allocation3]
        %3275 = vst.msk [vmem:[%s3274] ss:$2 sm:$0x7] %vm2803, %v3191
        %s3276 = scalar_lea.vmem %s3236, 120 [#allocation3]
        %3277 = vst.msk [vmem:[%s3276] ss:$2 sm:$0x7] %vm2803, %v3192
        %s3278 = scalar_lea.vmem %s3236, 126 [#allocation3]
        %3279 = vst.msk [vmem:[%s3278] ss:$2 sm:$0x7] %vm2803, %v3193
        %s3280 = scalar_lea.vmem %s3236, 132 [#allocation3]
        %3281 = vst.msk [vmem:[%s3280] ss:$2 sm:$0x7] %vm2803, %v3194
        %s3282 = scalar_lea.vmem %s3236, 138 [#allocation3]
        %3283 = vst.msk [vmem:[%s3282] ss:$2 sm:$0x7] %vm2803, %v3195
        %s3284 = scalar_lea.vmem %s3236, 144 [#allocation3]
        %3285 = vst.msk [vmem:[%s3284] ss:$2 sm:$0x7] %vm2803, %v3196
        %s3286 = scalar_lea.vmem %s3236, 150 [#allocation3]
        %3287 = vst.msk [vmem:[%s3286] ss:$2 sm:$0x7] %vm2803, %v3197
        %s3288 = scalar_lea.vmem %s3236, 156 [#allocation3]
        %3289 = vst.msk [vmem:[%s3288] ss:$2 sm:$0x7] %vm2803, %v3198
        %s3290 = scalar_lea.vmem %s3236, 162 [#allocation3]
        %3291 = vst.msk [vmem:[%s3290] ss:$2 sm:$0x7] %vm2803, %v3199
        %s3292 = scalar_lea.vmem %s3236, 168 [#allocation3]
        %3293 = vst.msk [vmem:[%s3292] ss:$2 sm:$0x7] %vm2803, %v3200
        %s3294 = scalar_lea.vmem %s3236, 174 [#allocation3]
        %3295 = vst.msk [vmem:[%s3294] ss:$2 sm:$0x7] %vm2803, %v3201
        %s3296 = scalar_lea.vmem %s3236, 180 [#allocation3]
        %3297 = vst.msk [vmem:[%s3296] ss:$2 sm:$0x7] %vm2803, %v3202
        %s3298 = scalar_lea.vmem %s3236, 186 [#allocation3]
        %3299 = vst.msk [vmem:[%s3298] ss:$2 sm:$0x7] %vm2803, %v3203
        %v3300 = vld [vmem:[#allocation3] sm:$0x3f]
        %v3301 = vld [vmem:[#allocation3 + $0x6] sm:$0x3f]
        %v3302 = vld [vmem:[#allocation3 + $0xc] sm:$0x3f]
        %v3303 = vld [vmem:[#allocation3 + $0x12] sm:$0x3f]
        %v3304 = vld [vmem:[#allocation3 + $0x18] sm:$0x3f]
        %v3305 = vld [vmem:[#allocation3 + $0x1e] sm:$0x3f]
        %v3306 = vld [vmem:[#allocation3 + $0x24] sm:$0x3f]
        %v3307 = vld [vmem:[#allocation3 + $0x2a] sm:$0x3f]
        %v3308 = vld [vmem:[#allocation3 + $0x30] sm:$0x3f]
        %v3309 = vld [vmem:[#allocation3 + $0x36] sm:$0x3f]
        %v3310 = vld [vmem:[#allocation3 + $0x3c] sm:$0x3f]
        %v3311 = vld [vmem:[#allocation3 + $0x42] sm:$0x3f]
        %v3312 = vld [vmem:[#allocation3 + $0x48] sm:$0x3f]
        %v3313 = vld [vmem:[#allocation3 + $0x4e] sm:$0x3f]
        %v3314 = vld [vmem:[#allocation3 + $0x54] sm:$0x3f]
        %v3315 = vld [vmem:[#allocation3 + $0x5a] sm:$0x3f]
        %v3316 = vld [vmem:[#allocation3 + $0x60] sm:$0x3f]
        %v3317 = vld [vmem:[#allocation3 + $0x66] sm:$0x3f]
        %v3318 = vld [vmem:[#allocation3 + $0x6c] sm:$0x3f]
        %v3319 = vld [vmem:[#allocation3 + $0x72] sm:$0x3f]
        %v3320 = vld [vmem:[#allocation3 + $0x78] sm:$0x3f]
        %v3321 = vld [vmem:[#allocation3 + $0x7e] sm:$0x3f]
        %v3322 = vld [vmem:[#allocation3 + $0x84] sm:$0x3f]
        %v3323 = vld [vmem:[#allocation3 + $0x8a] sm:$0x3f]
        %v3324 = vld [vmem:[#allocation3 + $0x90] sm:$0x3f]
        %v3325 = vld [vmem:[#allocation3 + $0x96] sm:$0x3f]
        %v3326 = vld [vmem:[#allocation3 + $0x9c] sm:$0x3f]
        %v3327 = vld [vmem:[#allocation3 + $0xa2] sm:$0x3f]
        %v3328 = vld [vmem:[#allocation3 + $0xa8] sm:$0x3f]
        %v3329 = vld [vmem:[#allocation3 + $0xae] sm:$0x3f]
        %v3330 = vld [vmem:[#allocation3 + $0xb4] sm:$0x3f]
        %v3331 = vld [vmem:[#allocation3 + $0xba] sm:$0x3f]
        %v3332 = vld [vmem:[#allocation3 + $0xc0] sm:$0x3f]
        %v3333 = vld [vmem:[#allocation8] sm:$0xff]
        %v3334 = vld [vmem:[#allocation8 + $0x8] sm:$0xff]
        %v3335 = vld [vmem:[#allocation8 + $0x10] sm:$0xff]
        %v3336 = vld [vmem:[#allocation8 + $0x18] sm:$0xff]
        %v3337 = vld [vmem:[#allocation8 + $0x20] sm:$0xff]
        %v3338 = vld [vmem:[#allocation8 + $0x28] sm:$0xff]
        %v3339 = vld [vmem:[#allocation8 + $0x30] sm:$0xff]
        %v3340 = vld [vmem:[#allocation8 + $0x38] sm:$0xff]
        %v3341 = vld [vmem:[#allocation8 + $0x40] sm:$0xff]
        %v3342 = vld [vmem:[#allocation8 + $0x48] sm:$0xff]
        %v3343 = vld [vmem:[#allocation8 + $0x50] sm:$0xff]
        %v3344 = vld [vmem:[#allocation8 + $0x58] sm:$0xff]
        %v3345 = vld [vmem:[#allocation8 + $0x60] sm:$0xff]
        %v3346 = vld [vmem:[#allocation8 + $0x68] sm:$0xff]
        %v3347 = vld [vmem:[#allocation8 + $0x70] sm:$0xff]
        %v3348 = vld [vmem:[#allocation8 + $0x78] sm:$0xff]
        %v3349 = vld [vmem:[#allocation8 + $0x80] sm:$0xff]
        %v3350 = vld [vmem:[#allocation8 + $0x88] sm:$0xff]
        %v3351 = vld [vmem:[#allocation8 + $0x90] sm:$0xff]
        %v3352 = vld [vmem:[#allocation8 + $0x98] sm:$0xff]
        %v3353 = vld [vmem:[#allocation8 + $0xa0] sm:$0xff]
        %v3354 = vld [vmem:[#allocation8 + $0xa8] sm:$0xff]
        %v3355 = vld [vmem:[#allocation8 + $0xb0] sm:$0xff]
        %v3356 = vld [vmem:[#allocation8 + $0xb8] sm:$0xff]
        %v3357 = vld [vmem:[#allocation8 + $0xc0] sm:$0xff]
        %v3358 = vld [vmem:[#allocation8 + $0xc8] sm:$0xff]
        %v3359 = vld [vmem:[#allocation8 + $0xd0] sm:$0xff]
        %v3360 = vld [vmem:[#allocation8 + $0xd8] sm:$0xff]
        %v3361 = vld [vmem:[#allocation8 + $0xe0] sm:$0xff]
        %v3362 = vld [vmem:[#allocation8 + $0xe8] sm:$0xff]
        %v3363 = vld [vmem:[#allocation8 + $0xf0] sm:$0xff]
        %v3364 = vld [vmem:[#allocation8 + $0xf8] sm:$0xff]
        %v3365 = vld [vmem:[#allocation8 + $0x100] sm:$0xff]
        %v3366 = vld [vmem:[#allocation8 + $0x108] sm:$0xff]
        %v3367 = vld [vmem:[#allocation8 + $0x110] sm:$0xff]
        %v3368 = vld [vmem:[#allocation8 + $0x118] sm:$0xff]
        %v3369 = vld [vmem:[#allocation8 + $0x120] sm:$0xff]
        %v3370 = vld [vmem:[#allocation8 + $0x128] sm:$0xff]
        %v3371 = vld [vmem:[#allocation8 + $0x130] sm:$0xff]
        %v3372 = vld [vmem:[#allocation8 + $0x138] sm:$0xff]
        %v3373 = vld [vmem:[#allocation8 + $0x140] sm:$0xff]
        %v3374 = vld [vmem:[#allocation8 + $0x148] sm:$0xff]
        %v3375 = vld [vmem:[#allocation8 + $0x150] sm:$0xff]
        %v3376 = vld [vmem:[#allocation8 + $0x158] sm:$0xff]
        %v3377 = vld [vmem:[#allocation8 + $0x160] sm:$0xff]
        %v3378 = vld [vmem:[#allocation8 + $0x168] sm:$0xff]
        %v3379 = vld [vmem:[#allocation8 + $0x170] sm:$0xff]
        %v3380 = vld [vmem:[#allocation8 + $0x178] sm:$0xff]
        %v3381 = vld [vmem:[#allocation8 + $0x180] sm:$0xff]
        %v3382 = vld [vmem:[#allocation8 + $0x188] sm:$0xff]
        %v3383 = vld [vmem:[#allocation8 + $0x190] sm:$0xff]
        %v3384 = vld [vmem:[#allocation8 + $0x198] sm:$0xff]
        %v3385 = vld [vmem:[#allocation8 + $0x1a0] sm:$0xff]
        %v3386 = vld [vmem:[#allocation8 + $0x1a8] sm:$0xff]
        %v3387 = vld [vmem:[#allocation8 + $0x1b0] sm:$0xff]
        %v3388 = vld [vmem:[#allocation8 + $0x1b8] sm:$0xff]
        %v3389 = vld [vmem:[#allocation8 + $0x1c0] sm:$0xff]
        %v3390 = vld [vmem:[#allocation8 + $0x1c8] sm:$0xff]
        %v3391 = vld [vmem:[#allocation8 + $0x1d0] sm:$0xff]
        %v3392 = vld [vmem:[#allocation8 + $0x1d8] sm:$0xff]
        %v3393 = vld [vmem:[#allocation8 + $0x1e0] sm:$0xff]
        %v3394 = vld [vmem:[#allocation8 + $0x1e8] sm:$0xff]
        %v3395 = vld [vmem:[#allocation8 + $0x1f0] sm:$0xff]
        %v3396 = vld [vmem:[#allocation8 + $0x1f8] sm:$0xff]
        %v3397 = vld [vmem:[#allocation8 + $0x200] sm:$0xff]
        %v3398 = vld [vmem:[#allocation8 + $0x208] sm:$0xff]
        %v3399 = vld [vmem:[#allocation8 + $0x210] sm:$0xff]
        %v3400 = vld [vmem:[#allocation8 + $0x218] sm:$0xff]
        %v3401 = vld [vmem:[#allocation8 + $0x220] sm:$0xff]
        %v3402 = vld [vmem:[#allocation8 + $0x228] sm:$0xff]
        %v3403 = vld [vmem:[#allocation8 + $0x230] sm:$0xff]
        %v3404 = vld [vmem:[#allocation8 + $0x238] sm:$0xff]
        %v3405 = vld [vmem:[#allocation8 + $0x240] sm:$0xff]
        %v3406 = vld [vmem:[#allocation8 + $0x248] sm:$0xff]
        %v3407 = vld [vmem:[#allocation8 + $0x250] sm:$0xff]
        %v3408 = vld [vmem:[#allocation8 + $0x258] sm:$0xff]
        %v3409 = vld [vmem:[#allocation8 + $0x260] sm:$0xff]
        %v3410 = vld [vmem:[#allocation8 + $0x268] sm:$0xff]
        %v3411 = vld [vmem:[#allocation8 + $0x270] sm:$0xff]
        %v3412 = vld [vmem:[#allocation8 + $0x278] sm:$0xff]
        %v3413 = vld [vmem:[#allocation8 + $0x280] sm:$0xff]
        %v3414 = vld [vmem:[#allocation8 + $0x288] sm:$0xff]
        %v3415 = vld [vmem:[#allocation8 + $0x290] sm:$0xff]
        %v3416 = vld [vmem:[#allocation8 + $0x298] sm:$0xff]
        %v3417 = vld [vmem:[#allocation8 + $0x2a0] sm:$0xff]
        %v3418 = vld [vmem:[#allocation8 + $0x2a8] sm:$0xff]
        %v3419 = vld [vmem:[#allocation8 + $0x2b0] sm:$0xff]
        %v3420 = vld [vmem:[#allocation8 + $0x2b8] sm:$0xff]
        %v3421 = vld [vmem:[#allocation8 + $0x2c0] sm:$0xff]
        %v3422 = vld [vmem:[#allocation8 + $0x2c8] sm:$0xff]
        %v3423 = vld [vmem:[#allocation8 + $0x2d0] sm:$0xff]
        %v3424 = vld [vmem:[#allocation8 + $0x2d8] sm:$0xff]
        %v3425 = vld [vmem:[#allocation8 + $0x2e0] sm:$0xff]
        %v3426 = vld [vmem:[#allocation8 + $0x2e8] sm:$0xff]
        %v3427 = vld [vmem:[#allocation8 + $0x2f0] sm:$0xff]
        %v3428 = vld [vmem:[#allocation8 + $0x2f8] sm:$0xff]
        %v3429 = vld [vmem:[#allocation8 + $0x300] sm:$0xff]
        %v3430 = vld [vmem:[#allocation8 + $0x308] sm:$0xff]
        %v3431 = vld [vmem:[#allocation8 + $0x310] sm:$0xff]
        %v3432 = vld [vmem:[#allocation8 + $0x318] sm:$0xff]
        %v3433 = vld [vmem:[#allocation8 + $0x320] sm:$0xff]
        %v3434 = vld [vmem:[#allocation8 + $0x328] sm:$0xff]
        %v3435 = vld [vmem:[#allocation8 + $0x330] sm:$0xff]
        %v3436 = vld [vmem:[#allocation8 + $0x338] sm:$0xff]
        %v3437 = vld [vmem:[#allocation8 + $0x340] sm:$0xff]
        %v3438 = vld [vmem:[#allocation8 + $0x348] sm:$0xff]
        %v3439 = vld [vmem:[#allocation8 + $0x350] sm:$0xff]
        %v3440 = vld [vmem:[#allocation8 + $0x358] sm:$0xff]
        %v3441 = vld [vmem:[#allocation8 + $0x360] sm:$0xff]
        %v3442 = vld [vmem:[#allocation8 + $0x368] sm:$0xff]
        %v3443 = vld [vmem:[#allocation8 + $0x370] sm:$0xff]
        %v3444 = vld [vmem:[#allocation8 + $0x378] sm:$0xff]
        %v3445 = vld [vmem:[#allocation8 + $0x380] sm:$0xff]
        %v3446 = vld [vmem:[#allocation8 + $0x388] sm:$0xff]
        %v3447 = vld [vmem:[#allocation8 + $0x390] sm:$0xff]
        %v3448 = vld [vmem:[#allocation8 + $0x398] sm:$0xff]
        %v3449 = vld [vmem:[#allocation8 + $0x3a0] sm:$0xff]
        %v3450 = vld [vmem:[#allocation8 + $0x3a8] sm:$0xff]
        %v3451 = vld [vmem:[#allocation8 + $0x3b0] sm:$0xff]
        %v3452 = vld [vmem:[#allocation8 + $0x3b8] sm:$0xff]
        %v3453 = vld [vmem:[#allocation8 + $0x3c0] sm:$0xff]
        %v3454 = vld [vmem:[#allocation8 + $0x3c8] sm:$0xff]
        %v3455 = vld [vmem:[#allocation8 + $0x3d0] sm:$0xff]
        %v3456 = vld [vmem:[#allocation8 + $0x3d8] sm:$0xff]
        %v3457 = vld [vmem:[#allocation8 + $0x3e0] sm:$0xff]
        %v3458 = vld [vmem:[#allocation8 + $0x3e8] sm:$0xff]
        %v3459 = vld [vmem:[#allocation8 + $0x3f0] sm:$0xff]
        %v3460 = vld [vmem:[#allocation8 + $0x3f8] sm:$0xff]
        %v3461 = vld [vmem:[#allocation8 + $0x400] sm:$0xff]
        %v3462 = vld [vmem:[#allocation8 + $0x408] sm:$0xff]
        %v3463 = vld [vmem:[#allocation8 + $0x410] sm:$0xff]
        %v3464 = vld [vmem:[#allocation8 + $0x418] sm:$0xff]
        %v3465 = vld [vmem:[#allocation8 + $0x420] sm:$0xff]
        %v3466 = vld [vmem:[#allocation8 + $0x428] sm:$0xff]
        %v3467 = vld [vmem:[#allocation8 + $0x430] sm:$0xff]
        %v3468 = vld [vmem:[#allocation8 + $0x438] sm:$0xff]
        %v3469 = vld [vmem:[#allocation8 + $0x440] sm:$0xff]
        %v3470 = vld [vmem:[#allocation8 + $0x448] sm:$0xff]
        %v3471 = vld [vmem:[#allocation8 + $0x450] sm:$0xff]
        %v3472 = vld [vmem:[#allocation8 + $0x458] sm:$0xff]
        %v3473 = vld [vmem:[#allocation8 + $0x460] sm:$0xff]
        %v3474 = vld [vmem:[#allocation8 + $0x468] sm:$0xff]
        %v3475 = vld [vmem:[#allocation8 + $0x470] sm:$0xff]
        %v3476 = vld [vmem:[#allocation8 + $0x478] sm:$0xff]
        %v3477 = vld [vmem:[#allocation8 + $0x480] sm:$0xff]
        %v3478 = vld [vmem:[#allocation8 + $0x488] sm:$0xff]
        %v3479 = vld [vmem:[#allocation8 + $0x490] sm:$0xff]
        %v3480 = vld [vmem:[#allocation8 + $0x498] sm:$0xff]
        %v3481 = vld [vmem:[#allocation8 + $0x4a0] sm:$0xff]
        %v3482 = vld [vmem:[#allocation8 + $0x4a8] sm:$0xff]
        %v3483 = vld [vmem:[#allocation8 + $0x4b0] sm:$0xff]
        %v3484 = vld [vmem:[#allocation8 + $0x4b8] sm:$0xff]
        %v3485 = vld [vmem:[#allocation8 + $0x4c0] sm:$0xff]
        %v3486 = vld [vmem:[#allocation8 + $0x4c8] sm:$0xff]
        %v3487 = vld [vmem:[#allocation8 + $0x4d0] sm:$0xff]
        %v3488 = vld [vmem:[#allocation8 + $0x4d8] sm:$0xff]
        %v3489 = vld [vmem:[#allocation8 + $0x4e0] sm:$0xff]
        %v3490 = vld [vmem:[#allocation8 + $0x4e8] sm:$0xff]
        %v3491 = vld [vmem:[#allocation8 + $0x4f0] sm:$0xff]
        %v3492 = vld [vmem:[#allocation8 + $0x4f8] sm:$0xff]
        %v3493 = vld [vmem:[#allocation8 + $0x500] sm:$0xff]
        %v3494 = vld [vmem:[#allocation8 + $0x508] sm:$0xff]
        %v3495 = vld [vmem:[#allocation8 + $0x510] sm:$0xff]
        %v3496 = vld [vmem:[#allocation8 + $0x518] sm:$0xff]
        %v3497 = vld [vmem:[#allocation8 + $0x520] sm:$0xff]
        %v3498 = vld [vmem:[#allocation8 + $0x528] sm:$0xff]
        %v3499 = vld [vmem:[#allocation8 + $0x530] sm:$0xff]
        %v3500 = vld [vmem:[#allocation8 + $0x538] sm:$0xff]
        %v3501 = vld [vmem:[#allocation8 + $0x540] sm:$0xff]
        %v3502 = vld [vmem:[#allocation8 + $0x548] sm:$0xff]
        %v3503 = vld [vmem:[#allocation8 + $0x550] sm:$0xff]
        %v3504 = vld [vmem:[#allocation8 + $0x558] sm:$0xff]
        %v3505 = vld [vmem:[#allocation8 + $0x560] sm:$0xff]
        %v3506 = vld [vmem:[#allocation8 + $0x568] sm:$0xff]
        %v3507 = vld [vmem:[#allocation8 + $0x570] sm:$0xff]
        %v3508 = vld [vmem:[#allocation8 + $0x578] sm:$0xff]
        %v3509 = vld [vmem:[#allocation8 + $0x580] sm:$0xff]
        %v3510 = vld [vmem:[#allocation8 + $0x588] sm:$0xff]
        %v3511 = vld [vmem:[#allocation8 + $0x590] sm:$0xff]
        %v3512 = vld [vmem:[#allocation8 + $0x598] sm:$0xff]
        %v3513 = vld [vmem:[#allocation8 + $0x5a0] sm:$0xff]
        %v3514 = vld [vmem:[#allocation8 + $0x5a8] sm:$0xff]
        %v3515 = vld [vmem:[#allocation8 + $0x5b0] sm:$0xff]
        %v3516 = vld [vmem:[#allocation8 + $0x5b8] sm:$0xff]
        %v3517 = vld [vmem:[#allocation8 + $0x5c0] sm:$0xff]
        %v3518 = vld [vmem:[#allocation8 + $0x5c8] sm:$0xff]
        %v3519 = vld [vmem:[#allocation8 + $0x5d0] sm:$0xff]
        %v3520 = vld [vmem:[#allocation8 + $0x5d8] sm:$0xff]
        %v3521 = vld [vmem:[#allocation8 + $0x5e0] sm:$0xff]
        %v3522 = vld [vmem:[#allocation8 + $0x5e8] sm:$0xff]
        %v3523 = vld [vmem:[#allocation8 + $0x5f0] sm:$0xff]
        %v3524 = vld [vmem:[#allocation8 + $0x5f8] sm:$0xff]
        %v3525 = vld [vmem:[#allocation8 + $0x600] sm:$0xff]
        %v3526 = vld [vmem:[#allocation8 + $0x608] sm:$0xff]
        %v3527 = vld [vmem:[#allocation8 + $0x610] sm:$0xff]
        %v3528 = vld [vmem:[#allocation8 + $0x618] sm:$0xff]
        %v3529 = vld [vmem:[#allocation8 + $0x620] sm:$0xff]
        %v3530 = vld [vmem:[#allocation8 + $0x628] sm:$0xff]
        %s3531 = scalar_lea.vmem [#allocation8], 1584
        %v3532 = vld [vmem:[%s3531] sm:$0xff]
        %v3533 = vld [vmem:[%s3531 + $0x8] sm:$0xff]
        %v3534 = vld [vmem:[%s3531 + $0x10] sm:$0xff]
        %v3535 = vld [vmem:[%s3531 + $0x18] sm:$0xff]
        %v3536 = vld [vmem:[%s3531 + $0x20] sm:$0xff]
        %v3537 = vld [vmem:[%s3531 + $0x28] sm:$0xff]
        %v3538 = vld [vmem:[%s3531 + $0x30] sm:$0xff]
        %v3539 = vld [vmem:[%s3531 + $0x38] sm:$0xff]
        %v3540 = vld [vmem:[%s3531 + $0x40] sm:$0xff]
        %v3541 = vld [vmem:[%s3531 + $0x48] sm:$0xff]
        %v3542 = vld [vmem:[%s3531 + $0x50] sm:$0xff]
        %v3543 = vld [vmem:[%s3531 + $0x58] sm:$0xff]
        %v3544 = vld [vmem:[%s3531 + $0x60] sm:$0xff]
        %v3545 = vld [vmem:[%s3531 + $0x68] sm:$0xff]
        %v3546 = vld [vmem:[%s3531 + $0x70] sm:$0xff]
        %v3547 = vld [vmem:[%s3531 + $0x78] sm:$0xff]
        %v3548 = vld [vmem:[%s3531 + $0x80] sm:$0xff]
        %v3549 = vld [vmem:[%s3531 + $0x88] sm:$0xff]
        %v3550 = vld [vmem:[%s3531 + $0x90] sm:$0xff]
        %v3551 = vld [vmem:[%s3531 + $0x98] sm:$0xff]
        %v3552 = vld [vmem:[%s3531 + $0xa0] sm:$0xff]
        %v3553 = vld [vmem:[%s3531 + $0xa8] sm:$0xff]
        %v3554 = vld [vmem:[%s3531 + $0xb0] sm:$0xff]
        %v3555 = vld [vmem:[%s3531 + $0xb8] sm:$0xff]
        %v3556 = vld [vmem:[%s3531 + $0xc0] sm:$0xff]
        %v3557 = vld [vmem:[%s3531 + $0xc8] sm:$0xff]
        %v3558 = vld [vmem:[%s3531 + $0xd0] sm:$0xff]
        %v3559 = vld [vmem:[%s3531 + $0xd8] sm:$0xff]
        %v3560 = vld [vmem:[%s3531 + $0xe0] sm:$0xff]
        %v3561 = vld [vmem:[%s3531 + $0xe8] sm:$0xff]
        %v3562 = vld [vmem:[%s3531 + $0xf0] sm:$0xff]
        %v3563 = vld [vmem:[%s3531 + $0xf8] sm:$0xff]
        %v3564 = vld [vmem:[%s3531 + $0x100] sm:$0xff]
        %v3565 = vld [vmem:[%s3531 + $0x108] sm:$0xff]
        %v3566 = vld [vmem:[%s3531 + $0x110] sm:$0xff]
        %v3567 = vld [vmem:[%s3531 + $0x118] sm:$0xff]
        %v3568 = vld [vmem:[%s3531 + $0x120] sm:$0xff]
        %v3569 = vld [vmem:[%s3531 + $0x128] sm:$0xff]
        %v3570 = vld [vmem:[%s3531 + $0x130] sm:$0xff]
        %v3571 = vld [vmem:[%s3531 + $0x138] sm:$0xff]
        %v3572 = vld [vmem:[%s3531 + $0x140] sm:$0xff]
        %v3573 = vld [vmem:[%s3531 + $0x148] sm:$0xff]
        %v3574 = vld [vmem:[%s3531 + $0x150] sm:$0xff]
        %v3575 = vld [vmem:[%s3531 + $0x158] sm:$0xff]
        %v3576 = vld [vmem:[%s3531 + $0x160] sm:$0xff]
        %v3577 = vld [vmem:[%s3531 + $0x168] sm:$0xff]
        %v3578 = vld [vmem:[%s3531 + $0x170] sm:$0xff]
        %v3579 = vld [vmem:[%s3531 + $0x178] sm:$0xff]
        %v3580 = vld [vmem:[%s3531 + $0x180] sm:$0xff]
        %v3581 = vld [vmem:[%s3531 + $0x188] sm:$0xff]
        %v3582 = vld [vmem:[%s3531 + $0x190] sm:$0xff]
        %v3583 = vld [vmem:[%s3531 + $0x198] sm:$0xff]
        %v3584 = vld [vmem:[%s3531 + $0x1a0] sm:$0xff]
        %v3585 = vld [vmem:[%s3531 + $0x1a8] sm:$0xff]
        %v3586 = vld [vmem:[%s3531 + $0x1b0] sm:$0xff]
        %v3587 = vld [vmem:[%s3531 + $0x1b8] sm:$0xff]
        %v3588 = vld [vmem:[%s3531 + $0x1c0] sm:$0xff]
        %v3589 = vld [vmem:[%s3531 + $0x1c8] sm:$0xff]
        %v3590 = vld [vmem:[%s3531 + $0x1d0] sm:$0xff]
        %v3591 = vld [vmem:[%s3531 + $0x1d8] sm:$0xff]
        %v3592 = vld [vmem:[%s3531 + $0x1e0] sm:$0xff]
        %v3593 = vld [vmem:[%s3531 + $0x1e8] sm:$0xff]
        %v3594 = vld [vmem:[%s3531 + $0x1f0] sm:$0xff]
        %v3595 = vld [vmem:[%s3531 + $0x1f8] sm:$0xff]
        %v3596 = vld [vmem:[%s3531 + $0x200] sm:$0xff]
        %v3597 = vld [vmem:[%s3531 + $0x208] sm:$0xff]
        %v3598 = vld [vmem:[%s3531 + $0x210] sm:$0xff]
        %v3599 = vld [vmem:[%s3531 + $0x218] sm:$0xff]
        %v3600 = vld [vmem:[%s3531 + $0x220] sm:$0xff]
        %v3601 = vld [vmem:[%s3531 + $0x228] sm:$0xff]
        %v3602 = vld [vmem:[%s3531 + $0x230] sm:$0xff]
        %v3603 = vld [vmem:[%s3531 + $0x238] sm:$0xff]
        %v3604 = vld [vmem:[%s3531 + $0x240] sm:$0xff]
        %v3605 = vld [vmem:[%s3531 + $0x248] sm:$0xff]
        %v3606 = vld [vmem:[%s3531 + $0x250] sm:$0xff]
        %v3607 = vld [vmem:[%s3531 + $0x258] sm:$0xff]
        %v3608 = vld [vmem:[%s3531 + $0x260] sm:$0xff]
        %v3609 = vld [vmem:[%s3531 + $0x268] sm:$0xff]
        %v3610 = vld [vmem:[%s3531 + $0x270] sm:$0xff]
        %v3611 = vld [vmem:[%s3531 + $0x278] sm:$0xff]
        %v3612 = vld [vmem:[%s3531 + $0x280] sm:$0xff]
        %v3613 = vld [vmem:[%s3531 + $0x288] sm:$0xff]
        %v3614 = vld [vmem:[%s3531 + $0x290] sm:$0xff]
        %v3615 = vld [vmem:[%s3531 + $0x298] sm:$0xff]
        %v3616 = vld [vmem:[%s3531 + $0x2a0] sm:$0xff]
        %v3617 = vld [vmem:[%s3531 + $0x2a8] sm:$0xff]
        %v3618 = vld [vmem:[%s3531 + $0x2b0] sm:$0xff]
        %v3619 = vld [vmem:[%s3531 + $0x2b8] sm:$0xff]
        %v3620 = vld [vmem:[%s3531 + $0x2c0] sm:$0xff]
        %v3621 = vld [vmem:[%s3531 + $0x2c8] sm:$0xff]
        %v3622 = vld [vmem:[%s3531 + $0x2d0] sm:$0xff]
        %v3623 = vld [vmem:[%s3531 + $0x2d8] sm:$0xff]
        %v3624 = vld [vmem:[%s3531 + $0x2e0] sm:$0xff]
        %v3625 = vld [vmem:[%s3531 + $0x2e8] sm:$0xff]
        %v3626 = vld [vmem:[%s3531 + $0x2f0] sm:$0xff]
        %v3627 = vld [vmem:[%s3531 + $0x2f8] sm:$0xff]
        %v3628 = vld [vmem:[%s3531 + $0x300] sm:$0xff]
        %v3629 = vld [vmem:[%s3531 + $0x308] sm:$0xff]
        %v3630 = vld [vmem:[%s3531 + $0x310] sm:$0xff]
        %v3631 = vld [vmem:[%s3531 + $0x318] sm:$0xff]
        %v3632 = vld [vmem:[%s3531 + $0x320] sm:$0xff]
        %v3633 = vld [vmem:[%s3531 + $0x328] sm:$0xff]
        %v3634 = vld [vmem:[%s3531 + $0x330] sm:$0xff]
        %v3635 = vld [vmem:[%s3531 + $0x338] sm:$0xff]
        %v3636 = vld [vmem:[%s3531 + $0x340] sm:$0xff]
        %v3637 = vld [vmem:[%s3531 + $0x348] sm:$0xff]
        %v3638 = vld [vmem:[%s3531 + $0x350] sm:$0xff]
        %v3639 = vld [vmem:[%s3531 + $0x358] sm:$0xff]
        %v3640 = vld [vmem:[%s3531 + $0x360] sm:$0xff]
        %v3641 = vld [vmem:[%s3531 + $0x368] sm:$0xff]
        %v3642 = vld [vmem:[%s3531 + $0x370] sm:$0xff]
        %v3643 = vld [vmem:[%s3531 + $0x378] sm:$0xff]
        %v3644 = vld [vmem:[%s3531 + $0x380] sm:$0xff]
        %v3645 = vld [vmem:[%s3531 + $0x388] sm:$0xff]
        %v3646 = vld [vmem:[%s3531 + $0x390] sm:$0xff]
        %v3647 = vld [vmem:[%s3531 + $0x398] sm:$0xff]
        %v3648 = vld [vmem:[%s3531 + $0x3a0] sm:$0xff]
        %v3649 = vld [vmem:[%s3531 + $0x3a8] sm:$0xff]
        %v3650 = vld [vmem:[%s3531 + $0x3b0] sm:$0xff]
        %v3651 = vld [vmem:[%s3531 + $0x3b8] sm:$0xff]
        %v3652 = vld [vmem:[%s3531 + $0x3c0] sm:$0xff]
        %v3653 = vld [vmem:[%s3531 + $0x3c8] sm:$0xff]
        %v3654 = vld [vmem:[%s3531 + $0x3d0] sm:$0xff]
        %v3655 = vld [vmem:[%s3531 + $0x3d8] sm:$0xff]
        %v3656 = vld [vmem:[%s3531 + $0x3e0] sm:$0xff]
        %v3657 = vld [vmem:[%s3531 + $0x3e8] sm:$0xff]
        %v3658 = vld [vmem:[%s3531 + $0x3f0] sm:$0xff]
        %v3659 = vld [vmem:[%s3531 + $0x3f8] sm:$0xff]
        %v3660 = vld [vmem:[%s3531 + $0x400] sm:$0xff]
        %v3661 = vld [vmem:[%s3531 + $0x408] sm:$0xff]
        %v3662 = vld [vmem:[%s3531 + $0x410] sm:$0xff]
        %v3663 = vld [vmem:[%s3531 + $0x418] sm:$0xff]
        %v3664 = vld [vmem:[%s3531 + $0x420] sm:$0xff]
        %v3665 = vld [vmem:[%s3531 + $0x428] sm:$0xff]
        %v3666 = vld [vmem:[%s3531 + $0x430] sm:$0xff]
        %v3667 = vld [vmem:[%s3531 + $0x438] sm:$0xff]
        %v3668 = vld [vmem:[%s3531 + $0x440] sm:$0xff]
        %v3669 = vld [vmem:[%s3531 + $0x448] sm:$0xff]
        %v3670 = vld [vmem:[%s3531 + $0x450] sm:$0xff]
        %v3671 = vld [vmem:[%s3531 + $0x458] sm:$0xff]
        %v3672 = vld [vmem:[%s3531 + $0x460] sm:$0xff]
        %v3673 = vld [vmem:[%s3531 + $0x468] sm:$0xff]
        %v3674 = vld [vmem:[%s3531 + $0x470] sm:$0xff]
        %v3675 = vld [vmem:[%s3531 + $0x478] sm:$0xff]
        %v3676 = vld [vmem:[%s3531 + $0x480] sm:$0xff]
        %v3677 = vld [vmem:[%s3531 + $0x488] sm:$0xff]
        %v3678 = vld [vmem:[%s3531 + $0x490] sm:$0xff]
        %v3679 = vld [vmem:[%s3531 + $0x498] sm:$0xff]
        %v3680 = vld [vmem:[%s3531 + $0x4a0] sm:$0xff]
        %v3681 = vld [vmem:[%s3531 + $0x4a8] sm:$0xff]
        %v3682 = vld [vmem:[%s3531 + $0x4b0] sm:$0xff]
        %v3683 = vld [vmem:[%s3531 + $0x4b8] sm:$0xff]
        %v3684 = vld [vmem:[%s3531 + $0x4c0] sm:$0xff]
        %v3685 = vld [vmem:[%s3531 + $0x4c8] sm:$0xff]
        %v3686 = vld [vmem:[%s3531 + $0x4d0] sm:$0xff]
        %v3687 = vld [vmem:[%s3531 + $0x4d8] sm:$0xff]
        %v3688 = vld [vmem:[%s3531 + $0x4e0] sm:$0xff]
        %v3689 = vld [vmem:[%s3531 + $0x4e8] sm:$0xff]
        %v3690 = vld [vmem:[%s3531 + $0x4f0] sm:$0xff]
        %v3691 = vld [vmem:[%s3531 + $0x4f8] sm:$0xff]
        %v3692 = vld [vmem:[%s3531 + $0x500] sm:$0xff]
        %v3693 = vld [vmem:[%s3531 + $0x508] sm:$0xff]
        %v3694 = vld [vmem:[%s3531 + $0x510] sm:$0xff]
        %v3695 = vld [vmem:[%s3531 + $0x518] sm:$0xff]
        %v3696 = vld [vmem:[%s3531 + $0x520] sm:$0xff]
        %v3697 = vld [vmem:[%s3531 + $0x528] sm:$0xff]
        %v3698 = vld [vmem:[%s3531 + $0x530] sm:$0xff]
        %v3699 = vld [vmem:[%s3531 + $0x538] sm:$0xff]
        %v3700 = vld [vmem:[%s3531 + $0x540] sm:$0xff]
        %v3701 = vld [vmem:[%s3531 + $0x548] sm:$0xff]
        %v3702 = vld [vmem:[%s3531 + $0x550] sm:$0xff]
        %v3703 = vld [vmem:[%s3531 + $0x558] sm:$0xff]
        %v3704 = vld [vmem:[%s3531 + $0x560] sm:$0xff]
        %v3705 = vld [vmem:[%s3531 + $0x568] sm:$0xff]
        %v3706 = vld [vmem:[%s3531 + $0x570] sm:$0xff]
        %v3707 = vld [vmem:[%s3531 + $0x578] sm:$0xff]
        %v3708 = vld [vmem:[%s3531 + $0x580] sm:$0xff]
        %v3709 = vld [vmem:[%s3531 + $0x588] sm:$0xff]
        %v3710 = vld [vmem:[%s3531 + $0x590] sm:$0xff]
        %v3711 = vld [vmem:[%s3531 + $0x598] sm:$0xff]
        %v3712 = vld [vmem:[%s3531 + $0x5a0] sm:$0xff]
        %v3713 = vld [vmem:[%s3531 + $0x5a8] sm:$0xff]
        %v3714 = vld [vmem:[%s3531 + $0x5b0] sm:$0xff]
        %v3715 = vld [vmem:[%s3531 + $0x5b8] sm:$0xff]
        %v3716 = vld [vmem:[%s3531 + $0x5c0] sm:$0xff]
        %v3717 = vld [vmem:[%s3531 + $0x5c8] sm:$0xff]
        %v3718 = vld [vmem:[%s3531 + $0x5d0] sm:$0xff]
        %v3719 = vld [vmem:[%s3531 + $0x5d8] sm:$0xff]
        %v3720 = vld [vmem:[%s3531 + $0x5e0] sm:$0xff]
        %v3721 = vld [vmem:[%s3531 + $0x5e8] sm:$0xff]
        %v3722 = vld [vmem:[%s3531 + $0x5f0] sm:$0xff]
        %v3723 = vld [vmem:[%s3531 + $0x5f8] sm:$0xff]
        %v3724 = vld [vmem:[%s3531 + $0x600] sm:$0xff]
        %v3725 = vld [vmem:[%s3531 + $0x608] sm:$0xff]
        %v3726 = vld [vmem:[%s3531 + $0x610] sm:$0xff]
        %v3727 = vld [vmem:[%s3531 + $0x618] sm:$0xff]
        %v3728 = vld [vmem:[%s3531 + $0x620] sm:$0xff]
        %v3729 = vld [vmem:[%s3531 + $0x628] sm:$0xff]
        %v3763 = vcombine.low %v3300, %v3301
        %v3764 = vcombine.high %v3300, %v3301
        %v3765 = vcombine.low %v3302, %v3303
        %v3766 = vcombine.high %v3302, %v3303
        %v3768 = vunpack.c.l.s4 1983009808
        %v3769 = vunpack.c.0.s8 %v3768
        %v3770 = vlaneseq
        %v3771 = vshrl.u32 %v3770, 7
        %v3772 = vsub.s32 %v3769, %v3771
        %v3773 = vrot.slane %v3763, %v3772
        %v3775 = vunpack.c.l.s4 1983009808
        %v3776 = vunpack.c.0.s8 %v3775
        %v3777 = vlaneseq
        %v3778 = vshrl.u32 %v3777, 7
        %v3779 = vsub.s32 %v3776, %v3778
        %v3780 = vrot.slane %v3764, %v3779
        %v3782 = vunpack.c.l.s4 1983009808
        %v3783 = vunpack.c.0.s8 %v3782
        %v3784 = vlaneseq
        %v3785 = vshrl.u32 %v3784, 7
        %v3786 = vsub.s32 %v3783, %v3785
        %v3787 = vrot.slane %v3765, %v3786
        %v3789 = vunpack.c.l.s4 1983009808
        %v3790 = vunpack.c.0.s8 %v3789
        %v3791 = vlaneseq
        %v3792 = vshrl.u32 %v3791, 7
        %v3793 = vsub.s32 %v3790, %v3792
        %v3794 = vrot.slane %v3766, %v3793
        %v3795 = vcombine.low %v3773, %v3787
        %v3796 = vcombine.high %v3773, %v3787
        %v3797 = vcombine.low %v3780, %v3794
        %v3798 = vcombine.low %v3304, %v3305
        %v3799 = vcombine.high %v3304, %v3305
        %v3800 = vcombine.low %v3306, %v3307
        %v3801 = vcombine.high %v3306, %v3307
        %v3803 = vunpack.c.l.s4 1983009808
        %v3804 = vunpack.c.0.s8 %v3803
        %v3805 = vlaneseq
        %v3806 = vshrl.u32 %v3805, 7
        %v3807 = vsub.s32 %v3804, %v3806
        %v3808 = vrot.slane %v3798, %v3807
        %v3810 = vunpack.c.l.s4 1983009808
        %v3811 = vunpack.c.0.s8 %v3810
        %v3812 = vlaneseq
        %v3813 = vshrl.u32 %v3812, 7
        %v3814 = vsub.s32 %v3811, %v3813
        %v3815 = vrot.slane %v3799, %v3814
        %v3817 = vunpack.c.l.s4 1983009808
        %v3818 = vunpack.c.0.s8 %v3817
        %v3819 = vlaneseq
        %v3820 = vshrl.u32 %v3819, 7
        %v3821 = vsub.s32 %v3818, %v3820
        %v3822 = vrot.slane %v3800, %v3821
        %v3824 = vunpack.c.l.s4 1983009808
        %v3825 = vunpack.c.0.s8 %v3824
        %v3826 = vlaneseq
        %v3827 = vshrl.u32 %v3826, 7
        %v3828 = vsub.s32 %v3825, %v3827
        %v3829 = vrot.slane %v3801, %v3828
        %v3830 = vcombine.low %v3808, %v3822
        %v3831 = vcombine.high %v3808, %v3822
        %v3832 = vcombine.low %v3815, %v3829
        %v3833 = vcombine.low %v3308, %v3309
        %v3834 = vcombine.high %v3308, %v3309
        %v3835 = vcombine.low %v3310, %v3311
        %v3836 = vcombine.high %v3310, %v3311
        %v3838 = vunpack.c.l.s4 1983009808
        %v3839 = vunpack.c.0.s8 %v3838
        %v3840 = vlaneseq
        %v3841 = vshrl.u32 %v3840, 7
        %v3842 = vsub.s32 %v3839, %v3841
        %v3843 = vrot.slane %v3833, %v3842
        %v3845 = vunpack.c.l.s4 1983009808
        %v3846 = vunpack.c.0.s8 %v3845
        %v3847 = vlaneseq
        %v3848 = vshrl.u32 %v3847, 7
        %v3849 = vsub.s32 %v3846, %v3848
        %v3850 = vrot.slane %v3834, %v3849
        %v3852 = vunpack.c.l.s4 1983009808
        %v3853 = vunpack.c.0.s8 %v3852
        %v3854 = vlaneseq
        %v3855 = vshrl.u32 %v3854, 7
        %v3856 = vsub.s32 %v3853, %v3855
        %v3857 = vrot.slane %v3835, %v3856
        %v3859 = vunpack.c.l.s4 1983009808
        %v3860 = vunpack.c.0.s8 %v3859
        %v3861 = vlaneseq
        %v3862 = vshrl.u32 %v3861, 7
        %v3863 = vsub.s32 %v3860, %v3862
        %v3864 = vrot.slane %v3836, %v3863
        %v3865 = vcombine.low %v3843, %v3857
        %v3866 = vcombine.high %v3843, %v3857
        %v3867 = vcombine.low %v3850, %v3864
        %v3868 = vcombine.low %v3312, %v3313
        %v3869 = vcombine.high %v3312, %v3313
        %v3870 = vcombine.low %v3314, %v3315
        %v3871 = vcombine.high %v3314, %v3315
        %v3873 = vunpack.c.l.s4 1983009808
        %v3874 = vunpack.c.0.s8 %v3873
        %v3875 = vlaneseq
        %v3876 = vshrl.u32 %v3875, 7
        %v3877 = vsub.s32 %v3874, %v3876
        %v3878 = vrot.slane %v3868, %v3877
        %v3880 = vunpack.c.l.s4 1983009808
        %v3881 = vunpack.c.0.s8 %v3880
        %v3882 = vlaneseq
        %v3883 = vshrl.u32 %v3882, 7
        %v3884 = vsub.s32 %v3881, %v3883
        %v3885 = vrot.slane %v3869, %v3884
        %v3887 = vunpack.c.l.s4 1983009808
        %v3888 = vunpack.c.0.s8 %v3887
        %v3889 = vlaneseq
        %v3890 = vshrl.u32 %v3889, 7
        %v3891 = vsub.s32 %v3888, %v3890
        %v3892 = vrot.slane %v3870, %v3891
        %v3894 = vunpack.c.l.s4 1983009808
        %v3895 = vunpack.c.0.s8 %v3894
        %v3896 = vlaneseq
        %v3897 = vshrl.u32 %v3896, 7
        %v3898 = vsub.s32 %v3895, %v3897
        %v3899 = vrot.slane %v3871, %v3898
        %v3900 = vcombine.low %v3878, %v3892
        %v3901 = vcombine.high %v3878, %v3892
        %v3902 = vcombine.low %v3885, %v3899
        %v3903 = vcombine.low %v3316, %v3317
        %v3904 = vcombine.high %v3316, %v3317
        %v3905 = vcombine.low %v3318, %v3319
        %v3906 = vcombine.high %v3318, %v3319
        %v3908 = vunpack.c.l.s4 1983009808
        %v3909 = vunpack.c.0.s8 %v3908
        %v3910 = vlaneseq
        %v3911 = vshrl.u32 %v3910, 7
        %v3912 = vsub.s32 %v3909, %v3911
        %v3913 = vrot.slane %v3903, %v3912
        %v3915 = vunpack.c.l.s4 1983009808
        %v3916 = vunpack.c.0.s8 %v3915
        %v3917 = vlaneseq
        %v3918 = vshrl.u32 %v3917, 7
        %v3919 = vsub.s32 %v3916, %v3918
        %v3920 = vrot.slane %v3904, %v3919
        %v3922 = vunpack.c.l.s4 1983009808
        %v3923 = vunpack.c.0.s8 %v3922
        %v3924 = vlaneseq
        %v3925 = vshrl.u32 %v3924, 7
        %v3926 = vsub.s32 %v3923, %v3925
        %v3927 = vrot.slane %v3905, %v3926
        %v3929 = vunpack.c.l.s4 1983009808
        %v3930 = vunpack.c.0.s8 %v3929
        %v3931 = vlaneseq
        %v3932 = vshrl.u32 %v3931, 7
        %v3933 = vsub.s32 %v3930, %v3932
        %v3934 = vrot.slane %v3906, %v3933
        %v3935 = vcombine.low %v3913, %v3927
        %v3936 = vcombine.high %v3913, %v3927
        %v3937 = vcombine.low %v3920, %v3934
        %v3938 = vcombine.low %v3320, %v3321
        %v3939 = vcombine.high %v3320, %v3321
        %v3940 = vcombine.low %v3322, %v3323
        %v3941 = vcombine.high %v3322, %v3323
        %v3943 = vunpack.c.l.s4 1983009808
        %v3944 = vunpack.c.0.s8 %v3943
        %v3945 = vlaneseq
        %v3946 = vshrl.u32 %v3945, 7
        %v3947 = vsub.s32 %v3944, %v3946
        %v3948 = vrot.slane %v3938, %v3947
        %v3950 = vunpack.c.l.s4 1983009808
        %v3951 = vunpack.c.0.s8 %v3950
        %v3952 = vlaneseq
        %v3953 = vshrl.u32 %v3952, 7
        %v3954 = vsub.s32 %v3951, %v3953
        %v3955 = vrot.slane %v3939, %v3954
        %v3957 = vunpack.c.l.s4 1983009808
        %v3958 = vunpack.c.0.s8 %v3957
        %v3959 = vlaneseq
        %v3960 = vshrl.u32 %v3959, 7
        %v3961 = vsub.s32 %v3958, %v3960
        %v3962 = vrot.slane %v3940, %v3961
        %v3964 = vunpack.c.l.s4 1983009808
        %v3965 = vunpack.c.0.s8 %v3964
        %v3966 = vlaneseq
        %v3967 = vshrl.u32 %v3966, 7
        %v3968 = vsub.s32 %v3965, %v3967
        %v3969 = vrot.slane %v3941, %v3968
        %v3970 = vcombine.low %v3948, %v3962
        %v3971 = vcombine.high %v3948, %v3962
        %v3972 = vcombine.low %v3955, %v3969
        %v3973 = vcombine.low %v3324, %v3325
        %v3974 = vcombine.high %v3324, %v3325
        %v3975 = vcombine.low %v3326, %v3327
        %v3976 = vcombine.high %v3326, %v3327
        %v3978 = vunpack.c.l.s4 1983009808
        %v3979 = vunpack.c.0.s8 %v3978
        %v3980 = vlaneseq
        %v3981 = vshrl.u32 %v3980, 7
        %v3982 = vsub.s32 %v3979, %v3981
        %v3983 = vrot.slane %v3973, %v3982
        %v3985 = vunpack.c.l.s4 1983009808
        %v3986 = vunpack.c.0.s8 %v3985
        %v3987 = vlaneseq
        %v3988 = vshrl.u32 %v3987, 7
        %v3989 = vsub.s32 %v3986, %v3988
        %v3990 = vrot.slane %v3974, %v3989
        %v3992 = vunpack.c.l.s4 1983009808
        %v3993 = vunpack.c.0.s8 %v3992
        %v3994 = vlaneseq
        %v3995 = vshrl.u32 %v3994, 7
        %v3996 = vsub.s32 %v3993, %v3995
        %v3997 = vrot.slane %v3975, %v3996
        %v3999 = vunpack.c.l.s4 1983009808
        %v4000 = vunpack.c.0.s8 %v3999
        %v4001 = vlaneseq
        %v4002 = vshrl.u32 %v4001, 7
        %v4003 = vsub.s32 %v4000, %v4002
        %v4004 = vrot.slane %v3976, %v4003
        %v4005 = vcombine.low %v3983, %v3997
        %v4006 = vcombine.high %v3983, %v3997
        %v4007 = vcombine.low %v3990, %v4004
        %v4008 = vcombine.low %v3328, %v3329
        %v4009 = vcombine.high %v3328, %v3329
        %v4010 = vcombine.low %v3330, %v3331
        %v4011 = vcombine.high %v3330, %v3331
        %v4013 = vunpack.c.l.s4 1983009808
        %v4014 = vunpack.c.0.s8 %v4013
        %v4015 = vlaneseq
        %v4016 = vshrl.u32 %v4015, 7
        %v4017 = vsub.s32 %v4014, %v4016
        %v4018 = vrot.slane %v4008, %v4017
        %v4020 = vunpack.c.l.s4 1983009808
        %v4021 = vunpack.c.0.s8 %v4020
        %v4022 = vlaneseq
        %v4023 = vshrl.u32 %v4022, 7
        %v4024 = vsub.s32 %v4021, %v4023
        %v4025 = vrot.slane %v4009, %v4024
        %v4027 = vunpack.c.l.s4 1983009808
        %v4028 = vunpack.c.0.s8 %v4027
        %v4029 = vlaneseq
        %v4030 = vshrl.u32 %v4029, 7
        %v4031 = vsub.s32 %v4028, %v4030
        %v4032 = vrot.slane %v4010, %v4031
        %v4034 = vunpack.c.l.s4 1983009808
        %v4035 = vunpack.c.0.s8 %v4034
        %v4036 = vlaneseq
        %v4037 = vshrl.u32 %v4036, 7
        %v4038 = vsub.s32 %v4035, %v4037
        %v4039 = vrot.slane %v4011, %v4038
        %v4040 = vcombine.low %v4018, %v4032
        %v4041 = vcombine.high %v4018, %v4032
        %v4042 = vcombine.low %v4025, %v4039
        %v4043 = vcombine.high %v3332, %v3332
        %v4045 = vunpack.c.l.s4 1983009808
        %v4046 = vunpack.c.0.s8 %v4045
        %v4047 = vlaneseq
        %v4048 = vshrl.u32 %v4047, 7
        %v4049 = vsub.s32 %v4046, %v4048
        %v4050 = vrot.slane %v3332, %v4049
        %v4052 = vunpack.c.l.s4 1983009808
        %v4053 = vunpack.c.0.s8 %v4052
        %v4054 = vlaneseq
        %v4055 = vshrl.u32 %v4054, 7
        %v4056 = vsub.s32 %v4053, %v4055
        %v4057 = vrot.slane %v4043, %v4056
        %v4058 = vcombine.high %v4050, %v4050
        %v4059 = vrot.slane %v3795, 1
        %v4060 = vrot.slane %v3830, 1
        %v4061 = vsel %vm404, %v4059, %v4060
        %v4062 = vrot.slane %v3796, 1
        %v4063 = vrot.slane %v3831, 1
        %v4064 = vsel %vm404, %v4062, %v4063
        %v4065 = vrot.slane %v3797, 1
        %v4066 = vrot.slane %v3832, 1
        %v4067 = vsel %vm404, %v4065, %v4066
        %v4068 = vrot.slane %v3865, 1
        %v4069 = vsel %vm404, %v4060, %v4068
        %v4070 = vrot.slane %v3866, 1
        %v4071 = vsel %vm404, %v4063, %v4070
        %v4072 = vrot.slane %v3867, 1
        %v4073 = vsel %vm404, %v4066, %v4072
        %v4074 = vrot.slane %v3900, 1
        %v4075 = vsel %vm404, %v4068, %v4074
        %v4076 = vrot.slane %v3901, 1
        %v4077 = vsel %vm404, %v4070, %v4076
        %v4078 = vrot.slane %v3902, 1
        %v4079 = vsel %vm404, %v4072, %v4078
        %v4080 = vrot.slane %v3935, 1
        %v4081 = vsel %vm404, %v4074, %v4080
        %v4082 = vrot.slane %v3936, 1
        %v4083 = vsel %vm404, %v4076, %v4082
        %v4084 = vrot.slane %v3937, 1
        %v4085 = vsel %vm404, %v4078, %v4084
        %v4086 = vrot.slane %v3970, 1
        %v4087 = vsel %vm404, %v4080, %v4086
        %v4088 = vrot.slane %v3971, 1
        %v4089 = vsel %vm404, %v4082, %v4088
        %v4090 = vrot.slane %v3972, 1
        %v4091 = vsel %vm404, %v4084, %v4090
        %v4092 = vrot.slane %v4005, 1
        %v4093 = vsel %vm404, %v4086, %v4092
        %v4094 = vrot.slane %v4006, 1
        %v4095 = vsel %vm404, %v4088, %v4094
        %v4096 = vrot.slane %v4007, 1
        %v4097 = vsel %vm404, %v4090, %v4096
        %v4098 = vrot.slane %v4040, 1
        %v4099 = vsel %vm404, %v4092, %v4098
        %v4100 = vrot.slane %v4041, 1
        %v4101 = vsel %vm404, %v4094, %v4100
        %v4102 = vrot.slane %v4042, 1
        %v4103 = vsel %vm404, %v4096, %v4102
        %v4104 = vrot.slane %v4050, 1
        %v4105 = vsel %vm404, %v4098, %v4104
        %v4106 = vrot.slane %v4058, 1
        %v4107 = vsel %vm404, %v4100, %v4106
        %v4108 = vrot.slane %v4057, 1
        %v4109 = vsel %vm404, %v4102, %v4108
        %v4126 = vsel %vm1617, %v4067, 0
        %v4128 = vsel %vm1617, %v4073, 0
        %v4130 = vsel %vm1617, %v4079, 0
        %v4132 = vsel %vm1617, %v4085, 0
        %v4134 = vsel %vm1617, %v4091, 0
        %v4136 = vsel %vm1617, %v4097, 0
        %v4138 = vsel %vm1617, %v4103, 0
        %v4140 = vsel %vm1617, %v4109, 0
        %4142 = vmatprep.subr.mxu0 %v3623
        %4143 = vmatpush1.msra.mxu0 %v3622
        %4144 = vmatprep.subr.mxu0 %v3617
        %4145 = vmatpush1.msra.mxu0 %v3616
        %4146 = vmatprep.subr.mxu0 %v3611
        %4147 = vmatpush1.msra.mxu0 %v3610
        %4148 = vmatprep.subr.mxu0 %v3605
        %4149 = vmatpush1.msra.mxu0 %v3604
        %4150 = vmatprep.subr.mxu0 %v3599
        %4151 = vmatpush1.msra.mxu0 %v3598
        %4152 = vmatprep.subr.mxu0 %v3593
        %4153 = vmatpush1.msra.mxu0 %v3592
        %4154 = vmatprep.subr.mxu0 %v3587
        %4155 = vmatpush1.msra.mxu0 %v3586
        %4156 = vmatprep.subr.mxu0 %v3581
        %4157 = vmatpush1.msra.mxu0 %v3580
        %4158 = vmatprep.subr.mxu0 %v3575
        %4159 = vmatpush1.msra.mxu0 %v3574
        %4160 = vmatprep.subr.mxu0 %v3569
        %4161 = vmatpush1.msra.mxu0 %v3568
        %4162 = vmatprep.subr.mxu0 %v3563
        %4163 = vmatpush1.msra.mxu0 %v3562
        %4164 = vmatprep.subr.mxu0 %v3557
        %4165 = vmatpush1.msra.mxu0 %v3556
        %4166 = vmatprep.subr.mxu0 %v3551
        %4167 = vmatpush1.msra.mxu0 %v3550
        %4168 = vmatprep.subr.mxu0 %v3545
        %4169 = vmatpush1.msra.mxu0 %v3544
        %4170 = vmatprep.subr.mxu0 %v3539
        %4171 = vmatpush1.msra.mxu0 %v3538
        %4172 = vmatprep.subr.mxu0 %v3533
        %4173 = vmatpush1.msra.mxu0 %v3532
        %4174 = vmatprep.subr.mxu0 %v3719
        %4175 = vmatpush2.msra.mxu0 %v3718
        %4176 = vmatprep.subr.mxu0 %v3713
        %4177 = vmatpush2.msra.mxu0 %v3712
        %4178 = vmatprep.subr.mxu0 %v3707
        %4179 = vmatpush2.msra.mxu0 %v3706
        %4180 = vmatprep.subr.mxu0 %v3701
        %4181 = vmatpush2.msra.mxu0 %v3700
        %4182 = vmatprep.subr.mxu0 %v3695
        %4183 = vmatpush2.msra.mxu0 %v3694
        %4184 = vmatprep.subr.mxu0 %v3689
        %4185 = vmatpush2.msra.mxu0 %v3688
        %4186 = vmatprep.subr.mxu0 %v3683
        %4187 = vmatpush2.msra.mxu0 %v3682
        %4188 = vmatprep.subr.mxu0 %v3677
        %4189 = vmatpush2.msra.mxu0 %v3676
        %4190 = vmatprep.subr.mxu0 %v3671
        %4191 = vmatpush2.msra.mxu0 %v3670
        %4192 = vmatprep.subr.mxu0 %v3665
        %4193 = vmatpush2.msra.mxu0 %v3664
        %4194 = vmatprep.subr.mxu0 %v3659
        %4195 = vmatpush2.msra.mxu0 %v3658
        %4196 = vmatprep.subr.mxu0 %v3653
        %4197 = vmatpush2.msra.mxu0 %v3652
        %4198 = vmatprep.subr.mxu0 %v3647
        %4199 = vmatpush2.msra.mxu0 %v3646
        %4200 = vmatprep.subr.mxu0 %v3641
        %4201 = vmatpush2.msra.mxu0 %v3640
        %4202 = vmatprep.subr.mxu0 %v3635
        %4203 = vmatpush2.msra.mxu0 %v3634
        %4204 = vmatprep.subr.mxu0 %v3629
        %4205 = vmatpush2.msra.mxu0 %v3628
        %4206 = vmatprep.mubr.f32.mxu0 %v4064
        %4207 = vmatmul.mubr.f32.gmra.mxu0 %v4061
        %v4208 = vpop.f32.mrf.mxu0
        %v4209 = vadd.f32 0.0, %v4208
        %v4210 = vpop.f32.mrf.mxu0
        %v4211 = vadd.f32 0.0, %v4210
        %4212 = vmatprep.mubr.f32.mxu0 %v4071
        %4213 = vmatmul.mubr.f32.gmra.mxu0 %v4069
        %v4214 = vpop.f32.mrf.mxu0
        %v4215 = vadd.f32 0.0, %v4214
        %v4216 = vpop.f32.mrf.mxu0
        %v4217 = vadd.f32 0.0, %v4216
        %4218 = vmatprep.mubr.f32.mxu0 %v4077
        %4219 = vmatmul.mubr.f32.gmra.mxu0 %v4075
        %v4220 = vpop.f32.mrf.mxu0
        %v4221 = vadd.f32 0.0, %v4220
        %v4222 = vpop.f32.mrf.mxu0
        %v4223 = vadd.f32 0.0, %v4222
        %4224 = vmatprep.mubr.f32.mxu0 %v4083
        %4225 = vmatmul.mubr.f32.gmra.mxu0 %v4081
        %v4226 = vpop.f32.mrf.mxu0
        %v4227 = vadd.f32 0.0, %v4226
        %v4228 = vpop.f32.mrf.mxu0
        %v4229 = vadd.f32 0.0, %v4228
        %4230 = vmatprep.mubr.f32.mxu0 %v4089
        %4231 = vmatmul.mubr.f32.gmra.mxu0 %v4087
        %v4232 = vpop.f32.mrf.mxu0
        %v4233 = vadd.f32 0.0, %v4232
        %v4234 = vpop.f32.mrf.mxu0
        %v4235 = vadd.f32 0.0, %v4234
        %4236 = vmatprep.mubr.f32.mxu0 %v4095
        %4237 = vmatmul.mubr.f32.gmra.mxu0 %v4093
        %v4238 = vpop.f32.mrf.mxu0
        %v4239 = vadd.f32 0.0, %v4238
        %v4240 = vpop.f32.mrf.mxu0
        %v4241 = vadd.f32 0.0, %v4240
        %4242 = vmatprep.mubr.f32.mxu0 %v4101
        %4243 = vmatmul.mubr.f32.gmra.mxu0 %v4099
        %v4244 = vpop.f32.mrf.mxu0
        %v4245 = vadd.f32 0.0, %v4244
        %v4246 = vpop.f32.mrf.mxu0
        %v4247 = vadd.f32 0.0, %v4246
        %4248 = vmatprep.mubr.f32.mxu0 %v4107
        %4249 = vmatmul.mubr.f32.gmra.mxu0 %v4105
        %v4250 = vpop.f32.mrf.mxu0
        %v4251 = vadd.f32 0.0, %v4250
        %v4252 = vpop.f32.mrf.mxu0
        %v4253 = vadd.f32 0.0, %v4252
        %4254 = vdwg.mxu0
        %4255 = vmatprep.subr.mxu0 0.0
        %4256 = vmatpush1.msra.mxu0 0.0
        %4257 = vmatprep.subr.mxu0 0.0
        %4258 = vmatpush1.msra.mxu0 0.0
        %4259 = vmatprep.subr.mxu0 0.0
        %4260 = vmatpush1.msra.mxu0 0.0
        %4261 = vmatprep.subr.mxu0 0.0
        %4262 = vmatpush1.msra.mxu0 0.0
        %4263 = vmatprep.subr.mxu0 0.0
        %4264 = vmatpush1.msra.mxu0 0.0
        %4265 = vmatprep.subr.mxu0 0.0
        %4266 = vmatpush1.msra.mxu0 0.0
        %4267 = vmatprep.subr.mxu0 0.0
        %4268 = vmatpush1.msra.mxu0 0.0
        %4269 = vmatprep.subr.mxu0 0.0
        %4270 = vmatpush1.msra.mxu0 0.0
        %4271 = vmatprep.subr.mxu0 0.0
        %4272 = vmatpush1.msra.mxu0 0.0
        %4273 = vmatprep.subr.mxu0 0.0
        %4274 = vmatpush1.msra.mxu0 0.0
        %4275 = vmatprep.subr.mxu0 0.0
        %4276 = vmatpush1.msra.mxu0 0.0
        %4277 = vmatprep.subr.mxu0 0.0
        %4278 = vmatpush1.msra.mxu0 0.0
        %4279 = vmatprep.subr.mxu0 0.0
        %4280 = vmatpush1.msra.mxu0 0.0
        %4281 = vmatprep.subr.mxu0 0.0
        %4282 = vmatpush1.msra.mxu0 0.0
        %4283 = vmatprep.subr.mxu0 0.0
        %4284 = vmatpush1.msra.mxu0 0.0
        %4285 = vmatprep.subr.mxu0 %v3725
        %4286 = vmatpush1.msra.mxu0 %v3724
        %4287 = vmatprep.subr.mxu0 0.0
        %4288 = vmatpush2.msra.mxu0 0.0
        %4289 = vmatprep.subr.mxu0 0.0
        %4290 = vmatpush2.msra.mxu0 0.0
        %4291 = vmatprep.subr.mxu0 0.0
        %4292 = vmatpush2.msra.mxu0 0.0
        %4293 = vmatprep.subr.mxu0 0.0
        %4294 = vmatpush2.msra.mxu0 0.0
        %4295 = vmatprep.subr.mxu0 0.0
        %4296 = vmatpush2.msra.mxu0 0.0
        %4297 = vmatprep.subr.mxu0 0.0
        %4298 = vmatpush2.msra.mxu0 0.0
        %4299 = vmatprep.subr.mxu0 0.0
        %4300 = vmatpush2.msra.mxu0 0.0
        %4301 = vmatprep.subr.mxu0 0.0
        %4302 = vmatpush2.msra.mxu0 0.0
        %4303 = vmatprep.subr.mxu0 0.0
        %4304 = vmatpush2.msra.mxu0 0.0
        %4305 = vmatprep.subr.mxu0 0.0
        %4306 = vmatpush2.msra.mxu0 0.0
        %4307 = vmatprep.subr.mxu0 0.0
        %4308 = vmatpush2.msra.mxu0 0.0
        %4309 = vmatprep.subr.mxu0 0.0
        %4310 = vmatpush2.msra.mxu0 0.0
        %4311 = vmatprep.subr.mxu0 0.0
        %4312 = vmatpush2.msra.mxu0 0.0
        %4313 = vmatprep.subr.mxu0 0.0
        %4314 = vmatpush2.msra.mxu0 0.0
        %4315 = vmatprep.subr.mxu0 0.0
        %4316 = vmatpush2.msra.mxu0 0.0
        %4317 = vmatprep.subr.mxu0 0.0
        %4318 = vmatpush2.msra.mxu0 0.0
        %4319 = vmatprep.mubr.f32.mxu0 0.0
        %4320 = vmatmul.mubr.f32.gmra.mxu0 %v4126
        %v4321 = vpop.f32.mrf.mxu0
        %v4322 = vadd.f32 %v4209, %v4321
        %v4323 = vpop.f32.mrf.mxu0
        %v4324 = vadd.f32 %v4211, %v4323
        %4325 = vmatprep.mubr.f32.mxu0 0.0
        %4326 = vmatmul.mubr.f32.gmra.mxu0 %v4128
        %v4327 = vpop.f32.mrf.mxu0
        %v4328 = vadd.f32 %v4215, %v4327
        %v4329 = vpop.f32.mrf.mxu0
        %v4330 = vadd.f32 %v4217, %v4329
        %4331 = vmatprep.mubr.f32.mxu0 0.0
        %4332 = vmatmul.mubr.f32.gmra.mxu0 %v4130
        %v4333 = vpop.f32.mrf.mxu0
        %v4334 = vadd.f32 %v4221, %v4333
        %v4335 = vpop.f32.mrf.mxu0
        %v4336 = vadd.f32 %v4223, %v4335
        %4337 = vmatprep.mubr.f32.mxu0 0.0
        %4338 = vmatmul.mubr.f32.gmra.mxu0 %v4132
        %v4339 = vpop.f32.mrf.mxu0
        %v4340 = vadd.f32 %v4227, %v4339
        %v4341 = vpop.f32.mrf.mxu0
        %v4342 = vadd.f32 %v4229, %v4341
        %4343 = vmatprep.mubr.f32.mxu0 0.0
        %4344 = vmatmul.mubr.f32.gmra.mxu0 %v4134
        %v4345 = vpop.f32.mrf.mxu0
        %v4346 = vadd.f32 %v4233, %v4345
        %v4347 = vpop.f32.mrf.mxu0
        %v4348 = vadd.f32 %v4235, %v4347
        %4349 = vmatprep.mubr.f32.mxu0 0.0
        %4350 = vmatmul.mubr.f32.gmra.mxu0 %v4136
        %v4351 = vpop.f32.mrf.mxu0
        %v4352 = vadd.f32 %v4239, %v4351
        %v4353 = vpop.f32.mrf.mxu0
        %v4354 = vadd.f32 %v4241, %v4353
        %4355 = vmatprep.mubr.f32.mxu0 0.0
        %4356 = vmatmul.mubr.f32.gmra.mxu0 %v4138
        %v4357 = vpop.f32.mrf.mxu0
        %v4358 = vadd.f32 %v4245, %v4357
        %v4359 = vpop.f32.mrf.mxu0
        %v4360 = vadd.f32 %v4247, %v4359
        %4361 = vmatprep.mubr.f32.mxu0 0.0
        %4362 = vmatmul.mubr.f32.gmra.mxu0 %v4140
        %v4363 = vpop.f32.mrf.mxu0
        %v4364 = vadd.f32 %v4251, %v4363
        %v4365 = vpop.f32.mrf.mxu0
        %v4366 = vadd.f32 %v4253, %v4365
        %4367 = vdwg.mxu0
        %4368 = vmatprep.subr.mxu0 %v3625
        %4369 = vmatpush1.msra.mxu0 %v3624
        %4370 = vmatprep.subr.mxu0 %v3619
        %4371 = vmatpush1.msra.mxu0 %v3618
        %4372 = vmatprep.subr.mxu0 %v3613
        %4373 = vmatpush1.msra.mxu0 %v3612
        %4374 = vmatprep.subr.mxu0 %v3607
        %4375 = vmatpush1.msra.mxu0 %v3606
        %4376 = vmatprep.subr.mxu0 %v3601
        %4377 = vmatpush1.msra.mxu0 %v3600
        %4378 = vmatprep.subr.mxu0 %v3595
        %4379 = vmatpush1.msra.mxu0 %v3594
        %4380 = vmatprep.subr.mxu0 %v3589
        %4381 = vmatpush1.msra.mxu0 %v3588
        %4382 = vmatprep.subr.mxu0 %v3583
        %4383 = vmatpush1.msra.mxu0 %v3582
        %4384 = vmatprep.subr.mxu0 %v3577
        %4385 = vmatpush1.msra.mxu0 %v3576
        %4386 = vmatprep.subr.mxu0 %v3571
        %4387 = vmatpush1.msra.mxu0 %v3570
        %4388 = vmatprep.subr.mxu0 %v3565
        %4389 = vmatpush1.msra.mxu0 %v3564
        %4390 = vmatprep.subr.mxu0 %v3559
        %4391 = vmatpush1.msra.mxu0 %v3558
        %4392 = vmatprep.subr.mxu0 %v3553
        %4393 = vmatpush1.msra.mxu0 %v3552
        %4394 = vmatprep.subr.mxu0 %v3547
        %4395 = vmatpush1.msra.mxu0 %v3546
        %4396 = vmatprep.subr.mxu0 %v3541
        %4397 = vmatpush1.msra.mxu0 %v3540
        %4398 = vmatprep.subr.mxu0 %v3535
        %4399 = vmatpush1.msra.mxu0 %v3534
        %4400 = vmatprep.subr.mxu0 %v3721
        %4401 = vmatpush2.msra.mxu0 %v3720
        %4402 = vmatprep.subr.mxu0 %v3715
        %4403 = vmatpush2.msra.mxu0 %v3714
        %4404 = vmatprep.subr.mxu0 %v3709
        %4405 = vmatpush2.msra.mxu0 %v3708
        %4406 = vmatprep.subr.mxu0 %v3703
        %4407 = vmatpush2.msra.mxu0 %v3702
        %4408 = vmatprep.subr.mxu0 %v3697
        %4409 = vmatpush2.msra.mxu0 %v3696
        %4410 = vmatprep.subr.mxu0 %v3691
        %4411 = vmatpush2.msra.mxu0 %v3690
        %4412 = vmatprep.subr.mxu0 %v3685
        %4413 = vmatpush2.msra.mxu0 %v3684
        %4414 = vmatprep.subr.mxu0 %v3679
        %4415 = vmatpush2.msra.mxu0 %v3678
        %4416 = vmatprep.subr.mxu0 %v3673
        %4417 = vmatpush2.msra.mxu0 %v3672
        %4418 = vmatprep.subr.mxu0 %v3667
        %4419 = vmatpush2.msra.mxu0 %v3666
        %4420 = vmatprep.subr.mxu0 %v3661
        %4421 = vmatpush2.msra.mxu0 %v3660
        %4422 = vmatprep.subr.mxu0 %v3655
        %4423 = vmatpush2.msra.mxu0 %v3654
        %4424 = vmatprep.subr.mxu0 %v3649
        %4425 = vmatpush2.msra.mxu0 %v3648
        %4426 = vmatprep.subr.mxu0 %v3643
        %4427 = vmatpush2.msra.mxu0 %v3642
        %4428 = vmatprep.subr.mxu0 %v3637
        %4429 = vmatpush2.msra.mxu0 %v3636
        %4430 = vmatprep.subr.mxu0 %v3631
        %4431 = vmatpush2.msra.mxu0 %v3630
        %4432 = vmatprep.mubr.f32.mxu0 %v4064
        %4433 = vmatmul.mubr.f32.gmra.mxu0 %v4061
        %v4434 = vpop.f32.mrf.mxu0
        %v4435 = vadd.f32 0.0, %v4434
        %v4436 = vpop.f32.mrf.mxu0
        %v4437 = vadd.f32 0.0, %v4436
        %4438 = vmatprep.mubr.f32.mxu0 %v4071
        %4439 = vmatmul.mubr.f32.gmra.mxu0 %v4069
        %v4440 = vpop.f32.mrf.mxu0
        %v4441 = vadd.f32 0.0, %v4440
        %v4442 = vpop.f32.mrf.mxu0
        %v4443 = vadd.f32 0.0, %v4442
        %4444 = vmatprep.mubr.f32.mxu0 %v4077
        %4445 = vmatmul.mubr.f32.gmra.mxu0 %v4075
        %v4446 = vpop.f32.mrf.mxu0
        %v4447 = vadd.f32 0.0, %v4446
        %v4448 = vpop.f32.mrf.mxu0
        %v4449 = vadd.f32 0.0, %v4448
        %4450 = vmatprep.mubr.f32.mxu0 %v4083
        %4451 = vmatmul.mubr.f32.gmra.mxu0 %v4081
        %v4452 = vpop.f32.mrf.mxu0
        %v4453 = vadd.f32 0.0, %v4452
        %v4454 = vpop.f32.mrf.mxu0
        %v4455 = vadd.f32 0.0, %v4454
        %4456 = vmatprep.mubr.f32.mxu0 %v4089
        %4457 = vmatmul.mubr.f32.gmra.mxu0 %v4087
        %v4458 = vpop.f32.mrf.mxu0
        %v4459 = vadd.f32 0.0, %v4458
        %v4460 = vpop.f32.mrf.mxu0
        %v4461 = vadd.f32 0.0, %v4460
        %4462 = vmatprep.mubr.f32.mxu0 %v4095
        %4463 = vmatmul.mubr.f32.gmra.mxu0 %v4093
        %v4464 = vpop.f32.mrf.mxu0
        %v4465 = vadd.f32 0.0, %v4464
        %v4466 = vpop.f32.mrf.mxu0
        %v4467 = vadd.f32 0.0, %v4466
        %4468 = vmatprep.mubr.f32.mxu0 %v4101
        %4469 = vmatmul.mubr.f32.gmra.mxu0 %v4099
        %v4470 = vpop.f32.mrf.mxu0
        %v4471 = vadd.f32 0.0, %v4470
        %v4472 = vpop.f32.mrf.mxu0
        %v4473 = vadd.f32 0.0, %v4472
        %4474 = vmatprep.mubr.f32.mxu0 %v4107
        %4475 = vmatmul.mubr.f32.gmra.mxu0 %v4105
        %v4476 = vpop.f32.mrf.mxu0
        %v4477 = vadd.f32 0.0, %v4476
        %v4478 = vpop.f32.mrf.mxu0
        %v4479 = vadd.f32 0.0, %v4478
        %4480 = vdwg.mxu0
        %4481 = vmatprep.subr.mxu0 0.0
        %4482 = vmatpush1.msra.mxu0 0.0
        %4483 = vmatprep.subr.mxu0 0.0
        %4484 = vmatpush1.msra.mxu0 0.0
        %4485 = vmatprep.subr.mxu0 0.0
        %4486 = vmatpush1.msra.mxu0 0.0
        %4487 = vmatprep.subr.mxu0 0.0
        %4488 = vmatpush1.msra.mxu0 0.0
        %4489 = vmatprep.subr.mxu0 0.0
        %4490 = vmatpush1.msra.mxu0 0.0
        %4491 = vmatprep.subr.mxu0 0.0
        %4492 = vmatpush1.msra.mxu0 0.0
        %4493 = vmatprep.subr.mxu0 0.0
        %4494 = vmatpush1.msra.mxu0 0.0
        %4495 = vmatprep.subr.mxu0 0.0
        %4496 = vmatpush1.msra.mxu0 0.0
        %4497 = vmatprep.subr.mxu0 0.0
        %4498 = vmatpush1.msra.mxu0 0.0
        %4499 = vmatprep.subr.mxu0 0.0
        %4500 = vmatpush1.msra.mxu0 0.0
        %4501 = vmatprep.subr.mxu0 0.0
        %4502 = vmatpush1.msra.mxu0 0.0
        %4503 = vmatprep.subr.mxu0 0.0
        %4504 = vmatpush1.msra.mxu0 0.0
        %4505 = vmatprep.subr.mxu0 0.0
        %4506 = vmatpush1.msra.mxu0 0.0
        %4507 = vmatprep.subr.mxu0 0.0
        %4508 = vmatpush1.msra.mxu0 0.0
        %4509 = vmatprep.subr.mxu0 0.0
        %4510 = vmatpush1.msra.mxu0 0.0
        %4511 = vmatprep.subr.mxu0 %v3727
        %4512 = vmatpush1.msra.mxu0 %v3726
        %4513 = vmatprep.subr.mxu0 0.0
        %4514 = vmatpush2.msra.mxu0 0.0
        %4515 = vmatprep.subr.mxu0 0.0
        %4516 = vmatpush2.msra.mxu0 0.0
        %4517 = vmatprep.subr.mxu0 0.0
        %4518 = vmatpush2.msra.mxu0 0.0
        %4519 = vmatprep.subr.mxu0 0.0
        %4520 = vmatpush2.msra.mxu0 0.0
        %4521 = vmatprep.subr.mxu0 0.0
        %4522 = vmatpush2.msra.mxu0 0.0
        %4523 = vmatprep.subr.mxu0 0.0
        %4524 = vmatpush2.msra.mxu0 0.0
        %4525 = vmatprep.subr.mxu0 0.0
        %4526 = vmatpush2.msra.mxu0 0.0
        %4527 = vmatprep.subr.mxu0 0.0
        %4528 = vmatpush2.msra.mxu0 0.0
        %4529 = vmatprep.subr.mxu0 0.0
        %4530 = vmatpush2.msra.mxu0 0.0
        %4531 = vmatprep.subr.mxu0 0.0
        %4532 = vmatpush2.msra.mxu0 0.0
        %4533 = vmatprep.subr.mxu0 0.0
        %4534 = vmatpush2.msra.mxu0 0.0
        %4535 = vmatprep.subr.mxu0 0.0
        %4536 = vmatpush2.msra.mxu0 0.0
        %4537 = vmatprep.subr.mxu0 0.0
        %4538 = vmatpush2.msra.mxu0 0.0
        %4539 = vmatprep.subr.mxu0 0.0
        %4540 = vmatpush2.msra.mxu0 0.0
        %4541 = vmatprep.subr.mxu0 0.0
        %4542 = vmatpush2.msra.mxu0 0.0
        %4543 = vmatprep.subr.mxu0 0.0
        %4544 = vmatpush2.msra.mxu0 0.0
        %4545 = vmatprep.mubr.f32.mxu0 0.0
        %4546 = vmatmul.mubr.f32.gmra.mxu0 %v4126
        %v4547 = vpop.f32.mrf.mxu0
        %v4548 = vadd.f32 %v4435, %v4547
        %v4549 = vpop.f32.mrf.mxu0
        %v4550 = vadd.f32 %v4437, %v4549
        %4551 = vmatprep.mubr.f32.mxu0 0.0
        %4552 = vmatmul.mubr.f32.gmra.mxu0 %v4128
        %v4553 = vpop.f32.mrf.mxu0
        %v4554 = vadd.f32 %v4441, %v4553
        %v4555 = vpop.f32.mrf.mxu0
        %v4556 = vadd.f32 %v4443, %v4555
        %4557 = vmatprep.mubr.f32.mxu0 0.0
        %4558 = vmatmul.mubr.f32.gmra.mxu0 %v4130
        %v4559 = vpop.f32.mrf.mxu0
        %v4560 = vadd.f32 %v4447, %v4559
        %v4561 = vpop.f32.mrf.mxu0
        %v4562 = vadd.f32 %v4449, %v4561
        %4563 = vmatprep.mubr.f32.mxu0 0.0
        %4564 = vmatmul.mubr.f32.gmra.mxu0 %v4132
        %v4565 = vpop.f32.mrf.mxu0
        %v4566 = vadd.f32 %v4453, %v4565
        %v4567 = vpop.f32.mrf.mxu0
        %v4568 = vadd.f32 %v4455, %v4567
        %4569 = vmatprep.mubr.f32.mxu0 0.0
        %4570 = vmatmul.mubr.f32.gmra.mxu0 %v4134
        %v4571 = vpop.f32.mrf.mxu0
        %v4572 = vadd.f32 %v4459, %v4571
        %v4573 = vpop.f32.mrf.mxu0
        %v4574 = vadd.f32 %v4461, %v4573
        %4575 = vmatprep.mubr.f32.mxu0 0.0
        %4576 = vmatmul.mubr.f32.gmra.mxu0 %v4136
        %v4577 = vpop.f32.mrf.mxu0
        %v4578 = vadd.f32 %v4465, %v4577
        %v4579 = vpop.f32.mrf.mxu0
        %v4580 = vadd.f32 %v4467, %v4579
        %4581 = vmatprep.mubr.f32.mxu0 0.0
        %4582 = vmatmul.mubr.f32.gmra.mxu0 %v4138
        %v4583 = vpop.f32.mrf.mxu0
        %v4584 = vadd.f32 %v4471, %v4583
        %v4585 = vpop.f32.mrf.mxu0
        %v4586 = vadd.f32 %v4473, %v4585
        %4587 = vmatprep.mubr.f32.mxu0 0.0
        %4588 = vmatmul.mubr.f32.gmra.mxu0 %v4140
        %v4589 = vpop.f32.mrf.mxu0
        %v4590 = vadd.f32 %v4477, %v4589
        %v4591 = vpop.f32.mrf.mxu0
        %v4592 = vadd.f32 %v4479, %v4591
        %4593 = vdwg.mxu0
        %4594 = vmatprep.subr.mxu0 %v3627
        %4595 = vmatpush1.msra.mxu0 %v3626
        %4596 = vmatprep.subr.mxu0 %v3621
        %4597 = vmatpush1.msra.mxu0 %v3620
        %4598 = vmatprep.subr.mxu0 %v3615
        %4599 = vmatpush1.msra.mxu0 %v3614
        %4600 = vmatprep.subr.mxu0 %v3609
        %4601 = vmatpush1.msra.mxu0 %v3608
        %4602 = vmatprep.subr.mxu0 %v3603
        %4603 = vmatpush1.msra.mxu0 %v3602
        %4604 = vmatprep.subr.mxu0 %v3597
        %4605 = vmatpush1.msra.mxu0 %v3596
        %4606 = vmatprep.subr.mxu0 %v3591
        %4607 = vmatpush1.msra.mxu0 %v3590
        %4608 = vmatprep.subr.mxu0 %v3585
        %4609 = vmatpush1.msra.mxu0 %v3584
        %4610 = vmatprep.subr.mxu0 %v3579
        %4611 = vmatpush1.msra.mxu0 %v3578
        %4612 = vmatprep.subr.mxu0 %v3573
        %4613 = vmatpush1.msra.mxu0 %v3572
        %4614 = vmatprep.subr.mxu0 %v3567
        %4615 = vmatpush1.msra.mxu0 %v3566
        %4616 = vmatprep.subr.mxu0 %v3561
        %4617 = vmatpush1.msra.mxu0 %v3560
        %4618 = vmatprep.subr.mxu0 %v3555
        %4619 = vmatpush1.msra.mxu0 %v3554
        %4620 = vmatprep.subr.mxu0 %v3549
        %4621 = vmatpush1.msra.mxu0 %v3548
        %4622 = vmatprep.subr.mxu0 %v3543
        %4623 = vmatpush1.msra.mxu0 %v3542
        %4624 = vmatprep.subr.mxu0 %v3537
        %4625 = vmatpush1.msra.mxu0 %v3536
        %4626 = vmatprep.subr.mxu0 %v3723
        %4627 = vmatpush2.msra.mxu0 %v3722
        %4628 = vmatprep.subr.mxu0 %v3717
        %4629 = vmatpush2.msra.mxu0 %v3716
        %4630 = vmatprep.subr.mxu0 %v3711
        %4631 = vmatpush2.msra.mxu0 %v3710
        %4632 = vmatprep.subr.mxu0 %v3705
        %4633 = vmatpush2.msra.mxu0 %v3704
        %4634 = vmatprep.subr.mxu0 %v3699
        %4635 = vmatpush2.msra.mxu0 %v3698
        %4636 = vmatprep.subr.mxu0 %v3693
        %4637 = vmatpush2.msra.mxu0 %v3692
        %4638 = vmatprep.subr.mxu0 %v3687
        %4639 = vmatpush2.msra.mxu0 %v3686
        %4640 = vmatprep.subr.mxu0 %v3681
        %4641 = vmatpush2.msra.mxu0 %v3680
        %4642 = vmatprep.subr.mxu0 %v3675
        %4643 = vmatpush2.msra.mxu0 %v3674
        %4644 = vmatprep.subr.mxu0 %v3669
        %4645 = vmatpush2.msra.mxu0 %v3668
        %4646 = vmatprep.subr.mxu0 %v3663
        %4647 = vmatpush2.msra.mxu0 %v3662
        %4648 = vmatprep.subr.mxu0 %v3657
        %4649 = vmatpush2.msra.mxu0 %v3656
        %4650 = vmatprep.subr.mxu0 %v3651
        %4651 = vmatpush2.msra.mxu0 %v3650
        %4652 = vmatprep.subr.mxu0 %v3645
        %4653 = vmatpush2.msra.mxu0 %v3644
        %4654 = vmatprep.subr.mxu0 %v3639
        %4655 = vmatpush2.msra.mxu0 %v3638
        %4656 = vmatprep.subr.mxu0 %v3633
        %4657 = vmatpush2.msra.mxu0 %v3632
        %4658 = vmatprep.mubr.f32.mxu0 %v4064
        %4659 = vmatmul.mubr.f32.gmra.mxu0 %v4061
        %v4660 = vpop.f32.mrf.mxu0
        %v4661 = vadd.f32 0.0, %v4660
        %v4662 = vpop.f32.mrf.mxu0
        %v4663 = vadd.f32 0.0, %v4662
        %4664 = vmatprep.mubr.f32.mxu0 %v4071
        %4665 = vmatmul.mubr.f32.gmra.mxu0 %v4069
        %v4666 = vpop.f32.mrf.mxu0
        %v4667 = vadd.f32 0.0, %v4666
        %v4668 = vpop.f32.mrf.mxu0
        %v4669 = vadd.f32 0.0, %v4668
        %4670 = vmatprep.mubr.f32.mxu0 %v4077
        %4671 = vmatmul.mubr.f32.gmra.mxu0 %v4075
        %v4672 = vpop.f32.mrf.mxu0
        %v4673 = vadd.f32 0.0, %v4672
        %v4674 = vpop.f32.mrf.mxu0
        %v4675 = vadd.f32 0.0, %v4674
        %4676 = vmatprep.mubr.f32.mxu0 %v4083
        %4677 = vmatmul.mubr.f32.gmra.mxu0 %v4081
        %v4678 = vpop.f32.mrf.mxu0
        %v4679 = vadd.f32 0.0, %v4678
        %v4680 = vpop.f32.mrf.mxu0
        %v4681 = vadd.f32 0.0, %v4680
        %4682 = vmatprep.mubr.f32.mxu0 %v4089
        %4683 = vmatmul.mubr.f32.gmra.mxu0 %v4087
        %v4684 = vpop.f32.mrf.mxu0
        %v4685 = vadd.f32 0.0, %v4684
        %v4686 = vpop.f32.mrf.mxu0
        %v4687 = vadd.f32 0.0, %v4686
        %4688 = vmatprep.mubr.f32.mxu0 %v4095
        %4689 = vmatmul.mubr.f32.gmra.mxu0 %v4093
        %v4690 = vpop.f32.mrf.mxu0
        %v4691 = vadd.f32 0.0, %v4690
        %v4692 = vpop.f32.mrf.mxu0
        %v4693 = vadd.f32 0.0, %v4692
        %4694 = vmatprep.mubr.f32.mxu0 %v4101
        %4695 = vmatmul.mubr.f32.gmra.mxu0 %v4099
        %v4696 = vpop.f32.mrf.mxu0
        %v4697 = vadd.f32 0.0, %v4696
        %v4698 = vpop.f32.mrf.mxu0
        %v4699 = vadd.f32 0.0, %v4698
        %4700 = vmatprep.mubr.f32.mxu0 %v4107
        %4701 = vmatmul.mubr.f32.gmra.mxu0 %v4105
        %v4702 = vpop.f32.mrf.mxu0
        %v4703 = vadd.f32 0.0, %v4702
        %v4704 = vpop.f32.mrf.mxu0
        %v4705 = vadd.f32 0.0, %v4704
        %4706 = vdwg.mxu0
        %4707 = vmatprep.subr.mxu0 0.0
        %4708 = vmatpush1.msra.mxu0 0.0
        %4709 = vmatprep.subr.mxu0 0.0
        %4710 = vmatpush1.msra.mxu0 0.0
        %4711 = vmatprep.subr.mxu0 0.0
        %4712 = vmatpush1.msra.mxu0 0.0
        %4713 = vmatprep.subr.mxu0 0.0
        %4714 = vmatpush1.msra.mxu0 0.0
        %4715 = vmatprep.subr.mxu0 0.0
        %4716 = vmatpush1.msra.mxu0 0.0
        %4717 = vmatprep.subr.mxu0 0.0
        %4718 = vmatpush1.msra.mxu0 0.0
        %4719 = vmatprep.subr.mxu0 0.0
        %4720 = vmatpush1.msra.mxu0 0.0
        %4721 = vmatprep.subr.mxu0 0.0
        %4722 = vmatpush1.msra.mxu0 0.0
        %4723 = vmatprep.subr.mxu0 0.0
        %4724 = vmatpush1.msra.mxu0 0.0
        %4725 = vmatprep.subr.mxu0 0.0
        %4726 = vmatpush1.msra.mxu0 0.0
        %4727 = vmatprep.subr.mxu0 0.0
        %4728 = vmatpush1.msra.mxu0 0.0
        %4729 = vmatprep.subr.mxu0 0.0
        %4730 = vmatpush1.msra.mxu0 0.0
        %4731 = vmatprep.subr.mxu0 0.0
        %4732 = vmatpush1.msra.mxu0 0.0
        %4733 = vmatprep.subr.mxu0 0.0
        %4734 = vmatpush1.msra.mxu0 0.0
        %4735 = vmatprep.subr.mxu0 0.0
        %4736 = vmatpush1.msra.mxu0 0.0
        %4737 = vmatprep.subr.mxu0 %v3729
        %4738 = vmatpush1.msra.mxu0 %v3728
        %4739 = vmatprep.subr.mxu0 0.0
        %4740 = vmatpush2.msra.mxu0 0.0
        %4741 = vmatprep.subr.mxu0 0.0
        %4742 = vmatpush2.msra.mxu0 0.0
        %4743 = vmatprep.subr.mxu0 0.0
        %4744 = vmatpush2.msra.mxu0 0.0
        %4745 = vmatprep.subr.mxu0 0.0
        %4746 = vmatpush2.msra.mxu0 0.0
        %4747 = vmatprep.subr.mxu0 0.0
        %4748 = vmatpush2.msra.mxu0 0.0
        %4749 = vmatprep.subr.mxu0 0.0
        %4750 = vmatpush2.msra.mxu0 0.0
        %4751 = vmatprep.subr.mxu0 0.0
        %4752 = vmatpush2.msra.mxu0 0.0
        %4753 = vmatprep.subr.mxu0 0.0
        %4754 = vmatpush2.msra.mxu0 0.0
        %4755 = vmatprep.subr.mxu0 0.0
        %4756 = vmatpush2.msra.mxu0 0.0
        %4757 = vmatprep.subr.mxu0 0.0
        %4758 = vmatpush2.msra.mxu0 0.0
        %4759 = vmatprep.subr.mxu0 0.0
        %4760 = vmatpush2.msra.mxu0 0.0
        %4761 = vmatprep.subr.mxu0 0.0
        %4762 = vmatpush2.msra.mxu0 0.0
        %4763 = vmatprep.subr.mxu0 0.0
        %4764 = vmatpush2.msra.mxu0 0.0
        %4765 = vmatprep.subr.mxu0 0.0
        %4766 = vmatpush2.msra.mxu0 0.0
        %4767 = vmatprep.subr.mxu0 0.0
        %4768 = vmatpush2.msra.mxu0 0.0
        %4769 = vmatprep.subr.mxu0 0.0
        %4770 = vmatpush2.msra.mxu0 0.0
        %4771 = vmatprep.mubr.f32.mxu0 0.0
        %4772 = vmatmul.mubr.f32.gmra.mxu0 %v4126
        %v4773 = vpop.f32.mrf.mxu0
        %v4774 = vadd.f32 %v4661, %v4773
        %v4775 = vpop.f32.mrf.mxu0
        %v4776 = vadd.f32 %v4663, %v4775
        %4777 = vmatprep.mubr.f32.mxu0 0.0
        %4778 = vmatmul.mubr.f32.gmra.mxu0 %v4128
        %v4779 = vpop.f32.mrf.mxu0
        %v4780 = vadd.f32 %v4667, %v4779
        %v4781 = vpop.f32.mrf.mxu0
        %v4782 = vadd.f32 %v4669, %v4781
        %4783 = vmatprep.mubr.f32.mxu0 0.0
        %4784 = vmatmul.mubr.f32.gmra.mxu0 %v4130
        %v4785 = vpop.f32.mrf.mxu0
        %v4786 = vadd.f32 %v4673, %v4785
        %v4787 = vpop.f32.mrf.mxu0
        %v4788 = vadd.f32 %v4675, %v4787
        %4789 = vmatprep.mubr.f32.mxu0 0.0
        %4790 = vmatmul.mubr.f32.gmra.mxu0 %v4132
        %v4791 = vpop.f32.mrf.mxu0
        %v4792 = vadd.f32 %v4679, %v4791
        %v4793 = vpop.f32.mrf.mxu0
        %v4794 = vadd.f32 %v4681, %v4793
        %4795 = vmatprep.mubr.f32.mxu0 0.0
        %4796 = vmatmul.mubr.f32.gmra.mxu0 %v4134
        %v4797 = vpop.f32.mrf.mxu0
        %v4798 = vadd.f32 %v4685, %v4797
        %v4799 = vpop.f32.mrf.mxu0
        %v4800 = vadd.f32 %v4687, %v4799
        %4801 = vmatprep.mubr.f32.mxu0 0.0
        %4802 = vmatmul.mubr.f32.gmra.mxu0 %v4136
        %v4803 = vpop.f32.mrf.mxu0
        %v4804 = vadd.f32 %v4691, %v4803
        %v4805 = vpop.f32.mrf.mxu0
        %v4806 = vadd.f32 %v4693, %v4805
        %4807 = vmatprep.mubr.f32.mxu0 0.0
        %4808 = vmatmul.mubr.f32.gmra.mxu0 %v4138
        %v4809 = vpop.f32.mrf.mxu0
        %v4810 = vadd.f32 %v4697, %v4809
        %v4811 = vpop.f32.mrf.mxu0
        %v4812 = vadd.f32 %v4699, %v4811
        %4813 = vmatprep.mubr.f32.mxu0 0.0
        %4814 = vmatmul.mubr.f32.gmra.mxu0 %v4140
        %v4815 = vpop.f32.mrf.mxu0
        %v4816 = vadd.f32 %v4703, %v4815
        %v4817 = vpop.f32.mrf.mxu0
        %v4818 = vadd.f32 %v4705, %v4817
        %4819 = vdwg.mxu0
        %v4836 = vsel %vm1617, %v3797, 0
        %v4838 = vsel %vm1617, %v3832, 0
        %v4840 = vsel %vm1617, %v3867, 0
        %v4842 = vsel %vm1617, %v3902, 0
        %v4844 = vsel %vm1617, %v3937, 0
        %v4846 = vsel %vm1617, %v3972, 0
        %v4848 = vsel %vm1617, %v4007, 0
        %v4850 = vsel %vm1617, %v4042, 0
        %4852 = vmatprep.subr.mxu0 %v3424
        %4853 = vmatpush1.msra.mxu0 %v3423
        %4854 = vmatprep.subr.mxu0 %v3418
        %4855 = vmatpush1.msra.mxu0 %v3417
        %4856 = vmatprep.subr.mxu0 %v3412
        %4857 = vmatpush1.msra.mxu0 %v3411
        %4858 = vmatprep.subr.mxu0 %v3406
        %4859 = vmatpush1.msra.mxu0 %v3405
        %4860 = vmatprep.subr.mxu0 %v3400
        %4861 = vmatpush1.msra.mxu0 %v3399
        %4862 = vmatprep.subr.mxu0 %v3394
        %4863 = vmatpush1.msra.mxu0 %v3393
        %4864 = vmatprep.subr.mxu0 %v3388
        %4865 = vmatpush1.msra.mxu0 %v3387
        %4866 = vmatprep.subr.mxu0 %v3382
        %4867 = vmatpush1.msra.mxu0 %v3381
        %4868 = vmatprep.subr.mxu0 %v3376
        %4869 = vmatpush1.msra.mxu0 %v3375
        %4870 = vmatprep.subr.mxu0 %v3370
        %4871 = vmatpush1.msra.mxu0 %v3369
        %4872 = vmatprep.subr.mxu0 %v3364
        %4873 = vmatpush1.msra.mxu0 %v3363
        %4874 = vmatprep.subr.mxu0 %v3358
        %4875 = vmatpush1.msra.mxu0 %v3357
        %4876 = vmatprep.subr.mxu0 %v3352
        %4877 = vmatpush1.msra.mxu0 %v3351
        %4878 = vmatprep.subr.mxu0 %v3346
        %4879 = vmatpush1.msra.mxu0 %v3345
        %4880 = vmatprep.subr.mxu0 %v3340
        %4881 = vmatpush1.msra.mxu0 %v3339
        %4882 = vmatprep.subr.mxu0 %v3334
        %4883 = vmatpush1.msra.mxu0 %v3333
        %4884 = vmatprep.subr.mxu0 %v3520
        %4885 = vmatpush2.msra.mxu0 %v3519
        %4886 = vmatprep.subr.mxu0 %v3514
        %4887 = vmatpush2.msra.mxu0 %v3513
        %4888 = vmatprep.subr.mxu0 %v3508
        %4889 = vmatpush2.msra.mxu0 %v3507
        %4890 = vmatprep.subr.mxu0 %v3502
        %4891 = vmatpush2.msra.mxu0 %v3501
        %4892 = vmatprep.subr.mxu0 %v3496
        %4893 = vmatpush2.msra.mxu0 %v3495
        %4894 = vmatprep.subr.mxu0 %v3490
        %4895 = vmatpush2.msra.mxu0 %v3489
        %4896 = vmatprep.subr.mxu0 %v3484
        %4897 = vmatpush2.msra.mxu0 %v3483
        %4898 = vmatprep.subr.mxu0 %v3478
        %4899 = vmatpush2.msra.mxu0 %v3477
        %4900 = vmatprep.subr.mxu0 %v3472
        %4901 = vmatpush2.msra.mxu0 %v3471
        %4902 = vmatprep.subr.mxu0 %v3466
        %4903 = vmatpush2.msra.mxu0 %v3465
        %4904 = vmatprep.subr.mxu0 %v3460
        %4905 = vmatpush2.msra.mxu0 %v3459
        %4906 = vmatprep.subr.mxu0 %v3454
        %4907 = vmatpush2.msra.mxu0 %v3453
        %4908 = vmatprep.subr.mxu0 %v3448
        %4909 = vmatpush2.msra.mxu0 %v3447
        %4910 = vmatprep.subr.mxu0 %v3442
        %4911 = vmatpush2.msra.mxu0 %v3441
        %4912 = vmatprep.subr.mxu0 %v3436
        %4913 = vmatpush2.msra.mxu0 %v3435
        %4914 = vmatprep.subr.mxu0 %v3430
        %4915 = vmatpush2.msra.mxu0 %v3429
        %4916 = vmatprep.mubr.f32.mxu0 %v3796
        %4917 = vmatmul.mubr.f32.gmra.mxu0 %v3795
        %v4918 = vpop.f32.mrf.mxu0
        %v4919 = vadd.f32 %v4322, %v4918
        %v4920 = vpop.f32.mrf.mxu0
        %v4921 = vadd.f32 %v4324, %v4920
        %4922 = vmatprep.mubr.f32.mxu0 %v3831
        %4923 = vmatmul.mubr.f32.gmra.mxu0 %v3830
        %v4924 = vpop.f32.mrf.mxu0
        %v4925 = vadd.f32 %v4328, %v4924
        %v4926 = vpop.f32.mrf.mxu0
        %v4927 = vadd.f32 %v4330, %v4926
        %4928 = vmatprep.mubr.f32.mxu0 %v3866
        %4929 = vmatmul.mubr.f32.gmra.mxu0 %v3865
        %v4930 = vpop.f32.mrf.mxu0
        %v4931 = vadd.f32 %v4334, %v4930
        %v4932 = vpop.f32.mrf.mxu0
        %v4933 = vadd.f32 %v4336, %v4932
        %4934 = vmatprep.mubr.f32.mxu0 %v3901
        %4935 = vmatmul.mubr.f32.gmra.mxu0 %v3900
        %v4936 = vpop.f32.mrf.mxu0
        %v4937 = vadd.f32 %v4340, %v4936
        %v4938 = vpop.f32.mrf.mxu0
        %v4939 = vadd.f32 %v4342, %v4938
        %4940 = vmatprep.mubr.f32.mxu0 %v3936
        %4941 = vmatmul.mubr.f32.gmra.mxu0 %v3935
        %v4942 = vpop.f32.mrf.mxu0
        %v4943 = vadd.f32 %v4346, %v4942
        %v4944 = vpop.f32.mrf.mxu0
        %v4945 = vadd.f32 %v4348, %v4944
        %4946 = vmatprep.mubr.f32.mxu0 %v3971
        %4947 = vmatmul.mubr.f32.gmra.mxu0 %v3970
        %v4948 = vpop.f32.mrf.mxu0
        %v4949 = vadd.f32 %v4352, %v4948
        %v4950 = vpop.f32.mrf.mxu0
        %v4951 = vadd.f32 %v4354, %v4950
        %4952 = vmatprep.mubr.f32.mxu0 %v4006
        %4953 = vmatmul.mubr.f32.gmra.mxu0 %v4005
        %v4954 = vpop.f32.mrf.mxu0
        %v4955 = vadd.f32 %v4358, %v4954
        %v4956 = vpop.f32.mrf.mxu0
        %v4957 = vadd.f32 %v4360, %v4956
        %4958 = vmatprep.mubr.f32.mxu0 %v4041
        %4959 = vmatmul.mubr.f32.gmra.mxu0 %v4040
        %v4960 = vpop.f32.mrf.mxu0
        %v4961 = vadd.f32 %v4364, %v4960
        %v4962 = vpop.f32.mrf.mxu0
        %v4963 = vadd.f32 %v4366, %v4962
        %4964 = vdwg.mxu0
        %4965 = vmatprep.subr.mxu0 0.0
        %4966 = vmatpush1.msra.mxu0 0.0
        %4967 = vmatprep.subr.mxu0 0.0
        %4968 = vmatpush1.msra.mxu0 0.0
        %4969 = vmatprep.subr.mxu0 0.0
        %4970 = vmatpush1.msra.mxu0 0.0
        %4971 = vmatprep.subr.mxu0 0.0
        %4972 = vmatpush1.msra.mxu0 0.0
        %4973 = vmatprep.subr.mxu0 0.0
        %4974 = vmatpush1.msra.mxu0 0.0
        %4975 = vmatprep.subr.mxu0 0.0
        %4976 = vmatpush1.msra.mxu0 0.0
        %4977 = vmatprep.subr.mxu0 0.0
        %4978 = vmatpush1.msra.mxu0 0.0
        %4979 = vmatprep.subr.mxu0 0.0
        %4980 = vmatpush1.msra.mxu0 0.0
        %4981 = vmatprep.subr.mxu0 0.0
        %4982 = vmatpush1.msra.mxu0 0.0
        %4983 = vmatprep.subr.mxu0 0.0
        %4984 = vmatpush1.msra.mxu0 0.0
        %4985 = vmatprep.subr.mxu0 0.0
        %4986 = vmatpush1.msra.mxu0 0.0
        %4987 = vmatprep.subr.mxu0 0.0
        %4988 = vmatpush1.msra.mxu0 0.0
        %4989 = vmatprep.subr.mxu0 0.0
        %4990 = vmatpush1.msra.mxu0 0.0
        %4991 = vmatprep.subr.mxu0 0.0
        %4992 = vmatpush1.msra.mxu0 0.0
        %4993 = vmatprep.subr.mxu0 0.0
        %4994 = vmatpush1.msra.mxu0 0.0
        %4995 = vmatprep.subr.mxu0 %v3526
        %4996 = vmatpush1.msra.mxu0 %v3525
        %4997 = vmatprep.subr.mxu0 0.0
        %4998 = vmatpush2.msra.mxu0 0.0
        %4999 = vmatprep.subr.mxu0 0.0
        %5000 = vmatpush2.msra.mxu0 0.0
        %5001 = vmatprep.subr.mxu0 0.0
        %5002 = vmatpush2.msra.mxu0 0.0
        %5003 = vmatprep.subr.mxu0 0.0
        %5004 = vmatpush2.msra.mxu0 0.0
        %5005 = vmatprep.subr.mxu0 0.0
        %5006 = vmatpush2.msra.mxu0 0.0
        %5007 = vmatprep.subr.mxu0 0.0
        %5008 = vmatpush2.msra.mxu0 0.0
        %5009 = vmatprep.subr.mxu0 0.0
        %5010 = vmatpush2.msra.mxu0 0.0
        %5011 = vmatprep.subr.mxu0 0.0
        %5012 = vmatpush2.msra.mxu0 0.0
        %5013 = vmatprep.subr.mxu0 0.0
        %5014 = vmatpush2.msra.mxu0 0.0
        %5015 = vmatprep.subr.mxu0 0.0
        %5016 = vmatpush2.msra.mxu0 0.0
        %5017 = vmatprep.subr.mxu0 0.0
        %5018 = vmatpush2.msra.mxu0 0.0
        %5019 = vmatprep.subr.mxu0 0.0
        %5020 = vmatpush2.msra.mxu0 0.0
        %5021 = vmatprep.subr.mxu0 0.0
        %5022 = vmatpush2.msra.mxu0 0.0
        %5023 = vmatprep.subr.mxu0 0.0
        %5024 = vmatpush2.msra.mxu0 0.0
        %5025 = vmatprep.subr.mxu0 0.0
        %5026 = vmatpush2.msra.mxu0 0.0
        %5027 = vmatprep.subr.mxu0 0.0
        %5028 = vmatpush2.msra.mxu0 0.0
        %5029 = vmatprep.mubr.f32.mxu0 0.0
        %5030 = vmatmul.mubr.f32.gmra.mxu0 %v4836
        %v5031 = vpop.f32.mrf.mxu0
        %v5032 = vadd.f32 %v4919, %v5031
        %v5033 = vpop.f32.mrf.mxu0
        %v5034 = vadd.f32 %v4921, %v5033
        %5035 = vmatprep.mubr.f32.mxu0 0.0
        %5036 = vmatmul.mubr.f32.gmra.mxu0 %v4838
        %v5037 = vpop.f32.mrf.mxu0
        %v5038 = vadd.f32 %v4925, %v5037
        %v5039 = vpop.f32.mrf.mxu0
        %v5040 = vadd.f32 %v4927, %v5039
        %5041 = vmatprep.mubr.f32.mxu0 0.0
        %5042 = vmatmul.mubr.f32.gmra.mxu0 %v4840
        %v5043 = vpop.f32.mrf.mxu0
        %v5044 = vadd.f32 %v4931, %v5043
        %v5045 = vpop.f32.mrf.mxu0
        %v5046 = vadd.f32 %v4933, %v5045
        %5047 = vmatprep.mubr.f32.mxu0 0.0
        %5048 = vmatmul.mubr.f32.gmra.mxu0 %v4842
        %v5049 = vpop.f32.mrf.mxu0
        %v5050 = vadd.f32 %v4937, %v5049
        %v5051 = vpop.f32.mrf.mxu0
        %v5052 = vadd.f32 %v4939, %v5051
        %5053 = vmatprep.mubr.f32.mxu0 0.0
        %5054 = vmatmul.mubr.f32.gmra.mxu0 %v4844
        %v5055 = vpop.f32.mrf.mxu0
        %v5056 = vadd.f32 %v4943, %v5055
        %v5057 = vpop.f32.mrf.mxu0
        %v5058 = vadd.f32 %v4945, %v5057
        %5059 = vmatprep.mubr.f32.mxu0 0.0
        %5060 = vmatmul.mubr.f32.gmra.mxu0 %v4846
        %v5061 = vpop.f32.mrf.mxu0
        %v5062 = vadd.f32 %v4949, %v5061
        %v5063 = vpop.f32.mrf.mxu0
        %v5064 = vadd.f32 %v4951, %v5063
        %5065 = vmatprep.mubr.f32.mxu0 0.0
        %5066 = vmatmul.mubr.f32.gmra.mxu0 %v4848
        %v5067 = vpop.f32.mrf.mxu0
        %v5068 = vadd.f32 %v4955, %v5067
        %v5069 = vpop.f32.mrf.mxu0
        %v5070 = vadd.f32 %v4957, %v5069
        %5071 = vmatprep.mubr.f32.mxu0 0.0
        %5072 = vmatmul.mubr.f32.gmra.mxu0 %v4850
        %v5073 = vpop.f32.mrf.mxu0
        %v5074 = vadd.f32 %v4961, %v5073
        %v5075 = vpop.f32.mrf.mxu0
        %v5076 = vadd.f32 %v4963, %v5075
        %5077 = vdwg.mxu0
        %5078 = vmatprep.subr.mxu0 %v3426
        %5079 = vmatpush1.msra.mxu0 %v3425
        %5080 = vmatprep.subr.mxu0 %v3420
        %5081 = vmatpush1.msra.mxu0 %v3419
        %5082 = vmatprep.subr.mxu0 %v3414
        %5083 = vmatpush1.msra.mxu0 %v3413
        %5084 = vmatprep.subr.mxu0 %v3408
        %5085 = vmatpush1.msra.mxu0 %v3407
        %5086 = vmatprep.subr.mxu0 %v3402
        %5087 = vmatpush1.msra.mxu0 %v3401
        %5088 = vmatprep.subr.mxu0 %v3396
        %5089 = vmatpush1.msra.mxu0 %v3395
        %5090 = vmatprep.subr.mxu0 %v3390
        %5091 = vmatpush1.msra.mxu0 %v3389
        %5092 = vmatprep.subr.mxu0 %v3384
        %5093 = vmatpush1.msra.mxu0 %v3383
        %5094 = vmatprep.subr.mxu0 %v3378
        %5095 = vmatpush1.msra.mxu0 %v3377
        %5096 = vmatprep.subr.mxu0 %v3372
        %5097 = vmatpush1.msra.mxu0 %v3371
        %5098 = vmatprep.subr.mxu0 %v3366
        %5099 = vmatpush1.msra.mxu0 %v3365
        %5100 = vmatprep.subr.mxu0 %v3360
        %5101 = vmatpush1.msra.mxu0 %v3359
        %5102 = vmatprep.subr.mxu0 %v3354
        %5103 = vmatpush1.msra.mxu0 %v3353
        %5104 = vmatprep.subr.mxu0 %v3348
        %5105 = vmatpush1.msra.mxu0 %v3347
        %5106 = vmatprep.subr.mxu0 %v3342
        %5107 = vmatpush1.msra.mxu0 %v3341
        %5108 = vmatprep.subr.mxu0 %v3336
        %5109 = vmatpush1.msra.mxu0 %v3335
        %5110 = vmatprep.subr.mxu0 %v3522
        %5111 = vmatpush2.msra.mxu0 %v3521
        %5112 = vmatprep.subr.mxu0 %v3516
        %5113 = vmatpush2.msra.mxu0 %v3515
        %5114 = vmatprep.subr.mxu0 %v3510
        %5115 = vmatpush2.msra.mxu0 %v3509
        %5116 = vmatprep.subr.mxu0 %v3504
        %5117 = vmatpush2.msra.mxu0 %v3503
        %5118 = vmatprep.subr.mxu0 %v3498
        %5119 = vmatpush2.msra.mxu0 %v3497
        %5120 = vmatprep.subr.mxu0 %v3492
        %5121 = vmatpush2.msra.mxu0 %v3491
        %5122 = vmatprep.subr.mxu0 %v3486
        %5123 = vmatpush2.msra.mxu0 %v3485
        %5124 = vmatprep.subr.mxu0 %v3480
        %5125 = vmatpush2.msra.mxu0 %v3479
        %5126 = vmatprep.subr.mxu0 %v3474
        %5127 = vmatpush2.msra.mxu0 %v3473
        %5128 = vmatprep.subr.mxu0 %v3468
        %5129 = vmatpush2.msra.mxu0 %v3467
        %5130 = vmatprep.subr.mxu0 %v3462
        %5131 = vmatpush2.msra.mxu0 %v3461
        %5132 = vmatprep.subr.mxu0 %v3456
        %5133 = vmatpush2.msra.mxu0 %v3455
        %5134 = vmatprep.subr.mxu0 %v3450
        %5135 = vmatpush2.msra.mxu0 %v3449
        %5136 = vmatprep.subr.mxu0 %v3444
        %5137 = vmatpush2.msra.mxu0 %v3443
        %5138 = vmatprep.subr.mxu0 %v3438
        %5139 = vmatpush2.msra.mxu0 %v3437
        %5140 = vmatprep.subr.mxu0 %v3432
        %5141 = vmatpush2.msra.mxu0 %v3431
        %5142 = vmatprep.mubr.f32.mxu0 %v3796
        %5143 = vmatmul.mubr.f32.gmra.mxu0 %v3795
        %v5144 = vpop.f32.mrf.mxu0
        %v5145 = vadd.f32 %v4548, %v5144
        %v5146 = vpop.f32.mrf.mxu0
        %v5147 = vadd.f32 %v4550, %v5146
        %5148 = vmatprep.mubr.f32.mxu0 %v3831
        %5149 = vmatmul.mubr.f32.gmra.mxu0 %v3830
        %v5150 = vpop.f32.mrf.mxu0
        %v5151 = vadd.f32 %v4554, %v5150
        %v5152 = vpop.f32.mrf.mxu0
        %v5153 = vadd.f32 %v4556, %v5152
        %5154 = vmatprep.mubr.f32.mxu0 %v3866
        %5155 = vmatmul.mubr.f32.gmra.mxu0 %v3865
        %v5156 = vpop.f32.mrf.mxu0
        %v5157 = vadd.f32 %v4560, %v5156
        %v5158 = vpop.f32.mrf.mxu0
        %v5159 = vadd.f32 %v4562, %v5158
        %5160 = vmatprep.mubr.f32.mxu0 %v3901
        %5161 = vmatmul.mubr.f32.gmra.mxu0 %v3900
        %v5162 = vpop.f32.mrf.mxu0
        %v5163 = vadd.f32 %v4566, %v5162
        %v5164 = vpop.f32.mrf.mxu0
        %v5165 = vadd.f32 %v4568, %v5164
        %5166 = vmatprep.mubr.f32.mxu0 %v3936
        %5167 = vmatmul.mubr.f32.gmra.mxu0 %v3935
        %v5168 = vpop.f32.mrf.mxu0
        %v5169 = vadd.f32 %v4572, %v5168
        %v5170 = vpop.f32.mrf.mxu0
        %v5171 = vadd.f32 %v4574, %v5170
        %5172 = vmatprep.mubr.f32.mxu0 %v3971
        %5173 = vmatmul.mubr.f32.gmra.mxu0 %v3970
        %v5174 = vpop.f32.mrf.mxu0
        %v5175 = vadd.f32 %v4578, %v5174
        %v5176 = vpop.f32.mrf.mxu0
        %v5177 = vadd.f32 %v4580, %v5176
        %5178 = vmatprep.mubr.f32.mxu0 %v4006
        %5179 = vmatmul.mubr.f32.gmra.mxu0 %v4005
        %v5180 = vpop.f32.mrf.mxu0
        %v5181 = vadd.f32 %v4584, %v5180
        %v5182 = vpop.f32.mrf.mxu0
        %v5183 = vadd.f32 %v4586, %v5182
        %5184 = vmatprep.mubr.f32.mxu0 %v4041
        %5185 = vmatmul.mubr.f32.gmra.mxu0 %v4040
        %v5186 = vpop.f32.mrf.mxu0
        %v5187 = vadd.f32 %v4590, %v5186
        %v5188 = vpop.f32.mrf.mxu0
        %v5189 = vadd.f32 %v4592, %v5188
        %5190 = vdwg.mxu0
        %5191 = vmatprep.subr.mxu0 0.0
        %5192 = vmatpush1.msra.mxu0 0.0
        %5193 = vmatprep.subr.mxu0 0.0
        %5194 = vmatpush1.msra.mxu0 0.0
        %5195 = vmatprep.subr.mxu0 0.0
        %5196 = vmatpush1.msra.mxu0 0.0
        %5197 = vmatprep.subr.mxu0 0.0
        %5198 = vmatpush1.msra.mxu0 0.0
        %5199 = vmatprep.subr.mxu0 0.0
        %5200 = vmatpush1.msra.mxu0 0.0
        %5201 = vmatprep.subr.mxu0 0.0
        %5202 = vmatpush1.msra.mxu0 0.0
        %5203 = vmatprep.subr.mxu0 0.0
        %5204 = vmatpush1.msra.mxu0 0.0
        %5205 = vmatprep.subr.mxu0 0.0
        %5206 = vmatpush1.msra.mxu0 0.0
        %5207 = vmatprep.subr.mxu0 0.0
        %5208 = vmatpush1.msra.mxu0 0.0
        %5209 = vmatprep.subr.mxu0 0.0
        %5210 = vmatpush1.msra.mxu0 0.0
        %5211 = vmatprep.subr.mxu0 0.0
        %5212 = vmatpush1.msra.mxu0 0.0
        %5213 = vmatprep.subr.mxu0 0.0
        %5214 = vmatpush1.msra.mxu0 0.0
        %5215 = vmatprep.subr.mxu0 0.0
        %5216 = vmatpush1.msra.mxu0 0.0
        %5217 = vmatprep.subr.mxu0 0.0
        %5218 = vmatpush1.msra.mxu0 0.0
        %5219 = vmatprep.subr.mxu0 0.0
        %5220 = vmatpush1.msra.mxu0 0.0
        %5221 = vmatprep.subr.mxu0 %v3528
        %5222 = vmatpush1.msra.mxu0 %v3527
        %5223 = vmatprep.subr.mxu0 0.0
        %5224 = vmatpush2.msra.mxu0 0.0
        %5225 = vmatprep.subr.mxu0 0.0
        %5226 = vmatpush2.msra.mxu0 0.0
        %5227 = vmatprep.subr.mxu0 0.0
        %5228 = vmatpush2.msra.mxu0 0.0
        %5229 = vmatprep.subr.mxu0 0.0
        %5230 = vmatpush2.msra.mxu0 0.0
        %5231 = vmatprep.subr.mxu0 0.0
        %5232 = vmatpush2.msra.mxu0 0.0
        %5233 = vmatprep.subr.mxu0 0.0
        %5234 = vmatpush2.msra.mxu0 0.0
        %5235 = vmatprep.subr.mxu0 0.0
        %5236 = vmatpush2.msra.mxu0 0.0
        %5237 = vmatprep.subr.mxu0 0.0
        %5238 = vmatpush2.msra.mxu0 0.0
        %5239 = vmatprep.subr.mxu0 0.0
        %5240 = vmatpush2.msra.mxu0 0.0
        %5241 = vmatprep.subr.mxu0 0.0
        %5242 = vmatpush2.msra.mxu0 0.0
        %5243 = vmatprep.subr.mxu0 0.0
        %5244 = vmatpush2.msra.mxu0 0.0
        %5245 = vmatprep.subr.mxu0 0.0
        %5246 = vmatpush2.msra.mxu0 0.0
        %5247 = vmatprep.subr.mxu0 0.0
        %5248 = vmatpush2.msra.mxu0 0.0
        %5249 = vmatprep.subr.mxu0 0.0
        %5250 = vmatpush2.msra.mxu0 0.0
        %5251 = vmatprep.subr.mxu0 0.0
        %5252 = vmatpush2.msra.mxu0 0.0
        %5253 = vmatprep.subr.mxu0 0.0
        %5254 = vmatpush2.msra.mxu0 0.0
        %5255 = vmatprep.mubr.f32.mxu0 0.0
        %5256 = vmatmul.mubr.f32.gmra.mxu0 %v4836
        %v5257 = vpop.f32.mrf.mxu0
        %v5258 = vadd.f32 %v5145, %v5257
        %v5259 = vpop.f32.mrf.mxu0
        %v5260 = vadd.f32 %v5147, %v5259
        %5261 = vmatprep.mubr.f32.mxu0 0.0
        %5262 = vmatmul.mubr.f32.gmra.mxu0 %v4838
        %v5263 = vpop.f32.mrf.mxu0
        %v5264 = vadd.f32 %v5151, %v5263
        %v5265 = vpop.f32.mrf.mxu0
        %v5266 = vadd.f32 %v5153, %v5265
        %5267 = vmatprep.mubr.f32.mxu0 0.0
        %5268 = vmatmul.mubr.f32.gmra.mxu0 %v4840
        %v5269 = vpop.f32.mrf.mxu0
        %v5270 = vadd.f32 %v5157, %v5269
        %v5271 = vpop.f32.mrf.mxu0
        %v5272 = vadd.f32 %v5159, %v5271
        %5273 = vmatprep.mubr.f32.mxu0 0.0
        %5274 = vmatmul.mubr.f32.gmra.mxu0 %v4842
        %v5275 = vpop.f32.mrf.mxu0
        %v5276 = vadd.f32 %v5163, %v5275
        %v5277 = vpop.f32.mrf.mxu0
        %v5278 = vadd.f32 %v5165, %v5277
        %5279 = vmatprep.mubr.f32.mxu0 0.0
        %5280 = vmatmul.mubr.f32.gmra.mxu0 %v4844
        %v5281 = vpop.f32.mrf.mxu0
        %v5282 = vadd.f32 %v5169, %v5281
        %v5283 = vpop.f32.mrf.mxu0
        %v5284 = vadd.f32 %v5171, %v5283
        %5285 = vmatprep.mubr.f32.mxu0 0.0
        %5286 = vmatmul.mubr.f32.gmra.mxu0 %v4846
        %v5287 = vpop.f32.mrf.mxu0
        %v5288 = vadd.f32 %v5175, %v5287
        %v5289 = vpop.f32.mrf.mxu0
        %v5290 = vadd.f32 %v5177, %v5289
        %5291 = vmatprep.mubr.f32.mxu0 0.0
        %5292 = vmatmul.mubr.f32.gmra.mxu0 %v4848
        %v5293 = vpop.f32.mrf.mxu0
        %v5294 = vadd.f32 %v5181, %v5293
        %v5295 = vpop.f32.mrf.mxu0
        %v5296 = vadd.f32 %v5183, %v5295
        %5297 = vmatprep.mubr.f32.mxu0 0.0
        %5298 = vmatmul.mubr.f32.gmra.mxu0 %v4850
        %v5299 = vpop.f32.mrf.mxu0
        %v5300 = vadd.f32 %v5187, %v5299
        %v5301 = vpop.f32.mrf.mxu0
        %v5302 = vadd.f32 %v5189, %v5301
        %5303 = vdwg.mxu0
        %5304 = vmatprep.subr.mxu0 %v3428
        %5305 = vmatpush1.msra.mxu0 %v3427
        %5306 = vmatprep.subr.mxu0 %v3422
        %5307 = vmatpush1.msra.mxu0 %v3421
        %5308 = vmatprep.subr.mxu0 %v3416
        %5309 = vmatpush1.msra.mxu0 %v3415
        %5310 = vmatprep.subr.mxu0 %v3410
        %5311 = vmatpush1.msra.mxu0 %v3409
        %5312 = vmatprep.subr.mxu0 %v3404
        %5313 = vmatpush1.msra.mxu0 %v3403
        %5314 = vmatprep.subr.mxu0 %v3398
        %5315 = vmatpush1.msra.mxu0 %v3397
        %5316 = vmatprep.subr.mxu0 %v3392
        %5317 = vmatpush1.msra.mxu0 %v3391
        %5318 = vmatprep.subr.mxu0 %v3386
        %5319 = vmatpush1.msra.mxu0 %v3385
        %5320 = vmatprep.subr.mxu0 %v3380
        %5321 = vmatpush1.msra.mxu0 %v3379
        %5322 = vmatprep.subr.mxu0 %v3374
        %5323 = vmatpush1.msra.mxu0 %v3373
        %5324 = vmatprep.subr.mxu0 %v3368
        %5325 = vmatpush1.msra.mxu0 %v3367
        %5326 = vmatprep.subr.mxu0 %v3362
        %5327 = vmatpush1.msra.mxu0 %v3361
        %5328 = vmatprep.subr.mxu0 %v3356
        %5329 = vmatpush1.msra.mxu0 %v3355
        %5330 = vmatprep.subr.mxu0 %v3350
        %5331 = vmatpush1.msra.mxu0 %v3349
        %5332 = vmatprep.subr.mxu0 %v3344
        %5333 = vmatpush1.msra.mxu0 %v3343
        %5334 = vmatprep.subr.mxu0 %v3338
        %5335 = vmatpush1.msra.mxu0 %v3337
        %5336 = vmatprep.subr.mxu0 %v3524
        %5337 = vmatpush2.msra.mxu0 %v3523
        %5338 = vmatprep.subr.mxu0 %v3518
        %5339 = vmatpush2.msra.mxu0 %v3517
        %5340 = vmatprep.subr.mxu0 %v3512
        %5341 = vmatpush2.msra.mxu0 %v3511
        %5342 = vmatprep.subr.mxu0 %v3506
        %5343 = vmatpush2.msra.mxu0 %v3505
        %5344 = vmatprep.subr.mxu0 %v3500
        %5345 = vmatpush2.msra.mxu0 %v3499
        %5346 = vmatprep.subr.mxu0 %v3494
        %5347 = vmatpush2.msra.mxu0 %v3493
        %5348 = vmatprep.subr.mxu0 %v3488
        %5349 = vmatpush2.msra.mxu0 %v3487
        %5350 = vmatprep.subr.mxu0 %v3482
        %5351 = vmatpush2.msra.mxu0 %v3481
        %5352 = vmatprep.subr.mxu0 %v3476
        %5353 = vmatpush2.msra.mxu0 %v3475
        %5354 = vmatprep.subr.mxu0 %v3470
        %5355 = vmatpush2.msra.mxu0 %v3469
        %5356 = vmatprep.subr.mxu0 %v3464
        %5357 = vmatpush2.msra.mxu0 %v3463
        %5358 = vmatprep.subr.mxu0 %v3458
        %5359 = vmatpush2.msra.mxu0 %v3457
        %5360 = vmatprep.subr.mxu0 %v3452
        %5361 = vmatpush2.msra.mxu0 %v3451
        %5362 = vmatprep.subr.mxu0 %v3446
        %5363 = vmatpush2.msra.mxu0 %v3445
        %5364 = vmatprep.subr.mxu0 %v3440
        %5365 = vmatpush2.msra.mxu0 %v3439
        %5366 = vmatprep.subr.mxu0 %v3434
        %5367 = vmatpush2.msra.mxu0 %v3433
        %5368 = vmatprep.mubr.f32.mxu0 %v3796
        %5369 = vmatmul.mubr.f32.gmra.mxu0 %v3795
        %v5370 = vpop.f32.mrf.mxu0
        %v5371 = vadd.f32 %v4774, %v5370
        %v5372 = vpop.f32.mrf.mxu0
        %v5373 = vadd.f32 %v4776, %v5372
        %5374 = vmatprep.mubr.f32.mxu0 %v3831
        %5375 = vmatmul.mubr.f32.gmra.mxu0 %v3830
        %v5376 = vpop.f32.mrf.mxu0
        %v5377 = vadd.f32 %v4780, %v5376
        %v5378 = vpop.f32.mrf.mxu0
        %v5379 = vadd.f32 %v4782, %v5378
        %5380 = vmatprep.mubr.f32.mxu0 %v3866
        %5381 = vmatmul.mubr.f32.gmra.mxu0 %v3865
        %v5382 = vpop.f32.mrf.mxu0
        %v5383 = vadd.f32 %v4786, %v5382
        %v5384 = vpop.f32.mrf.mxu0
        %v5385 = vadd.f32 %v4788, %v5384
        %5386 = vmatprep.mubr.f32.mxu0 %v3901
        %5387 = vmatmul.mubr.f32.gmra.mxu0 %v3900
        %v5388 = vpop.f32.mrf.mxu0
        %v5389 = vadd.f32 %v4792, %v5388
        %v5390 = vpop.f32.mrf.mxu0
        %v5391 = vadd.f32 %v4794, %v5390
        %5392 = vmatprep.mubr.f32.mxu0 %v3936
        %5393 = vmatmul.mubr.f32.gmra.mxu0 %v3935
        %v5394 = vpop.f32.mrf.mxu0
        %v5395 = vadd.f32 %v4798, %v5394
        %v5396 = vpop.f32.mrf.mxu0
        %v5397 = vadd.f32 %v4800, %v5396
        %5398 = vmatprep.mubr.f32.mxu0 %v3971
        %5399 = vmatmul.mubr.f32.gmra.mxu0 %v3970
        %v5400 = vpop.f32.mrf.mxu0
        %v5401 = vadd.f32 %v4804, %v5400
        %v5402 = vpop.f32.mrf.mxu0
        %v5403 = vadd.f32 %v4806, %v5402
        %5404 = vmatprep.mubr.f32.mxu0 %v4006
        %5405 = vmatmul.mubr.f32.gmra.mxu0 %v4005
        %v5406 = vpop.f32.mrf.mxu0
        %v5407 = vadd.f32 %v4810, %v5406
        %v5408 = vpop.f32.mrf.mxu0
        %v5409 = vadd.f32 %v4812, %v5408
        %5410 = vmatprep.mubr.f32.mxu0 %v4041
        %5411 = vmatmul.mubr.f32.gmra.mxu0 %v4040
        %v5412 = vpop.f32.mrf.mxu0
        %v5413 = vadd.f32 %v4816, %v5412
        %v5414 = vpop.f32.mrf.mxu0
        %v5415 = vadd.f32 %v4818, %v5414
        %5416 = vdwg.mxu0
        %5417 = vmatprep.subr.mxu0 0.0
        %5418 = vmatpush1.msra.mxu0 0.0
        %5419 = vmatprep.subr.mxu0 0.0
        %5420 = vmatpush1.msra.mxu0 0.0
        %5421 = vmatprep.subr.mxu0 0.0
        %5422 = vmatpush1.msra.mxu0 0.0
        %5423 = vmatprep.subr.mxu0 0.0
        %5424 = vmatpush1.msra.mxu0 0.0
        %5425 = vmatprep.subr.mxu0 0.0
        %5426 = vmatpush1.msra.mxu0 0.0
        %5427 = vmatprep.subr.mxu0 0.0
        %5428 = vmatpush1.msra.mxu0 0.0
        %5429 = vmatprep.subr.mxu0 0.0
        %5430 = vmatpush1.msra.mxu0 0.0
        %5431 = vmatprep.subr.mxu0 0.0
        %5432 = vmatpush1.msra.mxu0 0.0
        %5433 = vmatprep.subr.mxu0 0.0
        %5434 = vmatpush1.msra.mxu0 0.0
        %5435 = vmatprep.subr.mxu0 0.0
        %5436 = vmatpush1.msra.mxu0 0.0
        %5437 = vmatprep.subr.mxu0 0.0
        %5438 = vmatpush1.msra.mxu0 0.0
        %5439 = vmatprep.subr.mxu0 0.0
        %5440 = vmatpush1.msra.mxu0 0.0
        %5441 = vmatprep.subr.mxu0 0.0
        %5442 = vmatpush1.msra.mxu0 0.0
        %5443 = vmatprep.subr.mxu0 0.0
        %5444 = vmatpush1.msra.mxu0 0.0
        %5445 = vmatprep.subr.mxu0 0.0
        %5446 = vmatpush1.msra.mxu0 0.0
        %5447 = vmatprep.subr.mxu0 %v3530
        %5448 = vmatpush1.msra.mxu0 %v3529
        %5449 = vmatprep.subr.mxu0 0.0
        %5450 = vmatpush2.msra.mxu0 0.0
        %5451 = vmatprep.subr.mxu0 0.0
        %5452 = vmatpush2.msra.mxu0 0.0
        %5453 = vmatprep.subr.mxu0 0.0
        %5454 = vmatpush2.msra.mxu0 0.0
        %5455 = vmatprep.subr.mxu0 0.0
        %5456 = vmatpush2.msra.mxu0 0.0
        %5457 = vmatprep.subr.mxu0 0.0
        %5458 = vmatpush2.msra.mxu0 0.0
        %5459 = vmatprep.subr.mxu0 0.0
        %5460 = vmatpush2.msra.mxu0 0.0
        %5461 = vmatprep.subr.mxu0 0.0
        %5462 = vmatpush2.msra.mxu0 0.0
        %5463 = vmatprep.subr.mxu0 0.0
        %5464 = vmatpush2.msra.mxu0 0.0
        %5465 = vmatprep.subr.mxu0 0.0
        %5466 = vmatpush2.msra.mxu0 0.0
        %5467 = vmatprep.subr.mxu0 0.0
        %5468 = vmatpush2.msra.mxu0 0.0
        %5469 = vmatprep.subr.mxu0 0.0
        %5470 = vmatpush2.msra.mxu0 0.0
        %5471 = vmatprep.subr.mxu0 0.0
        %5472 = vmatpush2.msra.mxu0 0.0
        %5473 = vmatprep.subr.mxu0 0.0
        %5474 = vmatpush2.msra.mxu0 0.0
        %5475 = vmatprep.subr.mxu0 0.0
        %5476 = vmatpush2.msra.mxu0 0.0
        %5477 = vmatprep.subr.mxu0 0.0
        %5478 = vmatpush2.msra.mxu0 0.0
        %5479 = vmatprep.subr.mxu0 0.0
        %5480 = vmatpush2.msra.mxu0 0.0
        %5481 = vmatprep.mubr.f32.mxu0 0.0
        %5482 = vmatmul.mubr.f32.gmra.mxu0 %v4836
        %v5483 = vpop.f32.mrf.mxu0
        %v5484 = vadd.f32 %v5371, %v5483
        %v5485 = vpop.f32.mrf.mxu0
        %v5486 = vadd.f32 %v5373, %v5485
        %5487 = vmatprep.mubr.f32.mxu0 0.0
        %5488 = vmatmul.mubr.f32.gmra.mxu0 %v4838
        %v5489 = vpop.f32.mrf.mxu0
        %v5490 = vadd.f32 %v5377, %v5489
        %v5491 = vpop.f32.mrf.mxu0
        %v5492 = vadd.f32 %v5379, %v5491
        %5493 = vmatprep.mubr.f32.mxu0 0.0
        %5494 = vmatmul.mubr.f32.gmra.mxu0 %v4840
        %v5495 = vpop.f32.mrf.mxu0
        %v5496 = vadd.f32 %v5383, %v5495
        %v5497 = vpop.f32.mrf.mxu0
        %v5498 = vadd.f32 %v5385, %v5497
        %5499 = vmatprep.mubr.f32.mxu0 0.0
        %5500 = vmatmul.mubr.f32.gmra.mxu0 %v4842
        %v5501 = vpop.f32.mrf.mxu0
        %v5502 = vadd.f32 %v5389, %v5501
        %v5503 = vpop.f32.mrf.mxu0
        %v5504 = vadd.f32 %v5391, %v5503
        %5505 = vmatprep.mubr.f32.mxu0 0.0
        %5506 = vmatmul.mubr.f32.gmra.mxu0 %v4844
        %v5507 = vpop.f32.mrf.mxu0
        %v5508 = vadd.f32 %v5395, %v5507
        %v5509 = vpop.f32.mrf.mxu0
        %v5510 = vadd.f32 %v5397, %v5509
        %5511 = vmatprep.mubr.f32.mxu0 0.0
        %5512 = vmatmul.mubr.f32.gmra.mxu0 %v4846
        %v5513 = vpop.f32.mrf.mxu0
        %v5514 = vadd.f32 %v5401, %v5513
        %v5515 = vpop.f32.mrf.mxu0
        %v5516 = vadd.f32 %v5403, %v5515
        %5517 = vmatprep.mubr.f32.mxu0 0.0
        %5518 = vmatmul.mubr.f32.gmra.mxu0 %v4848
        %v5519 = vpop.f32.mrf.mxu0
        %v5520 = vadd.f32 %v5407, %v5519
        %v5521 = vpop.f32.mrf.mxu0
        %v5522 = vadd.f32 %v5409, %v5521
        %5523 = vmatprep.mubr.f32.mxu0 0.0
        %5524 = vmatmul.mubr.f32.gmra.mxu0 %v4850
        %v5525 = vpop.f32.mrf.mxu0
        %v5526 = vadd.f32 %v5413, %v5525
        %v5527 = vpop.f32.mrf.mxu0
        %v5528 = vadd.f32 %v5415, %v5527
        %5529 = vdwg.mxu0
        %s5530 = scalar_lea.vmem [#allocation8], 3168
        %v5531 = vld [vmem:[%s5530] sm:$0xff]
        %v5532 = vld [vmem:[%s5530 + $0x8] sm:$0xff]
        %v5533 = vld [vmem:[%s5530 + $0x10] sm:$0xff]
        %v5534 = vld [vmem:[%s5530 + $0x18] sm:$0xff]
        %v5535 = vld [vmem:[%s5530 + $0x20] sm:$0xff]
        %v5536 = vld [vmem:[%s5530 + $0x28] sm:$0xff]
        %v5537 = vld [vmem:[%s5530 + $0x30] sm:$0xff]
        %v5538 = vld [vmem:[%s5530 + $0x38] sm:$0xff]
        %v5539 = vld [vmem:[%s5530 + $0x40] sm:$0xff]
        %v5540 = vld [vmem:[%s5530 + $0x48] sm:$0xff]
        %v5541 = vld [vmem:[%s5530 + $0x50] sm:$0xff]
        %v5542 = vld [vmem:[%s5530 + $0x58] sm:$0xff]
        %v5543 = vld [vmem:[%s5530 + $0x60] sm:$0xff]
        %v5544 = vld [vmem:[%s5530 + $0x68] sm:$0xff]
        %v5545 = vld [vmem:[%s5530 + $0x70] sm:$0xff]
        %v5546 = vld [vmem:[%s5530 + $0x78] sm:$0xff]
        %v5547 = vld [vmem:[%s5530 + $0x80] sm:$0xff]
        %v5548 = vld [vmem:[%s5530 + $0x88] sm:$0xff]
        %v5549 = vld [vmem:[%s5530 + $0x90] sm:$0xff]
        %v5550 = vld [vmem:[%s5530 + $0x98] sm:$0xff]
        %v5551 = vld [vmem:[%s5530 + $0xa0] sm:$0xff]
        %v5552 = vld [vmem:[%s5530 + $0xa8] sm:$0xff]
        %v5553 = vld [vmem:[%s5530 + $0xb0] sm:$0xff]
        %v5554 = vld [vmem:[%s5530 + $0xb8] sm:$0xff]
        %v5555 = vld [vmem:[%s5530 + $0xc0] sm:$0xff]
        %v5556 = vld [vmem:[%s5530 + $0xc8] sm:$0xff]
        %v5557 = vld [vmem:[%s5530 + $0xd0] sm:$0xff]
        %v5558 = vld [vmem:[%s5530 + $0xd8] sm:$0xff]
        %v5559 = vld [vmem:[%s5530 + $0xe0] sm:$0xff]
        %v5560 = vld [vmem:[%s5530 + $0xe8] sm:$0xff]
        %v5561 = vld [vmem:[%s5530 + $0xf0] sm:$0xff]
        %v5562 = vld [vmem:[%s5530 + $0xf8] sm:$0xff]
        %v5563 = vld [vmem:[%s5530 + $0x100] sm:$0xff]
        %v5564 = vld [vmem:[%s5530 + $0x108] sm:$0xff]
        %v5565 = vld [vmem:[%s5530 + $0x110] sm:$0xff]
        %v5566 = vld [vmem:[%s5530 + $0x118] sm:$0xff]
        %v5567 = vld [vmem:[%s5530 + $0x120] sm:$0xff]
        %v5568 = vld [vmem:[%s5530 + $0x128] sm:$0xff]
        %v5569 = vld [vmem:[%s5530 + $0x130] sm:$0xff]
        %v5570 = vld [vmem:[%s5530 + $0x138] sm:$0xff]
        %v5571 = vld [vmem:[%s5530 + $0x140] sm:$0xff]
        %v5572 = vld [vmem:[%s5530 + $0x148] sm:$0xff]
        %v5573 = vld [vmem:[%s5530 + $0x150] sm:$0xff]
        %v5574 = vld [vmem:[%s5530 + $0x158] sm:$0xff]
        %v5575 = vld [vmem:[%s5530 + $0x160] sm:$0xff]
        %v5576 = vld [vmem:[%s5530 + $0x168] sm:$0xff]
        %v5577 = vld [vmem:[%s5530 + $0x170] sm:$0xff]
        %v5578 = vld [vmem:[%s5530 + $0x178] sm:$0xff]
        %v5579 = vld [vmem:[%s5530 + $0x180] sm:$0xff]
        %v5580 = vld [vmem:[%s5530 + $0x188] sm:$0xff]
        %v5581 = vld [vmem:[%s5530 + $0x190] sm:$0xff]
        %v5582 = vld [vmem:[%s5530 + $0x198] sm:$0xff]
        %v5583 = vld [vmem:[%s5530 + $0x1a0] sm:$0xff]
        %v5584 = vld [vmem:[%s5530 + $0x1a8] sm:$0xff]
        %v5585 = vld [vmem:[%s5530 + $0x1b0] sm:$0xff]
        %v5586 = vld [vmem:[%s5530 + $0x1b8] sm:$0xff]
        %v5587 = vld [vmem:[%s5530 + $0x1c0] sm:$0xff]
        %v5588 = vld [vmem:[%s5530 + $0x1c8] sm:$0xff]
        %v5589 = vld [vmem:[%s5530 + $0x1d0] sm:$0xff]
        %v5590 = vld [vmem:[%s5530 + $0x1d8] sm:$0xff]
        %v5591 = vld [vmem:[%s5530 + $0x1e0] sm:$0xff]
        %v5592 = vld [vmem:[%s5530 + $0x1e8] sm:$0xff]
        %v5593 = vld [vmem:[%s5530 + $0x1f0] sm:$0xff]
        %v5594 = vld [vmem:[%s5530 + $0x1f8] sm:$0xff]
        %v5595 = vld [vmem:[%s5530 + $0x200] sm:$0xff]
        %v5596 = vld [vmem:[%s5530 + $0x208] sm:$0xff]
        %v5597 = vld [vmem:[%s5530 + $0x210] sm:$0xff]
        %v5598 = vld [vmem:[%s5530 + $0x218] sm:$0xff]
        %v5599 = vld [vmem:[%s5530 + $0x220] sm:$0xff]
        %v5600 = vld [vmem:[%s5530 + $0x228] sm:$0xff]
        %v5601 = vld [vmem:[%s5530 + $0x230] sm:$0xff]
        %v5602 = vld [vmem:[%s5530 + $0x238] sm:$0xff]
        %v5603 = vld [vmem:[%s5530 + $0x240] sm:$0xff]
        %v5604 = vld [vmem:[%s5530 + $0x248] sm:$0xff]
        %v5605 = vld [vmem:[%s5530 + $0x250] sm:$0xff]
        %v5606 = vld [vmem:[%s5530 + $0x258] sm:$0xff]
        %v5607 = vld [vmem:[%s5530 + $0x260] sm:$0xff]
        %v5608 = vld [vmem:[%s5530 + $0x268] sm:$0xff]
        %v5609 = vld [vmem:[%s5530 + $0x270] sm:$0xff]
        %v5610 = vld [vmem:[%s5530 + $0x278] sm:$0xff]
        %v5611 = vld [vmem:[%s5530 + $0x280] sm:$0xff]
        %v5612 = vld [vmem:[%s5530 + $0x288] sm:$0xff]
        %v5613 = vld [vmem:[%s5530 + $0x290] sm:$0xff]
        %v5614 = vld [vmem:[%s5530 + $0x298] sm:$0xff]
        %v5615 = vld [vmem:[%s5530 + $0x2a0] sm:$0xff]
        %v5616 = vld [vmem:[%s5530 + $0x2a8] sm:$0xff]
        %v5617 = vld [vmem:[%s5530 + $0x2b0] sm:$0xff]
        %v5618 = vld [vmem:[%s5530 + $0x2b8] sm:$0xff]
        %v5619 = vld [vmem:[%s5530 + $0x2c0] sm:$0xff]
        %v5620 = vld [vmem:[%s5530 + $0x2c8] sm:$0xff]
        %v5621 = vld [vmem:[%s5530 + $0x2d0] sm:$0xff]
        %v5622 = vld [vmem:[%s5530 + $0x2d8] sm:$0xff]
        %v5623 = vld [vmem:[%s5530 + $0x2e0] sm:$0xff]
        %v5624 = vld [vmem:[%s5530 + $0x2e8] sm:$0xff]
        %v5625 = vld [vmem:[%s5530 + $0x2f0] sm:$0xff]
        %v5626 = vld [vmem:[%s5530 + $0x2f8] sm:$0xff]
        %v5627 = vld [vmem:[%s5530 + $0x300] sm:$0xff]
        %v5628 = vld [vmem:[%s5530 + $0x308] sm:$0xff]
        %v5629 = vld [vmem:[%s5530 + $0x310] sm:$0xff]
        %v5630 = vld [vmem:[%s5530 + $0x318] sm:$0xff]
        %v5631 = vld [vmem:[%s5530 + $0x320] sm:$0xff]
        %v5632 = vld [vmem:[%s5530 + $0x328] sm:$0xff]
        %v5633 = vld [vmem:[%s5530 + $0x330] sm:$0xff]
        %v5634 = vld [vmem:[%s5530 + $0x338] sm:$0xff]
        %v5635 = vld [vmem:[%s5530 + $0x340] sm:$0xff]
        %v5636 = vld [vmem:[%s5530 + $0x348] sm:$0xff]
        %v5637 = vld [vmem:[%s5530 + $0x350] sm:$0xff]
        %v5638 = vld [vmem:[%s5530 + $0x358] sm:$0xff]
        %v5639 = vld [vmem:[%s5530 + $0x360] sm:$0xff]
        %v5640 = vld [vmem:[%s5530 + $0x368] sm:$0xff]
        %v5641 = vld [vmem:[%s5530 + $0x370] sm:$0xff]
        %v5642 = vld [vmem:[%s5530 + $0x378] sm:$0xff]
        %v5643 = vld [vmem:[%s5530 + $0x380] sm:$0xff]
        %v5644 = vld [vmem:[%s5530 + $0x388] sm:$0xff]
        %v5645 = vld [vmem:[%s5530 + $0x390] sm:$0xff]
        %v5646 = vld [vmem:[%s5530 + $0x398] sm:$0xff]
        %v5647 = vld [vmem:[%s5530 + $0x3a0] sm:$0xff]
        %v5648 = vld [vmem:[%s5530 + $0x3a8] sm:$0xff]
        %v5649 = vld [vmem:[%s5530 + $0x3b0] sm:$0xff]
        %v5650 = vld [vmem:[%s5530 + $0x3b8] sm:$0xff]
        %v5651 = vld [vmem:[%s5530 + $0x3c0] sm:$0xff]
        %v5652 = vld [vmem:[%s5530 + $0x3c8] sm:$0xff]
        %v5653 = vld [vmem:[%s5530 + $0x3d0] sm:$0xff]
        %v5654 = vld [vmem:[%s5530 + $0x3d8] sm:$0xff]
        %v5655 = vld [vmem:[%s5530 + $0x3e0] sm:$0xff]
        %v5656 = vld [vmem:[%s5530 + $0x3e8] sm:$0xff]
        %v5657 = vld [vmem:[%s5530 + $0x3f0] sm:$0xff]
        %v5658 = vld [vmem:[%s5530 + $0x3f8] sm:$0xff]
        %v5659 = vld [vmem:[%s5530 + $0x400] sm:$0xff]
        %v5660 = vld [vmem:[%s5530 + $0x408] sm:$0xff]
        %v5661 = vld [vmem:[%s5530 + $0x410] sm:$0xff]
        %v5662 = vld [vmem:[%s5530 + $0x418] sm:$0xff]
        %v5663 = vld [vmem:[%s5530 + $0x420] sm:$0xff]
        %v5664 = vld [vmem:[%s5530 + $0x428] sm:$0xff]
        %v5665 = vld [vmem:[%s5530 + $0x430] sm:$0xff]
        %v5666 = vld [vmem:[%s5530 + $0x438] sm:$0xff]
        %v5667 = vld [vmem:[%s5530 + $0x440] sm:$0xff]
        %v5668 = vld [vmem:[%s5530 + $0x448] sm:$0xff]
        %v5669 = vld [vmem:[%s5530 + $0x450] sm:$0xff]
        %v5670 = vld [vmem:[%s5530 + $0x458] sm:$0xff]
        %v5671 = vld [vmem:[%s5530 + $0x460] sm:$0xff]
        %v5672 = vld [vmem:[%s5530 + $0x468] sm:$0xff]
        %v5673 = vld [vmem:[%s5530 + $0x470] sm:$0xff]
        %v5674 = vld [vmem:[%s5530 + $0x478] sm:$0xff]
        %v5675 = vld [vmem:[%s5530 + $0x480] sm:$0xff]
        %v5676 = vld [vmem:[%s5530 + $0x488] sm:$0xff]
        %v5677 = vld [vmem:[%s5530 + $0x490] sm:$0xff]
        %v5678 = vld [vmem:[%s5530 + $0x498] sm:$0xff]
        %v5679 = vld [vmem:[%s5530 + $0x4a0] sm:$0xff]
        %v5680 = vld [vmem:[%s5530 + $0x4a8] sm:$0xff]
        %v5681 = vld [vmem:[%s5530 + $0x4b0] sm:$0xff]
        %v5682 = vld [vmem:[%s5530 + $0x4b8] sm:$0xff]
        %v5683 = vld [vmem:[%s5530 + $0x4c0] sm:$0xff]
        %v5684 = vld [vmem:[%s5530 + $0x4c8] sm:$0xff]
        %v5685 = vld [vmem:[%s5530 + $0x4d0] sm:$0xff]
        %v5686 = vld [vmem:[%s5530 + $0x4d8] sm:$0xff]
        %v5687 = vld [vmem:[%s5530 + $0x4e0] sm:$0xff]
        %v5688 = vld [vmem:[%s5530 + $0x4e8] sm:$0xff]
        %v5689 = vld [vmem:[%s5530 + $0x4f0] sm:$0xff]
        %v5690 = vld [vmem:[%s5530 + $0x4f8] sm:$0xff]
        %v5691 = vld [vmem:[%s5530 + $0x500] sm:$0xff]
        %v5692 = vld [vmem:[%s5530 + $0x508] sm:$0xff]
        %v5693 = vld [vmem:[%s5530 + $0x510] sm:$0xff]
        %v5694 = vld [vmem:[%s5530 + $0x518] sm:$0xff]
        %v5695 = vld [vmem:[%s5530 + $0x520] sm:$0xff]
        %v5696 = vld [vmem:[%s5530 + $0x528] sm:$0xff]
        %v5697 = vld [vmem:[%s5530 + $0x530] sm:$0xff]
        %v5698 = vld [vmem:[%s5530 + $0x538] sm:$0xff]
        %v5699 = vld [vmem:[%s5530 + $0x540] sm:$0xff]
        %v5700 = vld [vmem:[%s5530 + $0x548] sm:$0xff]
        %v5701 = vld [vmem:[%s5530 + $0x550] sm:$0xff]
        %v5702 = vld [vmem:[%s5530 + $0x558] sm:$0xff]
        %v5703 = vld [vmem:[%s5530 + $0x560] sm:$0xff]
        %v5704 = vld [vmem:[%s5530 + $0x568] sm:$0xff]
        %v5705 = vld [vmem:[%s5530 + $0x570] sm:$0xff]
        %v5706 = vld [vmem:[%s5530 + $0x578] sm:$0xff]
        %v5707 = vld [vmem:[%s5530 + $0x580] sm:$0xff]
        %v5708 = vld [vmem:[%s5530 + $0x588] sm:$0xff]
        %v5709 = vld [vmem:[%s5530 + $0x590] sm:$0xff]
        %v5710 = vld [vmem:[%s5530 + $0x598] sm:$0xff]
        %v5711 = vld [vmem:[%s5530 + $0x5a0] sm:$0xff]
        %v5712 = vld [vmem:[%s5530 + $0x5a8] sm:$0xff]
        %v5713 = vld [vmem:[%s5530 + $0x5b0] sm:$0xff]
        %v5714 = vld [vmem:[%s5530 + $0x5b8] sm:$0xff]
        %v5715 = vld [vmem:[%s5530 + $0x5c0] sm:$0xff]
        %v5716 = vld [vmem:[%s5530 + $0x5c8] sm:$0xff]
        %v5717 = vld [vmem:[%s5530 + $0x5d0] sm:$0xff]
        %v5718 = vld [vmem:[%s5530 + $0x5d8] sm:$0xff]
        %v5719 = vld [vmem:[%s5530 + $0x5e0] sm:$0xff]
        %v5720 = vld [vmem:[%s5530 + $0x5e8] sm:$0xff]
        %v5721 = vld [vmem:[%s5530 + $0x5f0] sm:$0xff]
        %v5722 = vld [vmem:[%s5530 + $0x5f8] sm:$0xff]
        %v5723 = vld [vmem:[%s5530 + $0x600] sm:$0xff]
        %v5724 = vld [vmem:[%s5530 + $0x608] sm:$0xff]
        %v5725 = vld [vmem:[%s5530 + $0x610] sm:$0xff]
        %v5726 = vld [vmem:[%s5530 + $0x618] sm:$0xff]
        %v5727 = vld [vmem:[%s5530 + $0x620] sm:$0xff]
        %v5728 = vld [vmem:[%s5530 + $0x628] sm:$0xff]
        %v5729 = vcombine.low %v3301, %v3302
        %v5730 = vcombine.high %v3301, %v3302
        %v5731 = vcombine.low %v3303, %v3304
        %v5732 = vcombine.high %v3303, %v3304
        %v5734 = vunpack.c.l.s4 1983009808
        %v5735 = vunpack.c.0.s8 %v5734
        %v5736 = vlaneseq
        %v5737 = vshrl.u32 %v5736, 7
        %v5738 = vsub.s32 %v5735, %v5737
        %v5739 = vrot.slane %v5729, %v5738
        %v5741 = vunpack.c.l.s4 1983009808
        %v5742 = vunpack.c.0.s8 %v5741
        %v5743 = vlaneseq
        %v5744 = vshrl.u32 %v5743, 7
        %v5745 = vsub.s32 %v5742, %v5744
        %v5746 = vrot.slane %v5730, %v5745
        %v5748 = vunpack.c.l.s4 1983009808
        %v5749 = vunpack.c.0.s8 %v5748
        %v5750 = vlaneseq
        %v5751 = vshrl.u32 %v5750, 7
        %v5752 = vsub.s32 %v5749, %v5751
        %v5753 = vrot.slane %v5731, %v5752
        %v5755 = vunpack.c.l.s4 1983009808
        %v5756 = vunpack.c.0.s8 %v5755
        %v5757 = vlaneseq
        %v5758 = vshrl.u32 %v5757, 7
        %v5759 = vsub.s32 %v5756, %v5758
        %v5760 = vrot.slane %v5732, %v5759
        %v5761 = vcombine.low %v5739, %v5753
        %v5762 = vcombine.high %v5739, %v5753
        %v5763 = vcombine.low %v5746, %v5760
        %v5764 = vcombine.low %v3305, %v3306
        %v5765 = vcombine.high %v3305, %v3306
        %v5766 = vcombine.low %v3307, %v3308
        %v5767 = vcombine.high %v3307, %v3308
        %v5769 = vunpack.c.l.s4 1983009808
        %v5770 = vunpack.c.0.s8 %v5769
        %v5771 = vlaneseq
        %v5772 = vshrl.u32 %v5771, 7
        %v5773 = vsub.s32 %v5770, %v5772
        %v5774 = vrot.slane %v5764, %v5773
        %v5776 = vunpack.c.l.s4 1983009808
        %v5777 = vunpack.c.0.s8 %v5776
        %v5778 = vlaneseq
        %v5779 = vshrl.u32 %v5778, 7
        %v5780 = vsub.s32 %v5777, %v5779
        %v5781 = vrot.slane %v5765, %v5780
        %v5783 = vunpack.c.l.s4 1983009808
        %v5784 = vunpack.c.0.s8 %v5783
        %v5785 = vlaneseq
        %v5786 = vshrl.u32 %v5785, 7
        %v5787 = vsub.s32 %v5784, %v5786
        %v5788 = vrot.slane %v5766, %v5787
        %v5790 = vunpack.c.l.s4 1983009808
        %v5791 = vunpack.c.0.s8 %v5790
        %v5792 = vlaneseq
        %v5793 = vshrl.u32 %v5792, 7
        %v5794 = vsub.s32 %v5791, %v5793
        %v5795 = vrot.slane %v5767, %v5794
        %v5796 = vcombine.low %v5774, %v5788
        %v5797 = vcombine.high %v5774, %v5788
        %v5798 = vcombine.low %v5781, %v5795
        %v5799 = vcombine.low %v3309, %v3310
        %v5800 = vcombine.high %v3309, %v3310
        %v5801 = vcombine.low %v3311, %v3312
        %v5802 = vcombine.high %v3311, %v3312
        %v5804 = vunpack.c.l.s4 1983009808
        %v5805 = vunpack.c.0.s8 %v5804
        %v5806 = vlaneseq
        %v5807 = vshrl.u32 %v5806, 7
        %v5808 = vsub.s32 %v5805, %v5807
        %v5809 = vrot.slane %v5799, %v5808
        %v5811 = vunpack.c.l.s4 1983009808
        %v5812 = vunpack.c.0.s8 %v5811
        %v5813 = vlaneseq
        %v5814 = vshrl.u32 %v5813, 7
        %v5815 = vsub.s32 %v5812, %v5814
        %v5816 = vrot.slane %v5800, %v5815
        %v5818 = vunpack.c.l.s4 1983009808
        %v5819 = vunpack.c.0.s8 %v5818
        %v5820 = vlaneseq
        %v5821 = vshrl.u32 %v5820, 7
        %v5822 = vsub.s32 %v5819, %v5821
        %v5823 = vrot.slane %v5801, %v5822
        %v5825 = vunpack.c.l.s4 1983009808
        %v5826 = vunpack.c.0.s8 %v5825
        %v5827 = vlaneseq
        %v5828 = vshrl.u32 %v5827, 7
        %v5829 = vsub.s32 %v5826, %v5828
        %v5830 = vrot.slane %v5802, %v5829
        %v5831 = vcombine.low %v5809, %v5823
        %v5832 = vcombine.high %v5809, %v5823
        %v5833 = vcombine.low %v5816, %v5830
        %v5834 = vcombine.low %v3313, %v3314
        %v5835 = vcombine.high %v3313, %v3314
        %v5836 = vcombine.low %v3315, %v3316
        %v5837 = vcombine.high %v3315, %v3316
        %v5839 = vunpack.c.l.s4 1983009808
        %v5840 = vunpack.c.0.s8 %v5839
        %v5841 = vlaneseq
        %v5842 = vshrl.u32 %v5841, 7
        %v5843 = vsub.s32 %v5840, %v5842
        %v5844 = vrot.slane %v5834, %v5843
        %v5846 = vunpack.c.l.s4 1983009808
        %v5847 = vunpack.c.0.s8 %v5846
        %v5848 = vlaneseq
        %v5849 = vshrl.u32 %v5848, 7
        %v5850 = vsub.s32 %v5847, %v5849
        %v5851 = vrot.slane %v5835, %v5850
        %v5853 = vunpack.c.l.s4 1983009808
        %v5854 = vunpack.c.0.s8 %v5853
        %v5855 = vlaneseq
        %v5856 = vshrl.u32 %v5855, 7
        %v5857 = vsub.s32 %v5854, %v5856
        %v5858 = vrot.slane %v5836, %v5857
        %v5860 = vunpack.c.l.s4 1983009808
        %v5861 = vunpack.c.0.s8 %v5860
        %v5862 = vlaneseq
        %v5863 = vshrl.u32 %v5862, 7
        %v5864 = vsub.s32 %v5861, %v5863
        %v5865 = vrot.slane %v5837, %v5864
        %v5866 = vcombine.low %v5844, %v5858
        %v5867 = vcombine.high %v5844, %v5858
        %v5868 = vcombine.low %v5851, %v5865
        %v5869 = vcombine.low %v3317, %v3318
        %v5870 = vcombine.high %v3317, %v3318
        %v5871 = vcombine.low %v3319, %v3320
        %v5872 = vcombine.high %v3319, %v3320
        %v5874 = vunpack.c.l.s4 1983009808
        %v5875 = vunpack.c.0.s8 %v5874
        %v5876 = vlaneseq
        %v5877 = vshrl.u32 %v5876, 7
        %v5878 = vsub.s32 %v5875, %v5877
        %v5879 = vrot.slane %v5869, %v5878
        %v5881 = vunpack.c.l.s4 1983009808
        %v5882 = vunpack.c.0.s8 %v5881
        %v5883 = vlaneseq
        %v5884 = vshrl.u32 %v5883, 7
        %v5885 = vsub.s32 %v5882, %v5884
        %v5886 = vrot.slane %v5870, %v5885
        %v5888 = vunpack.c.l.s4 1983009808
        %v5889 = vunpack.c.0.s8 %v5888
        %v5890 = vlaneseq
        %v5891 = vshrl.u32 %v5890, 7
        %v5892 = vsub.s32 %v5889, %v5891
        %v5893 = vrot.slane %v5871, %v5892
        %v5895 = vunpack.c.l.s4 1983009808
        %v5896 = vunpack.c.0.s8 %v5895
        %v5897 = vlaneseq
        %v5898 = vshrl.u32 %v5897, 7
        %v5899 = vsub.s32 %v5896, %v5898
        %v5900 = vrot.slane %v5872, %v5899
        %v5901 = vcombine.low %v5879, %v5893
        %v5902 = vcombine.high %v5879, %v5893
        %v5903 = vcombine.low %v5886, %v5900
        %v5904 = vcombine.low %v3321, %v3322
        %v5905 = vcombine.high %v3321, %v3322
        %v5906 = vcombine.low %v3323, %v3324
        %v5907 = vcombine.high %v3323, %v3324
        %v5909 = vunpack.c.l.s4 1983009808
        %v5910 = vunpack.c.0.s8 %v5909
        %v5911 = vlaneseq
        %v5912 = vshrl.u32 %v5911, 7
        %v5913 = vsub.s32 %v5910, %v5912
        %v5914 = vrot.slane %v5904, %v5913
        %v5916 = vunpack.c.l.s4 1983009808
        %v5917 = vunpack.c.0.s8 %v5916
        %v5918 = vlaneseq
        %v5919 = vshrl.u32 %v5918, 7
        %v5920 = vsub.s32 %v5917, %v5919
        %v5921 = vrot.slane %v5905, %v5920
        %v5923 = vunpack.c.l.s4 1983009808
        %v5924 = vunpack.c.0.s8 %v5923
        %v5925 = vlaneseq
        %v5926 = vshrl.u32 %v5925, 7
        %v5927 = vsub.s32 %v5924, %v5926
        %v5928 = vrot.slane %v5906, %v5927
        %v5930 = vunpack.c.l.s4 1983009808
        %v5931 = vunpack.c.0.s8 %v5930
        %v5932 = vlaneseq
        %v5933 = vshrl.u32 %v5932, 7
        %v5934 = vsub.s32 %v5931, %v5933
        %v5935 = vrot.slane %v5907, %v5934
        %v5936 = vcombine.low %v5914, %v5928
        %v5937 = vcombine.high %v5914, %v5928
        %v5938 = vcombine.low %v5921, %v5935
        %v5939 = vcombine.low %v3325, %v3326
        %v5940 = vcombine.high %v3325, %v3326
        %v5941 = vcombine.low %v3327, %v3328
        %v5942 = vcombine.high %v3327, %v3328
        %v5944 = vunpack.c.l.s4 1983009808
        %v5945 = vunpack.c.0.s8 %v5944
        %v5946 = vlaneseq
        %v5947 = vshrl.u32 %v5946, 7
        %v5948 = vsub.s32 %v5945, %v5947
        %v5949 = vrot.slane %v5939, %v5948
        %v5951 = vunpack.c.l.s4 1983009808
        %v5952 = vunpack.c.0.s8 %v5951
        %v5953 = vlaneseq
        %v5954 = vshrl.u32 %v5953, 7
        %v5955 = vsub.s32 %v5952, %v5954
        %v5956 = vrot.slane %v5940, %v5955
        %v5958 = vunpack.c.l.s4 1983009808
        %v5959 = vunpack.c.0.s8 %v5958
        %v5960 = vlaneseq
        %v5961 = vshrl.u32 %v5960, 7
        %v5962 = vsub.s32 %v5959, %v5961
        %v5963 = vrot.slane %v5941, %v5962
        %v5965 = vunpack.c.l.s4 1983009808
        %v5966 = vunpack.c.0.s8 %v5965
        %v5967 = vlaneseq
        %v5968 = vshrl.u32 %v5967, 7
        %v5969 = vsub.s32 %v5966, %v5968
        %v5970 = vrot.slane %v5942, %v5969
        %v5971 = vcombine.low %v5949, %v5963
        %v5972 = vcombine.high %v5949, %v5963
        %v5973 = vcombine.low %v5956, %v5970
        %v5974 = vcombine.low %v3329, %v3330
        %v5975 = vcombine.high %v3329, %v3330
        %v5976 = vcombine.low %v3331, %v3332
        %v5977 = vcombine.high %v3331, %v3332
        %v5979 = vunpack.c.l.s4 1983009808
        %v5980 = vunpack.c.0.s8 %v5979
        %v5981 = vlaneseq
        %v5982 = vshrl.u32 %v5981, 7
        %v5983 = vsub.s32 %v5980, %v5982
        %v5984 = vrot.slane %v5974, %v5983
        %v5986 = vunpack.c.l.s4 1983009808
        %v5987 = vunpack.c.0.s8 %v5986
        %v5988 = vlaneseq
        %v5989 = vshrl.u32 %v5988, 7
        %v5990 = vsub.s32 %v5987, %v5989
        %v5991 = vrot.slane %v5975, %v5990
        %v5993 = vunpack.c.l.s4 1983009808
        %v5994 = vunpack.c.0.s8 %v5993
        %v5995 = vlaneseq
        %v5996 = vshrl.u32 %v5995, 7
        %v5997 = vsub.s32 %v5994, %v5996
        %v5998 = vrot.slane %v5976, %v5997
        %v6000 = vunpack.c.l.s4 1983009808
        %v6001 = vunpack.c.0.s8 %v6000
        %v6002 = vlaneseq
        %v6003 = vshrl.u32 %v6002, 7
        %v6004 = vsub.s32 %v6001, %v6003
        %v6005 = vrot.slane %v5977, %v6004
        %v6006 = vcombine.low %v5984, %v5998
        %v6007 = vcombine.high %v5984, %v5998
        %v6008 = vcombine.low %v5991, %v6005
        %v6025 = vsel %vm1617, %v5763, 0
        %v6027 = vsel %vm1617, %v5798, 0
        %v6029 = vsel %vm1617, %v5833, 0
        %v6031 = vsel %vm1617, %v5868, 0
        %v6033 = vsel %vm1617, %v5903, 0
        %v6035 = vsel %vm1617, %v5938, 0
        %v6037 = vsel %vm1617, %v5973, 0
        %v6039 = vsel %vm1617, %v6008, 0
        %6041 = vmatprep.subr.mxu0 %v5622
        %6042 = vmatpush1.msra.mxu0 %v5621
        %6043 = vmatprep.subr.mxu0 %v5616
        %6044 = vmatpush1.msra.mxu0 %v5615
        %6045 = vmatprep.subr.mxu0 %v5610
        %6046 = vmatpush1.msra.mxu0 %v5609
        %6047 = vmatprep.subr.mxu0 %v5604
        %6048 = vmatpush1.msra.mxu0 %v5603
        %6049 = vmatprep.subr.mxu0 %v5598
        %6050 = vmatpush1.msra.mxu0 %v5597
        %6051 = vmatprep.subr.mxu0 %v5592
        %6052 = vmatpush1.msra.mxu0 %v5591
        %6053 = vmatprep.subr.mxu0 %v5586
        %6054 = vmatpush1.msra.mxu0 %v5585
        %6055 = vmatprep.subr.mxu0 %v5580
        %6056 = vmatpush1.msra.mxu0 %v5579
        %6057 = vmatprep.subr.mxu0 %v5574
        %6058 = vmatpush1.msra.mxu0 %v5573
        %6059 = vmatprep.subr.mxu0 %v5568
        %6060 = vmatpush1.msra.mxu0 %v5567
        %6061 = vmatprep.subr.mxu0 %v5562
        %6062 = vmatpush1.msra.mxu0 %v5561
        %6063 = vmatprep.subr.mxu0 %v5556
        %6064 = vmatpush1.msra.mxu0 %v5555
        %6065 = vmatprep.subr.mxu0 %v5550
        %6066 = vmatpush1.msra.mxu0 %v5549
        %6067 = vmatprep.subr.mxu0 %v5544
        %6068 = vmatpush1.msra.mxu0 %v5543
        %6069 = vmatprep.subr.mxu0 %v5538
        %6070 = vmatpush1.msra.mxu0 %v5537
        %6071 = vmatprep.subr.mxu0 %v5532
        %6072 = vmatpush1.msra.mxu0 %v5531
        %6073 = vmatprep.subr.mxu0 %v5718
        %6074 = vmatpush2.msra.mxu0 %v5717
        %6075 = vmatprep.subr.mxu0 %v5712
        %6076 = vmatpush2.msra.mxu0 %v5711
        %6077 = vmatprep.subr.mxu0 %v5706
        %6078 = vmatpush2.msra.mxu0 %v5705
        %6079 = vmatprep.subr.mxu0 %v5700
        %6080 = vmatpush2.msra.mxu0 %v5699
        %6081 = vmatprep.subr.mxu0 %v5694
        %6082 = vmatpush2.msra.mxu0 %v5693
        %6083 = vmatprep.subr.mxu0 %v5688
        %6084 = vmatpush2.msra.mxu0 %v5687
        %6085 = vmatprep.subr.mxu0 %v5682
        %6086 = vmatpush2.msra.mxu0 %v5681
        %6087 = vmatprep.subr.mxu0 %v5676
        %6088 = vmatpush2.msra.mxu0 %v5675
        %6089 = vmatprep.subr.mxu0 %v5670
        %6090 = vmatpush2.msra.mxu0 %v5669
        %6091 = vmatprep.subr.mxu0 %v5664
        %6092 = vmatpush2.msra.mxu0 %v5663
        %6093 = vmatprep.subr.mxu0 %v5658
        %6094 = vmatpush2.msra.mxu0 %v5657
        %6095 = vmatprep.subr.mxu0 %v5652
        %6096 = vmatpush2.msra.mxu0 %v5651
        %6097 = vmatprep.subr.mxu0 %v5646
        %6098 = vmatpush2.msra.mxu0 %v5645
        %6099 = vmatprep.subr.mxu0 %v5640
        %6100 = vmatpush2.msra.mxu0 %v5639
        %6101 = vmatprep.subr.mxu0 %v5634
        %6102 = vmatpush2.msra.mxu0 %v5633
        %6103 = vmatprep.subr.mxu0 %v5628
        %6104 = vmatpush2.msra.mxu0 %v5627
        %6105 = vmatprep.mubr.f32.mxu0 %v5762
        %6106 = vmatmul.mubr.f32.gmra.mxu0 %v5761
        %v6107 = vpop.f32.mrf.mxu0
        %v6108 = vadd.f32 0.0, %v6107
        %v6109 = vpop.f32.mrf.mxu0
        %v6110 = vadd.f32 0.0, %v6109
        %6111 = vmatprep.mubr.f32.mxu0 %v5797
        %6112 = vmatmul.mubr.f32.gmra.mxu0 %v5796
        %v6113 = vpop.f32.mrf.mxu0
        %v6114 = vadd.f32 0.0, %v6113
        %v6115 = vpop.f32.mrf.mxu0
        %v6116 = vadd.f32 0.0, %v6115
        %6117 = vmatprep.mubr.f32.mxu0 %v5832
        %6118 = vmatmul.mubr.f32.gmra.mxu0 %v5831
        %v6119 = vpop.f32.mrf.mxu0
        %v6120 = vadd.f32 0.0, %v6119
        %v6121 = vpop.f32.mrf.mxu0
        %v6122 = vadd.f32 0.0, %v6121
        %6123 = vmatprep.mubr.f32.mxu0 %v5867
        %6124 = vmatmul.mubr.f32.gmra.mxu0 %v5866
        %v6125 = vpop.f32.mrf.mxu0
        %v6126 = vadd.f32 0.0, %v6125
        %v6127 = vpop.f32.mrf.mxu0
        %v6128 = vadd.f32 0.0, %v6127
        %6129 = vmatprep.mubr.f32.mxu0 %v5902
        %6130 = vmatmul.mubr.f32.gmra.mxu0 %v5901
        %v6131 = vpop.f32.mrf.mxu0
        %v6132 = vadd.f32 0.0, %v6131
        %v6133 = vpop.f32.mrf.mxu0
        %v6134 = vadd.f32 0.0, %v6133
        %6135 = vmatprep.mubr.f32.mxu0 %v5937
        %6136 = vmatmul.mubr.f32.gmra.mxu0 %v5936
        %v6137 = vpop.f32.mrf.mxu0
        %v6138 = vadd.f32 0.0, %v6137
        %v6139 = vpop.f32.mrf.mxu0
        %v6140 = vadd.f32 0.0, %v6139
        %6141 = vmatprep.mubr.f32.mxu0 %v5972
        %6142 = vmatmul.mubr.f32.gmra.mxu0 %v5971
        %v6143 = vpop.f32.mrf.mxu0
        %v6144 = vadd.f32 0.0, %v6143
        %v6145 = vpop.f32.mrf.mxu0
        %v6146 = vadd.f32 0.0, %v6145
        %6147 = vmatprep.mubr.f32.mxu0 %v6007
        %6148 = vmatmul.mubr.f32.gmra.mxu0 %v6006
        %v6149 = vpop.f32.mrf.mxu0
        %v6150 = vadd.f32 0.0, %v6149
        %v6151 = vpop.f32.mrf.mxu0
        %v6152 = vadd.f32 0.0, %v6151
        %6153 = vdwg.mxu0
        %6154 = vmatprep.subr.mxu0 0.0
        %6155 = vmatpush1.msra.mxu0 0.0
        %6156 = vmatprep.subr.mxu0 0.0
        %6157 = vmatpush1.msra.mxu0 0.0
        %6158 = vmatprep.subr.mxu0 0.0
        %6159 = vmatpush1.msra.mxu0 0.0
        %6160 = vmatprep.subr.mxu0 0.0
        %6161 = vmatpush1.msra.mxu0 0.0
        %6162 = vmatprep.subr.mxu0 0.0
        %6163 = vmatpush1.msra.mxu0 0.0
        %6164 = vmatprep.subr.mxu0 0.0
        %6165 = vmatpush1.msra.mxu0 0.0
        %6166 = vmatprep.subr.mxu0 0.0
        %6167 = vmatpush1.msra.mxu0 0.0
        %6168 = vmatprep.subr.mxu0 0.0
        %6169 = vmatpush1.msra.mxu0 0.0
        %6170 = vmatprep.subr.mxu0 0.0
        %6171 = vmatpush1.msra.mxu0 0.0
        %6172 = vmatprep.subr.mxu0 0.0
        %6173 = vmatpush1.msra.mxu0 0.0
        %6174 = vmatprep.subr.mxu0 0.0
        %6175 = vmatpush1.msra.mxu0 0.0
        %6176 = vmatprep.subr.mxu0 0.0
        %6177 = vmatpush1.msra.mxu0 0.0
        %6178 = vmatprep.subr.mxu0 0.0
        %6179 = vmatpush1.msra.mxu0 0.0
        %6180 = vmatprep.subr.mxu0 0.0
        %6181 = vmatpush1.msra.mxu0 0.0
        %6182 = vmatprep.subr.mxu0 0.0
        %6183 = vmatpush1.msra.mxu0 0.0
        %6184 = vmatprep.subr.mxu0 %v5724
        %6185 = vmatpush1.msra.mxu0 %v5723
        %6186 = vmatprep.subr.mxu0 0.0
        %6187 = vmatpush2.msra.mxu0 0.0
        %6188 = vmatprep.subr.mxu0 0.0
        %6189 = vmatpush2.msra.mxu0 0.0
        %6190 = vmatprep.subr.mxu0 0.0
        %6191 = vmatpush2.msra.mxu0 0.0
        %6192 = vmatprep.subr.mxu0 0.0
        %6193 = vmatpush2.msra.mxu0 0.0
        %6194 = vmatprep.subr.mxu0 0.0
        %6195 = vmatpush2.msra.mxu0 0.0
        %6196 = vmatprep.subr.mxu0 0.0
        %6197 = vmatpush2.msra.mxu0 0.0
        %6198 = vmatprep.subr.mxu0 0.0
        %6199 = vmatpush2.msra.mxu0 0.0
        %6200 = vmatprep.subr.mxu0 0.0
        %6201 = vmatpush2.msra.mxu0 0.0
        %6202 = vmatprep.subr.mxu0 0.0
        %6203 = vmatpush2.msra.mxu0 0.0
        %6204 = vmatprep.subr.mxu0 0.0
        %6205 = vmatpush2.msra.mxu0 0.0
        %6206 = vmatprep.subr.mxu0 0.0
        %6207 = vmatpush2.msra.mxu0 0.0
        %6208 = vmatprep.subr.mxu0 0.0
        %6209 = vmatpush2.msra.mxu0 0.0
        %6210 = vmatprep.subr.mxu0 0.0
        %6211 = vmatpush2.msra.mxu0 0.0
        %6212 = vmatprep.subr.mxu0 0.0
        %6213 = vmatpush2.msra.mxu0 0.0
        %6214 = vmatprep.subr.mxu0 0.0
        %6215 = vmatpush2.msra.mxu0 0.0
        %6216 = vmatprep.subr.mxu0 0.0
        %6217 = vmatpush2.msra.mxu0 0.0
        %6218 = vmatprep.mubr.f32.mxu0 0.0
        %6219 = vmatmul.mubr.f32.gmra.mxu0 %v6025
        %v6220 = vpop.f32.mrf.mxu0
        %v6221 = vadd.f32 %v6108, %v6220
        %v6222 = vpop.f32.mrf.mxu0
        %v6223 = vadd.f32 %v6110, %v6222
        %6224 = vmatprep.mubr.f32.mxu0 0.0
        %6225 = vmatmul.mubr.f32.gmra.mxu0 %v6027
        %v6226 = vpop.f32.mrf.mxu0
        %v6227 = vadd.f32 %v6114, %v6226
        %v6228 = vpop.f32.mrf.mxu0
        %v6229 = vadd.f32 %v6116, %v6228
        %6230 = vmatprep.mubr.f32.mxu0 0.0
        %6231 = vmatmul.mubr.f32.gmra.mxu0 %v6029
        %v6232 = vpop.f32.mrf.mxu0
        %v6233 = vadd.f32 %v6120, %v6232
        %v6234 = vpop.f32.mrf.mxu0
        %v6235 = vadd.f32 %v6122, %v6234
        %6236 = vmatprep.mubr.f32.mxu0 0.0
        %6237 = vmatmul.mubr.f32.gmra.mxu0 %v6031
        %v6238 = vpop.f32.mrf.mxu0
        %v6239 = vadd.f32 %v6126, %v6238
        %v6240 = vpop.f32.mrf.mxu0
        %v6241 = vadd.f32 %v6128, %v6240
        %6242 = vmatprep.mubr.f32.mxu0 0.0
        %6243 = vmatmul.mubr.f32.gmra.mxu0 %v6033
        %v6244 = vpop.f32.mrf.mxu0
        %v6245 = vadd.f32 %v6132, %v6244
        %v6246 = vpop.f32.mrf.mxu0
        %v6247 = vadd.f32 %v6134, %v6246
        %6248 = vmatprep.mubr.f32.mxu0 0.0
        %6249 = vmatmul.mubr.f32.gmra.mxu0 %v6035
        %v6250 = vpop.f32.mrf.mxu0
        %v6251 = vadd.f32 %v6138, %v6250
        %v6252 = vpop.f32.mrf.mxu0
        %v6253 = vadd.f32 %v6140, %v6252
        %6254 = vmatprep.mubr.f32.mxu0 0.0
        %6255 = vmatmul.mubr.f32.gmra.mxu0 %v6037
        %v6256 = vpop.f32.mrf.mxu0
        %v6257 = vadd.f32 %v6144, %v6256
        %v6258 = vpop.f32.mrf.mxu0
        %v6259 = vadd.f32 %v6146, %v6258
        %6260 = vmatprep.mubr.f32.mxu0 0.0
        %6261 = vmatmul.mubr.f32.gmra.mxu0 %v6039
        %v6262 = vpop.f32.mrf.mxu0
        %v6263 = vadd.f32 %v6150, %v6262
        %v6264 = vpop.f32.mrf.mxu0
        %v6265 = vadd.f32 %v6152, %v6264
        %6266 = vdwg.mxu0
        %6267 = vmatprep.subr.mxu0 %v5624
        %6268 = vmatpush1.msra.mxu0 %v5623
        %6269 = vmatprep.subr.mxu0 %v5618
        %6270 = vmatpush1.msra.mxu0 %v5617
        %6271 = vmatprep.subr.mxu0 %v5612
        %6272 = vmatpush1.msra.mxu0 %v5611
        %6273 = vmatprep.subr.mxu0 %v5606
        %6274 = vmatpush1.msra.mxu0 %v5605
        %6275 = vmatprep.subr.mxu0 %v5600
        %6276 = vmatpush1.msra.mxu0 %v5599
        %6277 = vmatprep.subr.mxu0 %v5594
        %6278 = vmatpush1.msra.mxu0 %v5593
        %6279 = vmatprep.subr.mxu0 %v5588
        %6280 = vmatpush1.msra.mxu0 %v5587
        %6281 = vmatprep.subr.mxu0 %v5582
        %6282 = vmatpush1.msra.mxu0 %v5581
        %6283 = vmatprep.subr.mxu0 %v5576
        %6284 = vmatpush1.msra.mxu0 %v5575
        %6285 = vmatprep.subr.mxu0 %v5570
        %6286 = vmatpush1.msra.mxu0 %v5569
        %6287 = vmatprep.subr.mxu0 %v5564
        %6288 = vmatpush1.msra.mxu0 %v5563
        %6289 = vmatprep.subr.mxu0 %v5558
        %6290 = vmatpush1.msra.mxu0 %v5557
        %6291 = vmatprep.subr.mxu0 %v5552
        %6292 = vmatpush1.msra.mxu0 %v5551
        %6293 = vmatprep.subr.mxu0 %v5546
        %6294 = vmatpush1.msra.mxu0 %v5545
        %6295 = vmatprep.subr.mxu0 %v5540
        %6296 = vmatpush1.msra.mxu0 %v5539
        %6297 = vmatprep.subr.mxu0 %v5534
        %6298 = vmatpush1.msra.mxu0 %v5533
        %6299 = vmatprep.subr.mxu0 %v5720
        %6300 = vmatpush2.msra.mxu0 %v5719
        %6301 = vmatprep.subr.mxu0 %v5714
        %6302 = vmatpush2.msra.mxu0 %v5713
        %6303 = vmatprep.subr.mxu0 %v5708
        %6304 = vmatpush2.msra.mxu0 %v5707
        %6305 = vmatprep.subr.mxu0 %v5702
        %6306 = vmatpush2.msra.mxu0 %v5701
        %6307 = vmatprep.subr.mxu0 %v5696
        %6308 = vmatpush2.msra.mxu0 %v5695
        %6309 = vmatprep.subr.mxu0 %v5690
        %6310 = vmatpush2.msra.mxu0 %v5689
        %6311 = vmatprep.subr.mxu0 %v5684
        %6312 = vmatpush2.msra.mxu0 %v5683
        %6313 = vmatprep.subr.mxu0 %v5678
        %6314 = vmatpush2.msra.mxu0 %v5677
        %6315 = vmatprep.subr.mxu0 %v5672
        %6316 = vmatpush2.msra.mxu0 %v5671
        %6317 = vmatprep.subr.mxu0 %v5666
        %6318 = vmatpush2.msra.mxu0 %v5665
        %6319 = vmatprep.subr.mxu0 %v5660
        %6320 = vmatpush2.msra.mxu0 %v5659
        %6321 = vmatprep.subr.mxu0 %v5654
        %6322 = vmatpush2.msra.mxu0 %v5653
        %6323 = vmatprep.subr.mxu0 %v5648
        %6324 = vmatpush2.msra.mxu0 %v5647
        %6325 = vmatprep.subr.mxu0 %v5642
        %6326 = vmatpush2.msra.mxu0 %v5641
        %6327 = vmatprep.subr.mxu0 %v5636
        %6328 = vmatpush2.msra.mxu0 %v5635
        %6329 = vmatprep.subr.mxu0 %v5630
        %6330 = vmatpush2.msra.mxu0 %v5629
        %6331 = vmatprep.mubr.f32.mxu0 %v5762
        %6332 = vmatmul.mubr.f32.gmra.mxu0 %v5761
        %v6333 = vpop.f32.mrf.mxu0
        %v6334 = vadd.f32 0.0, %v6333
        %v6335 = vpop.f32.mrf.mxu0
        %v6336 = vadd.f32 0.0, %v6335
        %6337 = vmatprep.mubr.f32.mxu0 %v5797
        %6338 = vmatmul.mubr.f32.gmra.mxu0 %v5796
        %v6339 = vpop.f32.mrf.mxu0
        %v6340 = vadd.f32 0.0, %v6339
        %v6341 = vpop.f32.mrf.mxu0
        %v6342 = vadd.f32 0.0, %v6341
        %6343 = vmatprep.mubr.f32.mxu0 %v5832
        %6344 = vmatmul.mubr.f32.gmra.mxu0 %v5831
        %v6345 = vpop.f32.mrf.mxu0
        %v6346 = vadd.f32 0.0, %v6345
        %v6347 = vpop.f32.mrf.mxu0
        %v6348 = vadd.f32 0.0, %v6347
        %6349 = vmatprep.mubr.f32.mxu0 %v5867
        %6350 = vmatmul.mubr.f32.gmra.mxu0 %v5866
        %v6351 = vpop.f32.mrf.mxu0
        %v6352 = vadd.f32 0.0, %v6351
        %v6353 = vpop.f32.mrf.mxu0
        %v6354 = vadd.f32 0.0, %v6353
        %6355 = vmatprep.mubr.f32.mxu0 %v5902
        %6356 = vmatmul.mubr.f32.gmra.mxu0 %v5901
        %v6357 = vpop.f32.mrf.mxu0
        %v6358 = vadd.f32 0.0, %v6357
        %v6359 = vpop.f32.mrf.mxu0
        %v6360 = vadd.f32 0.0, %v6359
        %6361 = vmatprep.mubr.f32.mxu0 %v5937
        %6362 = vmatmul.mubr.f32.gmra.mxu0 %v5936
        %v6363 = vpop.f32.mrf.mxu0
        %v6364 = vadd.f32 0.0, %v6363
        %v6365 = vpop.f32.mrf.mxu0
        %v6366 = vadd.f32 0.0, %v6365
        %6367 = vmatprep.mubr.f32.mxu0 %v5972
        %6368 = vmatmul.mubr.f32.gmra.mxu0 %v5971
        %v6369 = vpop.f32.mrf.mxu0
        %v6370 = vadd.f32 0.0, %v6369
        %v6371 = vpop.f32.mrf.mxu0
        %v6372 = vadd.f32 0.0, %v6371
        %6373 = vmatprep.mubr.f32.mxu0 %v6007
        %6374 = vmatmul.mubr.f32.gmra.mxu0 %v6006
        %v6375 = vpop.f32.mrf.mxu0
        %v6376 = vadd.f32 0.0, %v6375
        %v6377 = vpop.f32.mrf.mxu0
        %v6378 = vadd.f32 0.0, %v6377
        %6379 = vdwg.mxu0
        %6380 = vmatprep.subr.mxu0 0.0
        %6381 = vmatpush1.msra.mxu0 0.0
        %6382 = vmatprep.subr.mxu0 0.0
        %6383 = vmatpush1.msra.mxu0 0.0
        %6384 = vmatprep.subr.mxu0 0.0
        %6385 = vmatpush1.msra.mxu0 0.0
        %6386 = vmatprep.subr.mxu0 0.0
        %6387 = vmatpush1.msra.mxu0 0.0
        %6388 = vmatprep.subr.mxu0 0.0
        %6389 = vmatpush1.msra.mxu0 0.0
        %6390 = vmatprep.subr.mxu0 0.0
        %6391 = vmatpush1.msra.mxu0 0.0
        %6392 = vmatprep.subr.mxu0 0.0
        %6393 = vmatpush1.msra.mxu0 0.0
        %6394 = vmatprep.subr.mxu0 0.0
        %6395 = vmatpush1.msra.mxu0 0.0
        %6396 = vmatprep.subr.mxu0 0.0
        %6397 = vmatpush1.msra.mxu0 0.0
        %6398 = vmatprep.subr.mxu0 0.0
        %6399 = vmatpush1.msra.mxu0 0.0
        %6400 = vmatprep.subr.mxu0 0.0
        %6401 = vmatpush1.msra.mxu0 0.0
        %6402 = vmatprep.subr.mxu0 0.0
        %6403 = vmatpush1.msra.mxu0 0.0
        %6404 = vmatprep.subr.mxu0 0.0
        %6405 = vmatpush1.msra.mxu0 0.0
        %6406 = vmatprep.subr.mxu0 0.0
        %6407 = vmatpush1.msra.mxu0 0.0
        %6408 = vmatprep.subr.mxu0 0.0
        %6409 = vmatpush1.msra.mxu0 0.0
        %6410 = vmatprep.subr.mxu0 %v5726
        %6411 = vmatpush1.msra.mxu0 %v5725
        %6412 = vmatprep.subr.mxu0 0.0
        %6413 = vmatpush2.msra.mxu0 0.0
        %6414 = vmatprep.subr.mxu0 0.0
        %6415 = vmatpush2.msra.mxu0 0.0
        %6416 = vmatprep.subr.mxu0 0.0
        %6417 = vmatpush2.msra.mxu0 0.0
        %6418 = vmatprep.subr.mxu0 0.0
        %6419 = vmatpush2.msra.mxu0 0.0
        %6420 = vmatprep.subr.mxu0 0.0
        %6421 = vmatpush2.msra.mxu0 0.0
        %6422 = vmatprep.subr.mxu0 0.0
        %6423 = vmatpush2.msra.mxu0 0.0
        %6424 = vmatprep.subr.mxu0 0.0
        %6425 = vmatpush2.msra.mxu0 0.0
        %6426 = vmatprep.subr.mxu0 0.0
        %6427 = vmatpush2.msra.mxu0 0.0
        %6428 = vmatprep.subr.mxu0 0.0
        %6429 = vmatpush2.msra.mxu0 0.0
        %6430 = vmatprep.subr.mxu0 0.0
        %6431 = vmatpush2.msra.mxu0 0.0
        %6432 = vmatprep.subr.mxu0 0.0
        %6433 = vmatpush2.msra.mxu0 0.0
        %6434 = vmatprep.subr.mxu0 0.0
        %6435 = vmatpush2.msra.mxu0 0.0
        %6436 = vmatprep.subr.mxu0 0.0
        %6437 = vmatpush2.msra.mxu0 0.0
        %6438 = vmatprep.subr.mxu0 0.0
        %6439 = vmatpush2.msra.mxu0 0.0
        %6440 = vmatprep.subr.mxu0 0.0
        %6441 = vmatpush2.msra.mxu0 0.0
        %6442 = vmatprep.subr.mxu0 0.0
        %6443 = vmatpush2.msra.mxu0 0.0
        %6444 = vmatprep.mubr.f32.mxu0 0.0
        %6445 = vmatmul.mubr.f32.gmra.mxu0 %v6025
        %v6446 = vpop.f32.mrf.mxu0
        %v6447 = vadd.f32 %v6334, %v6446
        %v6448 = vpop.f32.mrf.mxu0
        %v6449 = vadd.f32 %v6336, %v6448
        %6450 = vmatprep.mubr.f32.mxu0 0.0
        %6451 = vmatmul.mubr.f32.gmra.mxu0 %v6027
        %v6452 = vpop.f32.mrf.mxu0
        %v6453 = vadd.f32 %v6340, %v6452
        %v6454 = vpop.f32.mrf.mxu0
        %v6455 = vadd.f32 %v6342, %v6454
        %6456 = vmatprep.mubr.f32.mxu0 0.0
        %6457 = vmatmul.mubr.f32.gmra.mxu0 %v6029
        %v6458 = vpop.f32.mrf.mxu0
        %v6459 = vadd.f32 %v6346, %v6458
        %v6460 = vpop.f32.mrf.mxu0
        %v6461 = vadd.f32 %v6348, %v6460
        %6462 = vmatprep.mubr.f32.mxu0 0.0
        %6463 = vmatmul.mubr.f32.gmra.mxu0 %v6031
        %v6464 = vpop.f32.mrf.mxu0
        %v6465 = vadd.f32 %v6352, %v6464
        %v6466 = vpop.f32.mrf.mxu0
        %v6467 = vadd.f32 %v6354, %v6466
        %6468 = vmatprep.mubr.f32.mxu0 0.0
        %6469 = vmatmul.mubr.f32.gmra.mxu0 %v6033
        %v6470 = vpop.f32.mrf.mxu0
        %v6471 = vadd.f32 %v6358, %v6470
        %v6472 = vpop.f32.mrf.mxu0
        %v6473 = vadd.f32 %v6360, %v6472
        %6474 = vmatprep.mubr.f32.mxu0 0.0
        %6475 = vmatmul.mubr.f32.gmra.mxu0 %v6035
        %v6476 = vpop.f32.mrf.mxu0
        %v6477 = vadd.f32 %v6364, %v6476
        %v6478 = vpop.f32.mrf.mxu0
        %v6479 = vadd.f32 %v6366, %v6478
        %6480 = vmatprep.mubr.f32.mxu0 0.0
        %6481 = vmatmul.mubr.f32.gmra.mxu0 %v6037
        %v6482 = vpop.f32.mrf.mxu0
        %v6483 = vadd.f32 %v6370, %v6482
        %v6484 = vpop.f32.mrf.mxu0
        %v6485 = vadd.f32 %v6372, %v6484
        %6486 = vmatprep.mubr.f32.mxu0 0.0
        %6487 = vmatmul.mubr.f32.gmra.mxu0 %v6039
        %v6488 = vpop.f32.mrf.mxu0
        %v6489 = vadd.f32 %v6376, %v6488
        %v6490 = vpop.f32.mrf.mxu0
        %v6491 = vadd.f32 %v6378, %v6490
        %6492 = vdwg.mxu0
        %6493 = vmatprep.subr.mxu0 %v5626
        %6494 = vmatpush1.msra.mxu0 %v5625
        %6495 = vmatprep.subr.mxu0 %v5620
        %6496 = vmatpush1.msra.mxu0 %v5619
        %6497 = vmatprep.subr.mxu0 %v5614
        %6498 = vmatpush1.msra.mxu0 %v5613
        %6499 = vmatprep.subr.mxu0 %v5608
        %6500 = vmatpush1.msra.mxu0 %v5607
        %6501 = vmatprep.subr.mxu0 %v5602
        %6502 = vmatpush1.msra.mxu0 %v5601
        %6503 = vmatprep.subr.mxu0 %v5596
        %6504 = vmatpush1.msra.mxu0 %v5595
        %6505 = vmatprep.subr.mxu0 %v5590
        %6506 = vmatpush1.msra.mxu0 %v5589
        %6507 = vmatprep.subr.mxu0 %v5584
        %6508 = vmatpush1.msra.mxu0 %v5583
        %6509 = vmatprep.subr.mxu0 %v5578
        %6510 = vmatpush1.msra.mxu0 %v5577
        %6511 = vmatprep.subr.mxu0 %v5572
        %6512 = vmatpush1.msra.mxu0 %v5571
        %6513 = vmatprep.subr.mxu0 %v5566
        %6514 = vmatpush1.msra.mxu0 %v5565
        %6515 = vmatprep.subr.mxu0 %v5560
        %6516 = vmatpush1.msra.mxu0 %v5559
        %6517 = vmatprep.subr.mxu0 %v5554
        %6518 = vmatpush1.msra.mxu0 %v5553
        %6519 = vmatprep.subr.mxu0 %v5548
        %6520 = vmatpush1.msra.mxu0 %v5547
        %6521 = vmatprep.subr.mxu0 %v5542
        %6522 = vmatpush1.msra.mxu0 %v5541
        %6523 = vmatprep.subr.mxu0 %v5536
        %6524 = vmatpush1.msra.mxu0 %v5535
        %6525 = vmatprep.subr.mxu0 %v5722
        %6526 = vmatpush2.msra.mxu0 %v5721
        %6527 = vmatprep.subr.mxu0 %v5716
        %6528 = vmatpush2.msra.mxu0 %v5715
        %6529 = vmatprep.subr.mxu0 %v5710
        %6530 = vmatpush2.msra.mxu0 %v5709
        %6531 = vmatprep.subr.mxu0 %v5704
        %6532 = vmatpush2.msra.mxu0 %v5703
        %6533 = vmatprep.subr.mxu0 %v5698
        %6534 = vmatpush2.msra.mxu0 %v5697
        %6535 = vmatprep.subr.mxu0 %v5692
        %6536 = vmatpush2.msra.mxu0 %v5691
        %6537 = vmatprep.subr.mxu0 %v5686
        %6538 = vmatpush2.msra.mxu0 %v5685
        %6539 = vmatprep.subr.mxu0 %v5680
        %6540 = vmatpush2.msra.mxu0 %v5679
        %6541 = vmatprep.subr.mxu0 %v5674
        %6542 = vmatpush2.msra.mxu0 %v5673
        %6543 = vmatprep.subr.mxu0 %v5668
        %6544 = vmatpush2.msra.mxu0 %v5667
        %6545 = vmatprep.subr.mxu0 %v5662
        %6546 = vmatpush2.msra.mxu0 %v5661
        %6547 = vmatprep.subr.mxu0 %v5656
        %6548 = vmatpush2.msra.mxu0 %v5655
        %6549 = vmatprep.subr.mxu0 %v5650
        %6550 = vmatpush2.msra.mxu0 %v5649
        %6551 = vmatprep.subr.mxu0 %v5644
        %6552 = vmatpush2.msra.mxu0 %v5643
        %6553 = vmatprep.subr.mxu0 %v5638
        %6554 = vmatpush2.msra.mxu0 %v5637
        %6555 = vmatprep.subr.mxu0 %v5632
        %6556 = vmatpush2.msra.mxu0 %v5631
        %6557 = vmatprep.mubr.f32.mxu0 %v5762
        %6558 = vmatmul.mubr.f32.gmra.mxu0 %v5761
        %v6559 = vpop.f32.mrf.mxu0
        %v6560 = vadd.f32 0.0, %v6559
        %v6561 = vpop.f32.mrf.mxu0
        %v6562 = vadd.f32 0.0, %v6561
        %6563 = vmatprep.mubr.f32.mxu0 %v5797
        %6564 = vmatmul.mubr.f32.gmra.mxu0 %v5796
        %v6565 = vpop.f32.mrf.mxu0
        %v6566 = vadd.f32 0.0, %v6565
        %v6567 = vpop.f32.mrf.mxu0
        %v6568 = vadd.f32 0.0, %v6567
        %6569 = vmatprep.mubr.f32.mxu0 %v5832
        %6570 = vmatmul.mubr.f32.gmra.mxu0 %v5831
        %v6571 = vpop.f32.mrf.mxu0
        %v6572 = vadd.f32 0.0, %v6571
        %v6573 = vpop.f32.mrf.mxu0
        %v6574 = vadd.f32 0.0, %v6573
        %6575 = vmatprep.mubr.f32.mxu0 %v5867
        %6576 = vmatmul.mubr.f32.gmra.mxu0 %v5866
        %v6577 = vpop.f32.mrf.mxu0
        %v6578 = vadd.f32 0.0, %v6577
        %v6579 = vpop.f32.mrf.mxu0
        %v6580 = vadd.f32 0.0, %v6579
        %6581 = vmatprep.mubr.f32.mxu0 %v5902
        %6582 = vmatmul.mubr.f32.gmra.mxu0 %v5901
        %v6583 = vpop.f32.mrf.mxu0
        %v6584 = vadd.f32 0.0, %v6583
        %v6585 = vpop.f32.mrf.mxu0
        %v6586 = vadd.f32 0.0, %v6585
        %6587 = vmatprep.mubr.f32.mxu0 %v5937
        %6588 = vmatmul.mubr.f32.gmra.mxu0 %v5936
        %v6589 = vpop.f32.mrf.mxu0
        %v6590 = vadd.f32 0.0, %v6589
        %v6591 = vpop.f32.mrf.mxu0
        %v6592 = vadd.f32 0.0, %v6591
        %6593 = vmatprep.mubr.f32.mxu0 %v5972
        %6594 = vmatmul.mubr.f32.gmra.mxu0 %v5971
        %v6595 = vpop.f32.mrf.mxu0
        %v6596 = vadd.f32 0.0, %v6595
        %v6597 = vpop.f32.mrf.mxu0
        %v6598 = vadd.f32 0.0, %v6597
        %6599 = vmatprep.mubr.f32.mxu0 %v6007
        %6600 = vmatmul.mubr.f32.gmra.mxu0 %v6006
        %v6601 = vpop.f32.mrf.mxu0
        %v6602 = vadd.f32 0.0, %v6601
        %v6603 = vpop.f32.mrf.mxu0
        %v6604 = vadd.f32 0.0, %v6603
        %6605 = vdwg.mxu0
        %6606 = vmatprep.subr.mxu0 0.0
        %6607 = vmatpush1.msra.mxu0 0.0
        %6608 = vmatprep.subr.mxu0 0.0
        %6609 = vmatpush1.msra.mxu0 0.0
        %6610 = vmatprep.subr.mxu0 0.0
        %6611 = vmatpush1.msra.mxu0 0.0
        %6612 = vmatprep.subr.mxu0 0.0
        %6613 = vmatpush1.msra.mxu0 0.0
        %6614 = vmatprep.subr.mxu0 0.0
        %6615 = vmatpush1.msra.mxu0 0.0
        %6616 = vmatprep.subr.mxu0 0.0
        %6617 = vmatpush1.msra.mxu0 0.0
        %6618 = vmatprep.subr.mxu0 0.0
        %6619 = vmatpush1.msra.mxu0 0.0
        %6620 = vmatprep.subr.mxu0 0.0
        %6621 = vmatpush1.msra.mxu0 0.0
        %6622 = vmatprep.subr.mxu0 0.0
        %6623 = vmatpush1.msra.mxu0 0.0
        %6624 = vmatprep.subr.mxu0 0.0
        %6625 = vmatpush1.msra.mxu0 0.0
        %6626 = vmatprep.subr.mxu0 0.0
        %6627 = vmatpush1.msra.mxu0 0.0
        %6628 = vmatprep.subr.mxu0 0.0
        %6629 = vmatpush1.msra.mxu0 0.0
        %6630 = vmatprep.subr.mxu0 0.0
        %6631 = vmatpush1.msra.mxu0 0.0
        %6632 = vmatprep.subr.mxu0 0.0
        %6633 = vmatpush1.msra.mxu0 0.0
        %6634 = vmatprep.subr.mxu0 0.0
        %6635 = vmatpush1.msra.mxu0 0.0
        %6636 = vmatprep.subr.mxu0 %v5728
        %6637 = vmatpush1.msra.mxu0 %v5727
        %6638 = vmatprep.subr.mxu0 0.0
        %6639 = vmatpush2.msra.mxu0 0.0
        %6640 = vmatprep.subr.mxu0 0.0
        %6641 = vmatpush2.msra.mxu0 0.0
        %6642 = vmatprep.subr.mxu0 0.0
        %6643 = vmatpush2.msra.mxu0 0.0
        %6644 = vmatprep.subr.mxu0 0.0
        %6645 = vmatpush2.msra.mxu0 0.0
        %6646 = vmatprep.subr.mxu0 0.0
        %6647 = vmatpush2.msra.mxu0 0.0
        %6648 = vmatprep.subr.mxu0 0.0
        %6649 = vmatpush2.msra.mxu0 0.0
        %6650 = vmatprep.subr.mxu0 0.0
        %6651 = vmatpush2.msra.mxu0 0.0
        %6652 = vmatprep.subr.mxu0 0.0
        %6653 = vmatpush2.msra.mxu0 0.0
        %6654 = vmatprep.subr.mxu0 0.0
        %6655 = vmatpush2.msra.mxu0 0.0
        %6656 = vmatprep.subr.mxu0 0.0
        %6657 = vmatpush2.msra.mxu0 0.0
        %6658 = vmatprep.subr.mxu0 0.0
        %6659 = vmatpush2.msra.mxu0 0.0
        %6660 = vmatprep.subr.mxu0 0.0
        %6661 = vmatpush2.msra.mxu0 0.0
        %6662 = vmatprep.subr.mxu0 0.0
        %6663 = vmatpush2.msra.mxu0 0.0
        %6664 = vmatprep.subr.mxu0 0.0
        %6665 = vmatpush2.msra.mxu0 0.0
        %6666 = vmatprep.subr.mxu0 0.0
        %6667 = vmatpush2.msra.mxu0 0.0
        %6668 = vmatprep.subr.mxu0 0.0
        %6669 = vmatpush2.msra.mxu0 0.0
        %6670 = vmatprep.mubr.f32.mxu0 0.0
        %6671 = vmatmul.mubr.f32.gmra.mxu0 %v6025
        %v6672 = vpop.f32.mrf.mxu0
        %v6673 = vadd.f32 %v6560, %v6672
        %v6674 = vpop.f32.mrf.mxu0
        %v6675 = vadd.f32 %v6562, %v6674
        %6676 = vmatprep.mubr.f32.mxu0 0.0
        %6677 = vmatmul.mubr.f32.gmra.mxu0 %v6027
        %v6678 = vpop.f32.mrf.mxu0
        %v6679 = vadd.f32 %v6566, %v6678
        %v6680 = vpop.f32.mrf.mxu0
        %v6681 = vadd.f32 %v6568, %v6680
        %6682 = vmatprep.mubr.f32.mxu0 0.0
        %6683 = vmatmul.mubr.f32.gmra.mxu0 %v6029
        %v6684 = vpop.f32.mrf.mxu0
        %v6685 = vadd.f32 %v6572, %v6684
        %v6686 = vpop.f32.mrf.mxu0
        %v6687 = vadd.f32 %v6574, %v6686
        %6688 = vmatprep.mubr.f32.mxu0 0.0
        %6689 = vmatmul.mubr.f32.gmra.mxu0 %v6031
        %v6690 = vpop.f32.mrf.mxu0
        %v6691 = vadd.f32 %v6578, %v6690
        %v6692 = vpop.f32.mrf.mxu0
        %v6693 = vadd.f32 %v6580, %v6692
        %6694 = vmatprep.mubr.f32.mxu0 0.0
        %6695 = vmatmul.mubr.f32.gmra.mxu0 %v6033
        %v6696 = vpop.f32.mrf.mxu0
        %v6697 = vadd.f32 %v6584, %v6696
        %v6698 = vpop.f32.mrf.mxu0
        %v6699 = vadd.f32 %v6586, %v6698
        %6700 = vmatprep.mubr.f32.mxu0 0.0
        %6701 = vmatmul.mubr.f32.gmra.mxu0 %v6035
        %v6702 = vpop.f32.mrf.mxu0
        %v6703 = vadd.f32 %v6590, %v6702
        %v6704 = vpop.f32.mrf.mxu0
        %v6705 = vadd.f32 %v6592, %v6704
        %6706 = vmatprep.mubr.f32.mxu0 0.0
        %6707 = vmatmul.mubr.f32.gmra.mxu0 %v6037
        %v6708 = vpop.f32.mrf.mxu0
        %v6709 = vadd.f32 %v6596, %v6708
        %v6710 = vpop.f32.mrf.mxu0
        %v6711 = vadd.f32 %v6598, %v6710
        %6712 = vmatprep.mubr.f32.mxu0 0.0
        %6713 = vmatmul.mubr.f32.gmra.mxu0 %v6039
        %v6714 = vpop.f32.mrf.mxu0
        %v6715 = vadd.f32 %v6602, %v6714
        %v6716 = vpop.f32.mrf.mxu0
        %v6717 = vadd.f32 %v6604, %v6716
        %6718 = vdwg.mxu0
        %v6719 = vadd.f32 %v5032, %v6221
        %v6720 = vadd.f32 %v5034, %v6223
        %v6721 = vadd.f32 %v5258, %v6447
        %v6722 = vadd.f32 %v5260, %v6449
        %v6723 = vadd.f32 %v5484, %v6673
        %v6724 = vadd.f32 %v5486, %v6675
        %v6725 = vadd.f32 %v5038, %v6227
        %v6726 = vadd.f32 %v5040, %v6229
        %v6727 = vadd.f32 %v5264, %v6453
        %v6728 = vadd.f32 %v5266, %v6455
        %v6729 = vadd.f32 %v5490, %v6679
        %v6730 = vadd.f32 %v5492, %v6681
        %v6731 = vadd.f32 %v5044, %v6233
        %v6732 = vadd.f32 %v5046, %v6235
        %v6733 = vadd.f32 %v5270, %v6459
        %v6734 = vadd.f32 %v5272, %v6461
        %v6735 = vadd.f32 %v5496, %v6685
        %v6736 = vadd.f32 %v5498, %v6687
        %v6737 = vadd.f32 %v5050, %v6239
        %v6738 = vadd.f32 %v5052, %v6241
        %v6739 = vadd.f32 %v5276, %v6465
        %v6740 = vadd.f32 %v5278, %v6467
        %v6741 = vadd.f32 %v5502, %v6691
        %v6742 = vadd.f32 %v5504, %v6693
        %v6743 = vadd.f32 %v5056, %v6245
        %v6744 = vadd.f32 %v5058, %v6247
        %v6745 = vadd.f32 %v5282, %v6471
        %v6746 = vadd.f32 %v5284, %v6473
        %v6747 = vadd.f32 %v5508, %v6697
        %v6748 = vadd.f32 %v5510, %v6699
        %v6749 = vadd.f32 %v5062, %v6251
        %v6750 = vadd.f32 %v5064, %v6253
        %v6751 = vadd.f32 %v5288, %v6477
        %v6752 = vadd.f32 %v5290, %v6479
        %v6753 = vadd.f32 %v5514, %v6703
        %v6754 = vadd.f32 %v5516, %v6705
        %v6755 = vadd.f32 %v5068, %v6257
        %v6756 = vadd.f32 %v5070, %v6259
        %v6757 = vadd.f32 %v5294, %v6483
        %v6758 = vadd.f32 %v5296, %v6485
        %v6759 = vadd.f32 %v5520, %v6709
        %v6760 = vadd.f32 %v5522, %v6711
        %v6761 = vadd.f32 %v5074, %v6263
        %v6762 = vadd.f32 %v5076, %v6265
        %v6763 = vadd.f32 %v5300, %v6489
        %v6764 = vadd.f32 %v5302, %v6491
        %v6765 = vadd.f32 %v5526, %v6715
        %v6766 = vadd.f32 %v5528, %v6717
        %v6767 = vld [vmem:[#allocation12] sm:$0x3f]
        %v6769 = vlaneseq
        %v6770 = vshrl.u32 %v6769, 7
        %v6771 = vsub.s32 0, %v6770
        %v6772 = vrot.slane %v6767, %v6771
        %v6773 = vlaneseq
        %v6774 = vshrl.u32 %v6773, 7
        %v6775 = vsub.s32 1, %v6774
        %v6776 = vrot.slane %v6767, %v6775
        %v6777 = vlaneseq
        %v6778 = vshrl.u32 %v6777, 7
        %v6779 = vsub.s32 2, %v6778
        %v6780 = vrot.slane %v6767, %v6779
        %v6781 = vlaneseq
        %v6782 = vshrl.u32 %v6781, 7
        %v6783 = vsub.s32 3, %v6782
        %v6784 = vrot.slane %v6767, %v6783
        %v6785 = vlaneseq
        %v6786 = vshrl.u32 %v6785, 7
        %v6787 = vsub.s32 4, %v6786
        %v6788 = vrot.slane %v6767, %v6787
        %v6789 = vlaneseq
        %v6790 = vshrl.u32 %v6789, 7
        %v6791 = vsub.s32 5, %v6790
        %v6792 = vrot.slane %v6767, %v6791
        %v6799 = vadd.f32 %v6719, %v6772
        %v6800 = vadd.f32 %v6720, %v6776
        %v6801 = vadd.f32 %v6721, %v6780
        %v6802 = vadd.f32 %v6722, %v6784
        %v6803 = vadd.f32 %v6723, %v6788
        %v6804 = vadd.f32 %v6724, %v6792
        %v6805 = vadd.f32 %v6725, %v6772
        %v6806 = vadd.f32 %v6726, %v6776
        %v6807 = vadd.f32 %v6727, %v6780
        %v6808 = vadd.f32 %v6728, %v6784
        %v6809 = vadd.f32 %v6729, %v6788
        %v6810 = vadd.f32 %v6730, %v6792
        %v6811 = vadd.f32 %v6731, %v6772
        %v6812 = vadd.f32 %v6732, %v6776
        %v6813 = vadd.f32 %v6733, %v6780
        %v6814 = vadd.f32 %v6734, %v6784
        %v6815 = vadd.f32 %v6735, %v6788
        %v6816 = vadd.f32 %v6736, %v6792
        %v6817 = vadd.f32 %v6737, %v6772
        %v6818 = vadd.f32 %v6738, %v6776
        %v6819 = vadd.f32 %v6739, %v6780
        %v6820 = vadd.f32 %v6740, %v6784
        %v6821 = vadd.f32 %v6741, %v6788
        %v6822 = vadd.f32 %v6742, %v6792
        %v6823 = vadd.f32 %v6743, %v6772
        %v6824 = vadd.f32 %v6744, %v6776
        %v6825 = vadd.f32 %v6745, %v6780
        %v6826 = vadd.f32 %v6746, %v6784
        %v6827 = vadd.f32 %v6747, %v6788
        %v6828 = vadd.f32 %v6748, %v6792
        %v6829 = vadd.f32 %v6749, %v6772
        %v6830 = vadd.f32 %v6750, %v6776
        %v6831 = vadd.f32 %v6751, %v6780
        %v6832 = vadd.f32 %v6752, %v6784
        %v6833 = vadd.f32 %v6753, %v6788
        %v6834 = vadd.f32 %v6754, %v6792
        %v6835 = vadd.f32 %v6755, %v6772
        %v6836 = vadd.f32 %v6756, %v6776
        %v6837 = vadd.f32 %v6757, %v6780
        %v6838 = vadd.f32 %v6758, %v6784
        %v6839 = vadd.f32 %v6759, %v6788
        %v6840 = vadd.f32 %v6760, %v6792
        %v6841 = vadd.f32 %v6761, %v6772
        %v6842 = vadd.f32 %v6762, %v6776
        %v6843 = vadd.f32 %v6763, %v6780
        %v6844 = vadd.f32 %v6764, %v6784
        %v6845 = vadd.f32 %v6765, %v6788
        %v6846 = vadd.f32 %v6766, %v6792
        %v6871 = vcombine.low %v6799, %v6800
        %v6872 = vcombine.high %v6799, %v6800
        %v6873 = vcombine.high %v6801, %v6801
        %v6875 = vunpack.c.l.s4 1966171168
        %v6876 = vunpack.c.0.s8 %v6875
        %v6877 = vlaneseq
        %v6878 = vshrl.u32 %v6877, 7
        %v6879 = vsub.s32 %v6876, %v6878
        %v6880 = vrot.slane %v6871, %v6879
        %v6882 = vunpack.c.l.s4 1966171168
        %v6883 = vunpack.c.0.s8 %v6882
        %v6884 = vlaneseq
        %v6885 = vshrl.u32 %v6884, 7
        %v6886 = vsub.s32 %v6883, %v6885
        %v6887 = vrot.slane %v6872, %v6886
        %v6889 = vunpack.c.l.s4 1966171168
        %v6890 = vunpack.c.0.s8 %v6889
        %v6891 = vlaneseq
        %v6892 = vshrl.u32 %v6891, 7
        %v6893 = vsub.s32 %v6890, %v6892
        %v6894 = vrot.slane %v6801, %v6893
        %v6896 = vunpack.c.l.s4 1966171168
        %v6897 = vunpack.c.0.s8 %v6896
        %v6898 = vlaneseq
        %v6899 = vshrl.u32 %v6898, 7
        %v6900 = vsub.s32 %v6897, %v6899
        %v6901 = vrot.slane %v6873, %v6900
        %v6902 = vcombine.low %v6880, %v6894
        %v6903 = vcombine.high %v6880, %v6894
        %v6904 = vcombine.low %v6887, %v6901
        %v6905 = vcombine.high %v6887, %v6901
        %v6907 = vunpack.c.l.s4 1966171168
        %v6908 = vunpack.c.0.s8 %v6907
        %v6909 = vlaneseq
        %v6910 = vshrl.u32 %v6909, 7
        %v6911 = vsub.s32 %v6908, %v6910
        %v6912 = vrot.slane %v6902, %v6911
        %v6914 = vunpack.c.l.s4 1966171168
        %v6915 = vunpack.c.0.s8 %v6914
        %v6916 = vlaneseq
        %v6917 = vshrl.u32 %v6916, 7
        %v6918 = vsub.s32 %v6915, %v6917
        %v6919 = vrot.slane %v6904, %v6918
        %v6921 = vunpack.c.l.s4 1966171168
        %v6922 = vunpack.c.0.s8 %v6921
        %v6923 = vlaneseq
        %v6924 = vshrl.u32 %v6923, 7
        %v6925 = vsub.s32 %v6922, %v6924
        %v6926 = vrot.slane %v6903, %v6925
        %v6928 = vunpack.c.l.s4 1966171168
        %v6929 = vunpack.c.0.s8 %v6928
        %v6930 = vlaneseq
        %v6931 = vshrl.u32 %v6930, 7
        %v6932 = vsub.s32 %v6929, %v6931
        %v6933 = vrot.slane %v6905, %v6932
        %v6934 = vcombine.high %v6912, %v6912
        %v6935 = vcombine.high %v6919, %v6919
        %v6936 = vcombine.high %v6926, %v6926
        %v6937 = vcombine.high %v6933, %v6933
        %v6938 = vcombine.low %v6805, %v6806
        %v6939 = vcombine.high %v6805, %v6806
        %v6940 = vcombine.high %v6807, %v6807
        %v6942 = vunpack.c.l.s4 1966171168
        %v6943 = vunpack.c.0.s8 %v6942
        %v6944 = vlaneseq
        %v6945 = vshrl.u32 %v6944, 7
        %v6946 = vsub.s32 %v6943, %v6945
        %v6947 = vrot.slane %v6938, %v6946
        %v6949 = vunpack.c.l.s4 1966171168
        %v6950 = vunpack.c.0.s8 %v6949
        %v6951 = vlaneseq
        %v6952 = vshrl.u32 %v6951, 7
        %v6953 = vsub.s32 %v6950, %v6952
        %v6954 = vrot.slane %v6939, %v6953
        %v6956 = vunpack.c.l.s4 1966171168
        %v6957 = vunpack.c.0.s8 %v6956
        %v6958 = vlaneseq
        %v6959 = vshrl.u32 %v6958, 7
        %v6960 = vsub.s32 %v6957, %v6959
        %v6961 = vrot.slane %v6807, %v6960
        %v6963 = vunpack.c.l.s4 1966171168
        %v6964 = vunpack.c.0.s8 %v6963
        %v6965 = vlaneseq
        %v6966 = vshrl.u32 %v6965, 7
        %v6967 = vsub.s32 %v6964, %v6966
        %v6968 = vrot.slane %v6940, %v6967
        %v6969 = vcombine.low %v6947, %v6961
        %v6970 = vcombine.high %v6947, %v6961
        %v6971 = vcombine.low %v6954, %v6968
        %v6972 = vcombine.high %v6954, %v6968
        %v6974 = vunpack.c.l.s4 1966171168
        %v6975 = vunpack.c.0.s8 %v6974
        %v6976 = vlaneseq
        %v6977 = vshrl.u32 %v6976, 7
        %v6978 = vsub.s32 %v6975, %v6977
        %v6979 = vrot.slane %v6969, %v6978
        %v6981 = vunpack.c.l.s4 1966171168
        %v6982 = vunpack.c.0.s8 %v6981
        %v6983 = vlaneseq
        %v6984 = vshrl.u32 %v6983, 7
        %v6985 = vsub.s32 %v6982, %v6984
        %v6986 = vrot.slane %v6971, %v6985
        %v6988 = vunpack.c.l.s4 1966171168
        %v6989 = vunpack.c.0.s8 %v6988
        %v6990 = vlaneseq
        %v6991 = vshrl.u32 %v6990, 7
        %v6992 = vsub.s32 %v6989, %v6991
        %v6993 = vrot.slane %v6970, %v6992
        %v6995 = vunpack.c.l.s4 1966171168
        %v6996 = vunpack.c.0.s8 %v6995
        %v6997 = vlaneseq
        %v6998 = vshrl.u32 %v6997, 7
        %v6999 = vsub.s32 %v6996, %v6998
        %v7000 = vrot.slane %v6972, %v6999
        %v7001 = vcombine.high %v6979, %v6979
        %v7002 = vcombine.high %v6986, %v6986
        %v7003 = vcombine.high %v6993, %v6993
        %v7004 = vcombine.high %v7000, %v7000
        %v7005 = vcombine.low %v6811, %v6812
        %v7006 = vcombine.high %v6811, %v6812
        %v7007 = vcombine.high %v6813, %v6813
        %v7009 = vunpack.c.l.s4 1966171168
        %v7010 = vunpack.c.0.s8 %v7009
        %v7011 = vlaneseq
        %v7012 = vshrl.u32 %v7011, 7
        %v7013 = vsub.s32 %v7010, %v7012
        %v7014 = vrot.slane %v7005, %v7013
        %v7016 = vunpack.c.l.s4 1966171168
        %v7017 = vunpack.c.0.s8 %v7016
        %v7018 = vlaneseq
        %v7019 = vshrl.u32 %v7018, 7
        %v7020 = vsub.s32 %v7017, %v7019
        %v7021 = vrot.slane %v7006, %v7020
        %v7023 = vunpack.c.l.s4 1966171168
        %v7024 = vunpack.c.0.s8 %v7023
        %v7025 = vlaneseq
        %v7026 = vshrl.u32 %v7025, 7
        %v7027 = vsub.s32 %v7024, %v7026
        %v7028 = vrot.slane %v6813, %v7027
        %v7030 = vunpack.c.l.s4 1966171168
        %v7031 = vunpack.c.0.s8 %v7030
        %v7032 = vlaneseq
        %v7033 = vshrl.u32 %v7032, 7
        %v7034 = vsub.s32 %v7031, %v7033
        %v7035 = vrot.slane %v7007, %v7034
        %v7036 = vcombine.low %v7014, %v7028
        %v7037 = vcombine.high %v7014, %v7028
        %v7038 = vcombine.low %v7021, %v7035
        %v7039 = vcombine.high %v7021, %v7035
        %v7041 = vunpack.c.l.s4 1966171168
        %v7042 = vunpack.c.0.s8 %v7041
        %v7043 = vlaneseq
        %v7044 = vshrl.u32 %v7043, 7
        %v7045 = vsub.s32 %v7042, %v7044
        %v7046 = vrot.slane %v7036, %v7045
        %v7048 = vunpack.c.l.s4 1966171168
        %v7049 = vunpack.c.0.s8 %v7048
        %v7050 = vlaneseq
        %v7051 = vshrl.u32 %v7050, 7
        %v7052 = vsub.s32 %v7049, %v7051
        %v7053 = vrot.slane %v7038, %v7052
        %v7055 = vunpack.c.l.s4 1966171168
        %v7056 = vunpack.c.0.s8 %v7055
        %v7057 = vlaneseq
        %v7058 = vshrl.u32 %v7057, 7
        %v7059 = vsub.s32 %v7056, %v7058
        %v7060 = vrot.slane %v7037, %v7059
        %v7062 = vunpack.c.l.s4 1966171168
        %v7063 = vunpack.c.0.s8 %v7062
        %v7064 = vlaneseq
        %v7065 = vshrl.u32 %v7064, 7
        %v7066 = vsub.s32 %v7063, %v7065
        %v7067 = vrot.slane %v7039, %v7066
        %v7068 = vcombine.high %v7046, %v7046
        %v7069 = vcombine.high %v7053, %v7053
        %v7070 = vcombine.high %v7060, %v7060
        %v7071 = vcombine.high %v7067, %v7067
        %v7072 = vcombine.low %v6817, %v6818
        %v7073 = vcombine.high %v6817, %v6818
        %v7074 = vcombine.high %v6819, %v6819
        %v7076 = vunpack.c.l.s4 1966171168
        %v7077 = vunpack.c.0.s8 %v7076
        %v7078 = vlaneseq
        %v7079 = vshrl.u32 %v7078, 7
        %v7080 = vsub.s32 %v7077, %v7079
        %v7081 = vrot.slane %v7072, %v7080
        %v7083 = vunpack.c.l.s4 1966171168
        %v7084 = vunpack.c.0.s8 %v7083
        %v7085 = vlaneseq
        %v7086 = vshrl.u32 %v7085, 7
        %v7087 = vsub.s32 %v7084, %v7086
        %v7088 = vrot.slane %v7073, %v7087
        %v7090 = vunpack.c.l.s4 1966171168
        %v7091 = vunpack.c.0.s8 %v7090
        %v7092 = vlaneseq
        %v7093 = vshrl.u32 %v7092, 7
        %v7094 = vsub.s32 %v7091, %v7093
        %v7095 = vrot.slane %v6819, %v7094
        %v7097 = vunpack.c.l.s4 1966171168
        %v7098 = vunpack.c.0.s8 %v7097
        %v7099 = vlaneseq
        %v7100 = vshrl.u32 %v7099, 7
        %v7101 = vsub.s32 %v7098, %v7100
        %v7102 = vrot.slane %v7074, %v7101
        %v7103 = vcombine.low %v7081, %v7095
        %v7104 = vcombine.high %v7081, %v7095
        %v7105 = vcombine.low %v7088, %v7102
        %v7106 = vcombine.high %v7088, %v7102
        %v7108 = vunpack.c.l.s4 1966171168
        %v7109 = vunpack.c.0.s8 %v7108
        %v7110 = vlaneseq
        %v7111 = vshrl.u32 %v7110, 7
        %v7112 = vsub.s32 %v7109, %v7111
        %v7113 = vrot.slane %v7103, %v7112
        %v7115 = vunpack.c.l.s4 1966171168
        %v7116 = vunpack.c.0.s8 %v7115
        %v7117 = vlaneseq
        %v7118 = vshrl.u32 %v7117, 7
        %v7119 = vsub.s32 %v7116, %v7118
        %v7120 = vrot.slane %v7105, %v7119
        %v7122 = vunpack.c.l.s4 1966171168
        %v7123 = vunpack.c.0.s8 %v7122
        %v7124 = vlaneseq
        %v7125 = vshrl.u32 %v7124, 7
        %v7126 = vsub.s32 %v7123, %v7125
        %v7127 = vrot.slane %v7104, %v7126
        %v7129 = vunpack.c.l.s4 1966171168
        %v7130 = vunpack.c.0.s8 %v7129
        %v7131 = vlaneseq
        %v7132 = vshrl.u32 %v7131, 7
        %v7133 = vsub.s32 %v7130, %v7132
        %v7134 = vrot.slane %v7106, %v7133
        %v7135 = vcombine.high %v7113, %v7113
        %v7136 = vcombine.high %v7120, %v7120
        %v7137 = vcombine.high %v7127, %v7127
        %v7138 = vcombine.high %v7134, %v7134
        %v7139 = vcombine.low %v6823, %v6824
        %v7140 = vcombine.high %v6823, %v6824
        %v7141 = vcombine.high %v6825, %v6825
        %v7143 = vunpack.c.l.s4 1966171168
        %v7144 = vunpack.c.0.s8 %v7143
        %v7145 = vlaneseq
        %v7146 = vshrl.u32 %v7145, 7
        %v7147 = vsub.s32 %v7144, %v7146
        %v7148 = vrot.slane %v7139, %v7147
        %v7150 = vunpack.c.l.s4 1966171168
        %v7151 = vunpack.c.0.s8 %v7150
        %v7152 = vlaneseq
        %v7153 = vshrl.u32 %v7152, 7
        %v7154 = vsub.s32 %v7151, %v7153
        %v7155 = vrot.slane %v7140, %v7154
        %v7157 = vunpack.c.l.s4 1966171168
        %v7158 = vunpack.c.0.s8 %v7157
        %v7159 = vlaneseq
        %v7160 = vshrl.u32 %v7159, 7
        %v7161 = vsub.s32 %v7158, %v7160
        %v7162 = vrot.slane %v6825, %v7161
        %v7164 = vunpack.c.l.s4 1966171168
        %v7165 = vunpack.c.0.s8 %v7164
        %v7166 = vlaneseq
        %v7167 = vshrl.u32 %v7166, 7
        %v7168 = vsub.s32 %v7165, %v7167
        %v7169 = vrot.slane %v7141, %v7168
        %v7170 = vcombine.low %v7148, %v7162
        %v7171 = vcombine.high %v7148, %v7162
        %v7172 = vcombine.low %v7155, %v7169
        %v7173 = vcombine.high %v7155, %v7169
        %v7175 = vunpack.c.l.s4 1966171168
        %v7176 = vunpack.c.0.s8 %v7175
        %v7177 = vlaneseq
        %v7178 = vshrl.u32 %v7177, 7
        %v7179 = vsub.s32 %v7176, %v7178
        %v7180 = vrot.slane %v7170, %v7179
        %v7182 = vunpack.c.l.s4 1966171168
        %v7183 = vunpack.c.0.s8 %v7182
        %v7184 = vlaneseq
        %v7185 = vshrl.u32 %v7184, 7
        %v7186 = vsub.s32 %v7183, %v7185
        %v7187 = vrot.slane %v7172, %v7186
        %v7189 = vunpack.c.l.s4 1966171168
        %v7190 = vunpack.c.0.s8 %v7189
        %v7191 = vlaneseq
        %v7192 = vshrl.u32 %v7191, 7
        %v7193 = vsub.s32 %v7190, %v7192
        %v7194 = vrot.slane %v7171, %v7193
        %v7196 = vunpack.c.l.s4 1966171168
        %v7197 = vunpack.c.0.s8 %v7196
        %v7198 = vlaneseq
        %v7199 = vshrl.u32 %v7198, 7
        %v7200 = vsub.s32 %v7197, %v7199
        %v7201 = vrot.slane %v7173, %v7200
        %v7202 = vcombine.high %v7180, %v7180
        %v7203 = vcombine.high %v7187, %v7187
        %v7204 = vcombine.high %v7194, %v7194
        %v7205 = vcombine.high %v7201, %v7201
        %v7206 = vcombine.low %v6829, %v6830
        %v7207 = vcombine.high %v6829, %v6830
        %v7208 = vcombine.high %v6831, %v6831
        %v7210 = vunpack.c.l.s4 1966171168
        %v7211 = vunpack.c.0.s8 %v7210
        %v7212 = vlaneseq
        %v7213 = vshrl.u32 %v7212, 7
        %v7214 = vsub.s32 %v7211, %v7213
        %v7215 = vrot.slane %v7206, %v7214
        %v7217 = vunpack.c.l.s4 1966171168
        %v7218 = vunpack.c.0.s8 %v7217
        %v7219 = vlaneseq
        %v7220 = vshrl.u32 %v7219, 7
        %v7221 = vsub.s32 %v7218, %v7220
        %v7222 = vrot.slane %v7207, %v7221
        %v7224 = vunpack.c.l.s4 1966171168
        %v7225 = vunpack.c.0.s8 %v7224
        %v7226 = vlaneseq
        %v7227 = vshrl.u32 %v7226, 7
        %v7228 = vsub.s32 %v7225, %v7227
        %v7229 = vrot.slane %v6831, %v7228
        %v7231 = vunpack.c.l.s4 1966171168
        %v7232 = vunpack.c.0.s8 %v7231
        %v7233 = vlaneseq
        %v7234 = vshrl.u32 %v7233, 7
        %v7235 = vsub.s32 %v7232, %v7234
        %v7236 = vrot.slane %v7208, %v7235
        %v7237 = vcombine.low %v7215, %v7229
        %v7238 = vcombine.high %v7215, %v7229
        %v7239 = vcombine.low %v7222, %v7236
        %v7240 = vcombine.high %v7222, %v7236
        %v7242 = vunpack.c.l.s4 1966171168
        %v7243 = vunpack.c.0.s8 %v7242
        %v7244 = vlaneseq
        %v7245 = vshrl.u32 %v7244, 7
        %v7246 = vsub.s32 %v7243, %v7245
        %v7247 = vrot.slane %v7237, %v7246
        %v7249 = vunpack.c.l.s4 1966171168
        %v7250 = vunpack.c.0.s8 %v7249
        %v7251 = vlaneseq
        %v7252 = vshrl.u32 %v7251, 7
        %v7253 = vsub.s32 %v7250, %v7252
        %v7254 = vrot.slane %v7239, %v7253
        %v7256 = vunpack.c.l.s4 1966171168
        %v7257 = vunpack.c.0.s8 %v7256
        %v7258 = vlaneseq
        %v7259 = vshrl.u32 %v7258, 7
        %v7260 = vsub.s32 %v7257, %v7259
        %v7261 = vrot.slane %v7238, %v7260
        %v7263 = vunpack.c.l.s4 1966171168
        %v7264 = vunpack.c.0.s8 %v7263
        %v7265 = vlaneseq
        %v7266 = vshrl.u32 %v7265, 7
        %v7267 = vsub.s32 %v7264, %v7266
        %v7268 = vrot.slane %v7240, %v7267
        %v7269 = vcombine.high %v7247, %v7247
        %v7270 = vcombine.high %v7254, %v7254
        %v7271 = vcombine.high %v7261, %v7261
        %v7272 = vcombine.high %v7268, %v7268
        %v7273 = vcombine.low %v6835, %v6836
        %v7274 = vcombine.high %v6835, %v6836
        %v7275 = vcombine.high %v6837, %v6837
        %v7277 = vunpack.c.l.s4 1966171168
        %v7278 = vunpack.c.0.s8 %v7277
        %v7279 = vlaneseq
        %v7280 = vshrl.u32 %v7279, 7
        %v7281 = vsub.s32 %v7278, %v7280
        %v7282 = vrot.slane %v7273, %v7281
        %v7284 = vunpack.c.l.s4 1966171168
        %v7285 = vunpack.c.0.s8 %v7284
        %v7286 = vlaneseq
        %v7287 = vshrl.u32 %v7286, 7
        %v7288 = vsub.s32 %v7285, %v7287
        %v7289 = vrot.slane %v7274, %v7288
        %v7291 = vunpack.c.l.s4 1966171168
        %v7292 = vunpack.c.0.s8 %v7291
        %v7293 = vlaneseq
        %v7294 = vshrl.u32 %v7293, 7
        %v7295 = vsub.s32 %v7292, %v7294
        %v7296 = vrot.slane %v6837, %v7295
        %v7298 = vunpack.c.l.s4 1966171168
        %v7299 = vunpack.c.0.s8 %v7298
        %v7300 = vlaneseq
        %v7301 = vshrl.u32 %v7300, 7
        %v7302 = vsub.s32 %v7299, %v7301
        %v7303 = vrot.slane %v7275, %v7302
        %v7304 = vcombine.low %v7282, %v7296
        %v7305 = vcombine.high %v7282, %v7296
        %v7306 = vcombine.low %v7289, %v7303
        %v7307 = vcombine.high %v7289, %v7303
        %v7309 = vunpack.c.l.s4 1966171168
        %v7310 = vunpack.c.0.s8 %v7309
        %v7311 = vlaneseq
        %v7312 = vshrl.u32 %v7311, 7
        %v7313 = vsub.s32 %v7310, %v7312
        %v7314 = vrot.slane %v7304, %v7313
        %v7316 = vunpack.c.l.s4 1966171168
        %v7317 = vunpack.c.0.s8 %v7316
        %v7318 = vlaneseq
        %v7319 = vshrl.u32 %v7318, 7
        %v7320 = vsub.s32 %v7317, %v7319
        %v7321 = vrot.slane %v7306, %v7320
        %v7323 = vunpack.c.l.s4 1966171168
        %v7324 = vunpack.c.0.s8 %v7323
        %v7325 = vlaneseq
        %v7326 = vshrl.u32 %v7325, 7
        %v7327 = vsub.s32 %v7324, %v7326
        %v7328 = vrot.slane %v7305, %v7327
        %v7330 = vunpack.c.l.s4 1966171168
        %v7331 = vunpack.c.0.s8 %v7330
        %v7332 = vlaneseq
        %v7333 = vshrl.u32 %v7332, 7
        %v7334 = vsub.s32 %v7331, %v7333
        %v7335 = vrot.slane %v7307, %v7334
        %v7336 = vcombine.high %v7314, %v7314
        %v7337 = vcombine.high %v7321, %v7321
        %v7338 = vcombine.high %v7328, %v7328
        %v7339 = vcombine.high %v7335, %v7335
        %v7340 = vcombine.low %v6841, %v6842
        %v7341 = vcombine.high %v6841, %v6842
        %v7342 = vcombine.high %v6843, %v6843
        %v7344 = vunpack.c.l.s4 1966171168
        %v7345 = vunpack.c.0.s8 %v7344
        %v7346 = vlaneseq
        %v7347 = vshrl.u32 %v7346, 7
        %v7348 = vsub.s32 %v7345, %v7347
        %v7349 = vrot.slane %v7340, %v7348
        %v7351 = vunpack.c.l.s4 1966171168
        %v7352 = vunpack.c.0.s8 %v7351
        %v7353 = vlaneseq
        %v7354 = vshrl.u32 %v7353, 7
        %v7355 = vsub.s32 %v7352, %v7354
        %v7356 = vrot.slane %v7341, %v7355
        %v7358 = vunpack.c.l.s4 1966171168
        %v7359 = vunpack.c.0.s8 %v7358
        %v7360 = vlaneseq
        %v7361 = vshrl.u32 %v7360, 7
        %v7362 = vsub.s32 %v7359, %v7361
        %v7363 = vrot.slane %v6843, %v7362
        %v7365 = vunpack.c.l.s4 1966171168
        %v7366 = vunpack.c.0.s8 %v7365
        %v7367 = vlaneseq
        %v7368 = vshrl.u32 %v7367, 7
        %v7369 = vsub.s32 %v7366, %v7368
        %v7370 = vrot.slane %v7342, %v7369
        %v7371 = vcombine.low %v7349, %v7363
        %v7372 = vcombine.high %v7349, %v7363
        %v7373 = vcombine.low %v7356, %v7370
        %v7374 = vcombine.high %v7356, %v7370
        %v7376 = vunpack.c.l.s4 1966171168
        %v7377 = vunpack.c.0.s8 %v7376
        %v7378 = vlaneseq
        %v7379 = vshrl.u32 %v7378, 7
        %v7380 = vsub.s32 %v7377, %v7379
        %v7381 = vrot.slane %v7371, %v7380
        %v7383 = vunpack.c.l.s4 1966171168
        %v7384 = vunpack.c.0.s8 %v7383
        %v7385 = vlaneseq
        %v7386 = vshrl.u32 %v7385, 7
        %v7387 = vsub.s32 %v7384, %v7386
        %v7388 = vrot.slane %v7373, %v7387
        %v7390 = vunpack.c.l.s4 1966171168
        %v7391 = vunpack.c.0.s8 %v7390
        %v7392 = vlaneseq
        %v7393 = vshrl.u32 %v7392, 7
        %v7394 = vsub.s32 %v7391, %v7393
        %v7395 = vrot.slane %v7372, %v7394
        %v7397 = vunpack.c.l.s4 1966171168
        %v7398 = vunpack.c.0.s8 %v7397
        %v7399 = vlaneseq
        %v7400 = vshrl.u32 %v7399, 7
        %v7401 = vsub.s32 %v7398, %v7400
        %v7402 = vrot.slane %v7374, %v7401
        %v7403 = vcombine.high %v7381, %v7381
        %v7404 = vcombine.high %v7388, %v7388
        %v7405 = vcombine.high %v7395, %v7395
        %v7406 = vcombine.high %v7402, %v7402
        %vm7471 = vcmp.ge.s32.totalorder %v2800, 0
        %vm7472 = vcmp.lt.s32.totalorder %v2800, 384
        %vm7473 = vmand %vm7471, %vm7472
        %7474 = vst.msk [vmem:[%s360] ss:$2 sm:$0x7] %vm7473, %v6912
        %s7475 = scalar_lea.vmem %s360, 6
        %7476 = vst.msk [vmem:[%s7475] ss:$2 sm:$0x7] %vm7473, %v6926
        %s7477 = scalar_lea.vmem %s360, 12
        %7478 = vst.msk [vmem:[%s7477] ss:$2 sm:$0x7] %vm7473, %v6934
        %s7479 = scalar_lea.vmem %s360, 18
        %7480 = vst.msk [vmem:[%s7479] ss:$2 sm:$0x7] %vm7473, %v6936
        %s7481 = scalar_lea.vmem %s360, 24
        %7482 = vst.msk [vmem:[%s7481] ss:$2 sm:$0x7] %vm7473, %v6919
        %s7483 = scalar_lea.vmem %s360, 30
        %7484 = vst.msk [vmem:[%s7483] ss:$2 sm:$0x7] %vm7473, %v6933
        %s7485 = scalar_lea.vmem %s360, 36
        %7486 = vst.msk [vmem:[%s7485] ss:$2 sm:$0x7] %vm7473, %v6935
        %s7487 = scalar_lea.vmem %s360, 42
        %7488 = vst.msk [vmem:[%s7487] ss:$2 sm:$0x7] %vm7473, %v6937
        %s7489 = scalar_lea.vmem %s360, 48
        %7490 = vst.msk [vmem:[%s7489] ss:$2 sm:$0x7] %vm7473, %v6979
        %s7491 = scalar_lea.vmem %s360, 54
        %7492 = vst.msk [vmem:[%s7491] ss:$2 sm:$0x7] %vm7473, %v6993
        %s7493 = scalar_lea.vmem %s360, 60
        %7494 = vst.msk [vmem:[%s7493] ss:$2 sm:$0x7] %vm7473, %v7001
        %s7495 = scalar_lea.vmem %s360, 66
        %7496 = vst.msk [vmem:[%s7495] ss:$2 sm:$0x7] %vm7473, %v7003
        %s7497 = scalar_lea.vmem %s360, 72
        %7498 = vst.msk [vmem:[%s7497] ss:$2 sm:$0x7] %vm7473, %v6986
        %s7499 = scalar_lea.vmem %s360, 78
        %7500 = vst.msk [vmem:[%s7499] ss:$2 sm:$0x7] %vm7473, %v7000
        %s7501 = scalar_lea.vmem %s360, 84
        %7502 = vst.msk [vmem:[%s7501] ss:$2 sm:$0x7] %vm7473, %v7002
        %s7503 = scalar_lea.vmem %s360, 90
        %7504 = vst.msk [vmem:[%s7503] ss:$2 sm:$0x7] %vm7473, %v7004
        %s7505 = scalar_lea.vmem %s360, 96
        %7506 = vst.msk [vmem:[%s7505] ss:$2 sm:$0x7] %vm7473, %v7046
        %s7507 = scalar_lea.vmem %s360, 102
        %7508 = vst.msk [vmem:[%s7507] ss:$2 sm:$0x7] %vm7473, %v7060
        %s7509 = scalar_lea.vmem %s360, 108
        %7510 = vst.msk [vmem:[%s7509] ss:$2 sm:$0x7] %vm7473, %v7068
        %s7511 = scalar_lea.vmem %s360, 114
        %7512 = vst.msk [vmem:[%s7511] ss:$2 sm:$0x7] %vm7473, %v7070
        %s7513 = scalar_lea.vmem %s360, 120
        %7514 = vst.msk [vmem:[%s7513] ss:$2 sm:$0x7] %vm7473, %v7053
        %s7515 = scalar_lea.vmem %s360, 126
        %7516 = vst.msk [vmem:[%s7515] ss:$2 sm:$0x7] %vm7473, %v7067
        %s7517 = scalar_lea.vmem %s360, 132
        %7518 = vst.msk [vmem:[%s7517] ss:$2 sm:$0x7] %vm7473, %v7069
        %s7519 = scalar_lea.vmem %s360, 138
        %7520 = vst.msk [vmem:[%s7519] ss:$2 sm:$0x7] %vm7473, %v7071
        %s7521 = scalar_lea.vmem %s360, 144
        %7522 = vst.msk [vmem:[%s7521] ss:$2 sm:$0x7] %vm7473, %v7113
        %s7523 = scalar_lea.vmem %s360, 150
        %7524 = vst.msk [vmem:[%s7523] ss:$2 sm:$0x7] %vm7473, %v7127
        %s7525 = scalar_lea.vmem %s360, 156
        %7526 = vst.msk [vmem:[%s7525] ss:$2 sm:$0x7] %vm7473, %v7135
        %s7527 = scalar_lea.vmem %s360, 162
        %7528 = vst.msk [vmem:[%s7527] ss:$2 sm:$0x7] %vm7473, %v7137
        %s7529 = scalar_lea.vmem %s360, 168
        %7530 = vst.msk [vmem:[%s7529] ss:$2 sm:$0x7] %vm7473, %v7120
        %s7531 = scalar_lea.vmem %s360, 174
        %7532 = vst.msk [vmem:[%s7531] ss:$2 sm:$0x7] %vm7473, %v7134
        %s7533 = scalar_lea.vmem %s360, 180
        %7534 = vst.msk [vmem:[%s7533] ss:$2 sm:$0x7] %vm7473, %v7136
        %s7535 = scalar_lea.vmem %s360, 186
        %7536 = vst.msk [vmem:[%s7535] ss:$2 sm:$0x7] %vm7473, %v7138
        %s7537 = scalar_lea.vmem %s360, 192
        %7538 = vst.msk [vmem:[%s7537] ss:$2 sm:$0x7] %vm7473, %v7180
        %s7539 = scalar_lea.vmem %s360, 198
        %7540 = vst.msk [vmem:[%s7539] ss:$2 sm:$0x7] %vm7473, %v7194
        %s7541 = scalar_lea.vmem %s360, 204
        %7542 = vst.msk [vmem:[%s7541] ss:$2 sm:$0x7] %vm7473, %v7202
        %s7543 = scalar_lea.vmem %s360, 210
        %7544 = vst.msk [vmem:[%s7543] ss:$2 sm:$0x7] %vm7473, %v7204
        %s7545 = scalar_lea.vmem %s360, 216
        %7546 = vst.msk [vmem:[%s7545] ss:$2 sm:$0x7] %vm7473, %v7187
        %s7547 = scalar_lea.vmem %s360, 222
        %7548 = vst.msk [vmem:[%s7547] ss:$2 sm:$0x7] %vm7473, %v7201
        %s7549 = scalar_lea.vmem %s360, 228
        %7550 = vst.msk [vmem:[%s7549] ss:$2 sm:$0x7] %vm7473, %v7203
        %s7551 = scalar_lea.vmem %s360, 234
        %7552 = vst.msk [vmem:[%s7551] ss:$2 sm:$0x7] %vm7473, %v7205
        %s7553 = scalar_lea.vmem %s360, 240
        %7554 = vst.msk [vmem:[%s7553] ss:$2 sm:$0x7] %vm7473, %v7247
        %s7555 = scalar_lea.vmem %s360, 246
        %7556 = vst.msk [vmem:[%s7555] ss:$2 sm:$0x7] %vm7473, %v7261
        %s7557 = scalar_lea.vmem %s360, 252
        %7558 = vst.msk [vmem:[%s7557] ss:$2 sm:$0x7] %vm7473, %v7269
        %s7559 = scalar_lea.vmem %s360, 258
        %7560 = vst.msk [vmem:[%s7559] ss:$2 sm:$0x7] %vm7473, %v7271
        %s7561 = scalar_lea.vmem %s360, 264
        %7562 = vst.msk [vmem:[%s7561] ss:$2 sm:$0x7] %vm7473, %v7254
        %s7563 = scalar_lea.vmem %s360, 270
        %7564 = vst.msk [vmem:[%s7563] ss:$2 sm:$0x7] %vm7473, %v7268
        %s7565 = scalar_lea.vmem %s360, 276
        %7566 = vst.msk [vmem:[%s7565] ss:$2 sm:$0x7] %vm7473, %v7270
        %s7567 = scalar_lea.vmem %s360, 282
        %7568 = vst.msk [vmem:[%s7567] ss:$2 sm:$0x7] %vm7473, %v7272
        %s7569 = scalar_lea.vmem %s360, 288
        %7570 = vst.msk [vmem:[%s7569] ss:$2 sm:$0x7] %vm7473, %v7314
        %s7571 = scalar_lea.vmem %s360, 294
        %7572 = vst.msk [vmem:[%s7571] ss:$2 sm:$0x7] %vm7473, %v7328
        %s7573 = scalar_lea.vmem %s360, 300
        %7574 = vst.msk [vmem:[%s7573] ss:$2 sm:$0x7] %vm7473, %v7336
        %s7575 = scalar_lea.vmem %s360, 306
        %7576 = vst.msk [vmem:[%s7575] ss:$2 sm:$0x7] %vm7473, %v7338
        %s7577 = scalar_lea.vmem %s360, 312
        %7578 = vst.msk [vmem:[%s7577] ss:$2 sm:$0x7] %vm7473, %v7321
        %s7579 = scalar_lea.vmem %s360, 318
        %7580 = vst.msk [vmem:[%s7579] ss:$2 sm:$0x7] %vm7473, %v7335
        %s7581 = scalar_lea.vmem %s360, 324
        %7582 = vst.msk [vmem:[%s7581] ss:$2 sm:$0x7] %vm7473, %v7337
        %s7583 = scalar_lea.vmem %s360, 330
        %7584 = vst.msk [vmem:[%s7583] ss:$2 sm:$0x7] %vm7473, %v7339
        %s7585 = scalar_lea.vmem %s360, 336
        %7586 = vst.msk [vmem:[%s7585] ss:$2 sm:$0x7] %vm7473, %v7381
        %s7587 = scalar_lea.vmem %s360, 342
        %7588 = vst.msk [vmem:[%s7587] ss:$2 sm:$0x7] %vm7473, %v7395
        %s7589 = scalar_lea.vmem %s360, 348
        %7590 = vst.msk [vmem:[%s7589] ss:$2 sm:$0x7] %vm7473, %v7403
        %s7591 = scalar_lea.vmem %s360, 354
        %7592 = vst.msk [vmem:[%s7591] ss:$2 sm:$0x7] %vm7473, %v7405
        %s7593 = scalar_lea.vmem %s360, 360
        %7594 = vst.msk [vmem:[%s7593] ss:$2 sm:$0x7] %vm7473, %v7388
        %s7595 = scalar_lea.vmem %s360, 366
        %7596 = vst.msk [vmem:[%s7595] ss:$2 sm:$0x7] %vm7473, %v7402
        %s7597 = scalar_lea.vmem %s360, 372
        %7598 = vst.msk [vmem:[%s7597] ss:$2 sm:$0x7] %vm7473, %v7404
        %s7599 = scalar_lea.vmem %s360, 378
        %7600 = vst.msk [vmem:[%s7599] ss:$2 sm:$0x7] %vm7473, %v7406
        %v7625 = vcombine.low %v6802, %v6803
        %v7626 = vcombine.high %v6802, %v6803
        %v7627 = vcombine.high %v6804, %v6804
        %v7629 = vunpack.c.l.s4 1966171168
        %v7630 = vunpack.c.0.s8 %v7629
        %v7631 = vlaneseq
        %v7632 = vshrl.u32 %v7631, 7
        %v7633 = vsub.s32 %v7630, %v7632
        %v7634 = vrot.slane %v7625, %v7633
        %v7636 = vunpack.c.l.s4 1966171168
        %v7637 = vunpack.c.0.s8 %v7636
        %v7638 = vlaneseq
        %v7639 = vshrl.u32 %v7638, 7
        %v7640 = vsub.s32 %v7637, %v7639
        %v7641 = vrot.slane %v7626, %v7640
        %v7643 = vunpack.c.l.s4 1966171168
        %v7644 = vunpack.c.0.s8 %v7643
        %v7645 = vlaneseq
        %v7646 = vshrl.u32 %v7645, 7
        %v7647 = vsub.s32 %v7644, %v7646
        %v7648 = vrot.slane %v6804, %v7647
        %v7650 = vunpack.c.l.s4 1966171168
        %v7651 = vunpack.c.0.s8 %v7650
        %v7652 = vlaneseq
        %v7653 = vshrl.u32 %v7652, 7
        %v7654 = vsub.s32 %v7651, %v7653
        %v7655 = vrot.slane %v7627, %v7654
        %v7656 = vcombine.low %v7634, %v7648
        %v7657 = vcombine.high %v7634, %v7648
        %v7658 = vcombine.low %v7641, %v7655
        %v7659 = vcombine.high %v7641, %v7655
        %v7661 = vunpack.c.l.s4 1966171168
        %v7662 = vunpack.c.0.s8 %v7661
        %v7663 = vlaneseq
        %v7664 = vshrl.u32 %v7663, 7
        %v7665 = vsub.s32 %v7662, %v7664
        %v7666 = vrot.slane %v7656, %v7665
        %v7668 = vunpack.c.l.s4 1966171168
        %v7669 = vunpack.c.0.s8 %v7668
        %v7670 = vlaneseq
        %v7671 = vshrl.u32 %v7670, 7
        %v7672 = vsub.s32 %v7669, %v7671
        %v7673 = vrot.slane %v7658, %v7672
        %v7675 = vunpack.c.l.s4 1966171168
        %v7676 = vunpack.c.0.s8 %v7675
        %v7677 = vlaneseq
        %v7678 = vshrl.u32 %v7677, 7
        %v7679 = vsub.s32 %v7676, %v7678
        %v7680 = vrot.slane %v7657, %v7679
        %v7682 = vunpack.c.l.s4 1966171168
        %v7683 = vunpack.c.0.s8 %v7682
        %v7684 = vlaneseq
        %v7685 = vshrl.u32 %v7684, 7
        %v7686 = vsub.s32 %v7683, %v7685
        %v7687 = vrot.slane %v7659, %v7686
        %v7688 = vcombine.high %v7666, %v7666
        %v7689 = vcombine.high %v7673, %v7673
        %v7690 = vcombine.high %v7680, %v7680
        %v7691 = vcombine.high %v7687, %v7687
        %v7692 = vcombine.low %v6808, %v6809
        %v7693 = vcombine.high %v6808, %v6809
        %v7694 = vcombine.high %v6810, %v6810
        %v7696 = vunpack.c.l.s4 1966171168
        %v7697 = vunpack.c.0.s8 %v7696
        %v7698 = vlaneseq
        %v7699 = vshrl.u32 %v7698, 7
        %v7700 = vsub.s32 %v7697, %v7699
        %v7701 = vrot.slane %v7692, %v7700
        %v7703 = vunpack.c.l.s4 1966171168
        %v7704 = vunpack.c.0.s8 %v7703
        %v7705 = vlaneseq
        %v7706 = vshrl.u32 %v7705, 7
        %v7707 = vsub.s32 %v7704, %v7706
        %v7708 = vrot.slane %v7693, %v7707
        %v7710 = vunpack.c.l.s4 1966171168
        %v7711 = vunpack.c.0.s8 %v7710
        %v7712 = vlaneseq
        %v7713 = vshrl.u32 %v7712, 7
        %v7714 = vsub.s32 %v7711, %v7713
        %v7715 = vrot.slane %v6810, %v7714
        %v7717 = vunpack.c.l.s4 1966171168
        %v7718 = vunpack.c.0.s8 %v7717
        %v7719 = vlaneseq
        %v7720 = vshrl.u32 %v7719, 7
        %v7721 = vsub.s32 %v7718, %v7720
        %v7722 = vrot.slane %v7694, %v7721
        %v7723 = vcombine.low %v7701, %v7715
        %v7724 = vcombine.high %v7701, %v7715
        %v7725 = vcombine.low %v7708, %v7722
        %v7726 = vcombine.high %v7708, %v7722
        %v7728 = vunpack.c.l.s4 1966171168
        %v7729 = vunpack.c.0.s8 %v7728
        %v7730 = vlaneseq
        %v7731 = vshrl.u32 %v7730, 7
        %v7732 = vsub.s32 %v7729, %v7731
        %v7733 = vrot.slane %v7723, %v7732
        %v7735 = vunpack.c.l.s4 1966171168
        %v7736 = vunpack.c.0.s8 %v7735
        %v7737 = vlaneseq
        %v7738 = vshrl.u32 %v7737, 7
        %v7739 = vsub.s32 %v7736, %v7738
        %v7740 = vrot.slane %v7725, %v7739
        %v7742 = vunpack.c.l.s4 1966171168
        %v7743 = vunpack.c.0.s8 %v7742
        %v7744 = vlaneseq
        %v7745 = vshrl.u32 %v7744, 7
        %v7746 = vsub.s32 %v7743, %v7745
        %v7747 = vrot.slane %v7724, %v7746
        %v7749 = vunpack.c.l.s4 1966171168
        %v7750 = vunpack.c.0.s8 %v7749
        %v7751 = vlaneseq
        %v7752 = vshrl.u32 %v7751, 7
        %v7753 = vsub.s32 %v7750, %v7752
        %v7754 = vrot.slane %v7726, %v7753
        %v7755 = vcombine.high %v7733, %v7733
        %v7756 = vcombine.high %v7740, %v7740
        %v7757 = vcombine.high %v7747, %v7747
        %v7758 = vcombine.high %v7754, %v7754
        %v7759 = vcombine.low %v6814, %v6815
        %v7760 = vcombine.high %v6814, %v6815
        %v7761 = vcombine.high %v6816, %v6816
        %v7763 = vunpack.c.l.s4 1966171168
        %v7764 = vunpack.c.0.s8 %v7763
        %v7765 = vlaneseq
        %v7766 = vshrl.u32 %v7765, 7
        %v7767 = vsub.s32 %v7764, %v7766
        %v7768 = vrot.slane %v7759, %v7767
        %v7770 = vunpack.c.l.s4 1966171168
        %v7771 = vunpack.c.0.s8 %v7770
        %v7772 = vlaneseq
        %v7773 = vshrl.u32 %v7772, 7
        %v7774 = vsub.s32 %v7771, %v7773
        %v7775 = vrot.slane %v7760, %v7774
        %v7777 = vunpack.c.l.s4 1966171168
        %v7778 = vunpack.c.0.s8 %v7777
        %v7779 = vlaneseq
        %v7780 = vshrl.u32 %v7779, 7
        %v7781 = vsub.s32 %v7778, %v7780
        %v7782 = vrot.slane %v6816, %v7781
        %v7784 = vunpack.c.l.s4 1966171168
        %v7785 = vunpack.c.0.s8 %v7784
        %v7786 = vlaneseq
        %v7787 = vshrl.u32 %v7786, 7
        %v7788 = vsub.s32 %v7785, %v7787
        %v7789 = vrot.slane %v7761, %v7788
        %v7790 = vcombine.low %v7768, %v7782
        %v7791 = vcombine.high %v7768, %v7782
        %v7792 = vcombine.low %v7775, %v7789
        %v7793 = vcombine.high %v7775, %v7789
        %v7795 = vunpack.c.l.s4 1966171168
        %v7796 = vunpack.c.0.s8 %v7795
        %v7797 = vlaneseq
        %v7798 = vshrl.u32 %v7797, 7
        %v7799 = vsub.s32 %v7796, %v7798
        %v7800 = vrot.slane %v7790, %v7799
        %v7802 = vunpack.c.l.s4 1966171168
        %v7803 = vunpack.c.0.s8 %v7802
        %v7804 = vlaneseq
        %v7805 = vshrl.u32 %v7804, 7
        %v7806 = vsub.s32 %v7803, %v7805
        %v7807 = vrot.slane %v7792, %v7806
        %v7809 = vunpack.c.l.s4 1966171168
        %v7810 = vunpack.c.0.s8 %v7809
        %v7811 = vlaneseq
        %v7812 = vshrl.u32 %v7811, 7
        %v7813 = vsub.s32 %v7810, %v7812
        %v7814 = vrot.slane %v7791, %v7813
        %v7816 = vunpack.c.l.s4 1966171168
        %v7817 = vunpack.c.0.s8 %v7816
        %v7818 = vlaneseq
        %v7819 = vshrl.u32 %v7818, 7
        %v7820 = vsub.s32 %v7817, %v7819
        %v7821 = vrot.slane %v7793, %v7820
        %v7822 = vcombine.high %v7800, %v7800
        %v7823 = vcombine.high %v7807, %v7807
        %v7824 = vcombine.high %v7814, %v7814
        %v7825 = vcombine.high %v7821, %v7821
        %v7826 = vcombine.low %v6820, %v6821
        %v7827 = vcombine.high %v6820, %v6821
        %v7828 = vcombine.high %v6822, %v6822
        %v7830 = vunpack.c.l.s4 1966171168
        %v7831 = vunpack.c.0.s8 %v7830
        %v7832 = vlaneseq
        %v7833 = vshrl.u32 %v7832, 7
        %v7834 = vsub.s32 %v7831, %v7833
        %v7835 = vrot.slane %v7826, %v7834
        %v7837 = vunpack.c.l.s4 1966171168
        %v7838 = vunpack.c.0.s8 %v7837
        %v7839 = vlaneseq
        %v7840 = vshrl.u32 %v7839, 7
        %v7841 = vsub.s32 %v7838, %v7840
        %v7842 = vrot.slane %v7827, %v7841
        %v7844 = vunpack.c.l.s4 1966171168
        %v7845 = vunpack.c.0.s8 %v7844
        %v7846 = vlaneseq
        %v7847 = vshrl.u32 %v7846, 7
        %v7848 = vsub.s32 %v7845, %v7847
        %v7849 = vrot.slane %v6822, %v7848
        %v7851 = vunpack.c.l.s4 1966171168
        %v7852 = vunpack.c.0.s8 %v7851
        %v7853 = vlaneseq
        %v7854 = vshrl.u32 %v7853, 7
        %v7855 = vsub.s32 %v7852, %v7854
        %v7856 = vrot.slane %v7828, %v7855
        %v7857 = vcombine.low %v7835, %v7849
        %v7858 = vcombine.high %v7835, %v7849
        %v7859 = vcombine.low %v7842, %v7856
        %v7860 = vcombine.high %v7842, %v7856
        %v7862 = vunpack.c.l.s4 1966171168
        %v7863 = vunpack.c.0.s8 %v7862
        %v7864 = vlaneseq
        %v7865 = vshrl.u32 %v7864, 7
        %v7866 = vsub.s32 %v7863, %v7865
        %v7867 = vrot.slane %v7857, %v7866
        %v7869 = vunpack.c.l.s4 1966171168
        %v7870 = vunpack.c.0.s8 %v7869
        %v7871 = vlaneseq
        %v7872 = vshrl.u32 %v7871, 7
        %v7873 = vsub.s32 %v7870, %v7872
        %v7874 = vrot.slane %v7859, %v7873
        %v7876 = vunpack.c.l.s4 1966171168
        %v7877 = vunpack.c.0.s8 %v7876
        %v7878 = vlaneseq
        %v7879 = vshrl.u32 %v7878, 7
        %v7880 = vsub.s32 %v7877, %v7879
        %v7881 = vrot.slane %v7858, %v7880
        %v7883 = vunpack.c.l.s4 1966171168
        %v7884 = vunpack.c.0.s8 %v7883
        %v7885 = vlaneseq
        %v7886 = vshrl.u32 %v7885, 7
        %v7887 = vsub.s32 %v7884, %v7886
        %v7888 = vrot.slane %v7860, %v7887
        %v7889 = vcombine.high %v7867, %v7867
        %v7890 = vcombine.high %v7874, %v7874
        %v7891 = vcombine.high %v7881, %v7881
        %v7892 = vcombine.high %v7888, %v7888
        %v7893 = vcombine.low %v6826, %v6827
        %v7894 = vcombine.high %v6826, %v6827
        %v7895 = vcombine.high %v6828, %v6828
        %v7897 = vunpack.c.l.s4 1966171168
        %v7898 = vunpack.c.0.s8 %v7897
        %v7899 = vlaneseq
        %v7900 = vshrl.u32 %v7899, 7
        %v7901 = vsub.s32 %v7898, %v7900
        %v7902 = vrot.slane %v7893, %v7901
        %v7904 = vunpack.c.l.s4 1966171168
        %v7905 = vunpack.c.0.s8 %v7904
        %v7906 = vlaneseq
        %v7907 = vshrl.u32 %v7906, 7
        %v7908 = vsub.s32 %v7905, %v7907
        %v7909 = vrot.slane %v7894, %v7908
        %v7911 = vunpack.c.l.s4 1966171168
        %v7912 = vunpack.c.0.s8 %v7911
        %v7913 = vlaneseq
        %v7914 = vshrl.u32 %v7913, 7
        %v7915 = vsub.s32 %v7912, %v7914
        %v7916 = vrot.slane %v6828, %v7915
        %v7918 = vunpack.c.l.s4 1966171168
        %v7919 = vunpack.c.0.s8 %v7918
        %v7920 = vlaneseq
        %v7921 = vshrl.u32 %v7920, 7
        %v7922 = vsub.s32 %v7919, %v7921
        %v7923 = vrot.slane %v7895, %v7922
        %v7924 = vcombine.low %v7902, %v7916
        %v7925 = vcombine.high %v7902, %v7916
        %v7926 = vcombine.low %v7909, %v7923
        %v7927 = vcombine.high %v7909, %v7923
        %v7929 = vunpack.c.l.s4 1966171168
        %v7930 = vunpack.c.0.s8 %v7929
        %v7931 = vlaneseq
        %v7932 = vshrl.u32 %v7931, 7
        %v7933 = vsub.s32 %v7930, %v7932
        %v7934 = vrot.slane %v7924, %v7933
        %v7936 = vunpack.c.l.s4 1966171168
        %v7937 = vunpack.c.0.s8 %v7936
        %v7938 = vlaneseq
        %v7939 = vshrl.u32 %v7938, 7
        %v7940 = vsub.s32 %v7937, %v7939
        %v7941 = vrot.slane %v7926, %v7940
        %v7943 = vunpack.c.l.s4 1966171168
        %v7944 = vunpack.c.0.s8 %v7943
        %v7945 = vlaneseq
        %v7946 = vshrl.u32 %v7945, 7
        %v7947 = vsub.s32 %v7944, %v7946
        %v7948 = vrot.slane %v7925, %v7947
        %v7950 = vunpack.c.l.s4 1966171168
        %v7951 = vunpack.c.0.s8 %v7950
        %v7952 = vlaneseq
        %v7953 = vshrl.u32 %v7952, 7
        %v7954 = vsub.s32 %v7951, %v7953
        %v7955 = vrot.slane %v7927, %v7954
        %v7956 = vcombine.high %v7934, %v7934
        %v7957 = vcombine.high %v7941, %v7941
        %v7958 = vcombine.high %v7948, %v7948
        %v7959 = vcombine.high %v7955, %v7955
        %v7960 = vcombine.low %v6832, %v6833
        %v7961 = vcombine.high %v6832, %v6833
        %v7962 = vcombine.high %v6834, %v6834
        %v7964 = vunpack.c.l.s4 1966171168
        %v7965 = vunpack.c.0.s8 %v7964
        %v7966 = vlaneseq
        %v7967 = vshrl.u32 %v7966, 7
        %v7968 = vsub.s32 %v7965, %v7967
        %v7969 = vrot.slane %v7960, %v7968
        %v7971 = vunpack.c.l.s4 1966171168
        %v7972 = vunpack.c.0.s8 %v7971
        %v7973 = vlaneseq
        %v7974 = vshrl.u32 %v7973, 7
        %v7975 = vsub.s32 %v7972, %v7974
        %v7976 = vrot.slane %v7961, %v7975
        %v7978 = vunpack.c.l.s4 1966171168
        %v7979 = vunpack.c.0.s8 %v7978
        %v7980 = vlaneseq
        %v7981 = vshrl.u32 %v7980, 7
        %v7982 = vsub.s32 %v7979, %v7981
        %v7983 = vrot.slane %v6834, %v7982
        %v7985 = vunpack.c.l.s4 1966171168
        %v7986 = vunpack.c.0.s8 %v7985
        %v7987 = vlaneseq
        %v7988 = vshrl.u32 %v7987, 7
        %v7989 = vsub.s32 %v7986, %v7988
        %v7990 = vrot.slane %v7962, %v7989
        %v7991 = vcombine.low %v7969, %v7983
        %v7992 = vcombine.high %v7969, %v7983
        %v7993 = vcombine.low %v7976, %v7990
        %v7994 = vcombine.high %v7976, %v7990
        %v7996 = vunpack.c.l.s4 1966171168
        %v7997 = vunpack.c.0.s8 %v7996
        %v7998 = vlaneseq
        %v7999 = vshrl.u32 %v7998, 7
        %v8000 = vsub.s32 %v7997, %v7999
        %v8001 = vrot.slane %v7991, %v8000
        %v8003 = vunpack.c.l.s4 1966171168
        %v8004 = vunpack.c.0.s8 %v8003
        %v8005 = vlaneseq
        %v8006 = vshrl.u32 %v8005, 7
        %v8007 = vsub.s32 %v8004, %v8006
        %v8008 = vrot.slane %v7993, %v8007
        %v8010 = vunpack.c.l.s4 1966171168
        %v8011 = vunpack.c.0.s8 %v8010
        %v8012 = vlaneseq
        %v8013 = vshrl.u32 %v8012, 7
        %v8014 = vsub.s32 %v8011, %v8013
        %v8015 = vrot.slane %v7992, %v8014
        %v8017 = vunpack.c.l.s4 1966171168
        %v8018 = vunpack.c.0.s8 %v8017
        %v8019 = vlaneseq
        %v8020 = vshrl.u32 %v8019, 7
        %v8021 = vsub.s32 %v8018, %v8020
        %v8022 = vrot.slane %v7994, %v8021
        %v8023 = vcombine.high %v8001, %v8001
        %v8024 = vcombine.high %v8008, %v8008
        %v8025 = vcombine.high %v8015, %v8015
        %v8026 = vcombine.high %v8022, %v8022
        %v8027 = vcombine.low %v6838, %v6839
        %v8028 = vcombine.high %v6838, %v6839
        %v8029 = vcombine.high %v6840, %v6840
        %v8031 = vunpack.c.l.s4 1966171168
        %v8032 = vunpack.c.0.s8 %v8031
        %v8033 = vlaneseq
        %v8034 = vshrl.u32 %v8033, 7
        %v8035 = vsub.s32 %v8032, %v8034
        %v8036 = vrot.slane %v8027, %v8035
        %v8038 = vunpack.c.l.s4 1966171168
        %v8039 = vunpack.c.0.s8 %v8038
        %v8040 = vlaneseq
        %v8041 = vshrl.u32 %v8040, 7
        %v8042 = vsub.s32 %v8039, %v8041
        %v8043 = vrot.slane %v8028, %v8042
        %v8045 = vunpack.c.l.s4 1966171168
        %v8046 = vunpack.c.0.s8 %v8045
        %v8047 = vlaneseq
        %v8048 = vshrl.u32 %v8047, 7
        %v8049 = vsub.s32 %v8046, %v8048
        %v8050 = vrot.slane %v6840, %v8049
        %v8052 = vunpack.c.l.s4 1966171168
        %v8053 = vunpack.c.0.s8 %v8052
        %v8054 = vlaneseq
        %v8055 = vshrl.u32 %v8054, 7
        %v8056 = vsub.s32 %v8053, %v8055
        %v8057 = vrot.slane %v8029, %v8056
        %v8058 = vcombine.low %v8036, %v8050
        %v8059 = vcombine.high %v8036, %v8050
        %v8060 = vcombine.low %v8043, %v8057
        %v8061 = vcombine.high %v8043, %v8057
        %v8063 = vunpack.c.l.s4 1966171168
        %v8064 = vunpack.c.0.s8 %v8063
        %v8065 = vlaneseq
        %v8066 = vshrl.u32 %v8065, 7
        %v8067 = vsub.s32 %v8064, %v8066
        %v8068 = vrot.slane %v8058, %v8067
        %v8070 = vunpack.c.l.s4 1966171168
        %v8071 = vunpack.c.0.s8 %v8070
        %v8072 = vlaneseq
        %v8073 = vshrl.u32 %v8072, 7
        %v8074 = vsub.s32 %v8071, %v8073
        %v8075 = vrot.slane %v8060, %v8074
        %v8077 = vunpack.c.l.s4 1966171168
        %v8078 = vunpack.c.0.s8 %v8077
        %v8079 = vlaneseq
        %v8080 = vshrl.u32 %v8079, 7
        %v8081 = vsub.s32 %v8078, %v8080
        %v8082 = vrot.slane %v8059, %v8081
        %v8084 = vunpack.c.l.s4 1966171168
        %v8085 = vunpack.c.0.s8 %v8084
        %v8086 = vlaneseq
        %v8087 = vshrl.u32 %v8086, 7
        %v8088 = vsub.s32 %v8085, %v8087
        %v8089 = vrot.slane %v8061, %v8088
        %v8090 = vcombine.high %v8068, %v8068
        %v8091 = vcombine.high %v8075, %v8075
        %v8092 = vcombine.high %v8082, %v8082
        %v8093 = vcombine.high %v8089, %v8089
        %v8094 = vcombine.low %v6844, %v6845
        %v8095 = vcombine.high %v6844, %v6845
        %v8096 = vcombine.high %v6846, %v6846
        %v8098 = vunpack.c.l.s4 1966171168
        %v8099 = vunpack.c.0.s8 %v8098
        %v8100 = vlaneseq
        %v8101 = vshrl.u32 %v8100, 7
        %v8102 = vsub.s32 %v8099, %v8101
        %v8103 = vrot.slane %v8094, %v8102
        %v8105 = vunpack.c.l.s4 1966171168
        %v8106 = vunpack.c.0.s8 %v8105
        %v8107 = vlaneseq
        %v8108 = vshrl.u32 %v8107, 7
        %v8109 = vsub.s32 %v8106, %v8108
        %v8110 = vrot.slane %v8095, %v8109
        %v8112 = vunpack.c.l.s4 1966171168
        %v8113 = vunpack.c.0.s8 %v8112
        %v8114 = vlaneseq
        %v8115 = vshrl.u32 %v8114, 7
        %v8116 = vsub.s32 %v8113, %v8115
        %v8117 = vrot.slane %v6846, %v8116
        %v8119 = vunpack.c.l.s4 1966171168
        %v8120 = vunpack.c.0.s8 %v8119
        %v8121 = vlaneseq
        %v8122 = vshrl.u32 %v8121, 7
        %v8123 = vsub.s32 %v8120, %v8122
        %v8124 = vrot.slane %v8096, %v8123
        %v8125 = vcombine.low %v8103, %v8117
        %v8126 = vcombine.high %v8103, %v8117
        %v8127 = vcombine.low %v8110, %v8124
        %v8128 = vcombine.high %v8110, %v8124
        %v8130 = vunpack.c.l.s4 1966171168
        %v8131 = vunpack.c.0.s8 %v8130
        %v8132 = vlaneseq
        %v8133 = vshrl.u32 %v8132, 7
        %v8134 = vsub.s32 %v8131, %v8133
        %v8135 = vrot.slane %v8125, %v8134
        %v8137 = vunpack.c.l.s4 1966171168
        %v8138 = vunpack.c.0.s8 %v8137
        %v8139 = vlaneseq
        %v8140 = vshrl.u32 %v8139, 7
        %v8141 = vsub.s32 %v8138, %v8140
        %v8142 = vrot.slane %v8127, %v8141
        %v8144 = vunpack.c.l.s4 1966171168
        %v8145 = vunpack.c.0.s8 %v8144
        %v8146 = vlaneseq
        %v8147 = vshrl.u32 %v8146, 7
        %v8148 = vsub.s32 %v8145, %v8147
        %v8149 = vrot.slane %v8126, %v8148
        %v8151 = vunpack.c.l.s4 1966171168
        %v8152 = vunpack.c.0.s8 %v8151
        %v8153 = vlaneseq
        %v8154 = vshrl.u32 %v8153, 7
        %v8155 = vsub.s32 %v8152, %v8154
        %v8156 = vrot.slane %v8128, %v8155
        %v8157 = vcombine.high %v8135, %v8135
        %v8158 = vcombine.high %v8142, %v8142
        %v8159 = vcombine.high %v8149, %v8149
        %v8160 = vcombine.high %v8156, %v8156
        %s8225 = scalar_lea.vmem %s360, 1
        %8226 = vst.msk [vmem:[%s8225] ss:$2 sm:$0x7] %vm7473, %v7666
        %s8227 = scalar_lea.vmem %s360, 7
        %8228 = vst.msk [vmem:[%s8227] ss:$2 sm:$0x7] %vm7473, %v7680
        %s8229 = scalar_lea.vmem %s360, 13
        %8230 = vst.msk [vmem:[%s8229] ss:$2 sm:$0x7] %vm7473, %v7688
        %s8231 = scalar_lea.vmem %s360, 19
        %8232 = vst.msk [vmem:[%s8231] ss:$2 sm:$0x7] %vm7473, %v7690
        %s8233 = scalar_lea.vmem %s360, 25
        %8234 = vst.msk [vmem:[%s8233] ss:$2 sm:$0x7] %vm7473, %v7673
        %s8235 = scalar_lea.vmem %s360, 31
        %8236 = vst.msk [vmem:[%s8235] ss:$2 sm:$0x7] %vm7473, %v7687
        %s8237 = scalar_lea.vmem %s360, 37
        %8238 = vst.msk [vmem:[%s8237] ss:$2 sm:$0x7] %vm7473, %v7689
        %s8239 = scalar_lea.vmem %s360, 43
        %8240 = vst.msk [vmem:[%s8239] ss:$2 sm:$0x7] %vm7473, %v7691
        %s8241 = scalar_lea.vmem %s360, 49
        %8242 = vst.msk [vmem:[%s8241] ss:$2 sm:$0x7] %vm7473, %v7733
        %s8243 = scalar_lea.vmem %s360, 55
        %8244 = vst.msk [vmem:[%s8243] ss:$2 sm:$0x7] %vm7473, %v7747
        %s8245 = scalar_lea.vmem %s360, 61
        %8246 = vst.msk [vmem:[%s8245] ss:$2 sm:$0x7] %vm7473, %v7755
        %s8247 = scalar_lea.vmem %s360, 67
        %8248 = vst.msk [vmem:[%s8247] ss:$2 sm:$0x7] %vm7473, %v7757
        %s8249 = scalar_lea.vmem %s360, 73
        %8250 = vst.msk [vmem:[%s8249] ss:$2 sm:$0x7] %vm7473, %v7740
        %s8251 = scalar_lea.vmem %s360, 79
        %8252 = vst.msk [vmem:[%s8251] ss:$2 sm:$0x7] %vm7473, %v7754
        %s8253 = scalar_lea.vmem %s360, 85
        %8254 = vst.msk [vmem:[%s8253] ss:$2 sm:$0x7] %vm7473, %v7756
        %s8255 = scalar_lea.vmem %s360, 91
        %8256 = vst.msk [vmem:[%s8255] ss:$2 sm:$0x7] %vm7473, %v7758
        %s8257 = scalar_lea.vmem %s360, 97
        %8258 = vst.msk [vmem:[%s8257] ss:$2 sm:$0x7] %vm7473, %v7800
        %s8259 = scalar_lea.vmem %s360, 103
        %8260 = vst.msk [vmem:[%s8259] ss:$2 sm:$0x7] %vm7473, %v7814
        %s8261 = scalar_lea.vmem %s360, 109
        %8262 = vst.msk [vmem:[%s8261] ss:$2 sm:$0x7] %vm7473, %v7822
        %s8263 = scalar_lea.vmem %s360, 115
        %8264 = vst.msk [vmem:[%s8263] ss:$2 sm:$0x7] %vm7473, %v7824
        %s8265 = scalar_lea.vmem %s360, 121
        %8266 = vst.msk [vmem:[%s8265] ss:$2 sm:$0x7] %vm7473, %v7807
        %s8267 = scalar_lea.vmem %s360, 127
        %8268 = vst.msk [vmem:[%s8267] ss:$2 sm:$0x7] %vm7473, %v7821
        %s8269 = scalar_lea.vmem %s360, 133
        %8270 = vst.msk [vmem:[%s8269] ss:$2 sm:$0x7] %vm7473, %v7823
        %s8271 = scalar_lea.vmem %s360, 139
        %8272 = vst.msk [vmem:[%s8271] ss:$2 sm:$0x7] %vm7473, %v7825
        %s8273 = scalar_lea.vmem %s360, 145
        %8274 = vst.msk [vmem:[%s8273] ss:$2 sm:$0x7] %vm7473, %v7867
        %s8275 = scalar_lea.vmem %s360, 151
        %8276 = vst.msk [vmem:[%s8275] ss:$2 sm:$0x7] %vm7473, %v7881
        %s8277 = scalar_lea.vmem %s360, 157
        %8278 = vst.msk [vmem:[%s8277] ss:$2 sm:$0x7] %vm7473, %v7889
        %s8279 = scalar_lea.vmem %s360, 163
        %8280 = vst.msk [vmem:[%s8279] ss:$2 sm:$0x7] %vm7473, %v7891
        %s8281 = scalar_lea.vmem %s360, 169
        %8282 = vst.msk [vmem:[%s8281] ss:$2 sm:$0x7] %vm7473, %v7874
        %s8283 = scalar_lea.vmem %s360, 175
        %8284 = vst.msk [vmem:[%s8283] ss:$2 sm:$0x7] %vm7473, %v7888
        %s8285 = scalar_lea.vmem %s360, 181
        %8286 = vst.msk [vmem:[%s8285] ss:$2 sm:$0x7] %vm7473, %v7890
        %s8287 = scalar_lea.vmem %s360, 187
        %8288 = vst.msk [vmem:[%s8287] ss:$2 sm:$0x7] %vm7473, %v7892
        %s8289 = scalar_lea.vmem %s360, 193
        %8290 = vst.msk [vmem:[%s8289] ss:$2 sm:$0x7] %vm7473, %v7934
        %s8291 = scalar_lea.vmem %s360, 199
        %8292 = vst.msk [vmem:[%s8291] ss:$2 sm:$0x7] %vm7473, %v7948
        %s8293 = scalar_lea.vmem %s360, 205
        %8294 = vst.msk [vmem:[%s8293] ss:$2 sm:$0x7] %vm7473, %v7956
        %s8295 = scalar_lea.vmem %s360, 211
        %8296 = vst.msk [vmem:[%s8295] ss:$2 sm:$0x7] %vm7473, %v7958
        %s8297 = scalar_lea.vmem %s360, 217
        %8298 = vst.msk [vmem:[%s8297] ss:$2 sm:$0x7] %vm7473, %v7941
        %s8299 = scalar_lea.vmem %s360, 223
        %8300 = vst.msk [vmem:[%s8299] ss:$2 sm:$0x7] %vm7473, %v7955
        %s8301 = scalar_lea.vmem %s360, 229
        %8302 = vst.msk [vmem:[%s8301] ss:$2 sm:$0x7] %vm7473, %v7957
        %s8303 = scalar_lea.vmem %s360, 235
        %8304 = vst.msk [vmem:[%s8303] ss:$2 sm:$0x7] %vm7473, %v7959
        %s8305 = scalar_lea.vmem %s360, 241
        %8306 = vst.msk [vmem:[%s8305] ss:$2 sm:$0x7] %vm7473, %v8001
        %s8307 = scalar_lea.vmem %s360, 247
        %8308 = vst.msk [vmem:[%s8307] ss:$2 sm:$0x7] %vm7473, %v8015
        %s8309 = scalar_lea.vmem %s360, 253
        %8310 = vst.msk [vmem:[%s8309] ss:$2 sm:$0x7] %vm7473, %v8023
        %s8311 = scalar_lea.vmem %s360, 259
        %8312 = vst.msk [vmem:[%s8311] ss:$2 sm:$0x7] %vm7473, %v8025
        %s8313 = scalar_lea.vmem %s360, 265
        %8314 = vst.msk [vmem:[%s8313] ss:$2 sm:$0x7] %vm7473, %v8008
        %s8315 = scalar_lea.vmem %s360, 271
        %8316 = vst.msk [vmem:[%s8315] ss:$2 sm:$0x7] %vm7473, %v8022
        %s8317 = scalar_lea.vmem %s360, 277
        %8318 = vst.msk [vmem:[%s8317] ss:$2 sm:$0x7] %vm7473, %v8024
        %s8319 = scalar_lea.vmem %s360, 283
        %8320 = vst.msk [vmem:[%s8319] ss:$2 sm:$0x7] %vm7473, %v8026
        %s8321 = scalar_lea.vmem %s360, 289
        %8322 = vst.msk [vmem:[%s8321] ss:$2 sm:$0x7] %vm7473, %v8068
        %s8323 = scalar_lea.vmem %s360, 295
        %8324 = vst.msk [vmem:[%s8323] ss:$2 sm:$0x7] %vm7473, %v8082
        %s8325 = scalar_lea.vmem %s360, 301
        %8326 = vst.msk [vmem:[%s8325] ss:$2 sm:$0x7] %vm7473, %v8090
        %s8327 = scalar_lea.vmem %s360, 307
        %8328 = vst.msk [vmem:[%s8327] ss:$2 sm:$0x7] %vm7473, %v8092
        %s8329 = scalar_lea.vmem %s360, 313
        %8330 = vst.msk [vmem:[%s8329] ss:$2 sm:$0x7] %vm7473, %v8075
        %s8331 = scalar_lea.vmem %s360, 319
        %8332 = vst.msk [vmem:[%s8331] ss:$2 sm:$0x7] %vm7473, %v8089
        %s8333 = scalar_lea.vmem %s360, 325
        %8334 = vst.msk [vmem:[%s8333] ss:$2 sm:$0x7] %vm7473, %v8091
        %s8335 = scalar_lea.vmem %s360, 331
        %8336 = vst.msk [vmem:[%s8335] ss:$2 sm:$0x7] %vm7473, %v8093
        %s8337 = scalar_lea.vmem %s360, 337
        %8338 = vst.msk [vmem:[%s8337] ss:$2 sm:$0x7] %vm7473, %v8135
        %s8339 = scalar_lea.vmem %s360, 343
        %8340 = vst.msk [vmem:[%s8339] ss:$2 sm:$0x7] %vm7473, %v8149
        %s8341 = scalar_lea.vmem %s360, 349
        %8342 = vst.msk [vmem:[%s8341] ss:$2 sm:$0x7] %vm7473, %v8157
        %s8343 = scalar_lea.vmem %s360, 355
        %8344 = vst.msk [vmem:[%s8343] ss:$2 sm:$0x7] %vm7473, %v8159
        %s8345 = scalar_lea.vmem %s360, 361
        %8346 = vst.msk [vmem:[%s8345] ss:$2 sm:$0x7] %vm7473, %v8142
        %s8347 = scalar_lea.vmem %s360, 367
        %8348 = vst.msk [vmem:[%s8347] ss:$2 sm:$0x7] %vm7473, %v8156
        %s8349 = scalar_lea.vmem %s360, 373
        %8350 = vst.msk [vmem:[%s8349] ss:$2 sm:$0x7] %vm7473, %v8158
        %s8351 = scalar_lea.vmem %s360, 379
        %8352 = vst.msk [vmem:[%s8351] ss:$2 sm:$0x7] %vm7473, %v8160
        %p8353 = scmp.lt.s32.totalorder %s22, 1
        %s8354 = scalar_select %p8353, %s22, 1
        %s8355 = smul.addr %s8354, 192
        %s8356 = smul.addr %s8355, 2
        %s8357 = scalar_lea.vmem %s7, %s8356
        // Predicated region
        $region73: #{decoder_forward.1} parent=47 // pred_check
          %p8358 = pneg %p192
        $region74: #{decoder_forward.1} parent=47 // pred_check_branch
          %8360 = sbr.rel (%p8358) target = $region76
        $region75: #{decoder_forward.1} parent=47 // pred_region
          _
        $region76: #{decoder_forward.1} parent=47 // pred_fallthru
          _
      $region48: #{decoder_forward.1} parent=5 // pred_fallthru
        _
      %p8361 = scmp.le.s32.totalorder 2, %s17
      // Predicated region
      $region77: #{decoder_forward.1} parent=5 // pred_check
        %p8362 = pneg %p8361
      $region78: #{decoder_forward.1} parent=5 // pred_check_branch
        %8364 = sbr.rel (%p8362) target = $region80
      $region79: #{decoder_forward.1} parent=5 // pred_region
        %s8365 = ssub.s32 %s17, 2
        // Predicated region
        $region81: #{decoder_forward.1} parent=79 // pred_check
          %p8366 = pneg %p198
        $region82: #{decoder_forward.1} parent=79 // pred_check_branch
          %8368 = sbr.rel (%p8366) target = $region84
        $region83: #{decoder_forward.1} parent=79 // pred_region
          %p8369 = scmp.lt.s32.totalorder %s23, 1
          %s8370 = scalar_select %p8369, %s23, 1
          %s8371 = smul.addr %s8370, 192
          %s8372 = smul.addr %s8371, 2
          %s8373 = scalar_lea.vmem %s7, %s8372
        $region84: #{decoder_forward.1} parent=79 // pred_fallthru
          _
      $region80: #{decoder_forward.1} parent=5 // pred_fallthru
        _
    $region6: #{decoder_forward.1} parent=1 // loop_footer
      %s21 = sadd.s32 1, %s17
    $region7: #{decoder_forward.1} parent=1 // loop_footer_branch
      %16 = sbr.rel target = $region3
    $region8: #{decoder_forward.1} parent=1 // loop_exit
      _
    %8374 = vsyncpa [#allocation5], 1
    %s8375 = scalar_lea.sflag [#allocation5], 1
    %8376 = vsyncpa %s8375, 1
    %8377 = vsyncpa [#allocation7], 1
    %8378 = vsyncpa [#allocation10], 1
    %8379 = vsyncpa [#allocation13], 1

</llo_original>
